<compile_context>
chip_gen: v5e
topology: v5e:2x2
jax: 0.10.0
libtpu: 0.0.40
codegen_flags: <defaults>
</compile_context>

<pallas_src>
import functools
import math

import jax
import jax.numpy as jnp
from jax import lax
from jax.experimental import pallas as pl
from jax.experimental.pallas import tpu as pltpu

LANES = 128


def _round_up(n, m):
    return ((n + m - 1) // m) * m


# -----------------------------------------------------------------------------
# Fused BasicBlock kernel: one image per grid step.
# -----------------------------------------------------------------------------
def _basic_block_kernel(*refs, stride, equal_in_out):
    if equal_in_out:
        (x_ref, s1_ref, b1_ref, w1_ref, b2_ref, w2_ref, out_ref,
         pad_ref, col_ref) = refs
        ws_ref = None
    else:
        (x_ref, s1_ref, b1_ref, w1_ref, b2_ref, w2_ref, ws_ref, out_ref,
         pad_ref, col_ref) = refs

    _, H, W, Ci = x_ref.shape
    _, Ho, Wo, Co = out_ref.shape

    # ---- bn1 + relu1 (f32 VPU math; eval-mode BN folded to scale/shift) ----
    a = jnp.maximum(x_ref[...].astype(jnp.float32) * s1_ref[...] + b1_ref[...], 0.0)
    a = a.reshape(H, W, Ci).astype(jnp.bfloat16)   # single cast; all consumers are MXU

    # ---- shared padded scratch (bf16): zero only the 1-px halo, write the interior ----
    zero_row = jnp.zeros((1, W + 2, Ci), jnp.bfloat16)
    zero_col = jnp.zeros((H + 2, 1, Ci), jnp.bfloat16)
    pad_ref[0:1, 0:W + 2, 0:Ci] = zero_row
    pad_ref[H + 1:H + 2, 0:W + 2, 0:Ci] = zero_row
    pad_ref[0:H + 2, 0:1, 0:Ci] = zero_col
    pad_ref[0:H + 2, W + 1:W + 2, 0:Ci] = zero_col
    pad_ref[1:H + 1, 1:W + 1, 0:Ci] = a

    # ---- conv1: im2col (9 lane-aligned column-block stores, no per-tap reshape) ----
    for kh in range(3):
        for kw in range(3):
            t = kh * 3 + kw
            if stride == 1:
                patch = pad_ref[kh:kh + Ho, kw:kw + Wo, 0:Ci]
            else:
                # TODO(synk): stride>1 path (strided ref slices) is not exercised by the
                # test below; real stride-2 stages should move decimation to the index_map.
                patch = pad_ref[pl.ds(kh, Ho, stride), pl.ds(kw, Wo, stride), 0:Ci]
            col_ref[:, :, t * Ci:(t + 1) * Ci] = patch
    acc1 = jnp.dot(col_ref[:, :, 0:9 * Ci].reshape(Ho * Wo, 9 * Ci), w1_ref[...],
                   preferred_element_type=jnp.float32)            # (Ho*Wo, Co) f32

    # ---- shortcut: identity, or 1x1 conv reusing the CENTER im2col column ----
    if equal_in_out:
        sc = x_ref[...].astype(jnp.float32).reshape(Ho * Wo, Co)
    else:
        # tap (1,1) of col1 is exactly the (strided) bn1+relu1 output.
        sc = jnp.dot(col_ref[:, :, 4 * Ci:5 * Ci].reshape(Ho * Wo, Ci), ws_ref[...],
                     preferred_element_type=jnp.float32)

    # ---- bn2 shift (scale pre-folded into w1) + relu2, back into the shared scratch ----
    if not (stride == 1 and Co <= Ci):
        zr = jnp.zeros((1, Wo + 2, Co), jnp.bfloat16)
        zc = jnp.zeros((Ho + 2, 1, Co), jnp.bfloat16)
        pad_ref[0:1, 0:Wo + 2, 0:Co] = zr
        pad_ref[Ho + 1:Ho + 2, 0:Wo + 2, 0:Co] = zr
        pad_ref[0:Ho + 2, 0:1, 0:Co] = zc
        pad_ref[0:Ho + 2, Wo + 1:Wo + 2, 0:Co] = zc
    pad_ref[1:Ho + 1, 1:Wo + 1, 0:Co] = jnp.maximum(
        acc1 + b2_ref[...], 0.0).reshape(Ho, Wo, Co).astype(jnp.bfloat16)

    # ---- conv2: im2col + ONE wide-K MXU matmul (stride 1) ----
    for kh in range(3):
        for kw in range(3):
            t = kh * 3 + kw
            patch = pad_ref[kh:kh + Ho, kw:kw + Wo, 0:Co]
            col_ref[:, :, t * Co:(t + 1) * Co] = patch
    acc2 = jnp.dot(col_ref[:, :, 0:9 * Co].reshape(Ho * Wo, 9 * Co), w2_ref[...],
                   preferred_element_type=jnp.float32)            # (Ho*Wo, Co) f32

    out_ref[...] = (sc + acc2).reshape(1, Ho, Wo, Co).astype(out_ref.dtype)


# -----------------------------------------------------------------------------
# Per-block pallas_call wrapper (NHWC, lane-padded channels).
# -----------------------------------------------------------------------------
def _basic_block_call(x, bp, *, stride, equal_in_out):
    """x: (N, H, W, Cin_p) f32 NHWC with lane-padded channels -> (N, Ho, Wo, Cout_p)."""
    N, H, W, Cip = x.shape
    Cop = bp["w1"].shape[-1]
    assert bp["w1"].shape[0] == 9 * Cip
    Ho = (H + 2 - 3) // stride + 1
    Wo = (W + 2 - 3) // stride + 1
    Cmax = max(Cip, Cop)
    if equal_in_out:
        assert stride == 1 and Cip == Cop, "identity shortcut needs stride==1, Cin==Cout"

    kernel = functools.partial(_basic_block_kernel, stride=stride,
                               equal_in_out=equal_in_out)

    # Grid-invariant params: pin whole array in VMEM once (single-buffered residency,
    # no per-step DMA or double-buffered weight copies).
    resident = pl.BlockSpec(memory_space=pltpu.MemorySpace.VMEM)

    in_specs = [
        pl.BlockSpec((1, H, W, Cip), lambda n: (n, 0, 0, 0)),   # x: one image per step
        resident,                                               # s1 (f32)
        resident,                                               # b1 (f32)
        resident,                                               # w1 (bf16, s2-folded)
        resident,                                               # b2 (f32)
        resident,                                               # w2 (bf16)
    ]
    args = [x, bp["s1"], bp["b1"], bp["w1"], bp["b2"], bp["w2"]]
    if not equal_in_out:
        in_specs.append(resident)                               # ws (bf16)
        args.append(bp["ws"])

    scratch_shapes = [
        pltpu.VMEM((H + 2, W + 2, Cmax), jnp.bfloat16),  # padded activation (shared)
        pltpu.VMEM((Ho, Wo, 9 * Cmax), jnp.bfloat16),    # im2col operand (shared)
    ]

    # Explicit VMEM budget: bf16 shared scratches + double-buffered activation tiles +
    # single-buffered resident params + headroom for Mosaic-internal scratch.
    bpe_x = x.dtype.itemsize
    scratch_b = 2 * ((H + 2) * (W + 2) * Cmax + Ho * Wo * 9 * Cmax)
    tile_b = 2 * (bpe_x * H * W * Cip + 4 * Ho * Wo * Cop)
    param_b = 2 * (9 * Cip * Cop + 9 * Cop * Cop + Cip * Cop) + 4 * (2 * Cip + Cop)
    need = scratch_b + tile_b + param_b + (4 << 20)
    try:
        phys_vmem = int(pltpu.get_tpu_info().vmem_capacity_bytes)
    except Exception:
        phys_vmem = 64 << 20            # conservative (v7x-sized) if the query fails
    cap = (phys_vmem * 3) // 4          # leave headroom for compiler scratch/semaphores
    vmem_limit = int(min(max(need, 32 << 20), cap))

    return pl.pallas_call(
        kernel,
        out_shape=jax.ShapeDtypeStruct((N, Ho, Wo, Cop), jnp.float32),
        grid=(N,),
        in_specs=in_specs,
        out_specs=pl.BlockSpec((1, Ho, Wo, Cop), lambda n: (n, 0, 0, 0)),
        scratch_shapes=scratch_shapes,
        compiler_params=pltpu.CompilerParams(
            dimension_semantics=("parallel",),     # shard batch across TensorCores
            vmem_limit_bytes=vmem_limit),
    )(*args)


# -----------------------------------------------------------------------------
# Parameter preparation: fold gates + BN, fold s2 into w1, lane-pad, bf16 weights.
# -----------------------------------------------------------------------------
def _fold_bn(gamma, beta, mean, var, eps=1e-5):
    scale = gamma / jnp.sqrt(var + eps)
    shift = beta - mean * scale
    return scale, shift


def prepare_block_params(raw, *, equal_in_out):
    w1 = raw["w1"] * raw["gate1"][None, None, None, :]     # GateConv2d: gate folded
    w2 = raw["w2"] * raw["gate2"][None, None, None, :]
    cin, cout = w1.shape[2], w1.shape[3]
    cip, cop = _round_up(cin, LANES), _round_up(cout, LANES)

    s1, b1 = _fold_bn(raw["gamma1"], raw["beta1"], raw["mean1"], raw["var1"])
    s2, b2 = _fold_bn(raw["gamma2"], raw["beta2"], raw["mean2"], raw["var2"])

    # Fold bn2's multiplicative scale into conv1's output channels (conv is linear).
    w1 = w1 * s2[None, None, None, :]

    def _padc(v, c):
        return jnp.pad(v, [(0, 0)] * (v.ndim - 1) + [(0, c - v.shape[-1])])

    w1p = jnp.pad(w1, ((0, 0), (0, 0), (0, cip - cin), (0, cop - cout)))
    w2p = jnp.pad(w2, ((0, 0), (0, 0), (0, cop - cout), (0, cop - cout)))

    bp = dict(
        s1=_padc(s1, cip).reshape(1, 1, cip).astype(jnp.float32),
        b1=_padc(b1, cip).reshape(1, 1, cip).astype(jnp.float32),
        b2=_padc(b2, cop).reshape(1, cop).astype(jnp.float32),
        w1=w1p.reshape(9 * cip, cop).astype(jnp.bfloat16),
        w2=w2p.reshape(9 * cop, cop).astype(jnp.bfloat16),
    )
    if not equal_in_out:
        ws = raw["ws"] * raw["gates"][None, :]
        bp["ws"] = jnp.pad(ws, ((0, cip - cin), (0, cop - cout))).astype(jnp.bfloat16)
    return bp


def prepare_network_block(raw_params, *, in_planes, out_planes, stride):
    blocks = []
    for i, raw in enumerate(raw_params):
        cin = in_planes if i == 0 else out_planes
        blk_stride = stride if i == 0 else 1
        equal_in_out = (cin == out_planes)
        blocks.append((prepare_block_params(raw, equal_in_out=equal_in_out),
                       blk_stride, equal_in_out))
    return blocks


def network_block_forward(x_nchw, blocks, *, out_planes):
    """NetworkBlock.forward: a stack of fused BasicBlock Pallas kernels (NHWC inside)."""
    x = jnp.transpose(x_nchw, (0, 2, 3, 1)).astype(jnp.float32)   # NCHW -> NHWC, once
    cin = x.shape[-1]
    x = jnp.pad(x, ((0, 0), (0, 0), (0, 0), (0, _round_up(cin, LANES) - cin)))
    # TODO(synk): optionally carry inter-block activations in bf16 to halve HBM traffic
    # (kept f32 to preserve residual-add precision against the 5e-2 tolerance).
    for bp, blk_stride, equal_in_out in blocks:
        x = _basic_block_call(x, bp, stride=blk_stride, equal_in_out=equal_in_out)
    x = x[..., :out_planes]                                       # drop lane padding
    return jnp.transpose(x, (0, 3, 1, 2))                         # NHWC -> NCHW, once


# -----------------------------------------------------------------------------
# Pure-JAX f32 reference (mirrors the PyTorch module math).
# -----------------------------------------------------------------------------
def network_block_ref(x_nchw, raw_params, *, in_planes, out_planes, stride):
    x = jnp.transpose(x_nchw, (0, 2, 3, 1)).astype(jnp.float32)

    def bn(v, gamma, beta, mean, var, eps=1e-5):
        return (v - mean) / jnp.sqrt(var + eps) * gamma + beta

    def conv(v, w, s, pad):
        return lax.conv_general_dilated(
            v, w, (s, s), [(pad, pad), (pad, pad)],
            dimension_numbers=("NHWC", "HWIO", "NHWC"))

    for i, raw in enumerate(raw_params):
        cin = in_planes if i == 0 else out_planes
        s = stride if i == 0 else 1
        eq = (cin == out_planes)
        a = jnp.maximum(bn(x, raw["gamma1"], raw["beta1"], raw["mean1"], raw["var1"]), 0.0)
        o = conv(a, raw["w1"] * raw["gate1"][None, None, None, :], s, 1)
        o = jnp.maximum(bn(o, raw["gamma2"], raw["beta2"], raw["mean2"], raw["var2"]), 0.0)
        o = conv(o, raw["w2"] * raw["gate2"][None, None, None, :], 1, 1)
        if eq:
            sc = x
        else:
            ws = (raw["ws"] * raw["gates"][None, :])[None, None, :, :]
            sc = conv(a, ws, s, 0)
        x = sc + o
    return jnp.transpose(x, (0, 3, 1, 2))


# -----------------------------------------------------------------------------
# Deterministic parameter init (eval-mode BN stats, He-style conv weights, gates).
# -----------------------------------------------------------------------------
def init_network_block_params(key, nb_layers, in_planes, out_planes):
    params = []
    for i in range(nb_layers):
        cin = in_planes if i == 0 else out_planes
        cout = out_planes
        key, *ks = jax.random.split(key, 16)

        def bn_init(k1, k2, k3, k4, c):
            return (jax.random.uniform(k1, (c,), jnp.float32, 0.5, 1.5),
                    0.1 * jax.random.normal(k2, (c,), jnp.float32),
                    0.1 * jax.random.normal(k3, (c,), jnp.float32),
                    jax.random.uniform(k4, (c,), jnp.float32, 0.5, 1.5))

        def conv_w(k, kh, kw, ci, co):
            std = math.sqrt(2.0 / (kh * kw * co))
            return std * jax.random.normal(k, (kh, kw, ci, co), jnp.float32)

        g1, be1, m1, v1 = bn_init(ks[0], ks[1], ks[2], ks[3], cin)
        g2, be2, m2, v2 = bn_init(ks[4], ks[5], ks[6], ks[7], cout)
        raw = dict(gamma1=g1, beta1=be1, mean1=m1, var1=v1,
                   gamma2=g2, beta2=be2, mean2=m2, var2=v2,
                   w1=conv_w(ks[8], 3, 3, cin, cout),
                   w2=conv_w(ks[9], 3, 3, cout, cout),
                   gate1=jax.random.uniform(ks[10], (cout,), jnp.float32, 0.5, 1.5),
                   gate2=jax.random.uniform(ks[11], (cout,), jnp.float32, 0.5, 1.5))
        if cin != cout:
            raw["ws"] = conv_w(ks[12], 1, 1, cin, cout)[0, 0]
            raw["gates"] = jax.random.uniform(ks[13], (cout,), jnp.float32, 0.5, 1.5)
        params.append(raw)
    return params


if __name__ == "__main__":
    key = jax.random.PRNGKey(0)
    kx, kp = jax.random.split(key)

    # NetworkBlock(nb_layers=2, in_planes=4, out_planes=8, stride=1):
    # block 0: 4->8 (conv shortcut), block 1: 8->8 (identity shortcut).
    nb_layers, in_planes, out_planes, stride = 2, 4, 8, 1

    x = jax.random.normal(kx, (2, in_planes, 16, 16), jnp.float32)   # NCHW like PyTorch
    raw_params = init_network_block_params(kp, nb_layers, in_planes, out_planes)
    blocks = prepare_network_block(raw_params, in_planes=in_planes,
                                   out_planes=out_planes, stride=stride)

    out = network_block_forward(x, blocks, out_planes=out_planes)
    out = jax.block_until_ready(out)

    ref = network_block_ref(x, raw_params, in_planes=in_planes,
                            out_planes=out_planes, stride=stride)
    assert out.shape == (2, out_planes, 16, 16), out.shape
    max_err = float(jnp.max(jnp.abs(out - ref)))
    # bf16 MXU operands vs f32 reference -> loose-but-meaningful tolerance.
    assert jnp.allclose(out, ref, atol=5e-2, rtol=5e-2), max_err

    print("KERNEL_OK")
</pallas_src>

<mosaic_0001>
module attributes {stable_mosaic.version = 11 : i64} {
  func.func @_basic_block_kernel(%arg0: i32, %arg1: memref<1x16x16x128xf32, #tpu.memory_space<vmem>>, %arg2: memref<1x1x128xf32, #tpu.memory_space<vmem>>, %arg3: memref<1x1x128xf32, #tpu.memory_space<vmem>>, %arg4: memref<1152x128xbf16, #tpu.memory_space<vmem>>, %arg5: memref<1x128xf32, #tpu.memory_space<vmem>>, %arg6: memref<1152x128xbf16, #tpu.memory_space<vmem>>, %arg7: memref<128x128xbf16, #tpu.memory_space<vmem>>, %arg8: memref<1x16x16x128xf32, #tpu.memory_space<vmem>>, %arg9: memref<18x18x128xbf16, #tpu.memory_space<vmem>>, %arg10: memref<16x16x1152xbf16, #tpu.memory_space<vmem>>) attributes {dimension_semantics = [#tpu.dimension_semantics<parallel>], iteration_bounds = array<i64: 2>, scalar_prefetch = 0 : i64, scratch_operands = 2 : i64, tpu.core_type = #tpu.core_type<tc>, window_params = [{transform_indices = @transform_0, window_bounds = array<i64: 1, 16, 16, 128>}, {pipeline_mode = #tpu.pipeline_mode<synchronous>, transform_indices = @transform_1, window_bounds = array<i64: 1, 1, 128>}, {pipeline_mode = #tpu.pipeline_mode<synchronous>, transform_indices = @transform_2, window_bounds = array<i64: 1, 1, 128>}, {pipeline_mode = #tpu.pipeline_mode<synchronous>, transform_indices = @transform_3, window_bounds = array<i64: 1152, 128>}, {pipeline_mode = #tpu.pipeline_mode<synchronous>, transform_indices = @transform_4, window_bounds = array<i64: 1, 128>}, {pipeline_mode = #tpu.pipeline_mode<synchronous>, transform_indices = @transform_5, window_bounds = array<i64: 1152, 128>}, {pipeline_mode = #tpu.pipeline_mode<synchronous>, transform_indices = @transform_6, window_bounds = array<i64: 128, 128>}, {transform_indices = @transform_7, window_bounds = array<i64: 1, 16, 16, 128>}]} {
    %c0 = arith.constant 0 : index
    %c0_0 = arith.constant 0 : index
    %c0_1 = arith.constant 0 : index
    %c0_2 = arith.constant 0 : index
    %0 = vector.load %arg1[%c0, %c0_0, %c0_1, %c0_2] : memref<1x16x16x128xf32, #tpu.memory_space<vmem>>, vector<1x16x16x128xf32>
    %c0_3 = arith.constant 0 : index
    %c0_4 = arith.constant 0 : index
    %c0_5 = arith.constant 0 : index
    %1 = vector.load %arg2[%c0_3, %c0_4, %c0_5] : memref<1x1x128xf32, #tpu.memory_space<vmem>>, vector<1x1x128xf32>
    %2 = vector.shape_cast %1 : vector<1x1x128xf32> to vector<1x1x1x128xf32>
    %3 = vector.broadcast %2 : vector<1x1x1x128xf32> to vector<1x16x16x128xf32>
    %4 = arith.mulf %0, %3 : vector<1x16x16x128xf32>
    %c0_6 = arith.constant 0 : index
    %c0_7 = arith.constant 0 : index
    %c0_8 = arith.constant 0 : index
    %5 = vector.load %arg3[%c0_6, %c0_7, %c0_8] : memref<1x1x128xf32, #tpu.memory_space<vmem>>, vector<1x1x128xf32>
    %6 = vector.shape_cast %5 : vector<1x1x128xf32> to vector<1x1x1x128xf32>
    %7 = vector.broadcast %6 : vector<1x1x1x128xf32> to vector<1x16x16x128xf32>
    %8 = arith.addf %4, %7 : vector<1x16x16x128xf32>
    %cst = arith.constant 0.000000e+00 : f32
    %9 = vector.broadcast %cst : f32 to vector<1x16x16x128xf32>
    %10 = arith.maximumf %8, %9 : vector<1x16x16x128xf32>
    %11 = vector.shape_cast %10 : vector<1x16x16x128xf32> to vector<16x16x128xf32>
    %12 = arith.truncf %11 : vector<16x16x128xf32> to vector<16x16x128xbf16>
    %cst_9 = arith.constant 0.000000e+00 : bf16
    %13 = vector.broadcast %cst_9 : bf16 to vector<1x18x128xbf16>
    %cst_10 = arith.constant 0.000000e+00 : bf16
    %14 = vector.broadcast %cst_10 : bf16 to vector<18x1x128xbf16>
    %c0_11 = arith.constant 0 : index
    %c0_12 = arith.constant 0 : index
    %c0_13 = arith.constant 0 : index
    %15 = vector.load %arg9[%c0_11, %c0_12, %c0_13] : memref<18x18x128xbf16, #tpu.memory_space<vmem>>, vector<1x18x128xbf16>
    tpu.vector_store %arg9[%c0_11, %c0_12, %c0_13], %13 {strides = array<i32>} : memref<18x18x128xbf16, #tpu.memory_space<vmem>>, vector<1x18x128xbf16>,
    %c17 = arith.constant 17 : index
    %c0_14 = arith.constant 0 : index
    %c0_15 = arith.constant 0 : index
    %16 = vector.load %arg9[%c17, %c0_14, %c0_15] : memref<18x18x128xbf16, #tpu.memory_space<vmem>>, vector<1x18x128xbf16>
    tpu.vector_store %arg9[%c17, %c0_14, %c0_15], %13 {strides = array<i32>} : memref<18x18x128xbf16, #tpu.memory_space<vmem>>, vector<1x18x128xbf16>,
    %c0_16 = arith.constant 0 : index
    %c0_17 = arith.constant 0 : index
    %c0_18 = arith.constant 0 : index
    %17 = vector.load %arg9[%c0_16, %c0_17, %c0_18] : memref<18x18x128xbf16, #tpu.memory_space<vmem>>, vector<18x1x128xbf16>
    tpu.vector_store %arg9[%c0_16, %c0_17, %c0_18], %14 {strides = array<i32>} : memref<18x18x128xbf16, #tpu.memory_space<vmem>>, vector<18x1x128xbf16>,
    %c0_19 = arith.constant 0 : index
    %c17_20 = arith.constant 17 : index
    %c0_21 = arith.constant 0 : index
    %18 = vector.load %arg9[%c0_19, %c17_20, %c0_21] : memref<18x18x128xbf16, #tpu.memory_space<vmem>>, vector<18x1x128xbf16>
    tpu.vector_store %arg9[%c0_19, %c17_20, %c0_21], %14 {strides = array<i32>} : memref<18x18x128xbf16, #tpu.memory_space<vmem>>, vector<18x1x128xbf16>,
    %c1 = arith.constant 1 : index
    %c1_22 = arith.constant 1 : index
    %c0_23 = arith.constant 0 : index
    %19 = vector.load %arg9[%c1, %c1_22, %c0_23] : memref<18x18x128xbf16, #tpu.memory_space<vmem>>, vector<16x16x128xbf16>
    tpu.vector_store %arg9[%c1, %c1_22, %c0_23], %12 {strides = array<i32>} : memref<18x18x128xbf16, #tpu.memory_space<vmem>>, vector<16x16x128xbf16>,
    %c0_24 = arith.constant 0 : index
    %c0_25 = arith.constant 0 : index
    %c0_26 = arith.constant 0 : index
    %20 = vector.load %arg9[%c0_24, %c0_25, %c0_26] : memref<18x18x128xbf16, #tpu.memory_space<vmem>>, vector<16x16x128xbf16>
    %c0_27 = arith.constant 0 : index
    %c0_28 = arith.constant 0 : index
    %c0_29 = arith.constant 0 : index
    %21 = vector.load %arg10[%c0_27, %c0_28, %c0_29] : memref<16x16x1152xbf16, #tpu.memory_space<vmem>>, vector<16x16x128xbf16>
    tpu.vector_store %arg10[%c0_27, %c0_28, %c0_29], %20 {strides = array<i32>} : memref<16x16x1152xbf16, #tpu.memory_space<vmem>>, vector<16x16x128xbf16>,
    %c0_30 = arith.constant 0 : index
    %c1_31 = arith.constant 1 : index
    %c0_32 = arith.constant 0 : index
    %22 = vector.load %arg9[%c0_30, %c1_31, %c0_32] : memref<18x18x128xbf16, #tpu.memory_space<vmem>>, vector<16x16x128xbf16>
    %c0_33 = arith.constant 0 : index
    %c0_34 = arith.constant 0 : index
    %c128 = arith.constant 128 : index
    %23 = vector.load %arg10[%c0_33, %c0_34, %c128] : memref<16x16x1152xbf16, #tpu.memory_space<vmem>>, vector<16x16x128xbf16>
    tpu.vector_store %arg10[%c0_33, %c0_34, %c128], %22 {strides = array<i32>} : memref<16x16x1152xbf16, #tpu.memory_space<vmem>>, vector<16x16x128xbf16>,
    %c0_35 = arith.constant 0 : index
    %c2 = arith.constant 2 : index
    %c0_36 = arith.constant 0 : index
    %24 = vector.load %arg9[%c0_35, %c2, %c0_36] : memref<18x18x128xbf16, #tpu.memory_space<vmem>>, vector<16x16x128xbf16>
    %c0_37 = arith.constant 0 : index
    %c0_38 = arith.constant 0 : index
    %c256 = arith.constant 256 : index
    %25 = vector.load %arg10[%c0_37, %c0_38, %c256] : memref<16x16x1152xbf16, #tpu.memory_space<vmem>>, vector<16x16x128xbf16>
    tpu.vector_store %arg10[%c0_37, %c0_38, %c256], %24 {strides = array<i32>} : memref<16x16x1152xbf16, #tpu.memory_space<vmem>>, vector<16x16x128xbf16>,
    %c1_39 = arith.constant 1 : index
    %c0_40 = arith.constant 0 : index
    %c0_41 = arith.constant 0 : index
    %26 = vector.load %arg9[%c1_39, %c0_40, %c0_41] : memref<18x18x128xbf16, #tpu.memory_space<vmem>>, vector<16x16x128xbf16>
    %c0_42 = arith.constant 0 : index
    %c0_43 = arith.constant 0 : index
    %c384 = arith.constant 384 : index
    %27 = vector.load %arg10[%c0_42, %c0_43, %c384] : memref<16x16x1152xbf16, #tpu.memory_space<vmem>>, vector<16x16x128xbf16>
    tpu.vector_store %arg10[%c0_42, %c0_43, %c384], %26 {strides = array<i32>} : memref<16x16x1152xbf16, #tpu.memory_space<vmem>>, vector<16x16x128xbf16>,
    %c1_44 = arith.constant 1 : index
    %c1_45 = arith.constant 1 : index
    %c0_46 = arith.constant 0 : index
    %28 = vector.load %arg9[%c1_44, %c1_45, %c0_46] : memref<18x18x128xbf16, #tpu.memory_space<vmem>>, vector<16x16x128xbf16>
    %c0_47 = arith.constant 0 : index
    %c0_48 = arith.constant 0 : index
    %c512 = arith.constant 512 : index
    %29 = vector.load %arg10[%c0_47, %c0_48, %c512] : memref<16x16x1152xbf16, #tpu.memory_space<vmem>>, vector<16x16x128xbf16>
    tpu.vector_store %arg10[%c0_47, %c0_48, %c512], %28 {strides = array<i32>} : memref<16x16x1152xbf16, #tpu.memory_space<vmem>>, vector<16x16x128xbf16>,
    %c1_49 = arith.constant 1 : index
    %c2_50 = arith.constant 2 : index
    %c0_51 = arith.constant 0 : index
    %30 = vector.load %arg9[%c1_49, %c2_50, %c0_51] : memref<18x18x128xbf16, #tpu.memory_space<vmem>>, vector<16x16x128xbf16>
    %c0_52 = arith.constant 0 : index
    %c0_53 = arith.constant 0 : index
    %c640 = arith.constant 640 : index
    %31 = vector.load %arg10[%c0_52, %c0_53, %c640] : memref<16x16x1152xbf16, #tpu.memory_space<vmem>>, vector<16x16x128xbf16>
    tpu.vector_store %arg10[%c0_52, %c0_53, %c640], %30 {strides = array<i32>} : memref<16x16x1152xbf16, #tpu.memory_space<vmem>>, vector<16x16x128xbf16>,
    %c2_54 = arith.constant 2 : index
    %c0_55 = arith.constant 0 : index
    %c0_56 = arith.constant 0 : index
    %32 = vector.load %arg9[%c2_54, %c0_55, %c0_56] : memref<18x18x128xbf16, #tpu.memory_space<vmem>>, vector<16x16x128xbf16>
    %c0_57 = arith.constant 0 : index
    %c0_58 = arith.constant 0 : index
    %c768 = arith.constant 768 : index
    %33 = vector.load %arg10[%c0_57, %c0_58, %c768] : memref<16x16x1152xbf16, #tpu.memory_space<vmem>>, vector<16x16x128xbf16>
    tpu.vector_store %arg10[%c0_57, %c0_58, %c768], %32 {strides = array<i32>} : memref<16x16x1152xbf16, #tpu.memory_space<vmem>>, vector<16x16x128xbf16>,
    %c2_59 = arith.constant 2 : index
    %c1_60 = arith.constant 1 : index
    %c0_61 = arith.constant 0 : index
    %34 = vector.load %arg9[%c2_59, %c1_60, %c0_61] : memref<18x18x128xbf16, #tpu.memory_space<vmem>>, vector<16x16x128xbf16>
    %c0_62 = arith.constant 0 : index
    %c0_63 = arith.constant 0 : index
    %c896 = arith.constant 896 : index
    %35 = vector.load %arg10[%c0_62, %c0_63, %c896] : memref<16x16x1152xbf16, #tpu.memory_space<vmem>>, vector<16x16x128xbf16>
    tpu.vector_store %arg10[%c0_62, %c0_63, %c896], %34 {strides = array<i32>} : memref<16x16x1152xbf16, #tpu.memory_space<vmem>>, vector<16x16x128xbf16>,
    %c2_64 = arith.constant 2 : index
    %c2_65 = arith.constant 2 : index
    %c0_66 = arith.constant 0 : index
    %36 = vector.load %arg9[%c2_64, %c2_65, %c0_66] : memref<18x18x128xbf16, #tpu.memory_space<vmem>>, vector<16x16x128xbf16>
    %c0_67 = arith.constant 0 : index
    %c0_68 = arith.constant 0 : index
    %c1024 = arith.constant 1024 : index
    %37 = vector.load %arg10[%c0_67, %c0_68, %c1024] : memref<16x16x1152xbf16, #tpu.memory_space<vmem>>, vector<16x16x128xbf16>
    tpu.vector_store %arg10[%c0_67, %c0_68, %c1024], %36 {strides = array<i32>} : memref<16x16x1152xbf16, #tpu.memory_space<vmem>>, vector<16x16x128xbf16>,
    %c0_69 = arith.constant 0 : index
    %c0_70 = arith.constant 0 : index
    %c0_71 = arith.constant 0 : index
    %38 = vector.load %arg10[%c0_69, %c0_70, %c0_71] : memref<16x16x1152xbf16, #tpu.memory_space<vmem>>, vector<16x16x1152xbf16>
    %39 = vector.shape_cast %38 : vector<16x16x1152xbf16> to vector<256x1152xbf16>
    %c0_72 = arith.constant 0 : index
    %c0_73 = arith.constant 0 : index
    %40 = vector.load %arg4[%c0_72, %c0_73] : memref<1152x128xbf16, #tpu.memory_space<vmem>>, vector<1152x128xbf16>
    %cst_74 = arith.constant dense<0.000000e+00> : vector<256x128xf32>
    %41 = tpu.matmul %39, %40, %cst_74 {dimension_numbers = #tpu.dot_dimension_numbers<[1], [0], [0], [1], [0, 0, 1, 1], [], []>} : vector<256x1152xbf16>, vector<1152x128xbf16>, vector<256x128xf32> -> vector<256x128xf32>
    %c0_75 = arith.constant 0 : index
    %c0_76 = arith.constant 0 : index
    %c512_77 = arith.constant 512 : index
    %42 = vector.load %arg10[%c0_75, %c0_76, %c512_77] : memref<16x16x1152xbf16, #tpu.memory_space<vmem>>, vector<16x16x128xbf16>
    %43 = vector.shape_cast %42 : vector<16x16x128xbf16> to vector<256x128xbf16>
    %c0_78 = arith.constant 0 : index
    %c0_79 = arith.constant 0 : index
    %44 = vector.load %arg7[%c0_78, %c0_79] : memref<128x128xbf16, #tpu.memory_space<vmem>>, vector<128x128xbf16>
    %cst_80 = arith.constant dense<0.000000e+00> : vector<256x128xf32>
    %45 = tpu.matmul %43, %44, %cst_80 {dimension_numbers = #tpu.dot_dimension_numbers<[1], [0], [0], [1], [0, 0, 1, 1], [], []>} : vector<256x128xbf16>, vector<128x128xbf16>, vector<256x128xf32> -> vector<256x128xf32>
    %c0_81 = arith.constant 0 : index
    %c0_82 = arith.constant 0 : index
    %46 = vector.load %arg5[%c0_81, %c0_82] : memref<1x128xf32, #tpu.memory_space<vmem>>, vector<1x128xf32>
    %47 = vector.broadcast %46 : vector<1x128xf32> to vector<256x128xf32>
    %48 = arith.addf %41, %47 : vector<256x128xf32>
    %cst_83 = arith.constant 0.000000e+00 : f32
    %49 = vector.broadcast %cst_83 : f32 to vector<256x128xf32>
    %50 = arith.maximumf %48, %49 : vector<256x128xf32>
    %51 = vector.shape_cast %50 : vector<256x128xf32> to vector<16x16x128xf32>
    %52 = arith.truncf %51 : vector<16x16x128xf32> to vector<16x16x128xbf16>
    %c1_84 = arith.constant 1 : index
    %c1_85 = arith.constant 1 : index
    %c0_86 = arith.constant 0 : index
    %53 = vector.load %arg9[%c1_84, %c1_85, %c0_86] : memref<18x18x128xbf16, #tpu.memory_space<vmem>>, vector<16x16x128xbf16>
    tpu.vector_store %arg9[%c1_84, %c1_85, %c0_86], %52 {strides = array<i32>} : memref<18x18x128xbf16, #tpu.memory_space<vmem>>, vector<16x16x128xbf16>,
    %c0_87 = arith.constant 0 : index
    %c0_88 = arith.constant 0 : index
    %c0_89 = arith.constant 0 : index
    %54 = vector.load %arg9[%c0_87, %c0_88, %c0_89] : memref<18x18x128xbf16, #tpu.memory_space<vmem>>, vector<16x16x128xbf16>
    %c0_90 = arith.constant 0 : index
    %c0_91 = arith.constant 0 : index
    %c0_92 = arith.constant 0 : index
    %55 = vector.load %arg10[%c0_90, %c0_91, %c0_92] : memref<16x16x1152xbf16, #tpu.memory_space<vmem>>, vector<16x16x128xbf16>
    tpu.vector_store %arg10[%c0_90, %c0_91, %c0_92], %54 {strides = array<i32>} : memref<16x16x1152xbf16, #tpu.memory_space<vmem>>, vector<16x16x128xbf16>,
    %c0_93 = arith.constant 0 : index
    %c1_94 = arith.constant 1 : index
    %c0_95 = arith.constant 0 : index
    %56 = vector.load %arg9[%c0_93, %c1_94, %c0_95] : memref<18x18x128xbf16, #tpu.memory_space<vmem>>, vector<16x16x128xbf16>
    %c0_96 = arith.constant 0 : index
    %c0_97 = arith.constant 0 : index
    %c128_98 = arith.constant 128 : index
    %57 = vector.load %arg10[%c0_96, %c0_97, %c128_98] : memref<16x16x1152xbf16, #tpu.memory_space<vmem>>, vector<16x16x128xbf16>
    tpu.vector_store %arg10[%c0_96, %c0_97, %c128_98], %56 {strides = array<i32>} : memref<16x16x1152xbf16, #tpu.memory_space<vmem>>, vector<16x16x128xbf16>,
    %c0_99 = arith.constant 0 : index
    %c2_100 = arith.constant 2 : index
    %c0_101 = arith.constant 0 : index
    %58 = vector.load %arg9[%c0_99, %c2_100, %c0_101] : memref<18x18x128xbf16, #tpu.memory_space<vmem>>, vector<16x16x128xbf16>
    %c0_102 = arith.constant 0 : index
    %c0_103 = arith.constant 0 : index
    %c256_104 = arith.constant 256 : index
    %59 = vector.load %arg10[%c0_102, %c0_103, %c256_104] : memref<16x16x1152xbf16, #tpu.memory_space<vmem>>, vector<16x16x128xbf16>
    tpu.vector_store %arg10[%c0_102, %c0_103, %c256_104], %58 {strides = array<i32>} : memref<16x16x1152xbf16, #tpu.memory_space<vmem>>, vector<16x16x128xbf16>,
    %c1_105 = arith.constant 1 : index
    %c0_106 = arith.constant 0 : index
    %c0_107 = arith.constant 0 : index
    %60 = vector.load %arg9[%c1_105, %c0_106, %c0_107] : memref<18x18x128xbf16, #tpu.memory_space<vmem>>, vector<16x16x128xbf16>
    %c0_108 = arith.constant 0 : index
    %c0_109 = arith.constant 0 : index
    %c384_110 = arith.constant 384 : index
    %61 = vector.load %arg10[%c0_108, %c0_109, %c384_110] : memref<16x16x1152xbf16, #tpu.memory_space<vmem>>, vector<16x16x128xbf16>
    tpu.vector_store %arg10[%c0_108, %c0_109, %c384_110], %60 {strides = array<i32>} : memref<16x16x1152xbf16, #tpu.memory_space<vmem>>, vector<16x16x128xbf16>,
    %c1_111 = arith.constant 1 : index
    %c1_112 = arith.constant 1 : index
    %c0_113 = arith.constant 0 : index
    %62 = vector.load %arg9[%c1_111, %c1_112, %c0_113] : memref<18x18x128xbf16, #tpu.memory_space<vmem>>, vector<16x16x128xbf16>
    %c0_114 = arith.constant 0 : index
    %c0_115 = arith.constant 0 : index
    %c512_116 = arith.constant 512 : index
    %63 = vector.load %arg10[%c0_114, %c0_115, %c512_116] : memref<16x16x1152xbf16, #tpu.memory_space<vmem>>, vector<16x16x128xbf16>
    tpu.vector_store %arg10[%c0_114, %c0_115, %c512_116], %62 {strides = array<i32>} : memref<16x16x1152xbf16, #tpu.memory_space<vmem>>, vector<16x16x128xbf16>,
    %c1_117 = arith.constant 1 : index
    %c2_118 = arith.constant 2 : index
    %c0_119 = arith.constant 0 : index
    %64 = vector.load %arg9[%c1_117, %c2_118, %c0_119] : memref<18x18x128xbf16, #tpu.memory_space<vmem>>, vector<16x16x128xbf16>
    %c0_120 = arith.constant 0 : index
    %c0_121 = arith.constant 0 : index
    %c640_122 = arith.constant 640 : index
    %65 = vector.load %arg10[%c0_120, %c0_121, %c640_122] : memref<16x16x1152xbf16, #tpu.memory_space<vmem>>, vector<16x16x128xbf16>
    tpu.vector_store %arg10[%c0_120, %c0_121, %c640_122], %64 {strides = array<i32>} : memref<16x16x1152xbf16, #tpu.memory_space<vmem>>, vector<16x16x128xbf16>,
    %c2_123 = arith.constant 2 : index
    %c0_124 = arith.constant 0 : index
    %c0_125 = arith.constant 0 : index
    %66 = vector.load %arg9[%c2_123, %c0_124, %c0_125] : memref<18x18x128xbf16, #tpu.memory_space<vmem>>, vector<16x16x128xbf16>
    %c0_126 = arith.constant 0 : index
    %c0_127 = arith.constant 0 : index
    %c768_128 = arith.constant 768 : index
    %67 = vector.load %arg10[%c0_126, %c0_127, %c768_128] : memref<16x16x1152xbf16, #tpu.memory_space<vmem>>, vector<16x16x128xbf16>
    tpu.vector_store %arg10[%c0_126, %c0_127, %c768_128], %66 {strides = array<i32>} : memref<16x16x1152xbf16, #tpu.memory_space<vmem>>, vector<16x16x128xbf16>,
    %c2_129 = arith.constant 2 : index
    %c1_130 = arith.constant 1 : index
    %c0_131 = arith.constant 0 : index
    %68 = vector.load %arg9[%c2_129, %c1_130, %c0_131] : memref<18x18x128xbf16, #tpu.memory_space<vmem>>, vector<16x16x128xbf16>
    %c0_132 = arith.constant 0 : index
    %c0_133 = arith.constant 0 : index
    %c896_134 = arith.constant 896 : index
    %69 = vector.load %arg10[%c0_132, %c0_133, %c896_134] : memref<16x16x1152xbf16, #tpu.memory_space<vmem>>, vector<16x16x128xbf16>
    tpu.vector_store %arg10[%c0_132, %c0_133, %c896_134], %68 {strides = array<i32>} : memref<16x16x1152xbf16, #tpu.memory_space<vmem>>, vector<16x16x128xbf16>,
    %c2_135 = arith.constant 2 : index
    %c2_136 = arith.constant 2 : index
    %c0_137 = arith.constant 0 : index
    %70 = vector.load %arg9[%c2_135, %c2_136, %c0_137] : memref<18x18x128xbf16, #tpu.memory_space<vmem>>, vector<16x16x128xbf16>
    %c0_138 = arith.constant 0 : index
    %c0_139 = arith.constant 0 : index
    %c1024_140 = arith.constant 1024 : index
    %71 = vector.load %arg10[%c0_138, %c0_139, %c1024_140] : memref<16x16x1152xbf16, #tpu.memory_space<vmem>>, vector<16x16x128xbf16>
    tpu.vector_store %arg10[%c0_138, %c0_139, %c1024_140], %70 {strides = array<i32>} : memref<16x16x1152xbf16, #tpu.memory_space<vmem>>, vector<16x16x128xbf16>,
    %c0_141 = arith.constant 0 : index
    %c0_142 = arith.constant 0 : index
    %c0_143 = arith.constant 0 : index
    %72 = vector.load %arg10[%c0_141, %c0_142, %c0_143] : memref<16x16x1152xbf16, #tpu.memory_space<vmem>>, vector<16x16x1152xbf16>
    %73 = vector.shape_cast %72 : vector<16x16x1152xbf16> to vector<256x1152xbf16>
    %c0_144 = arith.constant 0 : index
    %c0_145 = arith.constant 0 : index
    %74 = vector.load %arg6[%c0_144, %c0_145] : memref<1152x128xbf16, #tpu.memory_space<vmem>>, vector<1152x128xbf16>
    %cst_146 = arith.constant dense<0.000000e+00> : vector<256x128xf32>
    %75 = tpu.matmul %73, %74, %cst_146 {dimension_numbers = #tpu.dot_dimension_numbers<[1], [0], [0], [1], [0, 0, 1, 1], [], []>} : vector<256x1152xbf16>, vector<1152x128xbf16>, vector<256x128xf32> -> vector<256x128xf32>
    %76 = arith.addf %45, %75 : vector<256x128xf32>
    %77 = vector.shape_cast %76 : vector<256x128xf32> to vector<1x16x16x128xf32>
    %c0_147 = arith.constant 0 : index
    %c0_148 = arith.constant 0 : index
    %c0_149 = arith.constant 0 : index
    %c0_150 = arith.constant 0 : index
    %78 = vector.load %arg8[%c0_147, %c0_148, %c0_149, %c0_150] : memref<1x16x16x128xf32, #tpu.memory_space<vmem>>, vector<1x16x16x128xf32>
    tpu.vector_store %arg8[%c0_147, %c0_148, %c0_149, %c0_150], %77 {strides = array<i32>} : memref<1x16x16x128xf32, #tpu.memory_space<vmem>>, vector<1x16x16x128xf32>,
    return
  }
  func.func @transform_0(%arg0: i32) -> (i32, i32, i32, i32) {
    %c0_i32 = arith.constant 0 : i32
    %c0_i32_0 = arith.constant 0 : i32
    %c0_i32_1 = arith.constant 0 : i32
    %c0_i32_2 = arith.constant 0 : i32
    return %arg0, %c0_i32, %c0_i32_0, %c0_i32_1 : i32, i32, i32, i32
  }
  func.func @transform_1(%arg0: i32) -> (i32, i32, i32) {
    %c0_i32 = arith.constant 0 : i32
    %c0_i32_0 = arith.constant 0 : i32
    %c0_i32_1 = arith.constant 0 : i32
    %c0_i32_2 = arith.constant 0 : i32
    return %c0_i32, %c0_i32_0, %c0_i32_1 : i32, i32, i32
  }
  func.func @transform_2(%arg0: i32) -> (i32, i32, i32) {
    %c0_i32 = arith.constant 0 : i32
    %c0_i32_0 = arith.constant 0 : i32
    %c0_i32_1 = arith.constant 0 : i32
    %c0_i32_2 = arith.constant 0 : i32
    return %c0_i32, %c0_i32_0, %c0_i32_1 : i32, i32, i32
  }
  func.func @transform_3(%arg0: i32) -> (i32, i32) {
    %c0_i32 = arith.constant 0 : i32
    %c0_i32_0 = arith.constant 0 : i32
    %c0_i32_1 = arith.constant 0 : i32
    return %c0_i32, %c0_i32_0 : i32, i32
  }
  func.func @transform_4(%arg0: i32) -> (i32, i32) {
    %c0_i32 = arith.constant 0 : i32
    %c0_i32_0 = arith.constant 0 : i32
    %c0_i32_1 = arith.constant 0 : i32
    return %c0_i32, %c0_i32_0 : i32, i32
  }
  func.func @transform_5(%arg0: i32) -> (i32, i32) {
    %c0_i32 = arith.constant 0 : i32
    %c0_i32_0 = arith.constant 0 : i32
    %c0_i32_1 = arith.constant 0 : i32
    return %c0_i32, %c0_i32_0 : i32, i32
  }
  func.func @transform_6(%arg0: i32) -> (i32, i32) {
    %c0_i32 = arith.constant 0 : i32
    %c0_i32_0 = arith.constant 0 : i32
    %c0_i32_1 = arith.constant 0 : i32
    return %c0_i32, %c0_i32_0 : i32, i32
  }
  func.func @transform_7(%arg0: i32) -> (i32, i32, i32, i32) {
    %c0_i32 = arith.constant 0 : i32
    %c0_i32_0 = arith.constant 0 : i32
    %c0_i32_1 = arith.constant 0 : i32
    %c0_i32_2 = arith.constant 0 : i32
    return %arg0, %c0_i32, %c0_i32_0, %c0_i32_1 : i32, i32, i32, i32
  }
}

</mosaic_0001>

<llo_original>
// kernel: tpu_custom_call.1
$region0: #{tpu_custom_call.1}
  #allocation0 [shape = 'u32[]', space=smem, size = 0x4, offset = 0x4, fixed_abs, tag = 'smem constant byte address 0x4 - core index']
  #allocation1 [shape = 'u32[72,128]{1,0:T(1,128)}', space=vmem, size = 0x9000, scoped, tag = 'internal scratch']
  #allocation2 [shape = 'bf16[18,18,128]{2,1,0:T(8,128)(2,1)}', space=vmem, size = 0x1b000, scoped, tag = 'scratch operand']
  #allocation3 [shape = 'bf16[16,16,1152]{2,1,0:T(8,128)(2,1)}', space=vmem, size = 0x90000, scoped, tag = 'scratch operand']
  %s0 = inlined_call_operand.hbm [shape: f32[2,16,16,128], index: 0, kind: input, shape index: {}]
  %s1 = inlined_call_operand.hbm [shape: f32[1,1,128], index: 1, kind: input, shape index: {}]
  %s2 = inlined_call_operand.vmem [shape: f32[1,1,128], index: 2, kind: input, shape index: {}]
  %s3 = inlined_call_operand.hbm [shape: bf16[1152,128], index: 3, kind: input, shape index: {}]
  %s4 = inlined_call_operand.vmem [shape: f32[1,128], index: 4, kind: input, shape index: {}]
  %s5 = inlined_call_operand.hbm [shape: bf16[1152,128], index: 5, kind: input, shape index: {}]
  %s6 = inlined_call_operand.hbm [shape: bf16[128,128], index: 6, kind: input, shape index: {}]
  %s7 = inlined_call_operand.hbm [shape: f32[2,16,16,128], index: 7, kind: output, shape index: {}]
  %s8 = sld [smem:[#allocation0]]
  $region81: #{tpu_custom_call.1} parent=0
    _
  %s10 = ssub.s32 1, %s8
  %s11 = scalar_select 0, %s10, %s8
  $region1: #{tpu_custom_call.1} parent=0
    #allocation4 [shape = 'u8[262144]{0}', space=vmem, size = 0x40000, scoped, tag = 'input window, operand 0']
    #allocation5 [shape = 's32[2]{0}', space=sflag, size = 0x8, scoped, tag = 'scoped memory for tpu_custom_call.1']
    #allocation6 [shape = 's32[2]{0}', space=sflag, size = 0x8, scoped, tag = 'scoped memory for tpu_custom_call.1']
    #allocation7 [shape = 'u8[512]{0}', space=vmem, size = 0x400, scoped, tag = 'input window, operand 1, single buffered']
    #allocation8 [shape = 's32[1]{0}', space=sflag, size = 0x4, scoped, tag = 'scoped memory for tpu_custom_call.1']
    #allocation9 [shape = 'u8[294912]{0}', space=vmem, size = 0x48000, scoped, tag = 'input window, operand 3, single buffered']
    #allocation10 [shape = 'u8[294912]{0}', space=vmem, size = 0x48000, scoped, tag = 'input window, operand 5, single buffered']
    #allocation11 [shape = 's32[1]{0}', space=sflag, size = 0x4, scoped, tag = 'scoped memory for tpu_custom_call.1']
    #allocation12 [shape = 'u8[32768]{0}', space=vmem, size = 0x8000, scoped, tag = 'input window, operand 6, single buffered']
    #allocation13 [shape = 'u8[262144]{0}', space=vmem, size = 0x40000, scoped, tag = 'output window, operand 0']
    %12 = vsyncpa [#allocation5], 0
    %s13 = scalar_lea.sflag [#allocation5], 1
    %14 = vsyncpa %s13, 0
    %15 = vsyncpa [#allocation8], 0
    %16 = vsyncpa [#allocation11], 0
    %17 = vsyncpa [#allocation6], 0
    %s18 = scalar_lea.sflag [#allocation6], 1
    %19 = vsyncpa %s18, 0
    loop: start=0, step=1, limit=4
    $region2: #{tpu_custom_call.1} parent=1 // loop_pre_header
      _
    $region3: #{tpu_custom_call.1} parent=1 // loop_header
      %s21 = sphi 0, %s25
      %p22 = scmp.ge.s32.totalorder %s21, 4
      %s31 = sphi 0, %s33
      %s34 = sphi 0, %s31
      %s35 = sphi 0, %s34
      %s51 = sphi 0, %s35
      %s55 = sphi 0, %s55
      %s57 = sphi 0, %s55
      %s58 = sphi 0, %s57
      %s72 = sphi 0, %s58
      %s76 = sphi 0, %s76
      %s78 = sphi 0, %s76
      %s79 = sphi 0, %s78
      %s93 = sphi 0, %s79
      %s97 = sphi 0, %s97
      %s99 = sphi 0, %s97
      %s100 = sphi 0, %s99
      %s114 = sphi 0, %s100
      %s118 = sphi 0, %s118
      %s120 = sphi 0, %s118
      %s121 = sphi 0, %s120
      %s135 = sphi 0, %s121
      %s139 = sphi 0, %s139
      %s141 = sphi 0, %s139
      %s142 = sphi 0, %s141
      %s156 = sphi 0, %s142
      %s160 = sphi 0, %s160
      %s162 = sphi 0, %s160
      %s163 = sphi 0, %s162
      %s177 = sphi 0, %s163
      %s183 = sphi 0, %s185
      %s186 = sphi 0, %s183
      %s187 = sphi 0, %s186
      %s203 = sphi 0, %s187
    $region4: #{tpu_custom_call.1} parent=1 // loop_header_branch
      %24 = sbr.rel (%p22) target = $region8
    $region5: #{tpu_custom_call.1} parent=1 // loop_body
      %s26 = ssub.s32 %s21, 1
      %s27 = ssub.s32 %s21, 2
      %s28 = sadd.s32 %s21, 1
      %s29 = ssub.s32 %s21, %s28
      %p30 = scmp.eq.s32.totalorder %s29, 0
      %s32 = sadd.s32 %s31, 1
      %s33 = scalar_select %p30, %s31, %s32
      %p36 = pneg %p30
      %p37 = scmp.eq.s32.totalorder %s21, 1
      %p38 = por %p36, %p37
      %p39 = scmp.ne.s32.totalorder %s31, %s34
      %p40 = scmp.eq.s32.totalorder %s21, 0
      %p41 = por %p39, %p40
      %p42 = scmp.ne.s32.totalorder %s31, %s34
      %p43 = scmp.eq.s32.totalorder %s26, 1
      %p44 = por %p42, %p43
      %p45 = scmp.ne.s32.totalorder %s34, %s35
      %p46 = scmp.eq.s32.totalorder %s26, 0
      %p47 = por %p45, %p46
      %p48 = scmp.ne.s32.totalorder %s34, %s35
      %p49 = scmp.eq.s32.totalorder %s27, 1
      %p50 = por %p48, %p49
      %p52 = scmp.ne.s32.totalorder %s35, %s51
      %p53 = scmp.eq.s32.totalorder %s27, 0
      %p54 = por %p52, %p53
      %s56 = sadd.s32 %s55, 1
      %p59 = scmp.eq.s32.totalorder %s21, 1
      %p60 = scmp.ne.s32.totalorder %s55, %s57
      %p61 = scmp.eq.s32.totalorder %s21, 0
      %p62 = por %p60, %p61
      %p63 = scmp.ne.s32.totalorder %s55, %s57
      %p64 = scmp.eq.s32.totalorder %s26, 1
      %p65 = por %p63, %p64
      %p66 = scmp.ne.s32.totalorder %s57, %s58
      %p67 = scmp.eq.s32.totalorder %s26, 0
      %p68 = por %p66, %p67
      %p69 = scmp.ne.s32.totalorder %s57, %s58
      %p70 = scmp.eq.s32.totalorder %s27, 1
      %p71 = por %p69, %p70
      %p73 = scmp.ne.s32.totalorder %s58, %s72
      %p74 = scmp.eq.s32.totalorder %s27, 0
      %p75 = por %p73, %p74
      %s77 = sadd.s32 %s76, 1
      %p80 = scmp.eq.s32.totalorder %s21, 1
      %p81 = scmp.ne.s32.totalorder %s76, %s78
      %p82 = scmp.eq.s32.totalorder %s21, 0
      %p83 = por %p81, %p82
      %p84 = scmp.ne.s32.totalorder %s76, %s78
      %p85 = scmp.eq.s32.totalorder %s26, 1
      %p86 = por %p84, %p85
      %p87 = scmp.ne.s32.totalorder %s78, %s79
      %p88 = scmp.eq.s32.totalorder %s26, 0
      %p89 = por %p87, %p88
      %p90 = scmp.ne.s32.totalorder %s78, %s79
      %p91 = scmp.eq.s32.totalorder %s27, 1
      %p92 = por %p90, %p91
      %p94 = scmp.ne.s32.totalorder %s79, %s93
      %p95 = scmp.eq.s32.totalorder %s27, 0
      %p96 = por %p94, %p95
      %s98 = sadd.s32 %s97, 1
      %p101 = scmp.eq.s32.totalorder %s21, 1
      %p102 = scmp.ne.s32.totalorder %s97, %s99
      %p103 = scmp.eq.s32.totalorder %s21, 0
      %p104 = por %p102, %p103
      %p105 = scmp.ne.s32.totalorder %s97, %s99
      %p106 = scmp.eq.s32.totalorder %s26, 1
      %p107 = por %p105, %p106
      %p108 = scmp.ne.s32.totalorder %s99, %s100
      %p109 = scmp.eq.s32.totalorder %s26, 0
      %p110 = por %p108, %p109
      %p111 = scmp.ne.s32.totalorder %s99, %s100
      %p112 = scmp.eq.s32.totalorder %s27, 1
      %p113 = por %p111, %p112
      %p115 = scmp.ne.s32.totalorder %s100, %s114
      %p116 = scmp.eq.s32.totalorder %s27, 0
      %p117 = por %p115, %p116
      %s119 = sadd.s32 %s118, 1
      %p122 = scmp.eq.s32.totalorder %s21, 1
      %p123 = scmp.ne.s32.totalorder %s118, %s120
      %p124 = scmp.eq.s32.totalorder %s21, 0
      %p125 = por %p123, %p124
      %p126 = scmp.ne.s32.totalorder %s118, %s120
      %p127 = scmp.eq.s32.totalorder %s26, 1
      %p128 = por %p126, %p127
      %p129 = scmp.ne.s32.totalorder %s120, %s121
      %p130 = scmp.eq.s32.totalorder %s26, 0
      %p131 = por %p129, %p130
      %p132 = scmp.ne.s32.totalorder %s120, %s121
      %p133 = scmp.eq.s32.totalorder %s27, 1
      %p134 = por %p132, %p133
      %p136 = scmp.ne.s32.totalorder %s121, %s135
      %p137 = scmp.eq.s32.totalorder %s27, 0
      %p138 = por %p136, %p137
      %s140 = sadd.s32 %s139, 1
      %p143 = scmp.eq.s32.totalorder %s21, 1
      %p144 = scmp.ne.s32.totalorder %s139, %s141
      %p145 = scmp.eq.s32.totalorder %s21, 0
      %p146 = por %p144, %p145
      %p147 = scmp.ne.s32.totalorder %s139, %s141
      %p148 = scmp.eq.s32.totalorder %s26, 1
      %p149 = por %p147, %p148
      %p150 = scmp.ne.s32.totalorder %s141, %s142
      %p151 = scmp.eq.s32.totalorder %s26, 0
      %p152 = por %p150, %p151
      %p153 = scmp.ne.s32.totalorder %s141, %s142
      %p154 = scmp.eq.s32.totalorder %s27, 1
      %p155 = por %p153, %p154
      %p157 = scmp.ne.s32.totalorder %s142, %s156
      %p158 = scmp.eq.s32.totalorder %s27, 0
      %p159 = por %p157, %p158
      %s161 = sadd.s32 %s160, 1
      %p164 = scmp.eq.s32.totalorder %s21, 1
      %p165 = scmp.ne.s32.totalorder %s160, %s162
      %p166 = scmp.eq.s32.totalorder %s21, 0
      %p167 = por %p165, %p166
      %p168 = scmp.ne.s32.totalorder %s160, %s162
      %p169 = scmp.eq.s32.totalorder %s26, 1
      %p170 = por %p168, %p169
      %p171 = scmp.ne.s32.totalorder %s162, %s163
      %p172 = scmp.eq.s32.totalorder %s26, 0
      %p173 = por %p171, %p172
      %p174 = scmp.ne.s32.totalorder %s162, %s163
      %p175 = scmp.eq.s32.totalorder %s27, 1
      %p176 = por %p174, %p175
      %p178 = scmp.ne.s32.totalorder %s163, %s177
      %p179 = scmp.eq.s32.totalorder %s27, 0
      %p180 = por %p178, %p179
      %s181 = ssub.s32 %s21, %s28
      %p182 = scmp.eq.s32.totalorder %s181, 0
      %s184 = sadd.s32 %s183, 1
      %s185 = scalar_select %p182, %s183, %s184
      %p188 = pneg %p182
      %p189 = scmp.eq.s32.totalorder %s21, 1
      %p190 = por %p188, %p189
      %p191 = scmp.ne.s32.totalorder %s183, %s186
      %p192 = scmp.eq.s32.totalorder %s21, 0
      %p193 = por %p191, %p192
      %p194 = scmp.ne.s32.totalorder %s183, %s186
      %p195 = scmp.eq.s32.totalorder %s26, 1
      %p196 = por %p194, %p195
      %p197 = scmp.ne.s32.totalorder %s186, %s187
      %p198 = scmp.eq.s32.totalorder %s26, 0
      %p199 = por %p197, %p198
      %p200 = scmp.ne.s32.totalorder %s186, %s187
      %p201 = scmp.eq.s32.totalorder %s27, 1
      %p202 = por %p200, %p201
      %p204 = scmp.ne.s32.totalorder %s187, %s203
      %p205 = scmp.eq.s32.totalorder %s27, 0
      %p206 = por %p204, %p205
      %p207 = scmp.le.s32.totalorder 1, %s21
      %p208 = scmp.lt.s32.totalorder %s21, 3
      %p209 = pnand %p207, %p208
      %p210 = pneg %p209
      // Predicated region
      $region9: #{tpu_custom_call.1} parent=5 // pred_check
        _
      $region10: #{tpu_custom_call.1} parent=5 // pred_check_branch
        %212 = sbr.rel (%p209) target = $region12
      $region11: #{tpu_custom_call.1} parent=5 // pred_region
        %s213 = ssub.s32 %s21, 1
        // Predicated region
        $region13: #{tpu_custom_call.1} parent=11 // pred_check
          %p214 = pneg %p68
        $region14: #{tpu_custom_call.1} parent=11 // pred_check_branch
          %216 = sbr.rel (%p214) target = $region16
        $region15: #{tpu_custom_call.1} parent=11 // pred_region
          %218 = vsyncadd [#allocation8], 0
          %s220 = sshll.u32 %s1, 4
          %s221 = int_to_ptr.hbm [resolvable:$true] %s220
          %s222 = sshll.u32 [#allocation7], 4
          %s223 = int_to_ptr.vmem [resolvable:$true] %s222
          %225 = dma.hbm_to_vmem [thread:$0]  %s221, 16, %s223, [#allocation8]
        $region16: #{tpu_custom_call.1} parent=11 // pred_fallthru
          _
        // Predicated region
        $region17: #{tpu_custom_call.1} parent=11 // pred_check
          %p226 = pneg %p89
        $region18: #{tpu_custom_call.1} parent=11 // pred_check_branch
          %228 = sbr.rel (%p226) target = $region20
        $region19: #{tpu_custom_call.1} parent=11 // pred_region
          _
        $region20: #{tpu_custom_call.1} parent=11 // pred_fallthru
          _
        // Predicated region
        $region21: #{tpu_custom_call.1} parent=11 // pred_check
          %p229 = pneg %p110
        $region22: #{tpu_custom_call.1} parent=11 // pred_check_branch
          %231 = sbr.rel (%p229) target = $region24
        $region23: #{tpu_custom_call.1} parent=11 // pred_region
          %233 = vsyncadd [#allocation8], 0
          %s234 = sshll.u32 %s3, 4
          %s235 = int_to_ptr.hbm [resolvable:$true] %s234
          %s236 = sshll.u32 [#allocation9], 4
          %s237 = int_to_ptr.vmem [resolvable:$true] %s236
          %242 = dma.hbm_to_vmem [thread:$0]  %s235, 9216, %s237, [#allocation8], 64, 64, 4
        $region24: #{tpu_custom_call.1} parent=11 // pred_fallthru
          _
        // Predicated region
        $region25: #{tpu_custom_call.1} parent=11 // pred_check
          %p243 = pneg %p131
        $region26: #{tpu_custom_call.1} parent=11 // pred_check_branch
          %245 = sbr.rel (%p243) target = $region28
        $region27: #{tpu_custom_call.1} parent=11 // pred_region
          _
        $region28: #{tpu_custom_call.1} parent=11 // pred_fallthru
          _
        // Predicated region
        $region29: #{tpu_custom_call.1} parent=11 // pred_check
          %p246 = pneg %p152
        $region30: #{tpu_custom_call.1} parent=11 // pred_check_branch
          %248 = sbr.rel (%p246) target = $region32
        $region31: #{tpu_custom_call.1} parent=11 // pred_region
          %250 = vsyncadd [#allocation11], 0
          %s251 = sshll.u32 %s5, 4
          %s252 = int_to_ptr.hbm [resolvable:$true] %s251
          %s253 = sshll.u32 [#allocation10], 4
          %s254 = int_to_ptr.vmem [resolvable:$true] %s253
          %259 = dma.hbm_to_vmem [thread:$0]  %s252, 9216, %s254, [#allocation11], 64, 64, 4
        $region32: #{tpu_custom_call.1} parent=11 // pred_fallthru
          _
        // Predicated region
        $region33: #{tpu_custom_call.1} parent=11 // pred_check
          %p260 = pneg %p173
        $region34: #{tpu_custom_call.1} parent=11 // pred_check_branch
          %262 = sbr.rel (%p260) target = $region36
        $region35: #{tpu_custom_call.1} parent=11 // pred_region
          %264 = vsyncadd [#allocation11], 0
          %s265 = sshll.u32 %s6, 4
          %s266 = int_to_ptr.hbm [resolvable:$true] %s265
          %s267 = sshll.u32 [#allocation12], 4
          %s268 = int_to_ptr.vmem [resolvable:$true] %s267
          %273 = dma.hbm_to_vmem [thread:$0]  %s266, 1024, %s268, [#allocation11], 64, 64, 4
        $region36: #{tpu_custom_call.1} parent=11 // pred_fallthru
          _
      $region12: #{tpu_custom_call.1} parent=5 // pred_fallthru
        _
      %p274 = scmp.lt.s32.totalorder %s21, 2
      // Predicated region
      $region37: #{tpu_custom_call.1} parent=5 // pred_check
        %p275 = pneg %p274
      $region38: #{tpu_custom_call.1} parent=5 // pred_check_branch
        %277 = sbr.rel (%p275) target = $region40
      $region39: #{tpu_custom_call.1} parent=5 // pred_region
        // Predicated region
        $region41: #{tpu_custom_call.1} parent=39 // pred_check
          %p278 = pneg %p41
        $region42: #{tpu_custom_call.1} parent=39 // pred_check_branch
          %280 = sbr.rel (%p278) target = $region44
        $region43: #{tpu_custom_call.1} parent=39 // pred_region
          %s281 = sand.u32 %s31, 1
          %s282 = scalar_lea.sflag [#allocation5], %s281
          %s283 = sand.u32 %s31, 1
          %s284 = smul.addr %s283, 256
          %s285 = scalar_lea.vmem [#allocation4], %s284
          %287 = vsyncadd %s282, 0
          %s288 = smul.addr %s21, 32
          %s289 = smul.addr %s288, 8
          %s290 = scalar_lea.hbm %s0, %s289
          %s291 = sshll.u32 %s290, 4
          %s292 = int_to_ptr.hbm [resolvable:$true] %s291
          %s293 = sshll.u32 %s285, 4
          %s294 = int_to_ptr.vmem [resolvable:$true] %s293
          %299 = dma.hbm_to_vmem [thread:$0]  %s292, 4096, %s294, %s282, 128, 128, 8
        $region44: #{tpu_custom_call.1} parent=39 // pred_fallthru
          _
      $region40: #{tpu_custom_call.1} parent=5 // pred_fallthru
        _
      %p300 = scmp.le.s32.totalorder 1, %s21
      %p301 = scmp.lt.s32.totalorder %s21, 3
      %p302 = pnand %p300, %p301
      %p303 = pneg %p302
      // Predicated region
      $region45: #{tpu_custom_call.1} parent=5 // pred_check
        _
      $region46: #{tpu_custom_call.1} parent=5 // pred_check_branch
        %305 = sbr.rel (%p302) target = $region48
      $region47: #{tpu_custom_call.1} parent=5 // pred_region
        %s306 = ssub.s32 %s21, 1
        %s307 = sand.u32 %s34, 1
        %s308 = scalar_lea.sflag [#allocation5], %s307
        %s309 = sand.u32 %s34, 1
        %s310 = smul.addr %s309, 256
        %s311 = scalar_lea.vmem [#allocation4], %s310
        // Predicated region
        $region49: #{tpu_custom_call.1} parent=47 // pred_check
          %p312 = pneg %p47
        $region50: #{tpu_custom_call.1} parent=47 // pred_check_branch
          %314 = sbr.rel (%p312) target = $region52
        $region51: #{tpu_custom_call.1} parent=47 // pred_region
          %316 = dma.done %s308, 4096
        $region52: #{tpu_custom_call.1} parent=47 // pred_fallthru
          _
        // Predicated region
        $region53: #{tpu_custom_call.1} parent=47 // pred_check
          %p317 = pneg %p68
        $region54: #{tpu_custom_call.1} parent=47 // pred_check_branch
          %319 = sbr.rel (%p317) target = $region56
        $region55: #{tpu_custom_call.1} parent=47 // pred_region
          %321 = dma.done [#allocation8], 16
        $region56: #{tpu_custom_call.1} parent=47 // pred_fallthru
          _
        // Predicated region
        $region57: #{tpu_custom_call.1} parent=47 // pred_check
          %p322 = pneg %p110
        $region58: #{tpu_custom_call.1} parent=47 // pred_check_branch
          %324 = sbr.rel (%p322) target = $region60
        $region59: #{tpu_custom_call.1} parent=47 // pred_region
          %326 = dma.done [#allocation8], 9216
        $region60: #{tpu_custom_call.1} parent=47 // pred_fallthru
          _
        // Predicated region
        $region61: #{tpu_custom_call.1} parent=47 // pred_check
          %p327 = pneg %p152
        $region62: #{tpu_custom_call.1} parent=47 // pred_check_branch
          %329 = sbr.rel (%p327) target = $region64
        $region63: #{tpu_custom_call.1} parent=47 // pred_region
          %331 = dma.done [#allocation11], 9216
        $region64: #{tpu_custom_call.1} parent=47 // pred_fallthru
          _
        // Predicated region
        $region65: #{tpu_custom_call.1} parent=47 // pred_check
          %p332 = pneg %p173
        $region66: #{tpu_custom_call.1} parent=47 // pred_check_branch
          %334 = sbr.rel (%p332) target = $region68
        $region67: #{tpu_custom_call.1} parent=47 // pred_region
          %336 = dma.done [#allocation11], 1024
        $region68: #{tpu_custom_call.1} parent=47 // pred_fallthru
          _
        %s337 = sand.u32 %s34, 1
        %s338 = scalar_lea.sflag [#allocation5], %s337
        %s339 = sand.u32 %s34, 1
        %s340 = smul.addr %s339, 256
        %s341 = scalar_lea.vmem [#allocation4], %s340
        %p342 = pneg %p47
        %p343 = pneg %p44
        %p344 = pneg %p68
        %p345 = pneg %p65
        %p346 = pneg %p89
        %p347 = pneg %p86
        %p348 = pneg %p110
        %p349 = pneg %p107
        %p350 = pneg %p131
        %p351 = pneg %p128
        %p352 = pneg %p152
        %p353 = pneg %p149
        %p354 = pneg %p173
        %p355 = pneg %p170
        %p356 = pneg %p199
        %p357 = pneg %p196
        %s358 = sand.u32 %s186, 1
        %s359 = scalar_lea.sflag [#allocation6], %s358
        %s360 = sand.u32 %s186, 1
        %s361 = smul.addr %s360, 256
        %s362 = scalar_lea.vmem [#allocation13], %s361
        %v364 = vld [vmem:[%s311] sm:$0xff]
        %v365 = vld [vmem:[%s311 + $0x8] sm:$0xff]
        %v366 = vld [vmem:[%s311 + $0x10] sm:$0xff]
        %v367 = vld [vmem:[%s311 + $0x18] sm:$0xff]
        %v368 = vld [vmem:[%s311 + $0x20] sm:$0xff]
        %v369 = vld [vmem:[%s311 + $0x28] sm:$0xff]
        %v370 = vld [vmem:[%s311 + $0x30] sm:$0xff]
        %v371 = vld [vmem:[%s311 + $0x38] sm:$0xff]
        %v372 = vld [vmem:[%s311 + $0x40] sm:$0xff]
        %v373 = vld [vmem:[%s311 + $0x48] sm:$0xff]
        %v374 = vld [vmem:[%s311 + $0x50] sm:$0xff]
        %v375 = vld [vmem:[%s311 + $0x58] sm:$0xff]
        %v376 = vld [vmem:[%s311 + $0x60] sm:$0xff]
        %v377 = vld [vmem:[%s311 + $0x68] sm:$0xff]
        %v378 = vld [vmem:[%s311 + $0x70] sm:$0xff]
        %v379 = vld [vmem:[%s311 + $0x78] sm:$0xff]
        %v380 = vld [vmem:[%s311 + $0x80] sm:$0xff]
        %v381 = vld [vmem:[%s311 + $0x88] sm:$0xff]
        %v382 = vld [vmem:[%s311 + $0x90] sm:$0xff]
        %v383 = vld [vmem:[%s311 + $0x98] sm:$0xff]
        %v384 = vld [vmem:[%s311 + $0xa0] sm:$0xff]
        %v385 = vld [vmem:[%s311 + $0xa8] sm:$0xff]
        %v386 = vld [vmem:[%s311 + $0xb0] sm:$0xff]
        %v387 = vld [vmem:[%s311 + $0xb8] sm:$0xff]
        %v388 = vld [vmem:[%s311 + $0xc0] sm:$0xff]
        %v389 = vld [vmem:[%s311 + $0xc8] sm:$0xff]
        %v390 = vld [vmem:[%s311 + $0xd0] sm:$0xff]
        %v391 = vld [vmem:[%s311 + $0xd8] sm:$0xff]
        %v392 = vld [vmem:[%s311 + $0xe0] sm:$0xff]
        %v393 = vld [vmem:[%s311 + $0xe8] sm:$0xff]
        %v394 = vld [vmem:[%s311 + $0xf0] sm:$0xff]
        %v395 = vld [vmem:[%s311 + $0xf8] sm:$0xff]
        %v396 = vld [vmem:[#allocation7] sm:$0x1]
        %v398 = vperm.slane %v396, 0
        %v400 = vmul.f32 %v364, %v398
        %v401 = vmul.f32 %v365, %v398
        %v402 = vmul.f32 %v366, %v398
        %v403 = vmul.f32 %v367, %v398
        %v404 = vmul.f32 %v368, %v398
        %v405 = vmul.f32 %v369, %v398
        %v406 = vmul.f32 %v370, %v398
        %v407 = vmul.f32 %v371, %v398
        %v408 = vmul.f32 %v372, %v398
        %v409 = vmul.f32 %v373, %v398
        %v410 = vmul.f32 %v374, %v398
        %v411 = vmul.f32 %v375, %v398
        %v412 = vmul.f32 %v376, %v398
        %v413 = vmul.f32 %v377, %v398
        %v414 = vmul.f32 %v378, %v398
        %v415 = vmul.f32 %v379, %v398
        %v416 = vmul.f32 %v380, %v398
        %v417 = vmul.f32 %v381, %v398
        %v418 = vmul.f32 %v382, %v398
        %v419 = vmul.f32 %v383, %v398
        %v420 = vmul.f32 %v384, %v398
        %v421 = vmul.f32 %v385, %v398
        %v422 = vmul.f32 %v386, %v398
        %v423 = vmul.f32 %v387, %v398
        %v424 = vmul.f32 %v388, %v398
        %v425 = vmul.f32 %v389, %v398
        %v426 = vmul.f32 %v390, %v398
        %v427 = vmul.f32 %v391, %v398
        %v428 = vmul.f32 %v392, %v398
        %v429 = vmul.f32 %v393, %v398
        %v430 = vmul.f32 %v394, %v398
        %v431 = vmul.f32 %v395, %v398
        %v432 = vld [vmem:[%s2] sm:$0x1]
        %v434 = vperm.slane %v432, 0
        %v436 = vadd.f32 %v400, %v434
        %v437 = vadd.f32 %v401, %v434
        %v438 = vadd.f32 %v402, %v434
        %v439 = vadd.f32 %v403, %v434
        %v440 = vadd.f32 %v404, %v434
        %v441 = vadd.f32 %v405, %v434
        %v442 = vadd.f32 %v406, %v434
        %v443 = vadd.f32 %v407, %v434
        %v444 = vadd.f32 %v408, %v434
        %v445 = vadd.f32 %v409, %v434
        %v446 = vadd.f32 %v410, %v434
        %v447 = vadd.f32 %v411, %v434
        %v448 = vadd.f32 %v412, %v434
        %v449 = vadd.f32 %v413, %v434
        %v450 = vadd.f32 %v414, %v434
        %v451 = vadd.f32 %v415, %v434
        %v452 = vadd.f32 %v416, %v434
        %v453 = vadd.f32 %v417, %v434
        %v454 = vadd.f32 %v418, %v434
        %v455 = vadd.f32 %v419, %v434
        %v456 = vadd.f32 %v420, %v434
        %v457 = vadd.f32 %v421, %v434
        %v458 = vadd.f32 %v422, %v434
        %v459 = vadd.f32 %v423, %v434
        %v460 = vadd.f32 %v424, %v434
        %v461 = vadd.f32 %v425, %v434
        %v462 = vadd.f32 %v426, %v434
        %v463 = vadd.f32 %v427, %v434
        %v464 = vadd.f32 %v428, %v434
        %v465 = vadd.f32 %v429, %v434
        %v466 = vadd.f32 %v430, %v434
        %v467 = vadd.f32 %v431, %v434
        %v468 = vmax.f32 %v436, 0.0
        %v469 = vmax.f32 %v437, 0.0
        %v470 = vmax.f32 %v438, 0.0
        %v471 = vmax.f32 %v439, 0.0
        %v472 = vmax.f32 %v440, 0.0
        %v473 = vmax.f32 %v441, 0.0
        %v474 = vmax.f32 %v442, 0.0
        %v475 = vmax.f32 %v443, 0.0
        %v476 = vmax.f32 %v444, 0.0
        %v477 = vmax.f32 %v445, 0.0
        %v478 = vmax.f32 %v446, 0.0
        %v479 = vmax.f32 %v447, 0.0
        %v480 = vmax.f32 %v448, 0.0
        %v481 = vmax.f32 %v449, 0.0
        %v482 = vmax.f32 %v450, 0.0
        %v483 = vmax.f32 %v451, 0.0
        %v484 = vmax.f32 %v452, 0.0
        %v485 = vmax.f32 %v453, 0.0
        %v486 = vmax.f32 %v454, 0.0
        %v487 = vmax.f32 %v455, 0.0
        %v488 = vmax.f32 %v456, 0.0
        %v489 = vmax.f32 %v457, 0.0
        %v490 = vmax.f32 %v458, 0.0
        %v491 = vmax.f32 %v459, 0.0
        %v492 = vmax.f32 %v460, 0.0
        %v493 = vmax.f32 %v461, 0.0
        %v494 = vmax.f32 %v462, 0.0
        %v495 = vmax.f32 %v463, 0.0
        %v496 = vmax.f32 %v464, 0.0
        %v497 = vmax.f32 %v465, 0.0
        %v498 = vmax.f32 %v466, 0.0
        %v499 = vmax.f32 %v467, 0.0
        %v500 = vpack.c.bf16 %v468, %v468
        %v501 = vpack.c.bf16 %v469, %v469
        %v502 = vpack.c.bf16 %v470, %v470
        %v503 = vpack.c.bf16 %v471, %v471
        %v504 = vpack.c.bf16 %v472, %v472
        %v505 = vpack.c.bf16 %v473, %v473
        %v506 = vpack.c.bf16 %v474, %v474
        %v507 = vpack.c.bf16 %v475, %v475
        %v508 = vpack.c.bf16 %v476, %v476
        %v509 = vpack.c.bf16 %v477, %v477
        %v510 = vpack.c.bf16 %v478, %v478
        %v511 = vpack.c.bf16 %v479, %v479
        %v512 = vpack.c.bf16 %v480, %v480
        %v513 = vpack.c.bf16 %v481, %v481
        %v514 = vpack.c.bf16 %v482, %v482
        %v515 = vpack.c.bf16 %v483, %v483
        %v516 = vpack.c.bf16 %v484, %v484
        %v517 = vpack.c.bf16 %v485, %v485
        %v518 = vpack.c.bf16 %v486, %v486
        %v519 = vpack.c.bf16 %v487, %v487
        %v520 = vpack.c.bf16 %v488, %v488
        %v521 = vpack.c.bf16 %v489, %v489
        %v522 = vpack.c.bf16 %v490, %v490
        %v523 = vpack.c.bf16 %v491, %v491
        %v524 = vpack.c.bf16 %v492, %v492
        %v525 = vpack.c.bf16 %v493, %v493
        %v526 = vpack.c.bf16 %v494, %v494
        %v527 = vpack.c.bf16 %v495, %v495
        %v528 = vpack.c.bf16 %v496, %v496
        %v529 = vpack.c.bf16 %v497, %v497
        %v530 = vpack.c.bf16 %v498, %v498
        %v531 = vpack.c.bf16 %v499, %v499
        %532 = vst [vmem:[#allocation2] sm:$0xf] 0
        %533 = vst [vmem:[#allocation2 + $0x4] sm:$0xf] 0
        %534 = vst [vmem:[#allocation2 + $0x8] sm:$0x1] 0
        %s535 = scalar_lea.vmem [#allocation2], 204
        %536 = vst [vmem:[%s535] sm:$0xf] 0
        %537 = vst [vmem:[%s535 + $0x4] sm:$0xf] 0
        %538 = vst [vmem:[%s535 + $0x8] sm:$0x1] 0
        %vm539 = vcmask 1040384
        %vm540 = vsmask.f32 256
        %vm541 = vmand %vm539, %vm540
        %v542 = vld [vmem:[#allocation2] sm:$0x1]
        %v543 = vsel %vm541, 0, %v542
        %544 = vst [vmem:[#allocation2] sm:$0x1] %v543
        %v545 = vld [vmem:[#allocation2 + $0xc] sm:$0x1]
        %v546 = vsel %vm541, 0, %v545
        %547 = vst [vmem:[#allocation2 + $0xc] sm:$0x1] %v546
        %v548 = vld [vmem:[#allocation2 + $0x18] sm:$0x1]
        %v549 = vsel %vm541, 0, %v548
        %550 = vst [vmem:[#allocation2 + $0x18] sm:$0x1] %v549
        %v551 = vld [vmem:[#allocation2 + $0x24] sm:$0x1]
        %v552 = vsel %vm541, 0, %v551
        %553 = vst [vmem:[#allocation2 + $0x24] sm:$0x1] %v552
        %v554 = vld [vmem:[#allocation2 + $0x30] sm:$0x1]
        %v555 = vsel %vm541, 0, %v554
        %556 = vst [vmem:[#allocation2 + $0x30] sm:$0x1] %v555
        %v557 = vld [vmem:[#allocation2 + $0x3c] sm:$0x1]
        %v558 = vsel %vm541, 0, %v557
        %559 = vst [vmem:[#allocation2 + $0x3c] sm:$0x1] %v558
        %v560 = vld [vmem:[#allocation2 + $0x48] sm:$0x1]
        %v561 = vsel %vm541, 0, %v560
        %562 = vst [vmem:[#allocation2 + $0x48] sm:$0x1] %v561
        %v563 = vld [vmem:[#allocation2 + $0x54] sm:$0x1]
        %v564 = vsel %vm541, 0, %v563
        %565 = vst [vmem:[#allocation2 + $0x54] sm:$0x1] %v564
        %v566 = vld [vmem:[#allocation2 + $0x60] sm:$0x1]
        %v567 = vsel %vm541, 0, %v566
        %568 = vst [vmem:[#allocation2 + $0x60] sm:$0x1] %v567
        %v569 = vld [vmem:[#allocation2 + $0x6c] sm:$0x1]
        %v570 = vsel %vm541, 0, %v569
        %571 = vst [vmem:[#allocation2 + $0x6c] sm:$0x1] %v570
        %v572 = vld [vmem:[#allocation2 + $0x78] sm:$0x1]
        %v573 = vsel %vm541, 0, %v572
        %574 = vst [vmem:[#allocation2 + $0x78] sm:$0x1] %v573
        %v575 = vld [vmem:[#allocation2 + $0x84] sm:$0x1]
        %v576 = vsel %vm541, 0, %v575
        %577 = vst [vmem:[#allocation2 + $0x84] sm:$0x1] %v576
        %v578 = vld [vmem:[#allocation2 + $0x90] sm:$0x1]
        %v579 = vsel %vm541, 0, %v578
        %580 = vst [vmem:[#allocation2 + $0x90] sm:$0x1] %v579
        %v581 = vld [vmem:[#allocation2 + $0x9c] sm:$0x1]
        %v582 = vsel %vm541, 0, %v581
        %583 = vst [vmem:[#allocation2 + $0x9c] sm:$0x1] %v582
        %v584 = vld [vmem:[#allocation2 + $0xa8] sm:$0x1]
        %v585 = vsel %vm541, 0, %v584
        %586 = vst [vmem:[#allocation2 + $0xa8] sm:$0x1] %v585
        %v587 = vld [vmem:[#allocation2 + $0xb4] sm:$0x1]
        %v588 = vsel %vm541, 0, %v587
        %589 = vst [vmem:[#allocation2 + $0xb4] sm:$0x1] %v588
        %v590 = vld [vmem:[#allocation2 + $0xc0] sm:$0x1]
        %v591 = vsel %vm541, 0, %v590
        %592 = vst [vmem:[#allocation2 + $0xc0] sm:$0x1] %v591
        %v593 = vld [vmem:[#allocation2 + $0xcc] sm:$0x1]
        %v594 = vsel %vm541, 0, %v593
        %595 = vst [vmem:[#allocation2 + $0xcc] sm:$0x1] %v594
        %vm596 = vsmask.f32 7938
        %vm597 = vmand %vm539, %vm596
        %v598 = vld [vmem:[#allocation2 + $0x8] sm:$0x1]
        %v599 = vsel %vm597, 0, %v598
        %600 = vst [vmem:[#allocation2 + $0x8] sm:$0x1] %v599
        %v601 = vld [vmem:[#allocation2 + $0x14] sm:$0x1]
        %v602 = vsel %vm597, 0, %v601
        %603 = vst [vmem:[#allocation2 + $0x14] sm:$0x1] %v602
        %v604 = vld [vmem:[#allocation2 + $0x20] sm:$0x1]
        %v605 = vsel %vm597, 0, %v604
        %606 = vst [vmem:[#allocation2 + $0x20] sm:$0x1] %v605
        %v607 = vld [vmem:[#allocation2 + $0x2c] sm:$0x1]
        %v608 = vsel %vm597, 0, %v607
        %609 = vst [vmem:[#allocation2 + $0x2c] sm:$0x1] %v608
        %v610 = vld [vmem:[#allocation2 + $0x38] sm:$0x1]
        %v611 = vsel %vm597, 0, %v610
        %612 = vst [vmem:[#allocation2 + $0x38] sm:$0x1] %v611
        %v613 = vld [vmem:[#allocation2 + $0x44] sm:$0x1]
        %v614 = vsel %vm597, 0, %v613
        %615 = vst [vmem:[#allocation2 + $0x44] sm:$0x1] %v614
        %v616 = vld [vmem:[#allocation2 + $0x50] sm:$0x1]
        %v617 = vsel %vm597, 0, %v616
        %618 = vst [vmem:[#allocation2 + $0x50] sm:$0x1] %v617
        %v619 = vld [vmem:[#allocation2 + $0x5c] sm:$0x1]
        %v620 = vsel %vm597, 0, %v619
        %621 = vst [vmem:[#allocation2 + $0x5c] sm:$0x1] %v620
        %v622 = vld [vmem:[#allocation2 + $0x68] sm:$0x1]
        %v623 = vsel %vm597, 0, %v622
        %624 = vst [vmem:[#allocation2 + $0x68] sm:$0x1] %v623
        %v625 = vld [vmem:[#allocation2 + $0x74] sm:$0x1]
        %v626 = vsel %vm597, 0, %v625
        %627 = vst [vmem:[#allocation2 + $0x74] sm:$0x1] %v626
        %v628 = vld [vmem:[#allocation2 + $0x80] sm:$0x1]
        %v629 = vsel %vm597, 0, %v628
        %630 = vst [vmem:[#allocation2 + $0x80] sm:$0x1] %v629
        %v631 = vld [vmem:[#allocation2 + $0x8c] sm:$0x1]
        %v632 = vsel %vm597, 0, %v631
        %633 = vst [vmem:[#allocation2 + $0x8c] sm:$0x1] %v632
        %v634 = vld [vmem:[#allocation2 + $0x98] sm:$0x1]
        %v635 = vsel %vm597, 0, %v634
        %636 = vst [vmem:[#allocation2 + $0x98] sm:$0x1] %v635
        %v637 = vld [vmem:[#allocation2 + $0xa4] sm:$0x1]
        %v638 = vsel %vm597, 0, %v637
        %639 = vst [vmem:[#allocation2 + $0xa4] sm:$0x1] %v638
        %v640 = vld [vmem:[#allocation2 + $0xb0] sm:$0x1]
        %v641 = vsel %vm597, 0, %v640
        %642 = vst [vmem:[#allocation2 + $0xb0] sm:$0x1] %v641
        %v643 = vld [vmem:[#allocation2 + $0xbc] sm:$0x1]
        %v644 = vsel %vm597, 0, %v643
        %645 = vst [vmem:[#allocation2 + $0xbc] sm:$0x1] %v644
        %v646 = vld [vmem:[#allocation2 + $0xc8] sm:$0x1]
        %v647 = vsel %vm597, 0, %v646
        %648 = vst [vmem:[#allocation2 + $0xc8] sm:$0x1] %v647
        %v649 = vld [vmem:[#allocation2 + $0xd4] sm:$0x1]
        %v650 = vsel %vm597, 0, %v649
        %651 = vst [vmem:[#allocation2 + $0xd4] sm:$0x1] %v650
        %vm652 = vsmask.f32 4368
        %vm653 = vmor %vm540, %vm652
        %v655 = vshrl.u32 %v500, 16
        %v657 = vrot.slane %v655, 7
        %v658 = vshll.u32 %v500, 16
        %v660 = vor.u32 %v657, %v658
        %v661 = vrot.slane %v657, 4
        %v663 = vshrl.u32 %v501, 16
        %v665 = vrot.slane %v663, 7
        %v666 = vshll.u32 %v501, 16
        %v668 = vor.u32 %v665, %v666
        %v669 = vsel %vm653, %v661, %v668
        %v670 = vrot.slane %v665, 4
        %v672 = vshrl.u32 %v502, 16
        %v674 = vrot.slane %v672, 7
        %v675 = vshll.u32 %v502, 16
        %v677 = vor.u32 %v674, %v675
        %v678 = vrot.slane %v674, 4
        %v680 = vshrl.u32 %v503, 16
        %v682 = vrot.slane %v680, 7
        %v683 = vshll.u32 %v503, 16
        %v685 = vor.u32 %v682, %v683
        %v686 = vsel %vm653, %v678, %v685
        %v687 = vrot.slane %v682, 4
        %v689 = vshrl.u32 %v504, 16
        %v691 = vrot.slane %v689, 7
        %v692 = vshll.u32 %v504, 16
        %v694 = vor.u32 %v691, %v692
        %v695 = vrot.slane %v691, 4
        %v697 = vshrl.u32 %v505, 16
        %v699 = vrot.slane %v697, 7
        %v700 = vshll.u32 %v505, 16
        %v702 = vor.u32 %v699, %v700
        %v703 = vsel %vm653, %v695, %v702
        %v704 = vrot.slane %v699, 4
        %v706 = vshrl.u32 %v506, 16
        %v708 = vrot.slane %v706, 7
        %v709 = vshll.u32 %v506, 16
        %v711 = vor.u32 %v708, %v709
        %v712 = vrot.slane %v708, 4
        %v714 = vshrl.u32 %v507, 16
        %v716 = vrot.slane %v714, 7
        %v717 = vshll.u32 %v507, 16
        %v719 = vor.u32 %v716, %v717
        %v720 = vsel %vm653, %v712, %v719
        %v721 = vrot.slane %v716, 4
        %v723 = vshrl.u32 %v508, 16
        %v725 = vrot.slane %v723, 7
        %v726 = vshll.u32 %v508, 16
        %v728 = vor.u32 %v725, %v726
        %v729 = vrot.slane %v725, 4
        %v731 = vshrl.u32 %v509, 16
        %v733 = vrot.slane %v731, 7
        %v734 = vshll.u32 %v509, 16
        %v736 = vor.u32 %v733, %v734
        %v737 = vsel %vm653, %v729, %v736
        %v738 = vrot.slane %v733, 4
        %v740 = vshrl.u32 %v510, 16
        %v742 = vrot.slane %v740, 7
        %v743 = vshll.u32 %v510, 16
        %v745 = vor.u32 %v742, %v743
        %v746 = vrot.slane %v742, 4
        %v748 = vshrl.u32 %v511, 16
        %v750 = vrot.slane %v748, 7
        %v751 = vshll.u32 %v511, 16
        %v753 = vor.u32 %v750, %v751
        %v754 = vsel %vm653, %v746, %v753
        %v755 = vrot.slane %v750, 4
        %v757 = vshrl.u32 %v512, 16
        %v759 = vrot.slane %v757, 7
        %v760 = vshll.u32 %v512, 16
        %v762 = vor.u32 %v759, %v760
        %v763 = vrot.slane %v759, 4
        %v765 = vshrl.u32 %v513, 16
        %v767 = vrot.slane %v765, 7
        %v768 = vshll.u32 %v513, 16
        %v770 = vor.u32 %v767, %v768
        %v771 = vsel %vm653, %v763, %v770
        %v772 = vrot.slane %v767, 4
        %v774 = vshrl.u32 %v514, 16
        %v776 = vrot.slane %v774, 7
        %v777 = vshll.u32 %v514, 16
        %v779 = vor.u32 %v776, %v777
        %v780 = vrot.slane %v776, 4
        %v782 = vshrl.u32 %v515, 16
        %v784 = vrot.slane %v782, 7
        %v785 = vshll.u32 %v515, 16
        %v787 = vor.u32 %v784, %v785
        %v788 = vsel %vm653, %v780, %v787
        %v789 = vrot.slane %v784, 4
        %v791 = vshrl.u32 %v516, 16
        %v793 = vrot.slane %v791, 7
        %v794 = vshll.u32 %v516, 16
        %v796 = vor.u32 %v793, %v794
        %v797 = vrot.slane %v793, 4
        %v799 = vshrl.u32 %v517, 16
        %v801 = vrot.slane %v799, 7
        %v802 = vshll.u32 %v517, 16
        %v804 = vor.u32 %v801, %v802
        %v805 = vsel %vm653, %v797, %v804
        %v806 = vrot.slane %v801, 4
        %v808 = vshrl.u32 %v518, 16
        %v810 = vrot.slane %v808, 7
        %v811 = vshll.u32 %v518, 16
        %v813 = vor.u32 %v810, %v811
        %v814 = vrot.slane %v810, 4
        %v816 = vshrl.u32 %v519, 16
        %v818 = vrot.slane %v816, 7
        %v819 = vshll.u32 %v519, 16
        %v821 = vor.u32 %v818, %v819
        %v822 = vsel %vm653, %v814, %v821
        %v823 = vrot.slane %v818, 4
        %v825 = vshrl.u32 %v520, 16
        %v827 = vrot.slane %v825, 7
        %v828 = vshll.u32 %v520, 16
        %v830 = vor.u32 %v827, %v828
        %v831 = vrot.slane %v827, 4
        %v833 = vshrl.u32 %v521, 16
        %v835 = vrot.slane %v833, 7
        %v836 = vshll.u32 %v521, 16
        %v838 = vor.u32 %v835, %v836
        %v839 = vsel %vm653, %v831, %v838
        %v840 = vrot.slane %v835, 4
        %v842 = vshrl.u32 %v522, 16
        %v844 = vrot.slane %v842, 7
        %v845 = vshll.u32 %v522, 16
        %v847 = vor.u32 %v844, %v845
        %v848 = vrot.slane %v844, 4
        %v850 = vshrl.u32 %v523, 16
        %v852 = vrot.slane %v850, 7
        %v853 = vshll.u32 %v523, 16
        %v855 = vor.u32 %v852, %v853
        %v856 = vsel %vm653, %v848, %v855
        %v857 = vrot.slane %v852, 4
        %v859 = vshrl.u32 %v524, 16
        %v861 = vrot.slane %v859, 7
        %v862 = vshll.u32 %v524, 16
        %v864 = vor.u32 %v861, %v862
        %v865 = vrot.slane %v861, 4
        %v867 = vshrl.u32 %v525, 16
        %v869 = vrot.slane %v867, 7
        %v870 = vshll.u32 %v525, 16
        %v872 = vor.u32 %v869, %v870
        %v873 = vsel %vm653, %v865, %v872
        %v874 = vrot.slane %v869, 4
        %v876 = vshrl.u32 %v526, 16
        %v878 = vrot.slane %v876, 7
        %v879 = vshll.u32 %v526, 16
        %v881 = vor.u32 %v878, %v879
        %v882 = vrot.slane %v878, 4
        %v884 = vshrl.u32 %v527, 16
        %v886 = vrot.slane %v884, 7
        %v887 = vshll.u32 %v527, 16
        %v889 = vor.u32 %v886, %v887
        %v890 = vsel %vm653, %v882, %v889
        %v891 = vrot.slane %v886, 4
        %v893 = vshrl.u32 %v528, 16
        %v895 = vrot.slane %v893, 7
        %v896 = vshll.u32 %v528, 16
        %v898 = vor.u32 %v895, %v896
        %v899 = vrot.slane %v895, 4
        %v901 = vshrl.u32 %v529, 16
        %v903 = vrot.slane %v901, 7
        %v904 = vshll.u32 %v529, 16
        %v906 = vor.u32 %v903, %v904
        %v907 = vsel %vm653, %v899, %v906
        %v908 = vrot.slane %v903, 4
        %v910 = vshrl.u32 %v530, 16
        %v912 = vrot.slane %v910, 7
        %v913 = vshll.u32 %v530, 16
        %v915 = vor.u32 %v912, %v913
        %v916 = vrot.slane %v912, 4
        %v918 = vshrl.u32 %v531, 16
        %v920 = vrot.slane %v918, 7
        %v921 = vshll.u32 %v531, 16
        %v923 = vor.u32 %v920, %v921
        %v924 = vsel %vm653, %v916, %v923
        %v925 = vrot.slane %v920, 4
        %s974 = scalar_lea.vmem [#allocation2], 12
        %vm975 = vcmask 1043456
        %vm976 = vmand %vm975, %vm596
        %v977 = vld [vmem:[%s974] sm:$0xf]
        %v978 = vsel %vm976, %v660, %v977
        %979 = vst [vmem:[%s974] sm:$0xf] %v978
        %980 = vst [vmem:[%s974 + $0x4] sm:$0xf] %v669
        %v981 = vld [vmem:[%s974 + $0x8] sm:$0x1]
        %v982 = vsel %vm541, %v670, %v981
        %983 = vst [vmem:[%s974 + $0x8] sm:$0x1] %v982
        %v984 = vld [vmem:[%s974 + $0xc] sm:$0xf]
        %v985 = vsel %vm976, %v677, %v984
        %986 = vst [vmem:[%s974 + $0xc] sm:$0xf] %v985
        %987 = vst [vmem:[%s974 + $0x10] sm:$0xf] %v686
        %v988 = vld [vmem:[%s974 + $0x14] sm:$0x1]
        %v989 = vsel %vm541, %v687, %v988
        %990 = vst [vmem:[%s974 + $0x14] sm:$0x1] %v989
        %v991 = vld [vmem:[%s974 + $0x18] sm:$0xf]
        %v992 = vsel %vm976, %v694, %v991
        %993 = vst [vmem:[%s974 + $0x18] sm:$0xf] %v992
        %994 = vst [vmem:[%s974 + $0x1c] sm:$0xf] %v703
        %v995 = vld [vmem:[%s974 + $0x20] sm:$0x1]
        %v996 = vsel %vm541, %v704, %v995
        %997 = vst [vmem:[%s974 + $0x20] sm:$0x1] %v996
        %v998 = vld [vmem:[%s974 + $0x24] sm:$0xf]
        %v999 = vsel %vm976, %v711, %v998
        %1000 = vst [vmem:[%s974 + $0x24] sm:$0xf] %v999
        %1001 = vst [vmem:[%s974 + $0x28] sm:$0xf] %v720
        %v1002 = vld [vmem:[%s974 + $0x2c] sm:$0x1]
        %v1003 = vsel %vm541, %v721, %v1002
        %1004 = vst [vmem:[%s974 + $0x2c] sm:$0x1] %v1003
        %v1005 = vld [vmem:[%s974 + $0x30] sm:$0xf]
        %v1006 = vsel %vm976, %v728, %v1005
        %1007 = vst [vmem:[%s974 + $0x30] sm:$0xf] %v1006
        %1008 = vst [vmem:[%s974 + $0x34] sm:$0xf] %v737
        %v1009 = vld [vmem:[%s974 + $0x38] sm:$0x1]
        %v1010 = vsel %vm541, %v738, %v1009
        %1011 = vst [vmem:[%s974 + $0x38] sm:$0x1] %v1010
        %v1012 = vld [vmem:[%s974 + $0x3c] sm:$0xf]
        %v1013 = vsel %vm976, %v745, %v1012
        %1014 = vst [vmem:[%s974 + $0x3c] sm:$0xf] %v1013
        %1015 = vst [vmem:[%s974 + $0x40] sm:$0xf] %v754
        %v1016 = vld [vmem:[%s974 + $0x44] sm:$0x1]
        %v1017 = vsel %vm541, %v755, %v1016
        %1018 = vst [vmem:[%s974 + $0x44] sm:$0x1] %v1017
        %v1019 = vld [vmem:[%s974 + $0x48] sm:$0xf]
        %v1020 = vsel %vm976, %v762, %v1019
        %1021 = vst [vmem:[%s974 + $0x48] sm:$0xf] %v1020
        %1022 = vst [vmem:[%s974 + $0x4c] sm:$0xf] %v771
        %v1023 = vld [vmem:[%s974 + $0x50] sm:$0x1]
        %v1024 = vsel %vm541, %v772, %v1023
        %1025 = vst [vmem:[%s974 + $0x50] sm:$0x1] %v1024
        %v1026 = vld [vmem:[%s974 + $0x54] sm:$0xf]
        %v1027 = vsel %vm976, %v779, %v1026
        %1028 = vst [vmem:[%s974 + $0x54] sm:$0xf] %v1027
        %1029 = vst [vmem:[%s974 + $0x58] sm:$0xf] %v788
        %v1030 = vld [vmem:[%s974 + $0x5c] sm:$0x1]
        %v1031 = vsel %vm541, %v789, %v1030
        %1032 = vst [vmem:[%s974 + $0x5c] sm:$0x1] %v1031
        %v1033 = vld [vmem:[%s974 + $0x60] sm:$0xf]
        %v1034 = vsel %vm976, %v796, %v1033
        %1035 = vst [vmem:[%s974 + $0x60] sm:$0xf] %v1034
        %1036 = vst [vmem:[%s974 + $0x64] sm:$0xf] %v805
        %v1037 = vld [vmem:[%s974 + $0x68] sm:$0x1]
        %v1038 = vsel %vm541, %v806, %v1037
        %1039 = vst [vmem:[%s974 + $0x68] sm:$0x1] %v1038
        %v1040 = vld [vmem:[%s974 + $0x6c] sm:$0xf]
        %v1041 = vsel %vm976, %v813, %v1040
        %1042 = vst [vmem:[%s974 + $0x6c] sm:$0xf] %v1041
        %1043 = vst [vmem:[%s974 + $0x70] sm:$0xf] %v822
        %v1044 = vld [vmem:[%s974 + $0x74] sm:$0x1]
        %v1045 = vsel %vm541, %v823, %v1044
        %1046 = vst [vmem:[%s974 + $0x74] sm:$0x1] %v1045
        %v1047 = vld [vmem:[%s974 + $0x78] sm:$0xf]
        %v1048 = vsel %vm976, %v830, %v1047
        %1049 = vst [vmem:[%s974 + $0x78] sm:$0xf] %v1048
        %1050 = vst [vmem:[%s974 + $0x7c] sm:$0xf] %v839
        %v1051 = vld [vmem:[%s974 + $0x80] sm:$0x1]
        %v1052 = vsel %vm541, %v840, %v1051
        %1053 = vst [vmem:[%s974 + $0x80] sm:$0x1] %v1052
        %v1054 = vld [vmem:[%s974 + $0x84] sm:$0xf]
        %v1055 = vsel %vm976, %v847, %v1054
        %1056 = vst [vmem:[%s974 + $0x84] sm:$0xf] %v1055
        %1057 = vst [vmem:[%s974 + $0x88] sm:$0xf] %v856
        %v1058 = vld [vmem:[%s974 + $0x8c] sm:$0x1]
        %v1059 = vsel %vm541, %v857, %v1058
        %1060 = vst [vmem:[%s974 + $0x8c] sm:$0x1] %v1059
        %v1061 = vld [vmem:[%s974 + $0x90] sm:$0xf]
        %v1062 = vsel %vm976, %v864, %v1061
        %1063 = vst [vmem:[%s974 + $0x90] sm:$0xf] %v1062
        %1064 = vst [vmem:[%s974 + $0x94] sm:$0xf] %v873
        %v1065 = vld [vmem:[%s974 + $0x98] sm:$0x1]
        %v1066 = vsel %vm541, %v874, %v1065
        %1067 = vst [vmem:[%s974 + $0x98] sm:$0x1] %v1066
        %v1068 = vld [vmem:[%s974 + $0x9c] sm:$0xf]
        %v1069 = vsel %vm976, %v881, %v1068
        %1070 = vst [vmem:[%s974 + $0x9c] sm:$0xf] %v1069
        %1071 = vst [vmem:[%s974 + $0xa0] sm:$0xf] %v890
        %v1072 = vld [vmem:[%s974 + $0xa4] sm:$0x1]
        %v1073 = vsel %vm541, %v891, %v1072
        %1074 = vst [vmem:[%s974 + $0xa4] sm:$0x1] %v1073
        %v1075 = vld [vmem:[%s974 + $0xa8] sm:$0xf]
        %v1076 = vsel %vm976, %v898, %v1075
        %1077 = vst [vmem:[%s974 + $0xa8] sm:$0xf] %v1076
        %1078 = vst [vmem:[%s974 + $0xac] sm:$0xf] %v907
        %v1079 = vld [vmem:[%s974 + $0xb0] sm:$0x1]
        %v1080 = vsel %vm541, %v908, %v1079
        %1081 = vst [vmem:[%s974 + $0xb0] sm:$0x1] %v1080
        %v1082 = vld [vmem:[%s974 + $0xb4] sm:$0xf]
        %v1083 = vsel %vm976, %v915, %v1082
        %1084 = vst [vmem:[%s974 + $0xb4] sm:$0xf] %v1083
        %1085 = vst [vmem:[%s974 + $0xb8] sm:$0xf] %v924
        %v1086 = vld [vmem:[%s974 + $0xbc] sm:$0x1]
        %v1087 = vsel %vm541, %v925, %v1086
        %1088 = vst [vmem:[%s974 + $0xbc] sm:$0x1] %v1087
        %v1089 = vld [vmem:[#allocation2] sm:$0xf]
        %v1090 = vld [vmem:[#allocation2 + $0x4] sm:$0xf]
        %v1091 = vld [vmem:[#allocation2 + $0xc] sm:$0xf]
        %v1092 = vld [vmem:[#allocation2 + $0x10] sm:$0xf]
        %v1093 = vld [vmem:[#allocation2 + $0x18] sm:$0xf]
        %v1094 = vld [vmem:[#allocation2 + $0x1c] sm:$0xf]
        %v1095 = vld [vmem:[#allocation2 + $0x24] sm:$0xf]
        %v1096 = vld [vmem:[#allocation2 + $0x28] sm:$0xf]
        %v1097 = vld [vmem:[#allocation2 + $0x30] sm:$0xf]
        %v1098 = vld [vmem:[#allocation2 + $0x34] sm:$0xf]
        %v1099 = vld [vmem:[#allocation2 + $0x3c] sm:$0xf]
        %v1100 = vld [vmem:[#allocation2 + $0x40] sm:$0xf]
        %v1101 = vld [vmem:[#allocation2 + $0x48] sm:$0xf]
        %v1102 = vld [vmem:[#allocation2 + $0x4c] sm:$0xf]
        %v1103 = vld [vmem:[#allocation2 + $0x54] sm:$0xf]
        %v1104 = vld [vmem:[#allocation2 + $0x58] sm:$0xf]
        %v1105 = vld [vmem:[#allocation2 + $0x60] sm:$0xf]
        %v1106 = vld [vmem:[#allocation2 + $0x64] sm:$0xf]
        %v1107 = vld [vmem:[#allocation2 + $0x6c] sm:$0xf]
        %v1108 = vld [vmem:[#allocation2 + $0x70] sm:$0xf]
        %v1109 = vld [vmem:[#allocation2 + $0x78] sm:$0xf]
        %v1110 = vld [vmem:[#allocation2 + $0x7c] sm:$0xf]
        %v1111 = vld [vmem:[#allocation2 + $0x84] sm:$0xf]
        %v1112 = vld [vmem:[#allocation2 + $0x88] sm:$0xf]
        %v1113 = vld [vmem:[#allocation2 + $0x90] sm:$0xf]
        %v1114 = vld [vmem:[#allocation2 + $0x94] sm:$0xf]
        %v1115 = vld [vmem:[#allocation2 + $0x9c] sm:$0xf]
        %v1116 = vld [vmem:[#allocation2 + $0xa0] sm:$0xf]
        %v1117 = vld [vmem:[#allocation2 + $0xa8] sm:$0xf]
        %v1118 = vld [vmem:[#allocation2 + $0xac] sm:$0xf]
        %v1119 = vld [vmem:[#allocation2 + $0xb4] sm:$0xf]
        %v1120 = vld [vmem:[#allocation2 + $0xb8] sm:$0xf]
        %1121 = vst [vmem:[#allocation3] sm:$0xf] %v1089
        %1122 = vst [vmem:[#allocation3 + $0x24] sm:$0xf] %v1090
        %1123 = vst [vmem:[#allocation3 + $0x48] sm:$0xf] %v1091
        %1124 = vst [vmem:[#allocation3 + $0x6c] sm:$0xf] %v1092
        %1125 = vst [vmem:[#allocation3 + $0x90] sm:$0xf] %v1093
        %1126 = vst [vmem:[#allocation3 + $0xb4] sm:$0xf] %v1094
        %1127 = vst [vmem:[#allocation3 + $0xd8] sm:$0xf] %v1095
        %1128 = vst [vmem:[#allocation3 + $0xfc] sm:$0xf] %v1096
        %1129 = vst [vmem:[#allocation3 + $0x120] sm:$0xf] %v1097
        %1130 = vst [vmem:[#allocation3 + $0x144] sm:$0xf] %v1098
        %1131 = vst [vmem:[#allocation3 + $0x168] sm:$0xf] %v1099
        %1132 = vst [vmem:[#allocation3 + $0x18c] sm:$0xf] %v1100
        %1133 = vst [vmem:[#allocation3 + $0x1b0] sm:$0xf] %v1101
        %1134 = vst [vmem:[#allocation3 + $0x1d4] sm:$0xf] %v1102
        %1135 = vst [vmem:[#allocation3 + $0x1f8] sm:$0xf] %v1103
        %1136 = vst [vmem:[#allocation3 + $0x21c] sm:$0xf] %v1104
        %1137 = vst [vmem:[#allocation3 + $0x240] sm:$0xf] %v1105
        %1138 = vst [vmem:[#allocation3 + $0x264] sm:$0xf] %v1106
        %1139 = vst [vmem:[#allocation3 + $0x288] sm:$0xf] %v1107
        %1140 = vst [vmem:[#allocation3 + $0x2ac] sm:$0xf] %v1108
        %1141 = vst [vmem:[#allocation3 + $0x2d0] sm:$0xf] %v1109
        %1142 = vst [vmem:[#allocation3 + $0x2f4] sm:$0xf] %v1110
        %1143 = vst [vmem:[#allocation3 + $0x318] sm:$0xf] %v1111
        %1144 = vst [vmem:[#allocation3 + $0x33c] sm:$0xf] %v1112
        %1145 = vst [vmem:[#allocation3 + $0x360] sm:$0xf] %v1113
        %1146 = vst [vmem:[#allocation3 + $0x384] sm:$0xf] %v1114
        %1147 = vst [vmem:[#allocation3 + $0x3a8] sm:$0xf] %v1115
        %1148 = vst [vmem:[#allocation3 + $0x3cc] sm:$0xf] %v1116
        %1149 = vst [vmem:[#allocation3 + $0x3f0] sm:$0xf] %v1117
        %1150 = vst [vmem:[#allocation3 + $0x414] sm:$0xf] %v1118
        %1151 = vst [vmem:[#allocation3 + $0x438] sm:$0xf] %v1119
        %1152 = vst [vmem:[#allocation3 + $0x45c] sm:$0xf] %v1120
        %v1153 = vld [vmem:[#allocation2] sm:$0xf]
        %v1154 = vld [vmem:[#allocation2 + $0x4] sm:$0xf]
        %v1155 = vld [vmem:[#allocation2 + $0x8] sm:$0x1]
        %v1156 = vld [vmem:[#allocation2 + $0xc] sm:$0xf]
        %v1157 = vld [vmem:[#allocation2 + $0x10] sm:$0xf]
        %v1158 = vld [vmem:[#allocation2 + $0x14] sm:$0x1]
        %v1159 = vld [vmem:[#allocation2 + $0x18] sm:$0xf]
        %v1160 = vld [vmem:[#allocation2 + $0x1c] sm:$0xf]
        %v1161 = vld [vmem:[#allocation2 + $0x20] sm:$0x1]
        %v1162 = vld [vmem:[#allocation2 + $0x24] sm:$0xf]
        %v1163 = vld [vmem:[#allocation2 + $0x28] sm:$0xf]
        %v1164 = vld [vmem:[#allocation2 + $0x2c] sm:$0x1]
        %v1165 = vld [vmem:[#allocation2 + $0x30] sm:$0xf]
        %v1166 = vld [vmem:[#allocation2 + $0x34] sm:$0xf]
        %v1167 = vld [vmem:[#allocation2 + $0x38] sm:$0x1]
        %v1168 = vld [vmem:[#allocation2 + $0x3c] sm:$0xf]
        %v1169 = vld [vmem:[#allocation2 + $0x40] sm:$0xf]
        %v1170 = vld [vmem:[#allocation2 + $0x44] sm:$0x1]
        %v1171 = vld [vmem:[#allocation2 + $0x48] sm:$0xf]
        %v1172 = vld [vmem:[#allocation2 + $0x4c] sm:$0xf]
        %v1173 = vld [vmem:[#allocation2 + $0x50] sm:$0x1]
        %v1174 = vld [vmem:[#allocation2 + $0x54] sm:$0xf]
        %v1175 = vld [vmem:[#allocation2 + $0x58] sm:$0xf]
        %v1176 = vld [vmem:[#allocation2 + $0x5c] sm:$0x1]
        %v1177 = vld [vmem:[#allocation2 + $0x60] sm:$0xf]
        %v1178 = vld [vmem:[#allocation2 + $0x64] sm:$0xf]
        %v1179 = vld [vmem:[#allocation2 + $0x68] sm:$0x1]
        %v1180 = vld [vmem:[#allocation2 + $0x6c] sm:$0xf]
        %v1181 = vld [vmem:[#allocation2 + $0x70] sm:$0xf]
        %v1182 = vld [vmem:[#allocation2 + $0x74] sm:$0x1]
        %v1183 = vld [vmem:[#allocation2 + $0x78] sm:$0xf]
        %v1184 = vld [vmem:[#allocation2 + $0x7c] sm:$0xf]
        %v1185 = vld [vmem:[#allocation2 + $0x80] sm:$0x1]
        %v1186 = vld [vmem:[#allocation2 + $0x84] sm:$0xf]
        %v1187 = vld [vmem:[#allocation2 + $0x88] sm:$0xf]
        %v1188 = vld [vmem:[#allocation2 + $0x8c] sm:$0x1]
        %v1189 = vld [vmem:[#allocation2 + $0x90] sm:$0xf]
        %v1190 = vld [vmem:[#allocation2 + $0x94] sm:$0xf]
        %v1191 = vld [vmem:[#allocation2 + $0x98] sm:$0x1]
        %v1192 = vld [vmem:[#allocation2 + $0x9c] sm:$0xf]
        %v1193 = vld [vmem:[#allocation2 + $0xa0] sm:$0xf]
        %v1194 = vld [vmem:[#allocation2 + $0xa4] sm:$0x1]
        %v1195 = vld [vmem:[#allocation2 + $0xa8] sm:$0xf]
        %v1196 = vld [vmem:[#allocation2 + $0xac] sm:$0xf]
        %v1197 = vld [vmem:[#allocation2 + $0xb0] sm:$0x1]
        %v1198 = vld [vmem:[#allocation2 + $0xb4] sm:$0xf]
        %v1199 = vld [vmem:[#allocation2 + $0xb8] sm:$0xf]
        %v1200 = vld [vmem:[#allocation2 + $0xbc] sm:$0x1]
        %vm1201 = vsmask.f32 3328
        %vm1202 = vsmask.f32 7440
        %vm1203 = vmor %vm1201, %vm1202
        %v1205 = vshrl.u32 %v1153, 16
        %v1207 = vrot.slane %v1205, 4
        %v1208 = vshll.u32 %v1153, 16
        %v1210 = vrot.slane %v1208, 5
        %v1211 = vor.u32 %v1207, %v1210
        %v1212 = vrot.slane %v1211, 4
        %v1214 = vshll.u32 %v1154, 16
        %v1216 = vrot.slane %v1214, 5
        %v1217 = vsel %vm1203, %v1212, %v1216
        %v1218 = vshrl.u32 %v1154, 16
        %v1220 = vrot.slane %v1218, 4
        %v1221 = vor.u32 %v1220, %v1216
        %v1222 = vrot.slane %v1221, 4
        %v1224 = vshll.u32 %v1155, 16
        %v1226 = vrot.slane %v1224, 5
        %v1227 = vsel %vm1203, %v1222, %v1226
        %v1229 = vshrl.u32 %v1156, 16
        %v1231 = vrot.slane %v1229, 4
        %v1232 = vshll.u32 %v1156, 16
        %v1234 = vrot.slane %v1232, 5
        %v1235 = vor.u32 %v1231, %v1234
        %v1236 = vrot.slane %v1235, 4
        %v1238 = vshll.u32 %v1157, 16
        %v1240 = vrot.slane %v1238, 5
        %v1241 = vsel %vm1203, %v1236, %v1240
        %v1242 = vshrl.u32 %v1157, 16
        %v1244 = vrot.slane %v1242, 4
        %v1245 = vor.u32 %v1244, %v1240
        %v1246 = vrot.slane %v1245, 4
        %v1248 = vshll.u32 %v1158, 16
        %v1250 = vrot.slane %v1248, 5
        %v1251 = vsel %vm1203, %v1246, %v1250
        %v1253 = vshrl.u32 %v1159, 16
        %v1255 = vrot.slane %v1253, 4
        %v1256 = vshll.u32 %v1159, 16
        %v1258 = vrot.slane %v1256, 5
        %v1259 = vor.u32 %v1255, %v1258
        %v1260 = vrot.slane %v1259, 4
        %v1262 = vshll.u32 %v1160, 16
        %v1264 = vrot.slane %v1262, 5
        %v1265 = vsel %vm1203, %v1260, %v1264
        %v1266 = vshrl.u32 %v1160, 16
        %v1268 = vrot.slane %v1266, 4
        %v1269 = vor.u32 %v1268, %v1264
        %v1270 = vrot.slane %v1269, 4
        %v1272 = vshll.u32 %v1161, 16
        %v1274 = vrot.slane %v1272, 5
        %v1275 = vsel %vm1203, %v1270, %v1274
        %v1277 = vshrl.u32 %v1162, 16
        %v1279 = vrot.slane %v1277, 4
        %v1280 = vshll.u32 %v1162, 16
        %v1282 = vrot.slane %v1280, 5
        %v1283 = vor.u32 %v1279, %v1282
        %v1284 = vrot.slane %v1283, 4
        %v1286 = vshll.u32 %v1163, 16
        %v1288 = vrot.slane %v1286, 5
        %v1289 = vsel %vm1203, %v1284, %v1288
        %v1290 = vshrl.u32 %v1163, 16
        %v1292 = vrot.slane %v1290, 4
        %v1293 = vor.u32 %v1292, %v1288
        %v1294 = vrot.slane %v1293, 4
        %v1296 = vshll.u32 %v1164, 16
        %v1298 = vrot.slane %v1296, 5
        %v1299 = vsel %vm1203, %v1294, %v1298
        %v1301 = vshrl.u32 %v1165, 16
        %v1303 = vrot.slane %v1301, 4
        %v1304 = vshll.u32 %v1165, 16
        %v1306 = vrot.slane %v1304, 5
        %v1307 = vor.u32 %v1303, %v1306
        %v1308 = vrot.slane %v1307, 4
        %v1310 = vshll.u32 %v1166, 16
        %v1312 = vrot.slane %v1310, 5
        %v1313 = vsel %vm1203, %v1308, %v1312
        %v1314 = vshrl.u32 %v1166, 16
        %v1316 = vrot.slane %v1314, 4
        %v1317 = vor.u32 %v1316, %v1312
        %v1318 = vrot.slane %v1317, 4
        %v1320 = vshll.u32 %v1167, 16
        %v1322 = vrot.slane %v1320, 5
        %v1323 = vsel %vm1203, %v1318, %v1322
        %v1325 = vshrl.u32 %v1168, 16
        %v1327 = vrot.slane %v1325, 4
        %v1328 = vshll.u32 %v1168, 16
        %v1330 = vrot.slane %v1328, 5
        %v1331 = vor.u32 %v1327, %v1330
        %v1332 = vrot.slane %v1331, 4
        %v1334 = vshll.u32 %v1169, 16
        %v1336 = vrot.slane %v1334, 5
        %v1337 = vsel %vm1203, %v1332, %v1336
        %v1338 = vshrl.u32 %v1169, 16
        %v1340 = vrot.slane %v1338, 4
        %v1341 = vor.u32 %v1340, %v1336
        %v1342 = vrot.slane %v1341, 4
        %v1344 = vshll.u32 %v1170, 16
        %v1346 = vrot.slane %v1344, 5
        %v1347 = vsel %vm1203, %v1342, %v1346
        %v1349 = vshrl.u32 %v1171, 16
        %v1351 = vrot.slane %v1349, 4
        %v1352 = vshll.u32 %v1171, 16
        %v1354 = vrot.slane %v1352, 5
        %v1355 = vor.u32 %v1351, %v1354
        %v1356 = vrot.slane %v1355, 4
        %v1358 = vshll.u32 %v1172, 16
        %v1360 = vrot.slane %v1358, 5
        %v1361 = vsel %vm1203, %v1356, %v1360
        %v1362 = vshrl.u32 %v1172, 16
        %v1364 = vrot.slane %v1362, 4
        %v1365 = vor.u32 %v1364, %v1360
        %v1366 = vrot.slane %v1365, 4
        %v1368 = vshll.u32 %v1173, 16
        %v1370 = vrot.slane %v1368, 5
        %v1371 = vsel %vm1203, %v1366, %v1370
        %v1373 = vshrl.u32 %v1174, 16
        %v1375 = vrot.slane %v1373, 4
        %v1376 = vshll.u32 %v1174, 16
        %v1378 = vrot.slane %v1376, 5
        %v1379 = vor.u32 %v1375, %v1378
        %v1380 = vrot.slane %v1379, 4
        %v1382 = vshll.u32 %v1175, 16
        %v1384 = vrot.slane %v1382, 5
        %v1385 = vsel %vm1203, %v1380, %v1384
        %v1386 = vshrl.u32 %v1175, 16
        %v1388 = vrot.slane %v1386, 4
        %v1389 = vor.u32 %v1388, %v1384
        %v1390 = vrot.slane %v1389, 4
        %v1392 = vshll.u32 %v1176, 16
        %v1394 = vrot.slane %v1392, 5
        %v1395 = vsel %vm1203, %v1390, %v1394
        %v1397 = vshrl.u32 %v1177, 16
        %v1399 = vrot.slane %v1397, 4
        %v1400 = vshll.u32 %v1177, 16
        %v1402 = vrot.slane %v1400, 5
        %v1403 = vor.u32 %v1399, %v1402
        %v1404 = vrot.slane %v1403, 4
        %v1406 = vshll.u32 %v1178, 16
        %v1408 = vrot.slane %v1406, 5
        %v1409 = vsel %vm1203, %v1404, %v1408
        %v1410 = vshrl.u32 %v1178, 16
        %v1412 = vrot.slane %v1410, 4
        %v1413 = vor.u32 %v1412, %v1408
        %v1414 = vrot.slane %v1413, 4
        %v1416 = vshll.u32 %v1179, 16
        %v1418 = vrot.slane %v1416, 5
        %v1419 = vsel %vm1203, %v1414, %v1418
        %v1421 = vshrl.u32 %v1180, 16
        %v1423 = vrot.slane %v1421, 4
        %v1424 = vshll.u32 %v1180, 16
        %v1426 = vrot.slane %v1424, 5
        %v1427 = vor.u32 %v1423, %v1426
        %v1428 = vrot.slane %v1427, 4
        %v1430 = vshll.u32 %v1181, 16
        %v1432 = vrot.slane %v1430, 5
        %v1433 = vsel %vm1203, %v1428, %v1432
        %v1434 = vshrl.u32 %v1181, 16
        %v1436 = vrot.slane %v1434, 4
        %v1437 = vor.u32 %v1436, %v1432
        %v1438 = vrot.slane %v1437, 4
        %v1440 = vshll.u32 %v1182, 16
        %v1442 = vrot.slane %v1440, 5
        %v1443 = vsel %vm1203, %v1438, %v1442
        %v1445 = vshrl.u32 %v1183, 16
        %v1447 = vrot.slane %v1445, 4
        %v1448 = vshll.u32 %v1183, 16
        %v1450 = vrot.slane %v1448, 5
        %v1451 = vor.u32 %v1447, %v1450
        %v1452 = vrot.slane %v1451, 4
        %v1454 = vshll.u32 %v1184, 16
        %v1456 = vrot.slane %v1454, 5
        %v1457 = vsel %vm1203, %v1452, %v1456
        %v1458 = vshrl.u32 %v1184, 16
        %v1460 = vrot.slane %v1458, 4
        %v1461 = vor.u32 %v1460, %v1456
        %v1462 = vrot.slane %v1461, 4
        %v1464 = vshll.u32 %v1185, 16
        %v1466 = vrot.slane %v1464, 5
        %v1467 = vsel %vm1203, %v1462, %v1466
        %v1469 = vshrl.u32 %v1186, 16
        %v1471 = vrot.slane %v1469, 4
        %v1472 = vshll.u32 %v1186, 16
        %v1474 = vrot.slane %v1472, 5
        %v1475 = vor.u32 %v1471, %v1474
        %v1476 = vrot.slane %v1475, 4
        %v1478 = vshll.u32 %v1187, 16
        %v1480 = vrot.slane %v1478, 5
        %v1481 = vsel %vm1203, %v1476, %v1480
        %v1482 = vshrl.u32 %v1187, 16
        %v1484 = vrot.slane %v1482, 4
        %v1485 = vor.u32 %v1484, %v1480
        %v1486 = vrot.slane %v1485, 4
        %v1488 = vshll.u32 %v1188, 16
        %v1490 = vrot.slane %v1488, 5
        %v1491 = vsel %vm1203, %v1486, %v1490
        %v1493 = vshrl.u32 %v1189, 16
        %v1495 = vrot.slane %v1493, 4
        %v1496 = vshll.u32 %v1189, 16
        %v1498 = vrot.slane %v1496, 5
        %v1499 = vor.u32 %v1495, %v1498
        %v1500 = vrot.slane %v1499, 4
        %v1502 = vshll.u32 %v1190, 16
        %v1504 = vrot.slane %v1502, 5
        %v1505 = vsel %vm1203, %v1500, %v1504
        %v1506 = vshrl.u32 %v1190, 16
        %v1508 = vrot.slane %v1506, 4
        %v1509 = vor.u32 %v1508, %v1504
        %v1510 = vrot.slane %v1509, 4
        %v1512 = vshll.u32 %v1191, 16
        %v1514 = vrot.slane %v1512, 5
        %v1515 = vsel %vm1203, %v1510, %v1514
        %v1517 = vshrl.u32 %v1192, 16
        %v1519 = vrot.slane %v1517, 4
        %v1520 = vshll.u32 %v1192, 16
        %v1522 = vrot.slane %v1520, 5
        %v1523 = vor.u32 %v1519, %v1522
        %v1524 = vrot.slane %v1523, 4
        %v1526 = vshll.u32 %v1193, 16
        %v1528 = vrot.slane %v1526, 5
        %v1529 = vsel %vm1203, %v1524, %v1528
        %v1530 = vshrl.u32 %v1193, 16
        %v1532 = vrot.slane %v1530, 4
        %v1533 = vor.u32 %v1532, %v1528
        %v1534 = vrot.slane %v1533, 4
        %v1536 = vshll.u32 %v1194, 16
        %v1538 = vrot.slane %v1536, 5
        %v1539 = vsel %vm1203, %v1534, %v1538
        %v1541 = vshrl.u32 %v1195, 16
        %v1543 = vrot.slane %v1541, 4
        %v1544 = vshll.u32 %v1195, 16
        %v1546 = vrot.slane %v1544, 5
        %v1547 = vor.u32 %v1543, %v1546
        %v1548 = vrot.slane %v1547, 4
        %v1550 = vshll.u32 %v1196, 16
        %v1552 = vrot.slane %v1550, 5
        %v1553 = vsel %vm1203, %v1548, %v1552
        %v1554 = vshrl.u32 %v1196, 16
        %v1556 = vrot.slane %v1554, 4
        %v1557 = vor.u32 %v1556, %v1552
        %v1558 = vrot.slane %v1557, 4
        %v1560 = vshll.u32 %v1197, 16
        %v1562 = vrot.slane %v1560, 5
        %v1563 = vsel %vm1203, %v1558, %v1562
        %v1565 = vshrl.u32 %v1198, 16
        %v1567 = vrot.slane %v1565, 4
        %v1568 = vshll.u32 %v1198, 16
        %v1570 = vrot.slane %v1568, 5
        %v1571 = vor.u32 %v1567, %v1570
        %v1572 = vrot.slane %v1571, 4
        %v1574 = vshll.u32 %v1199, 16
        %v1576 = vrot.slane %v1574, 5
        %v1577 = vsel %vm1203, %v1572, %v1576
        %v1578 = vshrl.u32 %v1199, 16
        %v1580 = vrot.slane %v1578, 4
        %v1581 = vor.u32 %v1580, %v1576
        %v1582 = vrot.slane %v1581, 4
        %v1584 = vshll.u32 %v1200, 16
        %v1586 = vrot.slane %v1584, 5
        %v1587 = vsel %vm1203, %v1582, %v1586
        %1620 = vst [vmem:[#allocation3 + $0x4] sm:$0xf] %v1217
        %1621 = vst [vmem:[#allocation3 + $0x28] sm:$0xf] %v1227
        %1622 = vst [vmem:[#allocation3 + $0x4c] sm:$0xf] %v1241
        %1623 = vst [vmem:[#allocation3 + $0x70] sm:$0xf] %v1251
        %1624 = vst [vmem:[#allocation3 + $0x94] sm:$0xf] %v1265
        %1625 = vst [vmem:[#allocation3 + $0xb8] sm:$0xf] %v1275
        %1626 = vst [vmem:[#allocation3 + $0xdc] sm:$0xf] %v1289
        %1627 = vst [vmem:[#allocation3 + $0x100] sm:$0xf] %v1299
        %1628 = vst [vmem:[#allocation3 + $0x124] sm:$0xf] %v1313
        %1629 = vst [vmem:[#allocation3 + $0x148] sm:$0xf] %v1323
        %1630 = vst [vmem:[#allocation3 + $0x16c] sm:$0xf] %v1337
        %1631 = vst [vmem:[#allocation3 + $0x190] sm:$0xf] %v1347
        %1632 = vst [vmem:[#allocation3 + $0x1b4] sm:$0xf] %v1361
        %1633 = vst [vmem:[#allocation3 + $0x1d8] sm:$0xf] %v1371
        %1634 = vst [vmem:[#allocation3 + $0x1fc] sm:$0xf] %v1385
        %1635 = vst [vmem:[#allocation3 + $0x220] sm:$0xf] %v1395
        %1636 = vst [vmem:[#allocation3 + $0x244] sm:$0xf] %v1409
        %1637 = vst [vmem:[#allocation3 + $0x268] sm:$0xf] %v1419
        %1638 = vst [vmem:[#allocation3 + $0x28c] sm:$0xf] %v1433
        %1639 = vst [vmem:[#allocation3 + $0x2b0] sm:$0xf] %v1443
        %1640 = vst [vmem:[#allocation3 + $0x2d4] sm:$0xf] %v1457
        %1641 = vst [vmem:[#allocation3 + $0x2f8] sm:$0xf] %v1467
        %1642 = vst [vmem:[#allocation3 + $0x31c] sm:$0xf] %v1481
        %1643 = vst [vmem:[#allocation3 + $0x340] sm:$0xf] %v1491
        %1644 = vst [vmem:[#allocation3 + $0x364] sm:$0xf] %v1505
        %1645 = vst [vmem:[#allocation3 + $0x388] sm:$0xf] %v1515
        %1646 = vst [vmem:[#allocation3 + $0x3ac] sm:$0xf] %v1529
        %1647 = vst [vmem:[#allocation3 + $0x3d0] sm:$0xf] %v1539
        %1648 = vst [vmem:[#allocation3 + $0x3f4] sm:$0xf] %v1553
        %1649 = vst [vmem:[#allocation3 + $0x418] sm:$0xf] %v1563
        %1650 = vst [vmem:[#allocation3 + $0x43c] sm:$0xf] %v1577
        %1651 = vst [vmem:[#allocation3 + $0x460] sm:$0xf] %v1587
        %v1652 = vld [vmem:[#allocation2] sm:$0xe]
        %v1653 = vld [vmem:[#allocation2 + $0x4] sm:$0xf]
        %v1654 = vld [vmem:[#allocation2 + $0x8] sm:$0x1]
        %v1655 = vld [vmem:[#allocation2 + $0xc] sm:$0xe]
        %v1656 = vld [vmem:[#allocation2 + $0x10] sm:$0xf]
        %v1657 = vld [vmem:[#allocation2 + $0x14] sm:$0x1]
        %v1658 = vld [vmem:[#allocation2 + $0x18] sm:$0xe]
        %v1659 = vld [vmem:[#allocation2 + $0x1c] sm:$0xf]
        %v1660 = vld [vmem:[#allocation2 + $0x20] sm:$0x1]
        %v1661 = vld [vmem:[#allocation2 + $0x24] sm:$0xe]
        %v1662 = vld [vmem:[#allocation2 + $0x28] sm:$0xf]
        %v1663 = vld [vmem:[#allocation2 + $0x2c] sm:$0x1]
        %v1664 = vld [vmem:[#allocation2 + $0x30] sm:$0xe]
        %v1665 = vld [vmem:[#allocation2 + $0x34] sm:$0xf]
        %v1666 = vld [vmem:[#allocation2 + $0x38] sm:$0x1]
        %v1667 = vld [vmem:[#allocation2 + $0x3c] sm:$0xe]
        %v1668 = vld [vmem:[#allocation2 + $0x40] sm:$0xf]
        %v1669 = vld [vmem:[#allocation2 + $0x44] sm:$0x1]
        %v1670 = vld [vmem:[#allocation2 + $0x48] sm:$0xe]
        %v1671 = vld [vmem:[#allocation2 + $0x4c] sm:$0xf]
        %v1672 = vld [vmem:[#allocation2 + $0x50] sm:$0x1]
        %v1673 = vld [vmem:[#allocation2 + $0x54] sm:$0xe]
        %v1674 = vld [vmem:[#allocation2 + $0x58] sm:$0xf]
        %v1675 = vld [vmem:[#allocation2 + $0x5c] sm:$0x1]
        %v1676 = vld [vmem:[#allocation2 + $0x60] sm:$0xe]
        %v1677 = vld [vmem:[#allocation2 + $0x64] sm:$0xf]
        %v1678 = vld [vmem:[#allocation2 + $0x68] sm:$0x1]
        %v1679 = vld [vmem:[#allocation2 + $0x6c] sm:$0xe]
        %v1680 = vld [vmem:[#allocation2 + $0x70] sm:$0xf]
        %v1681 = vld [vmem:[#allocation2 + $0x74] sm:$0x1]
        %v1682 = vld [vmem:[#allocation2 + $0x78] sm:$0xe]
        %v1683 = vld [vmem:[#allocation2 + $0x7c] sm:$0xf]
        %v1684 = vld [vmem:[#allocation2 + $0x80] sm:$0x1]
        %v1685 = vld [vmem:[#allocation2 + $0x84] sm:$0xe]
        %v1686 = vld [vmem:[#allocation2 + $0x88] sm:$0xf]
        %v1687 = vld [vmem:[#allocation2 + $0x8c] sm:$0x1]
        %v1688 = vld [vmem:[#allocation2 + $0x90] sm:$0xe]
        %v1689 = vld [vmem:[#allocation2 + $0x94] sm:$0xf]
        %v1690 = vld [vmem:[#allocation2 + $0x98] sm:$0x1]
        %v1691 = vld [vmem:[#allocation2 + $0x9c] sm:$0xe]
        %v1692 = vld [vmem:[#allocation2 + $0xa0] sm:$0xf]
        %v1693 = vld [vmem:[#allocation2 + $0xa4] sm:$0x1]
        %v1694 = vld [vmem:[#allocation2 + $0xa8] sm:$0xe]
        %v1695 = vld [vmem:[#allocation2 + $0xac] sm:$0xf]
        %v1696 = vld [vmem:[#allocation2 + $0xb0] sm:$0x1]
        %v1697 = vld [vmem:[#allocation2 + $0xb4] sm:$0xe]
        %v1698 = vld [vmem:[#allocation2 + $0xb8] sm:$0xf]
        %v1699 = vld [vmem:[#allocation2 + $0xbc] sm:$0x1]
        %vm1748 = vcmask 1042432
        %vm1749 = vcmask 1046532
        %vm1750 = vmor %vm1748, %vm1749
        %v1751 = vrot.slane %v1652, 5
        %v1752 = vrot.slane %v1751, 4
        %v1753 = vrot.slane %v1653, 5
        %v1754 = vsel %vm1750, %v1752, %v1753
        %v1755 = vrot.slane %v1753, 4
        %v1756 = vrot.slane %v1654, 5
        %v1757 = vsel %vm1750, %v1755, %v1756
        %v1758 = vrot.slane %v1655, 5
        %v1759 = vrot.slane %v1758, 4
        %v1760 = vrot.slane %v1656, 5
        %v1761 = vsel %vm1750, %v1759, %v1760
        %v1762 = vrot.slane %v1760, 4
        %v1763 = vrot.slane %v1657, 5
        %v1764 = vsel %vm1750, %v1762, %v1763
        %v1765 = vrot.slane %v1658, 5
        %v1766 = vrot.slane %v1765, 4
        %v1767 = vrot.slane %v1659, 5
        %v1768 = vsel %vm1750, %v1766, %v1767
        %v1769 = vrot.slane %v1767, 4
        %v1770 = vrot.slane %v1660, 5
        %v1771 = vsel %vm1750, %v1769, %v1770
        %v1772 = vrot.slane %v1661, 5
        %v1773 = vrot.slane %v1772, 4
        %v1774 = vrot.slane %v1662, 5
        %v1775 = vsel %vm1750, %v1773, %v1774
        %v1776 = vrot.slane %v1774, 4
        %v1777 = vrot.slane %v1663, 5
        %v1778 = vsel %vm1750, %v1776, %v1777
        %v1779 = vrot.slane %v1664, 5
        %v1780 = vrot.slane %v1779, 4
        %v1781 = vrot.slane %v1665, 5
        %v1782 = vsel %vm1750, %v1780, %v1781
        %v1783 = vrot.slane %v1781, 4
        %v1784 = vrot.slane %v1666, 5
        %v1785 = vsel %vm1750, %v1783, %v1784
        %v1786 = vrot.slane %v1667, 5
        %v1787 = vrot.slane %v1786, 4
        %v1788 = vrot.slane %v1668, 5
        %v1789 = vsel %vm1750, %v1787, %v1788
        %v1790 = vrot.slane %v1788, 4
        %v1791 = vrot.slane %v1669, 5
        %v1792 = vsel %vm1750, %v1790, %v1791
        %v1793 = vrot.slane %v1670, 5
        %v1794 = vrot.slane %v1793, 4
        %v1795 = vrot.slane %v1671, 5
        %v1796 = vsel %vm1750, %v1794, %v1795
        %v1797 = vrot.slane %v1795, 4
        %v1798 = vrot.slane %v1672, 5
        %v1799 = vsel %vm1750, %v1797, %v1798
        %v1800 = vrot.slane %v1673, 5
        %v1801 = vrot.slane %v1800, 4
        %v1802 = vrot.slane %v1674, 5
        %v1803 = vsel %vm1750, %v1801, %v1802
        %v1804 = vrot.slane %v1802, 4
        %v1805 = vrot.slane %v1675, 5
        %v1806 = vsel %vm1750, %v1804, %v1805
        %v1807 = vrot.slane %v1676, 5
        %v1808 = vrot.slane %v1807, 4
        %v1809 = vrot.slane %v1677, 5
        %v1810 = vsel %vm1750, %v1808, %v1809
        %v1811 = vrot.slane %v1809, 4
        %v1812 = vrot.slane %v1678, 5
        %v1813 = vsel %vm1750, %v1811, %v1812
        %v1814 = vrot.slane %v1679, 5
        %v1815 = vrot.slane %v1814, 4
        %v1816 = vrot.slane %v1680, 5
        %v1817 = vsel %vm1750, %v1815, %v1816
        %v1818 = vrot.slane %v1816, 4
        %v1819 = vrot.slane %v1681, 5
        %v1820 = vsel %vm1750, %v1818, %v1819
        %v1821 = vrot.slane %v1682, 5
        %v1822 = vrot.slane %v1821, 4
        %v1823 = vrot.slane %v1683, 5
        %v1824 = vsel %vm1750, %v1822, %v1823
        %v1825 = vrot.slane %v1823, 4
        %v1826 = vrot.slane %v1684, 5
        %v1827 = vsel %vm1750, %v1825, %v1826
        %v1828 = vrot.slane %v1685, 5
        %v1829 = vrot.slane %v1828, 4
        %v1830 = vrot.slane %v1686, 5
        %v1831 = vsel %vm1750, %v1829, %v1830
        %v1832 = vrot.slane %v1830, 4
        %v1833 = vrot.slane %v1687, 5
        %v1834 = vsel %vm1750, %v1832, %v1833
        %v1835 = vrot.slane %v1688, 5
        %v1836 = vrot.slane %v1835, 4
        %v1837 = vrot.slane %v1689, 5
        %v1838 = vsel %vm1750, %v1836, %v1837
        %v1839 = vrot.slane %v1837, 4
        %v1840 = vrot.slane %v1690, 5
        %v1841 = vsel %vm1750, %v1839, %v1840
        %v1842 = vrot.slane %v1691, 5
        %v1843 = vrot.slane %v1842, 4
        %v1844 = vrot.slane %v1692, 5
        %v1845 = vsel %vm1750, %v1843, %v1844
        %v1846 = vrot.slane %v1844, 4
        %v1847 = vrot.slane %v1693, 5
        %v1848 = vsel %vm1750, %v1846, %v1847
        %v1849 = vrot.slane %v1694, 5
        %v1850 = vrot.slane %v1849, 4
        %v1851 = vrot.slane %v1695, 5
        %v1852 = vsel %vm1750, %v1850, %v1851
        %v1853 = vrot.slane %v1851, 4
        %v1854 = vrot.slane %v1696, 5
        %v1855 = vsel %vm1750, %v1853, %v1854
        %v1856 = vrot.slane %v1697, 5
        %v1857 = vrot.slane %v1856, 4
        %v1858 = vrot.slane %v1698, 5
        %v1859 = vsel %vm1750, %v1857, %v1858
        %v1860 = vrot.slane %v1858, 4
        %v1861 = vrot.slane %v1699, 5
        %v1862 = vsel %vm1750, %v1860, %v1861
        %1895 = vst [vmem:[#allocation3 + $0x8] sm:$0xf] %v1754
        %1896 = vst [vmem:[#allocation3 + $0x2c] sm:$0xf] %v1757
        %1897 = vst [vmem:[#allocation3 + $0x50] sm:$0xf] %v1761
        %1898 = vst [vmem:[#allocation3 + $0x74] sm:$0xf] %v1764
        %1899 = vst [vmem:[#allocation3 + $0x98] sm:$0xf] %v1768
        %1900 = vst [vmem:[#allocation3 + $0xbc] sm:$0xf] %v1771
        %1901 = vst [vmem:[#allocation3 + $0xe0] sm:$0xf] %v1775
        %1902 = vst [vmem:[#allocation3 + $0x104] sm:$0xf] %v1778
        %1903 = vst [vmem:[#allocation3 + $0x128] sm:$0xf] %v1782
        %1904 = vst [vmem:[#allocation3 + $0x14c] sm:$0xf] %v1785
        %1905 = vst [vmem:[#allocation3 + $0x170] sm:$0xf] %v1789
        %1906 = vst [vmem:[#allocation3 + $0x194] sm:$0xf] %v1792
        %1907 = vst [vmem:[#allocation3 + $0x1b8] sm:$0xf] %v1796
        %1908 = vst [vmem:[#allocation3 + $0x1dc] sm:$0xf] %v1799
        %1909 = vst [vmem:[#allocation3 + $0x200] sm:$0xf] %v1803
        %1910 = vst [vmem:[#allocation3 + $0x224] sm:$0xf] %v1806
        %1911 = vst [vmem:[#allocation3 + $0x248] sm:$0xf] %v1810
        %1912 = vst [vmem:[#allocation3 + $0x26c] sm:$0xf] %v1813
        %1913 = vst [vmem:[#allocation3 + $0x290] sm:$0xf] %v1817
        %1914 = vst [vmem:[#allocation3 + $0x2b4] sm:$0xf] %v1820
        %1915 = vst [vmem:[#allocation3 + $0x2d8] sm:$0xf] %v1824
        %1916 = vst [vmem:[#allocation3 + $0x2fc] sm:$0xf] %v1827
        %1917 = vst [vmem:[#allocation3 + $0x320] sm:$0xf] %v1831
        %1918 = vst [vmem:[#allocation3 + $0x344] sm:$0xf] %v1834
        %1919 = vst [vmem:[#allocation3 + $0x368] sm:$0xf] %v1838
        %1920 = vst [vmem:[#allocation3 + $0x38c] sm:$0xf] %v1841
        %1921 = vst [vmem:[#allocation3 + $0x3b0] sm:$0xf] %v1845
        %1922 = vst [vmem:[#allocation3 + $0x3d4] sm:$0xf] %v1848
        %1923 = vst [vmem:[#allocation3 + $0x3f8] sm:$0xf] %v1852
        %1924 = vst [vmem:[#allocation3 + $0x41c] sm:$0xf] %v1855
        %1925 = vst [vmem:[#allocation3 + $0x440] sm:$0xf] %v1859
        %1926 = vst [vmem:[#allocation3 + $0x464] sm:$0xf] %v1862
        %v1927 = vld [vmem:[%s974] sm:$0xf]
        %v1928 = vld [vmem:[%s974 + $0x4] sm:$0xf]
        %v1929 = vld [vmem:[%s974 + $0xc] sm:$0xf]
        %v1930 = vld [vmem:[%s974 + $0x10] sm:$0xf]
        %v1931 = vld [vmem:[%s974 + $0x18] sm:$0xf]
        %v1932 = vld [vmem:[%s974 + $0x1c] sm:$0xf]
        %v1933 = vld [vmem:[%s974 + $0x24] sm:$0xf]
        %v1934 = vld [vmem:[%s974 + $0x28] sm:$0xf]
        %v1935 = vld [vmem:[%s974 + $0x30] sm:$0xf]
        %v1936 = vld [vmem:[%s974 + $0x34] sm:$0xf]
        %v1937 = vld [vmem:[%s974 + $0x3c] sm:$0xf]
        %v1938 = vld [vmem:[%s974 + $0x40] sm:$0xf]
        %v1939 = vld [vmem:[%s974 + $0x48] sm:$0xf]
        %v1940 = vld [vmem:[%s974 + $0x4c] sm:$0xf]
        %v1941 = vld [vmem:[%s974 + $0x54] sm:$0xf]
        %v1942 = vld [vmem:[%s974 + $0x58] sm:$0xf]
        %v1943 = vld [vmem:[%s974 + $0x60] sm:$0xf]
        %v1944 = vld [vmem:[%s974 + $0x64] sm:$0xf]
        %v1945 = vld [vmem:[%s974 + $0x6c] sm:$0xf]
        %v1946 = vld [vmem:[%s974 + $0x70] sm:$0xf]
        %v1947 = vld [vmem:[%s974 + $0x78] sm:$0xf]
        %v1948 = vld [vmem:[%s974 + $0x7c] sm:$0xf]
        %v1949 = vld [vmem:[%s974 + $0x84] sm:$0xf]
        %v1950 = vld [vmem:[%s974 + $0x88] sm:$0xf]
        %v1951 = vld [vmem:[%s974 + $0x90] sm:$0xf]
        %v1952 = vld [vmem:[%s974 + $0x94] sm:$0xf]
        %v1953 = vld [vmem:[%s974 + $0x9c] sm:$0xf]
        %v1954 = vld [vmem:[%s974 + $0xa0] sm:$0xf]
        %v1955 = vld [vmem:[%s974 + $0xa8] sm:$0xf]
        %v1956 = vld [vmem:[%s974 + $0xac] sm:$0xf]
        %v1957 = vld [vmem:[%s974 + $0xb4] sm:$0xf]
        %v1958 = vld [vmem:[%s974 + $0xb8] sm:$0xf]
        %1959 = vst [vmem:[#allocation3 + $0xc] sm:$0xf] %v1927
        %1960 = vst [vmem:[#allocation3 + $0x30] sm:$0xf] %v1928
        %1961 = vst [vmem:[#allocation3 + $0x54] sm:$0xf] %v1929
        %1962 = vst [vmem:[#allocation3 + $0x78] sm:$0xf] %v1930
        %1963 = vst [vmem:[#allocation3 + $0x9c] sm:$0xf] %v1931
        %1964 = vst [vmem:[#allocation3 + $0xc0] sm:$0xf] %v1932
        %1965 = vst [vmem:[#allocation3 + $0xe4] sm:$0xf] %v1933
        %1966 = vst [vmem:[#allocation3 + $0x108] sm:$0xf] %v1934
        %1967 = vst [vmem:[#allocation3 + $0x12c] sm:$0xf] %v1935
        %1968 = vst [vmem:[#allocation3 + $0x150] sm:$0xf] %v1936
        %1969 = vst [vmem:[#allocation3 + $0x174] sm:$0xf] %v1937
        %1970 = vst [vmem:[#allocation3 + $0x198] sm:$0xf] %v1938
        %1971 = vst [vmem:[#allocation3 + $0x1bc] sm:$0xf] %v1939
        %1972 = vst [vmem:[#allocation3 + $0x1e0] sm:$0xf] %v1940
        %1973 = vst [vmem:[#allocation3 + $0x204] sm:$0xf] %v1941
        %1974 = vst [vmem:[#allocation3 + $0x228] sm:$0xf] %v1942
        %1975 = vst [vmem:[#allocation3 + $0x24c] sm:$0xf] %v1943
        %1976 = vst [vmem:[#allocation3 + $0x270] sm:$0xf] %v1944
        %1977 = vst [vmem:[#allocation3 + $0x294] sm:$0xf] %v1945
        %1978 = vst [vmem:[#allocation3 + $0x2b8] sm:$0xf] %v1946
        %1979 = vst [vmem:[#allocation3 + $0x2dc] sm:$0xf] %v1947
        %1980 = vst [vmem:[#allocation3 + $0x300] sm:$0xf] %v1948
        %1981 = vst [vmem:[#allocation3 + $0x324] sm:$0xf] %v1949
        %1982 = vst [vmem:[#allocation3 + $0x348] sm:$0xf] %v1950
        %1983 = vst [vmem:[#allocation3 + $0x36c] sm:$0xf] %v1951
        %1984 = vst [vmem:[#allocation3 + $0x390] sm:$0xf] %v1952
        %1985 = vst [vmem:[#allocation3 + $0x3b4] sm:$0xf] %v1953
        %1986 = vst [vmem:[#allocation3 + $0x3d8] sm:$0xf] %v1954
        %1987 = vst [vmem:[#allocation3 + $0x3fc] sm:$0xf] %v1955
        %1988 = vst [vmem:[#allocation3 + $0x420] sm:$0xf] %v1956
        %1989 = vst [vmem:[#allocation3 + $0x444] sm:$0xf] %v1957
        %1990 = vst [vmem:[#allocation3 + $0x468] sm:$0xf] %v1958
        %v1991 = vld [vmem:[%s974] sm:$0xf]
        %v1992 = vld [vmem:[%s974 + $0x4] sm:$0xf]
        %v1993 = vld [vmem:[%s974 + $0x8] sm:$0x1]
        %v1994 = vld [vmem:[%s974 + $0xc] sm:$0xf]
        %v1995 = vld [vmem:[%s974 + $0x10] sm:$0xf]
        %v1996 = vld [vmem:[%s974 + $0x14] sm:$0x1]
        %v1997 = vld [vmem:[%s974 + $0x18] sm:$0xf]
        %v1998 = vld [vmem:[%s974 + $0x1c] sm:$0xf]
        %v1999 = vld [vmem:[%s974 + $0x20] sm:$0x1]
        %v2000 = vld [vmem:[%s974 + $0x24] sm:$0xf]
        %v2001 = vld [vmem:[%s974 + $0x28] sm:$0xf]
        %v2002 = vld [vmem:[%s974 + $0x2c] sm:$0x1]
        %v2003 = vld [vmem:[%s974 + $0x30] sm:$0xf]
        %v2004 = vld [vmem:[%s974 + $0x34] sm:$0xf]
        %v2005 = vld [vmem:[%s974 + $0x38] sm:$0x1]
        %v2006 = vld [vmem:[%s974 + $0x3c] sm:$0xf]
        %v2007 = vld [vmem:[%s974 + $0x40] sm:$0xf]
        %v2008 = vld [vmem:[%s974 + $0x44] sm:$0x1]
        %v2009 = vld [vmem:[%s974 + $0x48] sm:$0xf]
        %v2010 = vld [vmem:[%s974 + $0x4c] sm:$0xf]
        %v2011 = vld [vmem:[%s974 + $0x50] sm:$0x1]
        %v2012 = vld [vmem:[%s974 + $0x54] sm:$0xf]
        %v2013 = vld [vmem:[%s974 + $0x58] sm:$0xf]
        %v2014 = vld [vmem:[%s974 + $0x5c] sm:$0x1]
        %v2015 = vld [vmem:[%s974 + $0x60] sm:$0xf]
        %v2016 = vld [vmem:[%s974 + $0x64] sm:$0xf]
        %v2017 = vld [vmem:[%s974 + $0x68] sm:$0x1]
        %v2018 = vld [vmem:[%s974 + $0x6c] sm:$0xf]
        %v2019 = vld [vmem:[%s974 + $0x70] sm:$0xf]
        %v2020 = vld [vmem:[%s974 + $0x74] sm:$0x1]
        %v2021 = vld [vmem:[%s974 + $0x78] sm:$0xf]
        %v2022 = vld [vmem:[%s974 + $0x7c] sm:$0xf]
        %v2023 = vld [vmem:[%s974 + $0x80] sm:$0x1]
        %v2024 = vld [vmem:[%s974 + $0x84] sm:$0xf]
        %v2025 = vld [vmem:[%s974 + $0x88] sm:$0xf]
        %v2026 = vld [vmem:[%s974 + $0x8c] sm:$0x1]
        %v2027 = vld [vmem:[%s974 + $0x90] sm:$0xf]
        %v2028 = vld [vmem:[%s974 + $0x94] sm:$0xf]
        %v2029 = vld [vmem:[%s974 + $0x98] sm:$0x1]
        %v2030 = vld [vmem:[%s974 + $0x9c] sm:$0xf]
        %v2031 = vld [vmem:[%s974 + $0xa0] sm:$0xf]
        %v2032 = vld [vmem:[%s974 + $0xa4] sm:$0x1]
        %v2033 = vld [vmem:[%s974 + $0xa8] sm:$0xf]
        %v2034 = vld [vmem:[%s974 + $0xac] sm:$0xf]
        %v2035 = vld [vmem:[%s974 + $0xb0] sm:$0x1]
        %v2036 = vld [vmem:[%s974 + $0xb4] sm:$0xf]
        %v2037 = vld [vmem:[%s974 + $0xb8] sm:$0xf]
        %v2038 = vld [vmem:[%s974 + $0xbc] sm:$0x1]
        %v2040 = vshrl.u32 %v1991, 16
        %v2042 = vrot.slane %v2040, 4
        %v2043 = vshll.u32 %v1991, 16
        %v2045 = vrot.slane %v2043, 5
        %v2046 = vor.u32 %v2042, %v2045
        %v2047 = vrot.slane %v2046, 4
        %v2049 = vshll.u32 %v1992, 16
        %v2051 = vrot.slane %v2049, 5
        %v2052 = vsel %vm1203, %v2047, %v2051
        %v2053 = vshrl.u32 %v1992, 16
        %v2055 = vrot.slane %v2053, 4
        %v2056 = vor.u32 %v2055, %v2051
        %v2057 = vrot.slane %v2056, 4
        %v2059 = vshll.u32 %v1993, 16
        %v2061 = vrot.slane %v2059, 5
        %v2062 = vsel %vm1203, %v2057, %v2061
        %v2064 = vshrl.u32 %v1994, 16
        %v2066 = vrot.slane %v2064, 4
        %v2067 = vshll.u32 %v1994, 16
        %v2069 = vrot.slane %v2067, 5
        %v2070 = vor.u32 %v2066, %v2069
        %v2071 = vrot.slane %v2070, 4
        %v2073 = vshll.u32 %v1995, 16
        %v2075 = vrot.slane %v2073, 5
        %v2076 = vsel %vm1203, %v2071, %v2075
        %v2077 = vshrl.u32 %v1995, 16
        %v2079 = vrot.slane %v2077, 4
        %v2080 = vor.u32 %v2079, %v2075
        %v2081 = vrot.slane %v2080, 4
        %v2083 = vshll.u32 %v1996, 16
        %v2085 = vrot.slane %v2083, 5
        %v2086 = vsel %vm1203, %v2081, %v2085
        %v2088 = vshrl.u32 %v1997, 16
        %v2090 = vrot.slane %v2088, 4
        %v2091 = vshll.u32 %v1997, 16
        %v2093 = vrot.slane %v2091, 5
        %v2094 = vor.u32 %v2090, %v2093
        %v2095 = vrot.slane %v2094, 4
        %v2097 = vshll.u32 %v1998, 16
        %v2099 = vrot.slane %v2097, 5
        %v2100 = vsel %vm1203, %v2095, %v2099
        %v2101 = vshrl.u32 %v1998, 16
        %v2103 = vrot.slane %v2101, 4
        %v2104 = vor.u32 %v2103, %v2099
        %v2105 = vrot.slane %v2104, 4
        %v2107 = vshll.u32 %v1999, 16
        %v2109 = vrot.slane %v2107, 5
        %v2110 = vsel %vm1203, %v2105, %v2109
        %v2112 = vshrl.u32 %v2000, 16
        %v2114 = vrot.slane %v2112, 4
        %v2115 = vshll.u32 %v2000, 16
        %v2117 = vrot.slane %v2115, 5
        %v2118 = vor.u32 %v2114, %v2117
        %v2119 = vrot.slane %v2118, 4
        %v2121 = vshll.u32 %v2001, 16
        %v2123 = vrot.slane %v2121, 5
        %v2124 = vsel %vm1203, %v2119, %v2123
        %v2125 = vshrl.u32 %v2001, 16
        %v2127 = vrot.slane %v2125, 4
        %v2128 = vor.u32 %v2127, %v2123
        %v2129 = vrot.slane %v2128, 4
        %v2131 = vshll.u32 %v2002, 16
        %v2133 = vrot.slane %v2131, 5
        %v2134 = vsel %vm1203, %v2129, %v2133
        %v2136 = vshrl.u32 %v2003, 16
        %v2138 = vrot.slane %v2136, 4
        %v2139 = vshll.u32 %v2003, 16
        %v2141 = vrot.slane %v2139, 5
        %v2142 = vor.u32 %v2138, %v2141
        %v2143 = vrot.slane %v2142, 4
        %v2145 = vshll.u32 %v2004, 16
        %v2147 = vrot.slane %v2145, 5
        %v2148 = vsel %vm1203, %v2143, %v2147
        %v2149 = vshrl.u32 %v2004, 16
        %v2151 = vrot.slane %v2149, 4
        %v2152 = vor.u32 %v2151, %v2147
        %v2153 = vrot.slane %v2152, 4
        %v2155 = vshll.u32 %v2005, 16
        %v2157 = vrot.slane %v2155, 5
        %v2158 = vsel %vm1203, %v2153, %v2157
        %v2160 = vshrl.u32 %v2006, 16
        %v2162 = vrot.slane %v2160, 4
        %v2163 = vshll.u32 %v2006, 16
        %v2165 = vrot.slane %v2163, 5
        %v2166 = vor.u32 %v2162, %v2165
        %v2167 = vrot.slane %v2166, 4
        %v2169 = vshll.u32 %v2007, 16
        %v2171 = vrot.slane %v2169, 5
        %v2172 = vsel %vm1203, %v2167, %v2171
        %v2173 = vshrl.u32 %v2007, 16
        %v2175 = vrot.slane %v2173, 4
        %v2176 = vor.u32 %v2175, %v2171
        %v2177 = vrot.slane %v2176, 4
        %v2179 = vshll.u32 %v2008, 16
        %v2181 = vrot.slane %v2179, 5
        %v2182 = vsel %vm1203, %v2177, %v2181
        %v2184 = vshrl.u32 %v2009, 16
        %v2186 = vrot.slane %v2184, 4
        %v2187 = vshll.u32 %v2009, 16
        %v2189 = vrot.slane %v2187, 5
        %v2190 = vor.u32 %v2186, %v2189
        %v2191 = vrot.slane %v2190, 4
        %v2193 = vshll.u32 %v2010, 16
        %v2195 = vrot.slane %v2193, 5
        %v2196 = vsel %vm1203, %v2191, %v2195
        %v2197 = vshrl.u32 %v2010, 16
        %v2199 = vrot.slane %v2197, 4
        %v2200 = vor.u32 %v2199, %v2195
        %v2201 = vrot.slane %v2200, 4
        %v2203 = vshll.u32 %v2011, 16
        %v2205 = vrot.slane %v2203, 5
        %v2206 = vsel %vm1203, %v2201, %v2205
        %v2208 = vshrl.u32 %v2012, 16
        %v2210 = vrot.slane %v2208, 4
        %v2211 = vshll.u32 %v2012, 16
        %v2213 = vrot.slane %v2211, 5
        %v2214 = vor.u32 %v2210, %v2213
        %v2215 = vrot.slane %v2214, 4
        %v2217 = vshll.u32 %v2013, 16
        %v2219 = vrot.slane %v2217, 5
        %v2220 = vsel %vm1203, %v2215, %v2219
        %v2221 = vshrl.u32 %v2013, 16
        %v2223 = vrot.slane %v2221, 4
        %v2224 = vor.u32 %v2223, %v2219
        %v2225 = vrot.slane %v2224, 4
        %v2227 = vshll.u32 %v2014, 16
        %v2229 = vrot.slane %v2227, 5
        %v2230 = vsel %vm1203, %v2225, %v2229
        %v2232 = vshrl.u32 %v2015, 16
        %v2234 = vrot.slane %v2232, 4
        %v2235 = vshll.u32 %v2015, 16
        %v2237 = vrot.slane %v2235, 5
        %v2238 = vor.u32 %v2234, %v2237
        %v2239 = vrot.slane %v2238, 4
        %v2241 = vshll.u32 %v2016, 16
        %v2243 = vrot.slane %v2241, 5
        %v2244 = vsel %vm1203, %v2239, %v2243
        %v2245 = vshrl.u32 %v2016, 16
        %v2247 = vrot.slane %v2245, 4
        %v2248 = vor.u32 %v2247, %v2243
        %v2249 = vrot.slane %v2248, 4
        %v2251 = vshll.u32 %v2017, 16
        %v2253 = vrot.slane %v2251, 5
        %v2254 = vsel %vm1203, %v2249, %v2253
        %v2256 = vshrl.u32 %v2018, 16
        %v2258 = vrot.slane %v2256, 4
        %v2259 = vshll.u32 %v2018, 16
        %v2261 = vrot.slane %v2259, 5
        %v2262 = vor.u32 %v2258, %v2261
        %v2263 = vrot.slane %v2262, 4
        %v2265 = vshll.u32 %v2019, 16
        %v2267 = vrot.slane %v2265, 5
        %v2268 = vsel %vm1203, %v2263, %v2267
        %v2269 = vshrl.u32 %v2019, 16
        %v2271 = vrot.slane %v2269, 4
        %v2272 = vor.u32 %v2271, %v2267
        %v2273 = vrot.slane %v2272, 4
        %v2275 = vshll.u32 %v2020, 16
        %v2277 = vrot.slane %v2275, 5
        %v2278 = vsel %vm1203, %v2273, %v2277
        %v2280 = vshrl.u32 %v2021, 16
        %v2282 = vrot.slane %v2280, 4
        %v2283 = vshll.u32 %v2021, 16
        %v2285 = vrot.slane %v2283, 5
        %v2286 = vor.u32 %v2282, %v2285
        %v2287 = vrot.slane %v2286, 4
        %v2289 = vshll.u32 %v2022, 16
        %v2291 = vrot.slane %v2289, 5
        %v2292 = vsel %vm1203, %v2287, %v2291
        %v2293 = vshrl.u32 %v2022, 16
        %v2295 = vrot.slane %v2293, 4
        %v2296 = vor.u32 %v2295, %v2291
        %v2297 = vrot.slane %v2296, 4
        %v2299 = vshll.u32 %v2023, 16
        %v2301 = vrot.slane %v2299, 5
        %v2302 = vsel %vm1203, %v2297, %v2301
        %v2304 = vshrl.u32 %v2024, 16
        %v2306 = vrot.slane %v2304, 4
        %v2307 = vshll.u32 %v2024, 16
        %v2309 = vrot.slane %v2307, 5
        %v2310 = vor.u32 %v2306, %v2309
        %v2311 = vrot.slane %v2310, 4
        %v2313 = vshll.u32 %v2025, 16
        %v2315 = vrot.slane %v2313, 5
        %v2316 = vsel %vm1203, %v2311, %v2315
        %v2317 = vshrl.u32 %v2025, 16
        %v2319 = vrot.slane %v2317, 4
        %v2320 = vor.u32 %v2319, %v2315
        %v2321 = vrot.slane %v2320, 4
        %v2323 = vshll.u32 %v2026, 16
        %v2325 = vrot.slane %v2323, 5
        %v2326 = vsel %vm1203, %v2321, %v2325
        %v2328 = vshrl.u32 %v2027, 16
        %v2330 = vrot.slane %v2328, 4
        %v2331 = vshll.u32 %v2027, 16
        %v2333 = vrot.slane %v2331, 5
        %v2334 = vor.u32 %v2330, %v2333
        %v2335 = vrot.slane %v2334, 4
        %v2337 = vshll.u32 %v2028, 16
        %v2339 = vrot.slane %v2337, 5
        %v2340 = vsel %vm1203, %v2335, %v2339
        %v2341 = vshrl.u32 %v2028, 16
        %v2343 = vrot.slane %v2341, 4
        %v2344 = vor.u32 %v2343, %v2339
        %v2345 = vrot.slane %v2344, 4
        %v2347 = vshll.u32 %v2029, 16
        %v2349 = vrot.slane %v2347, 5
        %v2350 = vsel %vm1203, %v2345, %v2349
        %v2352 = vshrl.u32 %v2030, 16
        %v2354 = vrot.slane %v2352, 4
        %v2355 = vshll.u32 %v2030, 16
        %v2357 = vrot.slane %v2355, 5
        %v2358 = vor.u32 %v2354, %v2357
        %v2359 = vrot.slane %v2358, 4
        %v2361 = vshll.u32 %v2031, 16
        %v2363 = vrot.slane %v2361, 5
        %v2364 = vsel %vm1203, %v2359, %v2363
        %v2365 = vshrl.u32 %v2031, 16
        %v2367 = vrot.slane %v2365, 4
        %v2368 = vor.u32 %v2367, %v2363
        %v2369 = vrot.slane %v2368, 4
        %v2371 = vshll.u32 %v2032, 16
        %v2373 = vrot.slane %v2371, 5
        %v2374 = vsel %vm1203, %v2369, %v2373
        %v2376 = vshrl.u32 %v2033, 16
        %v2378 = vrot.slane %v2376, 4
        %v2379 = vshll.u32 %v2033, 16
        %v2381 = vrot.slane %v2379, 5
        %v2382 = vor.u32 %v2378, %v2381
        %v2383 = vrot.slane %v2382, 4
        %v2385 = vshll.u32 %v2034, 16
        %v2387 = vrot.slane %v2385, 5
        %v2388 = vsel %vm1203, %v2383, %v2387
        %v2389 = vshrl.u32 %v2034, 16
        %v2391 = vrot.slane %v2389, 4
        %v2392 = vor.u32 %v2391, %v2387
        %v2393 = vrot.slane %v2392, 4
        %v2395 = vshll.u32 %v2035, 16
        %v2397 = vrot.slane %v2395, 5
        %v2398 = vsel %vm1203, %v2393, %v2397
        %v2400 = vshrl.u32 %v2036, 16
        %v2402 = vrot.slane %v2400, 4
        %v2403 = vshll.u32 %v2036, 16
        %v2405 = vrot.slane %v2403, 5
        %v2406 = vor.u32 %v2402, %v2405
        %v2407 = vrot.slane %v2406, 4
        %v2409 = vshll.u32 %v2037, 16
        %v2411 = vrot.slane %v2409, 5
        %v2412 = vsel %vm1203, %v2407, %v2411
        %v2413 = vshrl.u32 %v2037, 16
        %v2415 = vrot.slane %v2413, 4
        %v2416 = vor.u32 %v2415, %v2411
        %v2417 = vrot.slane %v2416, 4
        %v2419 = vshll.u32 %v2038, 16
        %v2421 = vrot.slane %v2419, 5
        %v2422 = vsel %vm1203, %v2417, %v2421
        %2455 = vst [vmem:[#allocation3 + $0x10] sm:$0xf] %v2052
        %2456 = vst [vmem:[#allocation3 + $0x34] sm:$0xf] %v2062
        %2457 = vst [vmem:[#allocation3 + $0x58] sm:$0xf] %v2076
        %2458 = vst [vmem:[#allocation3 + $0x7c] sm:$0xf] %v2086
        %2459 = vst [vmem:[#allocation3 + $0xa0] sm:$0xf] %v2100
        %2460 = vst [vmem:[#allocation3 + $0xc4] sm:$0xf] %v2110
        %2461 = vst [vmem:[#allocation3 + $0xe8] sm:$0xf] %v2124
        %2462 = vst [vmem:[#allocation3 + $0x10c] sm:$0xf] %v2134
        %2463 = vst [vmem:[#allocation3 + $0x130] sm:$0xf] %v2148
        %2464 = vst [vmem:[#allocation3 + $0x154] sm:$0xf] %v2158
        %2465 = vst [vmem:[#allocation3 + $0x178] sm:$0xf] %v2172
        %2466 = vst [vmem:[#allocation3 + $0x19c] sm:$0xf] %v2182
        %2467 = vst [vmem:[#allocation3 + $0x1c0] sm:$0xf] %v2196
        %2468 = vst [vmem:[#allocation3 + $0x1e4] sm:$0xf] %v2206
        %2469 = vst [vmem:[#allocation3 + $0x208] sm:$0xf] %v2220
        %2470 = vst [vmem:[#allocation3 + $0x22c] sm:$0xf] %v2230
        %2471 = vst [vmem:[#allocation3 + $0x250] sm:$0xf] %v2244
        %2472 = vst [vmem:[#allocation3 + $0x274] sm:$0xf] %v2254
        %2473 = vst [vmem:[#allocation3 + $0x298] sm:$0xf] %v2268
        %2474 = vst [vmem:[#allocation3 + $0x2bc] sm:$0xf] %v2278
        %2475 = vst [vmem:[#allocation3 + $0x2e0] sm:$0xf] %v2292
        %2476 = vst [vmem:[#allocation3 + $0x304] sm:$0xf] %v2302
        %2477 = vst [vmem:[#allocation3 + $0x328] sm:$0xf] %v2316
        %2478 = vst [vmem:[#allocation3 + $0x34c] sm:$0xf] %v2326
        %2479 = vst [vmem:[#allocation3 + $0x370] sm:$0xf] %v2340
        %2480 = vst [vmem:[#allocation3 + $0x394] sm:$0xf] %v2350
        %2481 = vst [vmem:[#allocation3 + $0x3b8] sm:$0xf] %v2364
        %2482 = vst [vmem:[#allocation3 + $0x3dc] sm:$0xf] %v2374
        %2483 = vst [vmem:[#allocation3 + $0x400] sm:$0xf] %v2388
        %2484 = vst [vmem:[#allocation3 + $0x424] sm:$0xf] %v2398
        %2485 = vst [vmem:[#allocation3 + $0x448] sm:$0xf] %v2412
        %2486 = vst [vmem:[#allocation3 + $0x46c] sm:$0xf] %v2422
        %v2487 = vld [vmem:[%s974] sm:$0xe]
        %v2488 = vld [vmem:[%s974 + $0x4] sm:$0xf]
        %v2489 = vld [vmem:[%s974 + $0x8] sm:$0x1]
        %v2490 = vld [vmem:[%s974 + $0xc] sm:$0xe]
        %v2491 = vld [vmem:[%s974 + $0x10] sm:$0xf]
        %v2492 = vld [vmem:[%s974 + $0x14] sm:$0x1]
        %v2493 = vld [vmem:[%s974 + $0x18] sm:$0xe]
        %v2494 = vld [vmem:[%s974 + $0x1c] sm:$0xf]
        %v2495 = vld [vmem:[%s974 + $0x20] sm:$0x1]
        %v2496 = vld [vmem:[%s974 + $0x24] sm:$0xe]
        %v2497 = vld [vmem:[%s974 + $0x28] sm:$0xf]
        %v2498 = vld [vmem:[%s974 + $0x2c] sm:$0x1]
        %v2499 = vld [vmem:[%s974 + $0x30] sm:$0xe]
        %v2500 = vld [vmem:[%s974 + $0x34] sm:$0xf]
        %v2501 = vld [vmem:[%s974 + $0x38] sm:$0x1]
        %v2502 = vld [vmem:[%s974 + $0x3c] sm:$0xe]
        %v2503 = vld [vmem:[%s974 + $0x40] sm:$0xf]
        %v2504 = vld [vmem:[%s974 + $0x44] sm:$0x1]
        %v2505 = vld [vmem:[%s974 + $0x48] sm:$0xe]
        %v2506 = vld [vmem:[%s974 + $0x4c] sm:$0xf]
        %v2507 = vld [vmem:[%s974 + $0x50] sm:$0x1]
        %v2508 = vld [vmem:[%s974 + $0x54] sm:$0xe]
        %v2509 = vld [vmem:[%s974 + $0x58] sm:$0xf]
        %v2510 = vld [vmem:[%s974 + $0x5c] sm:$0x1]
        %v2511 = vld [vmem:[%s974 + $0x60] sm:$0xe]
        %v2512 = vld [vmem:[%s974 + $0x64] sm:$0xf]
        %v2513 = vld [vmem:[%s974 + $0x68] sm:$0x1]
        %v2514 = vld [vmem:[%s974 + $0x6c] sm:$0xe]
        %v2515 = vld [vmem:[%s974 + $0x70] sm:$0xf]
        %v2516 = vld [vmem:[%s974 + $0x74] sm:$0x1]
        %v2517 = vld [vmem:[%s974 + $0x78] sm:$0xe]
        %v2518 = vld [vmem:[%s974 + $0x7c] sm:$0xf]
        %v2519 = vld [vmem:[%s974 + $0x80] sm:$0x1]
        %v2520 = vld [vmem:[%s974 + $0x84] sm:$0xe]
        %v2521 = vld [vmem:[%s974 + $0x88] sm:$0xf]
        %v2522 = vld [vmem:[%s974 + $0x8c] sm:$0x1]
        %v2523 = vld [vmem:[%s974 + $0x90] sm:$0xe]
        %v2524 = vld [vmem:[%s974 + $0x94] sm:$0xf]
        %v2525 = vld [vmem:[%s974 + $0x98] sm:$0x1]
        %v2526 = vld [vmem:[%s974 + $0x9c] sm:$0xe]
        %v2527 = vld [vmem:[%s974 + $0xa0] sm:$0xf]
        %v2528 = vld [vmem:[%s974 + $0xa4] sm:$0x1]
        %v2529 = vld [vmem:[%s974 + $0xa8] sm:$0xe]
        %v2530 = vld [vmem:[%s974 + $0xac] sm:$0xf]
        %v2531 = vld [vmem:[%s974 + $0xb0] sm:$0x1]
        %v2532 = vld [vmem:[%s974 + $0xb4] sm:$0xe]
        %v2533 = vld [vmem:[%s974 + $0xb8] sm:$0xf]
        %v2534 = vld [vmem:[%s974 + $0xbc] sm:$0x1]
        %v2583 = vrot.slane %v2487, 5
        %v2584 = vrot.slane %v2583, 4
        %v2585 = vrot.slane %v2488, 5
        %v2586 = vsel %vm1750, %v2584, %v2585
        %v2587 = vrot.slane %v2585, 4
        %v2588 = vrot.slane %v2489, 5
        %v2589 = vsel %vm1750, %v2587, %v2588
        %v2590 = vrot.slane %v2490, 5
        %v2591 = vrot.slane %v2590, 4
        %v2592 = vrot.slane %v2491, 5
        %v2593 = vsel %vm1750, %v2591, %v2592
        %v2594 = vrot.slane %v2592, 4
        %v2595 = vrot.slane %v2492, 5
        %v2596 = vsel %vm1750, %v2594, %v2595
        %v2597 = vrot.slane %v2493, 5
        %v2598 = vrot.slane %v2597, 4
        %v2599 = vrot.slane %v2494, 5
        %v2600 = vsel %vm1750, %v2598, %v2599
        %v2601 = vrot.slane %v2599, 4
        %v2602 = vrot.slane %v2495, 5
        %v2603 = vsel %vm1750, %v2601, %v2602
        %v2604 = vrot.slane %v2496, 5
        %v2605 = vrot.slane %v2604, 4
        %v2606 = vrot.slane %v2497, 5
        %v2607 = vsel %vm1750, %v2605, %v2606
        %v2608 = vrot.slane %v2606, 4
        %v2609 = vrot.slane %v2498, 5
        %v2610 = vsel %vm1750, %v2608, %v2609
        %v2611 = vrot.slane %v2499, 5
        %v2612 = vrot.slane %v2611, 4
        %v2613 = vrot.slane %v2500, 5
        %v2614 = vsel %vm1750, %v2612, %v2613
        %v2615 = vrot.slane %v2613, 4
        %v2616 = vrot.slane %v2501, 5
        %v2617 = vsel %vm1750, %v2615, %v2616
        %v2618 = vrot.slane %v2502, 5
        %v2619 = vrot.slane %v2618, 4
        %v2620 = vrot.slane %v2503, 5
        %v2621 = vsel %vm1750, %v2619, %v2620
        %v2622 = vrot.slane %v2620, 4
        %v2623 = vrot.slane %v2504, 5
        %v2624 = vsel %vm1750, %v2622, %v2623
        %v2625 = vrot.slane %v2505, 5
        %v2626 = vrot.slane %v2625, 4
        %v2627 = vrot.slane %v2506, 5
        %v2628 = vsel %vm1750, %v2626, %v2627
        %v2629 = vrot.slane %v2627, 4
        %v2630 = vrot.slane %v2507, 5
        %v2631 = vsel %vm1750, %v2629, %v2630
        %v2632 = vrot.slane %v2508, 5
        %v2633 = vrot.slane %v2632, 4
        %v2634 = vrot.slane %v2509, 5
        %v2635 = vsel %vm1750, %v2633, %v2634
        %v2636 = vrot.slane %v2634, 4
        %v2637 = vrot.slane %v2510, 5
        %v2638 = vsel %vm1750, %v2636, %v2637
        %v2639 = vrot.slane %v2511, 5
        %v2640 = vrot.slane %v2639, 4
        %v2641 = vrot.slane %v2512, 5
        %v2642 = vsel %vm1750, %v2640, %v2641
        %v2643 = vrot.slane %v2641, 4
        %v2644 = vrot.slane %v2513, 5
        %v2645 = vsel %vm1750, %v2643, %v2644
        %v2646 = vrot.slane %v2514, 5
        %v2647 = vrot.slane %v2646, 4
        %v2648 = vrot.slane %v2515, 5
        %v2649 = vsel %vm1750, %v2647, %v2648
        %v2650 = vrot.slane %v2648, 4
        %v2651 = vrot.slane %v2516, 5
        %v2652 = vsel %vm1750, %v2650, %v2651
        %v2653 = vrot.slane %v2517, 5
        %v2654 = vrot.slane %v2653, 4
        %v2655 = vrot.slane %v2518, 5
        %v2656 = vsel %vm1750, %v2654, %v2655
        %v2657 = vrot.slane %v2655, 4
        %v2658 = vrot.slane %v2519, 5
        %v2659 = vsel %vm1750, %v2657, %v2658
        %v2660 = vrot.slane %v2520, 5
        %v2661 = vrot.slane %v2660, 4
        %v2662 = vrot.slane %v2521, 5
        %v2663 = vsel %vm1750, %v2661, %v2662
        %v2664 = vrot.slane %v2662, 4
        %v2665 = vrot.slane %v2522, 5
        %v2666 = vsel %vm1750, %v2664, %v2665
        %v2667 = vrot.slane %v2523, 5
        %v2668 = vrot.slane %v2667, 4
        %v2669 = vrot.slane %v2524, 5
        %v2670 = vsel %vm1750, %v2668, %v2669
        %v2671 = vrot.slane %v2669, 4
        %v2672 = vrot.slane %v2525, 5
        %v2673 = vsel %vm1750, %v2671, %v2672
        %v2674 = vrot.slane %v2526, 5
        %v2675 = vrot.slane %v2674, 4
        %v2676 = vrot.slane %v2527, 5
        %v2677 = vsel %vm1750, %v2675, %v2676
        %v2678 = vrot.slane %v2676, 4
        %v2679 = vrot.slane %v2528, 5
        %v2680 = vsel %vm1750, %v2678, %v2679
        %v2681 = vrot.slane %v2529, 5
        %v2682 = vrot.slane %v2681, 4
        %v2683 = vrot.slane %v2530, 5
        %v2684 = vsel %vm1750, %v2682, %v2683
        %v2685 = vrot.slane %v2683, 4
        %v2686 = vrot.slane %v2531, 5
        %v2687 = vsel %vm1750, %v2685, %v2686
        %v2688 = vrot.slane %v2532, 5
        %v2689 = vrot.slane %v2688, 4
        %v2690 = vrot.slane %v2533, 5
        %v2691 = vsel %vm1750, %v2689, %v2690
        %v2692 = vrot.slane %v2690, 4
        %v2693 = vrot.slane %v2534, 5
        %v2694 = vsel %vm1750, %v2692, %v2693
        %2727 = vst [vmem:[#allocation3 + $0x14] sm:$0xf] %v2586
        %2728 = vst [vmem:[#allocation3 + $0x38] sm:$0xf] %v2589
        %2729 = vst [vmem:[#allocation3 + $0x5c] sm:$0xf] %v2593
        %2730 = vst [vmem:[#allocation3 + $0x80] sm:$0xf] %v2596
        %2731 = vst [vmem:[#allocation3 + $0xa4] sm:$0xf] %v2600
        %2732 = vst [vmem:[#allocation3 + $0xc8] sm:$0xf] %v2603
        %2733 = vst [vmem:[#allocation3 + $0xec] sm:$0xf] %v2607
        %2734 = vst [vmem:[#allocation3 + $0x110] sm:$0xf] %v2610
        %2735 = vst [vmem:[#allocation3 + $0x134] sm:$0xf] %v2614
        %2736 = vst [vmem:[#allocation3 + $0x158] sm:$0xf] %v2617
        %2737 = vst [vmem:[#allocation3 + $0x17c] sm:$0xf] %v2621
        %2738 = vst [vmem:[#allocation3 + $0x1a0] sm:$0xf] %v2624
        %2739 = vst [vmem:[#allocation3 + $0x1c4] sm:$0xf] %v2628
        %2740 = vst [vmem:[#allocation3 + $0x1e8] sm:$0xf] %v2631
        %2741 = vst [vmem:[#allocation3 + $0x20c] sm:$0xf] %v2635
        %2742 = vst [vmem:[#allocation3 + $0x230] sm:$0xf] %v2638
        %2743 = vst [vmem:[#allocation3 + $0x254] sm:$0xf] %v2642
        %2744 = vst [vmem:[#allocation3 + $0x278] sm:$0xf] %v2645
        %2745 = vst [vmem:[#allocation3 + $0x29c] sm:$0xf] %v2649
        %2746 = vst [vmem:[#allocation3 + $0x2c0] sm:$0xf] %v2652
        %2747 = vst [vmem:[#allocation3 + $0x2e4] sm:$0xf] %v2656
        %2748 = vst [vmem:[#allocation3 + $0x308] sm:$0xf] %v2659
        %2749 = vst [vmem:[#allocation3 + $0x32c] sm:$0xf] %v2663
        %2750 = vst [vmem:[#allocation3 + $0x350] sm:$0xf] %v2666
        %2751 = vst [vmem:[#allocation3 + $0x374] sm:$0xf] %v2670
        %2752 = vst [vmem:[#allocation3 + $0x398] sm:$0xf] %v2673
        %2753 = vst [vmem:[#allocation3 + $0x3bc] sm:$0xf] %v2677
        %2754 = vst [vmem:[#allocation3 + $0x3e0] sm:$0xf] %v2680
        %2755 = vst [vmem:[#allocation3 + $0x404] sm:$0xf] %v2684
        %2756 = vst [vmem:[#allocation3 + $0x428] sm:$0xf] %v2687
        %2757 = vst [vmem:[#allocation3 + $0x44c] sm:$0xf] %v2691
        %2758 = vst [vmem:[#allocation3 + $0x470] sm:$0xf] %v2694
        %s2759 = scalar_lea.vmem [#allocation2], 24
        %v2760 = vld [vmem:[%s2759] sm:$0xf]
        %v2761 = vld [vmem:[%s2759 + $0x4] sm:$0xf]
        %v2762 = vld [vmem:[%s2759 + $0xc] sm:$0xf]
        %v2763 = vld [vmem:[%s2759 + $0x10] sm:$0xf]
        %v2764 = vld [vmem:[%s2759 + $0x18] sm:$0xf]
        %v2765 = vld [vmem:[%s2759 + $0x1c] sm:$0xf]
        %v2766 = vld [vmem:[%s2759 + $0x24] sm:$0xf]
        %v2767 = vld [vmem:[%s2759 + $0x28] sm:$0xf]
        %v2768 = vld [vmem:[%s2759 + $0x30] sm:$0xf]
        %v2769 = vld [vmem:[%s2759 + $0x34] sm:$0xf]
        %v2770 = vld [vmem:[%s2759 + $0x3c] sm:$0xf]
        %v2771 = vld [vmem:[%s2759 + $0x40] sm:$0xf]
        %v2772 = vld [vmem:[%s2759 + $0x48] sm:$0xf]
        %v2773 = vld [vmem:[%s2759 + $0x4c] sm:$0xf]
        %v2774 = vld [vmem:[%s2759 + $0x54] sm:$0xf]
        %v2775 = vld [vmem:[%s2759 + $0x58] sm:$0xf]
        %v2776 = vld [vmem:[%s2759 + $0x60] sm:$0xf]
        %v2777 = vld [vmem:[%s2759 + $0x64] sm:$0xf]
        %v2778 = vld [vmem:[%s2759 + $0x6c] sm:$0xf]
        %v2779 = vld [vmem:[%s2759 + $0x70] sm:$0xf]
        %v2780 = vld [vmem:[%s2759 + $0x78] sm:$0xf]
        %v2781 = vld [vmem:[%s2759 + $0x7c] sm:$0xf]
        %v2782 = vld [vmem:[%s2759 + $0x84] sm:$0xf]
        %v2783 = vld [vmem:[%s2759 + $0x88] sm:$0xf]
        %v2784 = vld [vmem:[%s2759 + $0x90] sm:$0xf]
        %v2785 = vld [vmem:[%s2759 + $0x94] sm:$0xf]
        %v2786 = vld [vmem:[%s2759 + $0x9c] sm:$0xf]
        %v2787 = vld [vmem:[%s2759 + $0xa0] sm:$0xf]
        %v2788 = vld [vmem:[%s2759 + $0xa8] sm:$0xf]
        %v2789 = vld [vmem:[%s2759 + $0xac] sm:$0xf]
        %v2790 = vld [vmem:[%s2759 + $0xb4] sm:$0xf]
        %v2791 = vld [vmem:[%s2759 + $0xb8] sm:$0xf]
        %2792 = vst [vmem:[#allocation3 + $0x18] sm:$0xf] %v2760
        %2793 = vst [vmem:[#allocation3 + $0x3c] sm:$0xf] %v2761
        %2794 = vst [vmem:[#allocation3 + $0x60] sm:$0xf] %v2762
        %2795 = vst [vmem:[#allocation3 + $0x84] sm:$0xf] %v2763
        %2796 = vst [vmem:[#allocation3 + $0xa8] sm:$0xf] %v2764
        %2797 = vst [vmem:[#allocation3 + $0xcc] sm:$0xf] %v2765
        %2798 = vst [vmem:[#allocation3 + $0xf0] sm:$0xf] %v2766
        %2799 = vst [vmem:[#allocation3 + $0x114] sm:$0xf] %v2767
        %2800 = vst [vmem:[#allocation3 + $0x138] sm:$0xf] %v2768
        %2801 = vst [vmem:[#allocation3 + $0x15c] sm:$0xf] %v2769
        %2802 = vst [vmem:[#allocation3 + $0x180] sm:$0xf] %v2770
        %2803 = vst [vmem:[#allocation3 + $0x1a4] sm:$0xf] %v2771
        %2804 = vst [vmem:[#allocation3 + $0x1c8] sm:$0xf] %v2772
        %2805 = vst [vmem:[#allocation3 + $0x1ec] sm:$0xf] %v2773
        %2806 = vst [vmem:[#allocation3 + $0x210] sm:$0xf] %v2774
        %2807 = vst [vmem:[#allocation3 + $0x234] sm:$0xf] %v2775
        %2808 = vst [vmem:[#allocation3 + $0x258] sm:$0xf] %v2776
        %2809 = vst [vmem:[#allocation3 + $0x27c] sm:$0xf] %v2777
        %2810 = vst [vmem:[#allocation3 + $0x2a0] sm:$0xf] %v2778
        %2811 = vst [vmem:[#allocation3 + $0x2c4] sm:$0xf] %v2779
        %2812 = vst [vmem:[#allocation3 + $0x2e8] sm:$0xf] %v2780
        %2813 = vst [vmem:[#allocation3 + $0x30c] sm:$0xf] %v2781
        %2814 = vst [vmem:[#allocation3 + $0x330] sm:$0xf] %v2782
        %2815 = vst [vmem:[#allocation3 + $0x354] sm:$0xf] %v2783
        %2816 = vst [vmem:[#allocation3 + $0x378] sm:$0xf] %v2784
        %2817 = vst [vmem:[#allocation3 + $0x39c] sm:$0xf] %v2785
        %2818 = vst [vmem:[#allocation3 + $0x3c0] sm:$0xf] %v2786
        %2819 = vst [vmem:[#allocation3 + $0x3e4] sm:$0xf] %v2787
        %2820 = vst [vmem:[#allocation3 + $0x408] sm:$0xf] %v2788
        %2821 = vst [vmem:[#allocation3 + $0x42c] sm:$0xf] %v2789
        %2822 = vst [vmem:[#allocation3 + $0x450] sm:$0xf] %v2790
        %2823 = vst [vmem:[#allocation3 + $0x474] sm:$0xf] %v2791
        %v2824 = vld [vmem:[%s2759] sm:$0xf]
        %v2825 = vld [vmem:[%s2759 + $0x4] sm:$0xf]
        %v2826 = vld [vmem:[%s2759 + $0x8] sm:$0x1]
        %v2827 = vld [vmem:[%s2759 + $0xc] sm:$0xf]
        %v2828 = vld [vmem:[%s2759 + $0x10] sm:$0xf]
        %v2829 = vld [vmem:[%s2759 + $0x14] sm:$0x1]
        %v2830 = vld [vmem:[%s2759 + $0x18] sm:$0xf]
        %v2831 = vld [vmem:[%s2759 + $0x1c] sm:$0xf]
        %v2832 = vld [vmem:[%s2759 + $0x20] sm:$0x1]
        %v2833 = vld [vmem:[%s2759 + $0x24] sm:$0xf]
        %v2834 = vld [vmem:[%s2759 + $0x28] sm:$0xf]
        %v2835 = vld [vmem:[%s2759 + $0x2c] sm:$0x1]
        %v2836 = vld [vmem:[%s2759 + $0x30] sm:$0xf]
        %v2837 = vld [vmem:[%s2759 + $0x34] sm:$0xf]
        %v2838 = vld [vmem:[%s2759 + $0x38] sm:$0x1]
        %v2839 = vld [vmem:[%s2759 + $0x3c] sm:$0xf]
        %v2840 = vld [vmem:[%s2759 + $0x40] sm:$0xf]
        %v2841 = vld [vmem:[%s2759 + $0x44] sm:$0x1]
        %v2842 = vld [vmem:[%s2759 + $0x48] sm:$0xf]
        %v2843 = vld [vmem:[%s2759 + $0x4c] sm:$0xf]
        %v2844 = vld [vmem:[%s2759 + $0x50] sm:$0x1]
        %v2845 = vld [vmem:[%s2759 + $0x54] sm:$0xf]
        %v2846 = vld [vmem:[%s2759 + $0x58] sm:$0xf]
        %v2847 = vld [vmem:[%s2759 + $0x5c] sm:$0x1]
        %v2848 = vld [vmem:[%s2759 + $0x60] sm:$0xf]
        %v2849 = vld [vmem:[%s2759 + $0x64] sm:$0xf]
        %v2850 = vld [vmem:[%s2759 + $0x68] sm:$0x1]
        %v2851 = vld [vmem:[%s2759 + $0x6c] sm:$0xf]
        %v2852 = vld [vmem:[%s2759 + $0x70] sm:$0xf]
        %v2853 = vld [vmem:[%s2759 + $0x74] sm:$0x1]
        %v2854 = vld [vmem:[%s2759 + $0x78] sm:$0xf]
        %v2855 = vld [vmem:[%s2759 + $0x7c] sm:$0xf]
        %v2856 = vld [vmem:[%s2759 + $0x80] sm:$0x1]
        %v2857 = vld [vmem:[%s2759 + $0x84] sm:$0xf]
        %v2858 = vld [vmem:[%s2759 + $0x88] sm:$0xf]
        %v2859 = vld [vmem:[%s2759 + $0x8c] sm:$0x1]
        %v2860 = vld [vmem:[%s2759 + $0x90] sm:$0xf]
        %v2861 = vld [vmem:[%s2759 + $0x94] sm:$0xf]
        %v2862 = vld [vmem:[%s2759 + $0x98] sm:$0x1]
        %v2863 = vld [vmem:[%s2759 + $0x9c] sm:$0xf]
        %v2864 = vld [vmem:[%s2759 + $0xa0] sm:$0xf]
        %v2865 = vld [vmem:[%s2759 + $0xa4] sm:$0x1]
        %v2866 = vld [vmem:[%s2759 + $0xa8] sm:$0xf]
        %v2867 = vld [vmem:[%s2759 + $0xac] sm:$0xf]
        %v2868 = vld [vmem:[%s2759 + $0xb0] sm:$0x1]
        %v2869 = vld [vmem:[%s2759 + $0xb4] sm:$0xf]
        %v2870 = vld [vmem:[%s2759 + $0xb8] sm:$0xf]
        %v2871 = vld [vmem:[%s2759 + $0xbc] sm:$0x1]
        %v2873 = vshrl.u32 %v2824, 16
        %v2875 = vrot.slane %v2873, 4
        %v2876 = vshll.u32 %v2824, 16
        %v2878 = vrot.slane %v2876, 5
        %v2879 = vor.u32 %v2875, %v2878
        %v2880 = vrot.slane %v2879, 4
        %v2882 = vshll.u32 %v2825, 16
        %v2884 = vrot.slane %v2882, 5
        %v2885 = vsel %vm1203, %v2880, %v2884
        %v2886 = vshrl.u32 %v2825, 16
        %v2888 = vrot.slane %v2886, 4
        %v2889 = vor.u32 %v2888, %v2884
        %v2890 = vrot.slane %v2889, 4
        %v2892 = vshll.u32 %v2826, 16
        %v2894 = vrot.slane %v2892, 5
        %v2895 = vsel %vm1203, %v2890, %v2894
        %v2897 = vshrl.u32 %v2827, 16
        %v2899 = vrot.slane %v2897, 4
        %v2900 = vshll.u32 %v2827, 16
        %v2902 = vrot.slane %v2900, 5
        %v2903 = vor.u32 %v2899, %v2902
        %v2904 = vrot.slane %v2903, 4
        %v2906 = vshll.u32 %v2828, 16
        %v2908 = vrot.slane %v2906, 5
        %v2909 = vsel %vm1203, %v2904, %v2908
        %v2910 = vshrl.u32 %v2828, 16
        %v2912 = vrot.slane %v2910, 4
        %v2913 = vor.u32 %v2912, %v2908
        %v2914 = vrot.slane %v2913, 4
        %v2916 = vshll.u32 %v2829, 16
        %v2918 = vrot.slane %v2916, 5
        %v2919 = vsel %vm1203, %v2914, %v2918
        %v2921 = vshrl.u32 %v2830, 16
        %v2923 = vrot.slane %v2921, 4
        %v2924 = vshll.u32 %v2830, 16
        %v2926 = vrot.slane %v2924, 5
        %v2927 = vor.u32 %v2923, %v2926
        %v2928 = vrot.slane %v2927, 4
        %v2930 = vshll.u32 %v2831, 16
        %v2932 = vrot.slane %v2930, 5
        %v2933 = vsel %vm1203, %v2928, %v2932
        %v2934 = vshrl.u32 %v2831, 16
        %v2936 = vrot.slane %v2934, 4
        %v2937 = vor.u32 %v2936, %v2932
        %v2938 = vrot.slane %v2937, 4
        %v2940 = vshll.u32 %v2832, 16
        %v2942 = vrot.slane %v2940, 5
        %v2943 = vsel %vm1203, %v2938, %v2942
        %v2945 = vshrl.u32 %v2833, 16
        %v2947 = vrot.slane %v2945, 4
        %v2948 = vshll.u32 %v2833, 16
        %v2950 = vrot.slane %v2948, 5
        %v2951 = vor.u32 %v2947, %v2950
        %v2952 = vrot.slane %v2951, 4
        %v2954 = vshll.u32 %v2834, 16
        %v2956 = vrot.slane %v2954, 5
        %v2957 = vsel %vm1203, %v2952, %v2956
        %v2958 = vshrl.u32 %v2834, 16
        %v2960 = vrot.slane %v2958, 4
        %v2961 = vor.u32 %v2960, %v2956
        %v2962 = vrot.slane %v2961, 4
        %v2964 = vshll.u32 %v2835, 16
        %v2966 = vrot.slane %v2964, 5
        %v2967 = vsel %vm1203, %v2962, %v2966
        %v2969 = vshrl.u32 %v2836, 16
        %v2971 = vrot.slane %v2969, 4
        %v2972 = vshll.u32 %v2836, 16
        %v2974 = vrot.slane %v2972, 5
        %v2975 = vor.u32 %v2971, %v2974
        %v2976 = vrot.slane %v2975, 4
        %v2978 = vshll.u32 %v2837, 16
        %v2980 = vrot.slane %v2978, 5
        %v2981 = vsel %vm1203, %v2976, %v2980
        %v2982 = vshrl.u32 %v2837, 16
        %v2984 = vrot.slane %v2982, 4
        %v2985 = vor.u32 %v2984, %v2980
        %v2986 = vrot.slane %v2985, 4
        %v2988 = vshll.u32 %v2838, 16
        %v2990 = vrot.slane %v2988, 5
        %v2991 = vsel %vm1203, %v2986, %v2990
        %v2993 = vshrl.u32 %v2839, 16
        %v2995 = vrot.slane %v2993, 4
        %v2996 = vshll.u32 %v2839, 16
        %v2998 = vrot.slane %v2996, 5
        %v2999 = vor.u32 %v2995, %v2998
        %v3000 = vrot.slane %v2999, 4
        %v3002 = vshll.u32 %v2840, 16
        %v3004 = vrot.slane %v3002, 5
        %v3005 = vsel %vm1203, %v3000, %v3004
        %v3006 = vshrl.u32 %v2840, 16
        %v3008 = vrot.slane %v3006, 4
        %v3009 = vor.u32 %v3008, %v3004
        %v3010 = vrot.slane %v3009, 4
        %v3012 = vshll.u32 %v2841, 16
        %v3014 = vrot.slane %v3012, 5
        %v3015 = vsel %vm1203, %v3010, %v3014
        %v3017 = vshrl.u32 %v2842, 16
        %v3019 = vrot.slane %v3017, 4
        %v3020 = vshll.u32 %v2842, 16
        %v3022 = vrot.slane %v3020, 5
        %v3023 = vor.u32 %v3019, %v3022
        %v3024 = vrot.slane %v3023, 4
        %v3026 = vshll.u32 %v2843, 16
        %v3028 = vrot.slane %v3026, 5
        %v3029 = vsel %vm1203, %v3024, %v3028
        %v3030 = vshrl.u32 %v2843, 16
        %v3032 = vrot.slane %v3030, 4
        %v3033 = vor.u32 %v3032, %v3028
        %v3034 = vrot.slane %v3033, 4
        %v3036 = vshll.u32 %v2844, 16
        %v3038 = vrot.slane %v3036, 5
        %v3039 = vsel %vm1203, %v3034, %v3038
        %v3041 = vshrl.u32 %v2845, 16
        %v3043 = vrot.slane %v3041, 4
        %v3044 = vshll.u32 %v2845, 16
        %v3046 = vrot.slane %v3044, 5
        %v3047 = vor.u32 %v3043, %v3046
        %v3048 = vrot.slane %v3047, 4
        %v3050 = vshll.u32 %v2846, 16
        %v3052 = vrot.slane %v3050, 5
        %v3053 = vsel %vm1203, %v3048, %v3052
        %v3054 = vshrl.u32 %v2846, 16
        %v3056 = vrot.slane %v3054, 4
        %v3057 = vor.u32 %v3056, %v3052
        %v3058 = vrot.slane %v3057, 4
        %v3060 = vshll.u32 %v2847, 16
        %v3062 = vrot.slane %v3060, 5
        %v3063 = vsel %vm1203, %v3058, %v3062
        %v3065 = vshrl.u32 %v2848, 16
        %v3067 = vrot.slane %v3065, 4
        %v3068 = vshll.u32 %v2848, 16
        %v3070 = vrot.slane %v3068, 5
        %v3071 = vor.u32 %v3067, %v3070
        %v3072 = vrot.slane %v3071, 4
        %v3074 = vshll.u32 %v2849, 16
        %v3076 = vrot.slane %v3074, 5
        %v3077 = vsel %vm1203, %v3072, %v3076
        %v3078 = vshrl.u32 %v2849, 16
        %v3080 = vrot.slane %v3078, 4
        %v3081 = vor.u32 %v3080, %v3076
        %v3082 = vrot.slane %v3081, 4
        %v3084 = vshll.u32 %v2850, 16
        %v3086 = vrot.slane %v3084, 5
        %v3087 = vsel %vm1203, %v3082, %v3086
        %v3089 = vshrl.u32 %v2851, 16
        %v3091 = vrot.slane %v3089, 4
        %v3092 = vshll.u32 %v2851, 16
        %v3094 = vrot.slane %v3092, 5
        %v3095 = vor.u32 %v3091, %v3094
        %v3096 = vrot.slane %v3095, 4
        %v3098 = vshll.u32 %v2852, 16
        %v3100 = vrot.slane %v3098, 5
        %v3101 = vsel %vm1203, %v3096, %v3100
        %v3102 = vshrl.u32 %v2852, 16
        %v3104 = vrot.slane %v3102, 4
        %v3105 = vor.u32 %v3104, %v3100
        %v3106 = vrot.slane %v3105, 4
        %v3108 = vshll.u32 %v2853, 16
        %v3110 = vrot.slane %v3108, 5
        %v3111 = vsel %vm1203, %v3106, %v3110
        %v3113 = vshrl.u32 %v2854, 16
        %v3115 = vrot.slane %v3113, 4
        %v3116 = vshll.u32 %v2854, 16
        %v3118 = vrot.slane %v3116, 5
        %v3119 = vor.u32 %v3115, %v3118
        %v3120 = vrot.slane %v3119, 4
        %v3122 = vshll.u32 %v2855, 16
        %v3124 = vrot.slane %v3122, 5
        %v3125 = vsel %vm1203, %v3120, %v3124
        %v3126 = vshrl.u32 %v2855, 16
        %v3128 = vrot.slane %v3126, 4
        %v3129 = vor.u32 %v3128, %v3124
        %v3130 = vrot.slane %v3129, 4
        %v3132 = vshll.u32 %v2856, 16
        %v3134 = vrot.slane %v3132, 5
        %v3135 = vsel %vm1203, %v3130, %v3134
        %v3137 = vshrl.u32 %v2857, 16
        %v3139 = vrot.slane %v3137, 4
        %v3140 = vshll.u32 %v2857, 16
        %v3142 = vrot.slane %v3140, 5
        %v3143 = vor.u32 %v3139, %v3142
        %v3144 = vrot.slane %v3143, 4
        %v3146 = vshll.u32 %v2858, 16
        %v3148 = vrot.slane %v3146, 5
        %v3149 = vsel %vm1203, %v3144, %v3148
        %v3150 = vshrl.u32 %v2858, 16
        %v3152 = vrot.slane %v3150, 4
        %v3153 = vor.u32 %v3152, %v3148
        %v3154 = vrot.slane %v3153, 4
        %v3156 = vshll.u32 %v2859, 16
        %v3158 = vrot.slane %v3156, 5
        %v3159 = vsel %vm1203, %v3154, %v3158
        %v3161 = vshrl.u32 %v2860, 16
        %v3163 = vrot.slane %v3161, 4
        %v3164 = vshll.u32 %v2860, 16
        %v3166 = vrot.slane %v3164, 5
        %v3167 = vor.u32 %v3163, %v3166
        %v3168 = vrot.slane %v3167, 4
        %v3170 = vshll.u32 %v2861, 16
        %v3172 = vrot.slane %v3170, 5
        %v3173 = vsel %vm1203, %v3168, %v3172
        %v3174 = vshrl.u32 %v2861, 16
        %v3176 = vrot.slane %v3174, 4
        %v3177 = vor.u32 %v3176, %v3172
        %v3178 = vrot.slane %v3177, 4
        %v3180 = vshll.u32 %v2862, 16
        %v3182 = vrot.slane %v3180, 5
        %v3183 = vsel %vm1203, %v3178, %v3182
        %v3185 = vshrl.u32 %v2863, 16
        %v3187 = vrot.slane %v3185, 4
        %v3188 = vshll.u32 %v2863, 16
        %v3190 = vrot.slane %v3188, 5
        %v3191 = vor.u32 %v3187, %v3190
        %v3192 = vrot.slane %v3191, 4
        %v3194 = vshll.u32 %v2864, 16
        %v3196 = vrot.slane %v3194, 5
        %v3197 = vsel %vm1203, %v3192, %v3196
        %v3198 = vshrl.u32 %v2864, 16
        %v3200 = vrot.slane %v3198, 4
        %v3201 = vor.u32 %v3200, %v3196
        %v3202 = vrot.slane %v3201, 4
        %v3204 = vshll.u32 %v2865, 16
        %v3206 = vrot.slane %v3204, 5
        %v3207 = vsel %vm1203, %v3202, %v3206
        %v3209 = vshrl.u32 %v2866, 16
        %v3211 = vrot.slane %v3209, 4
        %v3212 = vshll.u32 %v2866, 16
        %v3214 = vrot.slane %v3212, 5
        %v3215 = vor.u32 %v3211, %v3214
        %v3216 = vrot.slane %v3215, 4
        %v3218 = vshll.u32 %v2867, 16
        %v3220 = vrot.slane %v3218, 5
        %v3221 = vsel %vm1203, %v3216, %v3220
        %v3222 = vshrl.u32 %v2867, 16
        %v3224 = vrot.slane %v3222, 4
        %v3225 = vor.u32 %v3224, %v3220
        %v3226 = vrot.slane %v3225, 4
        %v3228 = vshll.u32 %v2868, 16
        %v3230 = vrot.slane %v3228, 5
        %v3231 = vsel %vm1203, %v3226, %v3230
        %v3233 = vshrl.u32 %v2869, 16
        %v3235 = vrot.slane %v3233, 4
        %v3236 = vshll.u32 %v2869, 16
        %v3238 = vrot.slane %v3236, 5
        %v3239 = vor.u32 %v3235, %v3238
        %v3240 = vrot.slane %v3239, 4
        %v3242 = vshll.u32 %v2870, 16
        %v3244 = vrot.slane %v3242, 5
        %v3245 = vsel %vm1203, %v3240, %v3244
        %v3246 = vshrl.u32 %v2870, 16
        %v3248 = vrot.slane %v3246, 4
        %v3249 = vor.u32 %v3248, %v3244
        %v3250 = vrot.slane %v3249, 4
        %v3252 = vshll.u32 %v2871, 16
        %v3254 = vrot.slane %v3252, 5
        %v3255 = vsel %vm1203, %v3250, %v3254
        %3288 = vst [vmem:[#allocation3 + $0x1c] sm:$0xf] %v2885
        %3289 = vst [vmem:[#allocation3 + $0x40] sm:$0xf] %v2895
        %3290 = vst [vmem:[#allocation3 + $0x64] sm:$0xf] %v2909
        %3291 = vst [vmem:[#allocation3 + $0x88] sm:$0xf] %v2919
        %3292 = vst [vmem:[#allocation3 + $0xac] sm:$0xf] %v2933
        %3293 = vst [vmem:[#allocation3 + $0xd0] sm:$0xf] %v2943
        %3294 = vst [vmem:[#allocation3 + $0xf4] sm:$0xf] %v2957
        %3295 = vst [vmem:[#allocation3 + $0x118] sm:$0xf] %v2967
        %3296 = vst [vmem:[#allocation3 + $0x13c] sm:$0xf] %v2981
        %3297 = vst [vmem:[#allocation3 + $0x160] sm:$0xf] %v2991
        %3298 = vst [vmem:[#allocation3 + $0x184] sm:$0xf] %v3005
        %3299 = vst [vmem:[#allocation3 + $0x1a8] sm:$0xf] %v3015
        %3300 = vst [vmem:[#allocation3 + $0x1cc] sm:$0xf] %v3029
        %3301 = vst [vmem:[#allocation3 + $0x1f0] sm:$0xf] %v3039
        %3302 = vst [vmem:[#allocation3 + $0x214] sm:$0xf] %v3053
        %3303 = vst [vmem:[#allocation3 + $0x238] sm:$0xf] %v3063
        %3304 = vst [vmem:[#allocation3 + $0x25c] sm:$0xf] %v3077
        %3305 = vst [vmem:[#allocation3 + $0x280] sm:$0xf] %v3087
        %3306 = vst [vmem:[#allocation3 + $0x2a4] sm:$0xf] %v3101
        %3307 = vst [vmem:[#allocation3 + $0x2c8] sm:$0xf] %v3111
        %3308 = vst [vmem:[#allocation3 + $0x2ec] sm:$0xf] %v3125
        %3309 = vst [vmem:[#allocation3 + $0x310] sm:$0xf] %v3135
        %3310 = vst [vmem:[#allocation3 + $0x334] sm:$0xf] %v3149
        %3311 = vst [vmem:[#allocation3 + $0x358] sm:$0xf] %v3159
        %3312 = vst [vmem:[#allocation3 + $0x37c] sm:$0xf] %v3173
        %3313 = vst [vmem:[#allocation3 + $0x3a0] sm:$0xf] %v3183
        %3314 = vst [vmem:[#allocation3 + $0x3c4] sm:$0xf] %v3197
        %3315 = vst [vmem:[#allocation3 + $0x3e8] sm:$0xf] %v3207
        %3316 = vst [vmem:[#allocation3 + $0x40c] sm:$0xf] %v3221
        %3317 = vst [vmem:[#allocation3 + $0x430] sm:$0xf] %v3231
        %3318 = vst [vmem:[#allocation3 + $0x454] sm:$0xf] %v3245
        %3319 = vst [vmem:[#allocation3 + $0x478] sm:$0xf] %v3255
        %v3320 = vld [vmem:[%s2759] sm:$0xe]
        %v3321 = vld [vmem:[%s2759 + $0x4] sm:$0xf]
        %v3322 = vld [vmem:[%s2759 + $0x8] sm:$0x1]
        %v3323 = vld [vmem:[%s2759 + $0xc] sm:$0xe]
        %v3324 = vld [vmem:[%s2759 + $0x10] sm:$0xf]
        %v3325 = vld [vmem:[%s2759 + $0x14] sm:$0x1]
        %v3326 = vld [vmem:[%s2759 + $0x18] sm:$0xe]
        %v3327 = vld [vmem:[%s2759 + $0x1c] sm:$0xf]
        %v3328 = vld [vmem:[%s2759 + $0x20] sm:$0x1]
        %v3329 = vld [vmem:[%s2759 + $0x24] sm:$0xe]
        %v3330 = vld [vmem:[%s2759 + $0x28] sm:$0xf]
        %v3331 = vld [vmem:[%s2759 + $0x2c] sm:$0x1]
        %v3332 = vld [vmem:[%s2759 + $0x30] sm:$0xe]
        %v3333 = vld [vmem:[%s2759 + $0x34] sm:$0xf]
        %v3334 = vld [vmem:[%s2759 + $0x38] sm:$0x1]
        %v3335 = vld [vmem:[%s2759 + $0x3c] sm:$0xe]
        %v3336 = vld [vmem:[%s2759 + $0x40] sm:$0xf]
        %v3337 = vld [vmem:[%s2759 + $0x44] sm:$0x1]
        %v3338 = vld [vmem:[%s2759 + $0x48] sm:$0xe]
        %v3339 = vld [vmem:[%s2759 + $0x4c] sm:$0xf]
        %v3340 = vld [vmem:[%s2759 + $0x50] sm:$0x1]
        %v3341 = vld [vmem:[%s2759 + $0x54] sm:$0xe]
        %v3342 = vld [vmem:[%s2759 + $0x58] sm:$0xf]
        %v3343 = vld [vmem:[%s2759 + $0x5c] sm:$0x1]
        %v3344 = vld [vmem:[%s2759 + $0x60] sm:$0xe]
        %v3345 = vld [vmem:[%s2759 + $0x64] sm:$0xf]
        %v3346 = vld [vmem:[%s2759 + $0x68] sm:$0x1]
        %v3347 = vld [vmem:[%s2759 + $0x6c] sm:$0xe]
        %v3348 = vld [vmem:[%s2759 + $0x70] sm:$0xf]
        %v3349 = vld [vmem:[%s2759 + $0x74] sm:$0x1]
        %v3350 = vld [vmem:[%s2759 + $0x78] sm:$0xe]
        %v3351 = vld [vmem:[%s2759 + $0x7c] sm:$0xf]
        %v3352 = vld [vmem:[%s2759 + $0x80] sm:$0x1]
        %v3353 = vld [vmem:[%s2759 + $0x84] sm:$0xe]
        %v3354 = vld [vmem:[%s2759 + $0x88] sm:$0xf]
        %v3355 = vld [vmem:[%s2759 + $0x8c] sm:$0x1]
        %v3356 = vld [vmem:[%s2759 + $0x90] sm:$0xe]
        %v3357 = vld [vmem:[%s2759 + $0x94] sm:$0xf]
        %v3358 = vld [vmem:[%s2759 + $0x98] sm:$0x1]
        %v3359 = vld [vmem:[%s2759 + $0x9c] sm:$0xe]
        %v3360 = vld [vmem:[%s2759 + $0xa0] sm:$0xf]
        %v3361 = vld [vmem:[%s2759 + $0xa4] sm:$0x1]
        %v3362 = vld [vmem:[%s2759 + $0xa8] sm:$0xe]
        %v3363 = vld [vmem:[%s2759 + $0xac] sm:$0xf]
        %v3364 = vld [vmem:[%s2759 + $0xb0] sm:$0x1]
        %v3365 = vld [vmem:[%s2759 + $0xb4] sm:$0xe]
        %v3366 = vld [vmem:[%s2759 + $0xb8] sm:$0xf]
        %v3367 = vld [vmem:[%s2759 + $0xbc] sm:$0x1]
        %v3416 = vrot.slane %v3320, 5
        %v3417 = vrot.slane %v3416, 4
        %v3418 = vrot.slane %v3321, 5
        %v3419 = vsel %vm1750, %v3417, %v3418
        %v3420 = vrot.slane %v3418, 4
        %v3421 = vrot.slane %v3322, 5
        %v3422 = vsel %vm1750, %v3420, %v3421
        %v3423 = vrot.slane %v3323, 5
        %v3424 = vrot.slane %v3423, 4
        %v3425 = vrot.slane %v3324, 5
        %v3426 = vsel %vm1750, %v3424, %v3425
        %v3427 = vrot.slane %v3425, 4
        %v3428 = vrot.slane %v3325, 5
        %v3429 = vsel %vm1750, %v3427, %v3428
        %v3430 = vrot.slane %v3326, 5
        %v3431 = vrot.slane %v3430, 4
        %v3432 = vrot.slane %v3327, 5
        %v3433 = vsel %vm1750, %v3431, %v3432
        %v3434 = vrot.slane %v3432, 4
        %v3435 = vrot.slane %v3328, 5
        %v3436 = vsel %vm1750, %v3434, %v3435
        %v3437 = vrot.slane %v3329, 5
        %v3438 = vrot.slane %v3437, 4
        %v3439 = vrot.slane %v3330, 5
        %v3440 = vsel %vm1750, %v3438, %v3439
        %v3441 = vrot.slane %v3439, 4
        %v3442 = vrot.slane %v3331, 5
        %v3443 = vsel %vm1750, %v3441, %v3442
        %v3444 = vrot.slane %v3332, 5
        %v3445 = vrot.slane %v3444, 4
        %v3446 = vrot.slane %v3333, 5
        %v3447 = vsel %vm1750, %v3445, %v3446
        %v3448 = vrot.slane %v3446, 4
        %v3449 = vrot.slane %v3334, 5
        %v3450 = vsel %vm1750, %v3448, %v3449
        %v3451 = vrot.slane %v3335, 5
        %v3452 = vrot.slane %v3451, 4
        %v3453 = vrot.slane %v3336, 5
        %v3454 = vsel %vm1750, %v3452, %v3453
        %v3455 = vrot.slane %v3453, 4
        %v3456 = vrot.slane %v3337, 5
        %v3457 = vsel %vm1750, %v3455, %v3456
        %v3458 = vrot.slane %v3338, 5
        %v3459 = vrot.slane %v3458, 4
        %v3460 = vrot.slane %v3339, 5
        %v3461 = vsel %vm1750, %v3459, %v3460
        %v3462 = vrot.slane %v3460, 4
        %v3463 = vrot.slane %v3340, 5
        %v3464 = vsel %vm1750, %v3462, %v3463
        %v3465 = vrot.slane %v3341, 5
        %v3466 = vrot.slane %v3465, 4
        %v3467 = vrot.slane %v3342, 5
        %v3468 = vsel %vm1750, %v3466, %v3467
        %v3469 = vrot.slane %v3467, 4
        %v3470 = vrot.slane %v3343, 5
        %v3471 = vsel %vm1750, %v3469, %v3470
        %v3472 = vrot.slane %v3344, 5
        %v3473 = vrot.slane %v3472, 4
        %v3474 = vrot.slane %v3345, 5
        %v3475 = vsel %vm1750, %v3473, %v3474
        %v3476 = vrot.slane %v3474, 4
        %v3477 = vrot.slane %v3346, 5
        %v3478 = vsel %vm1750, %v3476, %v3477
        %v3479 = vrot.slane %v3347, 5
        %v3480 = vrot.slane %v3479, 4
        %v3481 = vrot.slane %v3348, 5
        %v3482 = vsel %vm1750, %v3480, %v3481
        %v3483 = vrot.slane %v3481, 4
        %v3484 = vrot.slane %v3349, 5
        %v3485 = vsel %vm1750, %v3483, %v3484
        %v3486 = vrot.slane %v3350, 5
        %v3487 = vrot.slane %v3486, 4
        %v3488 = vrot.slane %v3351, 5
        %v3489 = vsel %vm1750, %v3487, %v3488
        %v3490 = vrot.slane %v3488, 4
        %v3491 = vrot.slane %v3352, 5
        %v3492 = vsel %vm1750, %v3490, %v3491
        %v3493 = vrot.slane %v3353, 5
        %v3494 = vrot.slane %v3493, 4
        %v3495 = vrot.slane %v3354, 5
        %v3496 = vsel %vm1750, %v3494, %v3495
        %v3497 = vrot.slane %v3495, 4
        %v3498 = vrot.slane %v3355, 5
        %v3499 = vsel %vm1750, %v3497, %v3498
        %v3500 = vrot.slane %v3356, 5
        %v3501 = vrot.slane %v3500, 4
        %v3502 = vrot.slane %v3357, 5
        %v3503 = vsel %vm1750, %v3501, %v3502
        %v3504 = vrot.slane %v3502, 4
        %v3505 = vrot.slane %v3358, 5
        %v3506 = vsel %vm1750, %v3504, %v3505
        %v3507 = vrot.slane %v3359, 5
        %v3508 = vrot.slane %v3507, 4
        %v3509 = vrot.slane %v3360, 5
        %v3510 = vsel %vm1750, %v3508, %v3509
        %v3511 = vrot.slane %v3509, 4
        %v3512 = vrot.slane %v3361, 5
        %v3513 = vsel %vm1750, %v3511, %v3512
        %v3514 = vrot.slane %v3362, 5
        %v3515 = vrot.slane %v3514, 4
        %v3516 = vrot.slane %v3363, 5
        %v3517 = vsel %vm1750, %v3515, %v3516
        %v3518 = vrot.slane %v3516, 4
        %v3519 = vrot.slane %v3364, 5
        %v3520 = vsel %vm1750, %v3518, %v3519
        %v3521 = vrot.slane %v3365, 5
        %v3522 = vrot.slane %v3521, 4
        %v3523 = vrot.slane %v3366, 5
        %v3524 = vsel %vm1750, %v3522, %v3523
        %v3525 = vrot.slane %v3523, 4
        %v3526 = vrot.slane %v3367, 5
        %v3527 = vsel %vm1750, %v3525, %v3526
        %3560 = vst [vmem:[#allocation3 + $0x20] sm:$0xf] %v3419
        %3561 = vst [vmem:[#allocation3 + $0x44] sm:$0xf] %v3422
        %3562 = vst [vmem:[#allocation3 + $0x68] sm:$0xf] %v3426
        %3563 = vst [vmem:[#allocation3 + $0x8c] sm:$0xf] %v3429
        %3564 = vst [vmem:[#allocation3 + $0xb0] sm:$0xf] %v3433
        %3565 = vst [vmem:[#allocation3 + $0xd4] sm:$0xf] %v3436
        %3566 = vst [vmem:[#allocation3 + $0xf8] sm:$0xf] %v3440
        %3567 = vst [vmem:[#allocation3 + $0x11c] sm:$0xf] %v3443
        %3568 = vst [vmem:[#allocation3 + $0x140] sm:$0xf] %v3447
        %3569 = vst [vmem:[#allocation3 + $0x164] sm:$0xf] %v3450
        %3570 = vst [vmem:[#allocation3 + $0x188] sm:$0xf] %v3454
        %3571 = vst [vmem:[#allocation3 + $0x1ac] sm:$0xf] %v3457
        %3572 = vst [vmem:[#allocation3 + $0x1d0] sm:$0xf] %v3461
        %3573 = vst [vmem:[#allocation3 + $0x1f4] sm:$0xf] %v3464
        %3574 = vst [vmem:[#allocation3 + $0x218] sm:$0xf] %v3468
        %3575 = vst [vmem:[#allocation3 + $0x23c] sm:$0xf] %v3471
        %3576 = vst [vmem:[#allocation3 + $0x260] sm:$0xf] %v3475
        %3577 = vst [vmem:[#allocation3 + $0x284] sm:$0xf] %v3478
        %3578 = vst [vmem:[#allocation3 + $0x2a8] sm:$0xf] %v3482
        %3579 = vst [vmem:[#allocation3 + $0x2cc] sm:$0xf] %v3485
        %3580 = vst [vmem:[#allocation3 + $0x2f0] sm:$0xf] %v3489
        %3581 = vst [vmem:[#allocation3 + $0x314] sm:$0xf] %v3492
        %3582 = vst [vmem:[#allocation3 + $0x338] sm:$0xf] %v3496
        %3583 = vst [vmem:[#allocation3 + $0x35c] sm:$0xf] %v3499
        %3584 = vst [vmem:[#allocation3 + $0x380] sm:$0xf] %v3503
        %3585 = vst [vmem:[#allocation3 + $0x3a4] sm:$0xf] %v3506
        %3586 = vst [vmem:[#allocation3 + $0x3c8] sm:$0xf] %v3510
        %3587 = vst [vmem:[#allocation3 + $0x3ec] sm:$0xf] %v3513
        %3588 = vst [vmem:[#allocation3 + $0x410] sm:$0xf] %v3517
        %3589 = vst [vmem:[#allocation3 + $0x434] sm:$0xf] %v3520
        %3590 = vst [vmem:[#allocation3 + $0x458] sm:$0xf] %v3524
        %3591 = vst [vmem:[#allocation3 + $0x47c] sm:$0xf] %v3527
        %v3592 = vld [vmem:[#allocation3] sm:$0xff]
        %v3593 = vld [vmem:[#allocation3 + $0x8] sm:$0xff]
        %v3594 = vld [vmem:[#allocation3 + $0x10] sm:$0xff]
        %v3595 = vld [vmem:[#allocation3 + $0x18] sm:$0xff]
        %v3596 = vld [vmem:[#allocation3 + $0x20] sm:$0xf]
        %v3597 = vld [vmem:[#allocation3 + $0x24] sm:$0xff]
        %v3598 = vld [vmem:[#allocation3 + $0x2c] sm:$0xff]
        %v3599 = vld [vmem:[#allocation3 + $0x34] sm:$0xff]
        %v3600 = vld [vmem:[#allocation3 + $0x3c] sm:$0xff]
        %v3601 = vld [vmem:[#allocation3 + $0x44] sm:$0xf]
        %v3602 = vld [vmem:[#allocation3 + $0x48] sm:$0xff]
        %v3603 = vld [vmem:[#allocation3 + $0x50] sm:$0xff]
        %v3604 = vld [vmem:[#allocation3 + $0x58] sm:$0xff]
        %v3605 = vld [vmem:[#allocation3 + $0x60] sm:$0xff]
        %v3606 = vld [vmem:[#allocation3 + $0x68] sm:$0xf]
        %v3607 = vld [vmem:[#allocation3 + $0x6c] sm:$0xff]
        %v3608 = vld [vmem:[#allocation3 + $0x74] sm:$0xff]
        %v3609 = vld [vmem:[#allocation3 + $0x7c] sm:$0xff]
        %v3610 = vld [vmem:[#allocation3 + $0x84] sm:$0xff]
        %v3611 = vld [vmem:[#allocation3 + $0x8c] sm:$0xf]
        %v3612 = vld [vmem:[#allocation3 + $0x90] sm:$0xff]
        %v3613 = vld [vmem:[#allocation3 + $0x98] sm:$0xff]
        %v3614 = vld [vmem:[#allocation3 + $0xa0] sm:$0xff]
        %v3615 = vld [vmem:[#allocation3 + $0xa8] sm:$0xff]
        %v3616 = vld [vmem:[#allocation3 + $0xb0] sm:$0xf]
        %v3617 = vld [vmem:[#allocation3 + $0xb4] sm:$0xff]
        %v3618 = vld [vmem:[#allocation3 + $0xbc] sm:$0xff]
        %v3619 = vld [vmem:[#allocation3 + $0xc4] sm:$0xff]
        %v3620 = vld [vmem:[#allocation3 + $0xcc] sm:$0xff]
        %v3621 = vld [vmem:[#allocation3 + $0xd4] sm:$0xf]
        %v3622 = vld [vmem:[#allocation3 + $0xd8] sm:$0xff]
        %v3623 = vld [vmem:[#allocation3 + $0xe0] sm:$0xff]
        %v3624 = vld [vmem:[#allocation3 + $0xe8] sm:$0xff]
        %v3625 = vld [vmem:[#allocation3 + $0xf0] sm:$0xff]
        %v3626 = vld [vmem:[#allocation3 + $0xf8] sm:$0xf]
        %v3627 = vld [vmem:[#allocation3 + $0xfc] sm:$0xff]
        %v3628 = vld [vmem:[#allocation3 + $0x104] sm:$0xff]
        %v3629 = vld [vmem:[#allocation3 + $0x10c] sm:$0xff]
        %v3630 = vld [vmem:[#allocation3 + $0x114] sm:$0xff]
        %v3631 = vld [vmem:[#allocation3 + $0x11c] sm:$0xf]
        %v3632 = vld [vmem:[#allocation3 + $0x120] sm:$0xff]
        %v3633 = vld [vmem:[#allocation3 + $0x128] sm:$0xff]
        %v3634 = vld [vmem:[#allocation3 + $0x130] sm:$0xff]
        %v3635 = vld [vmem:[#allocation3 + $0x138] sm:$0xff]
        %v3636 = vld [vmem:[#allocation3 + $0x140] sm:$0xf]
        %v3637 = vld [vmem:[#allocation3 + $0x144] sm:$0xff]
        %v3638 = vld [vmem:[#allocation3 + $0x14c] sm:$0xff]
        %v3639 = vld [vmem:[#allocation3 + $0x154] sm:$0xff]
        %v3640 = vld [vmem:[#allocation3 + $0x15c] sm:$0xff]
        %v3641 = vld [vmem:[#allocation3 + $0x164] sm:$0xf]
        %v3642 = vld [vmem:[#allocation3 + $0x168] sm:$0xff]
        %v3643 = vld [vmem:[#allocation3 + $0x170] sm:$0xff]
        %v3644 = vld [vmem:[#allocation3 + $0x178] sm:$0xff]
        %v3645 = vld [vmem:[#allocation3 + $0x180] sm:$0xff]
        %v3646 = vld [vmem:[#allocation3 + $0x188] sm:$0xf]
        %v3647 = vld [vmem:[#allocation3 + $0x18c] sm:$0xff]
        %v3648 = vld [vmem:[#allocation3 + $0x194] sm:$0xff]
        %v3649 = vld [vmem:[#allocation3 + $0x19c] sm:$0xff]
        %v3650 = vld [vmem:[#allocation3 + $0x1a4] sm:$0xff]
        %v3651 = vld [vmem:[#allocation3 + $0x1ac] sm:$0xf]
        %v3652 = vld [vmem:[#allocation3 + $0x1b0] sm:$0xff]
        %v3653 = vld [vmem:[#allocation3 + $0x1b8] sm:$0xff]
        %v3654 = vld [vmem:[#allocation3 + $0x1c0] sm:$0xff]
        %v3655 = vld [vmem:[#allocation3 + $0x1c8] sm:$0xff]
        %v3656 = vld [vmem:[#allocation3 + $0x1d0] sm:$0xf]
        %v3657 = vld [vmem:[#allocation3 + $0x1d4] sm:$0xff]
        %v3658 = vld [vmem:[#allocation3 + $0x1dc] sm:$0xff]
        %v3659 = vld [vmem:[#allocation3 + $0x1e4] sm:$0xff]
        %v3660 = vld [vmem:[#allocation3 + $0x1ec] sm:$0xff]
        %v3661 = vld [vmem:[#allocation3 + $0x1f4] sm:$0xf]
        %v3662 = vld [vmem:[#allocation3 + $0x1f8] sm:$0xff]
        %v3663 = vld [vmem:[#allocation3 + $0x200] sm:$0xff]
        %v3664 = vld [vmem:[#allocation3 + $0x208] sm:$0xff]
        %v3665 = vld [vmem:[#allocation3 + $0x210] sm:$0xff]
        %v3666 = vld [vmem:[#allocation3 + $0x218] sm:$0xf]
        %v3667 = vld [vmem:[#allocation3 + $0x21c] sm:$0xff]
        %v3668 = vld [vmem:[#allocation3 + $0x224] sm:$0xff]
        %v3669 = vld [vmem:[#allocation3 + $0x22c] sm:$0xff]
        %v3670 = vld [vmem:[#allocation3 + $0x234] sm:$0xff]
        %v3671 = vld [vmem:[#allocation3 + $0x23c] sm:$0xf]
        %v3672 = vld [vmem:[#allocation3 + $0x240] sm:$0xff]
        %v3673 = vld [vmem:[#allocation3 + $0x248] sm:$0xff]
        %v3674 = vld [vmem:[#allocation3 + $0x250] sm:$0xff]
        %v3675 = vld [vmem:[#allocation3 + $0x258] sm:$0xff]
        %v3676 = vld [vmem:[#allocation3 + $0x260] sm:$0xf]
        %v3677 = vld [vmem:[#allocation3 + $0x264] sm:$0xff]
        %v3678 = vld [vmem:[#allocation3 + $0x26c] sm:$0xff]
        %v3679 = vld [vmem:[#allocation3 + $0x274] sm:$0xff]
        %v3680 = vld [vmem:[#allocation3 + $0x27c] sm:$0xff]
        %v3681 = vld [vmem:[#allocation3 + $0x284] sm:$0xf]
        %v3682 = vld [vmem:[#allocation3 + $0x288] sm:$0xff]
        %v3683 = vld [vmem:[#allocation3 + $0x290] sm:$0xff]
        %v3684 = vld [vmem:[#allocation3 + $0x298] sm:$0xff]
        %v3685 = vld [vmem:[#allocation3 + $0x2a0] sm:$0xff]
        %v3686 = vld [vmem:[#allocation3 + $0x2a8] sm:$0xf]
        %v3687 = vld [vmem:[#allocation3 + $0x2ac] sm:$0xff]
        %v3688 = vld [vmem:[#allocation3 + $0x2b4] sm:$0xff]
        %v3689 = vld [vmem:[#allocation3 + $0x2bc] sm:$0xff]
        %v3690 = vld [vmem:[#allocation3 + $0x2c4] sm:$0xff]
        %v3691 = vld [vmem:[#allocation3 + $0x2cc] sm:$0xf]
        %v3692 = vld [vmem:[#allocation3 + $0x2d0] sm:$0xff]
        %v3693 = vld [vmem:[#allocation3 + $0x2d8] sm:$0xff]
        %v3694 = vld [vmem:[#allocation3 + $0x2e0] sm:$0xff]
        %v3695 = vld [vmem:[#allocation3 + $0x2e8] sm:$0xff]
        %v3696 = vld [vmem:[#allocation3 + $0x2f0] sm:$0xf]
        %v3697 = vld [vmem:[#allocation3 + $0x2f4] sm:$0xff]
        %v3698 = vld [vmem:[#allocation3 + $0x2fc] sm:$0xff]
        %v3699 = vld [vmem:[#allocation3 + $0x304] sm:$0xff]
        %v3700 = vld [vmem:[#allocation3 + $0x30c] sm:$0xff]
        %v3701 = vld [vmem:[#allocation3 + $0x314] sm:$0xf]
        %v3702 = vld [vmem:[#allocation3 + $0x318] sm:$0xff]
        %v3703 = vld [vmem:[#allocation3 + $0x320] sm:$0xff]
        %v3704 = vld [vmem:[#allocation3 + $0x328] sm:$0xff]
        %v3705 = vld [vmem:[#allocation3 + $0x330] sm:$0xff]
        %v3706 = vld [vmem:[#allocation3 + $0x338] sm:$0xf]
        %v3707 = vld [vmem:[#allocation3 + $0x33c] sm:$0xff]
        %v3708 = vld [vmem:[#allocation3 + $0x344] sm:$0xff]
        %v3709 = vld [vmem:[#allocation3 + $0x34c] sm:$0xff]
        %v3710 = vld [vmem:[#allocation3 + $0x354] sm:$0xff]
        %v3711 = vld [vmem:[#allocation3 + $0x35c] sm:$0xf]
        %v3712 = vld [vmem:[#allocation3 + $0x360] sm:$0xff]
        %v3713 = vld [vmem:[#allocation3 + $0x368] sm:$0xff]
        %v3714 = vld [vmem:[#allocation3 + $0x370] sm:$0xff]
        %v3715 = vld [vmem:[#allocation3 + $0x378] sm:$0xff]
        %v3716 = vld [vmem:[#allocation3 + $0x380] sm:$0xf]
        %v3717 = vld [vmem:[#allocation3 + $0x384] sm:$0xff]
        %v3718 = vld [vmem:[#allocation3 + $0x38c] sm:$0xff]
        %v3719 = vld [vmem:[#allocation3 + $0x394] sm:$0xff]
        %v3720 = vld [vmem:[#allocation3 + $0x39c] sm:$0xff]
        %v3721 = vld [vmem:[#allocation3 + $0x3a4] sm:$0xf]
        %v3722 = vld [vmem:[#allocation3 + $0x3a8] sm:$0xff]
        %v3723 = vld [vmem:[#allocation3 + $0x3b0] sm:$0xff]
        %v3724 = vld [vmem:[#allocation3 + $0x3b8] sm:$0xff]
        %v3725 = vld [vmem:[#allocation3 + $0x3c0] sm:$0xff]
        %v3726 = vld [vmem:[#allocation3 + $0x3c8] sm:$0xf]
        %v3727 = vld [vmem:[#allocation3 + $0x3cc] sm:$0xff]
        %v3728 = vld [vmem:[#allocation3 + $0x3d4] sm:$0xff]
        %v3729 = vld [vmem:[#allocation3 + $0x3dc] sm:$0xff]
        %v3730 = vld [vmem:[#allocation3 + $0x3e4] sm:$0xff]
        %v3731 = vld [vmem:[#allocation3 + $0x3ec] sm:$0xf]
        %v3732 = vld [vmem:[#allocation3 + $0x3f0] sm:$0xff]
        %v3733 = vld [vmem:[#allocation3 + $0x3f8] sm:$0xff]
        %v3734 = vld [vmem:[#allocation3 + $0x400] sm:$0xff]
        %v3735 = vld [vmem:[#allocation3 + $0x408] sm:$0xff]
        %v3736 = vld [vmem:[#allocation3 + $0x410] sm:$0xf]
        %v3737 = vld [vmem:[#allocation3 + $0x414] sm:$0xff]
        %v3738 = vld [vmem:[#allocation3 + $0x41c] sm:$0xff]
        %v3739 = vld [vmem:[#allocation3 + $0x424] sm:$0xff]
        %v3740 = vld [vmem:[#allocation3 + $0x42c] sm:$0xff]
        %v3741 = vld [vmem:[#allocation3 + $0x434] sm:$0xf]
        %v3742 = vld [vmem:[#allocation3 + $0x438] sm:$0xff]
        %v3743 = vld [vmem:[#allocation3 + $0x440] sm:$0xff]
        %v3744 = vld [vmem:[#allocation3 + $0x448] sm:$0xff]
        %v3745 = vld [vmem:[#allocation3 + $0x450] sm:$0xff]
        %v3746 = vld [vmem:[#allocation3 + $0x458] sm:$0xf]
        %v3747 = vld [vmem:[#allocation3 + $0x45c] sm:$0xff]
        %v3748 = vld [vmem:[#allocation3 + $0x464] sm:$0xff]
        %v3749 = vld [vmem:[#allocation3 + $0x46c] sm:$0xff]
        %v3750 = vld [vmem:[#allocation3 + $0x474] sm:$0xff]
        %v3751 = vld [vmem:[#allocation3 + $0x47c] sm:$0xf]
        %v3752 = vld [vmem:[#allocation9] sm:$0xf]
        %v3753 = vld [vmem:[#allocation9 + $0x4] sm:$0xf]
        %v3754 = vld [vmem:[#allocation9 + $0x8] sm:$0xf]
        %v3755 = vld [vmem:[#allocation9 + $0xc] sm:$0xf]
        %v3756 = vld [vmem:[#allocation9 + $0x10] sm:$0xf]
        %v3757 = vld [vmem:[#allocation9 + $0x14] sm:$0xf]
        %v3758 = vld [vmem:[#allocation9 + $0x18] sm:$0xf]
        %v3759 = vld [vmem:[#allocation9 + $0x1c] sm:$0xf]
        %v3760 = vld [vmem:[#allocation9 + $0x20] sm:$0xf]
        %v3761 = vld [vmem:[#allocation9 + $0x24] sm:$0xf]
        %v3762 = vld [vmem:[#allocation9 + $0x28] sm:$0xf]
        %v3763 = vld [vmem:[#allocation9 + $0x2c] sm:$0xf]
        %v3764 = vld [vmem:[#allocation9 + $0x30] sm:$0xf]
        %v3765 = vld [vmem:[#allocation9 + $0x34] sm:$0xf]
        %v3766 = vld [vmem:[#allocation9 + $0x38] sm:$0xf]
        %v3767 = vld [vmem:[#allocation9 + $0x3c] sm:$0xf]
        %v3768 = vld [vmem:[#allocation9 + $0x40] sm:$0xf]
        %v3769 = vld [vmem:[#allocation9 + $0x44] sm:$0xf]
        %v3770 = vld [vmem:[#allocation9 + $0x48] sm:$0xf]
        %v3771 = vld [vmem:[#allocation9 + $0x4c] sm:$0xf]
        %v3772 = vld [vmem:[#allocation9 + $0x50] sm:$0xf]
        %v3773 = vld [vmem:[#allocation9 + $0x54] sm:$0xf]
        %v3774 = vld [vmem:[#allocation9 + $0x58] sm:$0xf]
        %v3775 = vld [vmem:[#allocation9 + $0x5c] sm:$0xf]
        %v3776 = vld [vmem:[#allocation9 + $0x60] sm:$0xf]
        %v3777 = vld [vmem:[#allocation9 + $0x64] sm:$0xf]
        %v3778 = vld [vmem:[#allocation9 + $0x68] sm:$0xf]
        %v3779 = vld [vmem:[#allocation9 + $0x6c] sm:$0xf]
        %v3780 = vld [vmem:[#allocation9 + $0x70] sm:$0xf]
        %v3781 = vld [vmem:[#allocation9 + $0x74] sm:$0xf]
        %v3782 = vld [vmem:[#allocation9 + $0x78] sm:$0xf]
        %v3783 = vld [vmem:[#allocation9 + $0x7c] sm:$0xf]
        %v3784 = vld [vmem:[#allocation9 + $0x80] sm:$0xf]
        %v3785 = vld [vmem:[#allocation9 + $0x84] sm:$0xf]
        %v3786 = vld [vmem:[#allocation9 + $0x88] sm:$0xf]
        %v3787 = vld [vmem:[#allocation9 + $0x8c] sm:$0xf]
        %v3788 = vld [vmem:[#allocation9 + $0x90] sm:$0xf]
        %v3789 = vld [vmem:[#allocation9 + $0x94] sm:$0xf]
        %v3790 = vld [vmem:[#allocation9 + $0x98] sm:$0xf]
        %v3791 = vld [vmem:[#allocation9 + $0x9c] sm:$0xf]
        %v3792 = vld [vmem:[#allocation9 + $0xa0] sm:$0xf]
        %v3793 = vld [vmem:[#allocation9 + $0xa4] sm:$0xf]
        %v3794 = vld [vmem:[#allocation9 + $0xa8] sm:$0xf]
        %v3795 = vld [vmem:[#allocation9 + $0xac] sm:$0xf]
        %v3796 = vld [vmem:[#allocation9 + $0xb0] sm:$0xf]
        %v3797 = vld [vmem:[#allocation9 + $0xb4] sm:$0xf]
        %v3798 = vld [vmem:[#allocation9 + $0xb8] sm:$0xf]
        %v3799 = vld [vmem:[#allocation9 + $0xbc] sm:$0xf]
        %v3800 = vld [vmem:[#allocation9 + $0xc0] sm:$0xf]
        %v3801 = vld [vmem:[#allocation9 + $0xc4] sm:$0xf]
        %v3802 = vld [vmem:[#allocation9 + $0xc8] sm:$0xf]
        %v3803 = vld [vmem:[#allocation9 + $0xcc] sm:$0xf]
        %v3804 = vld [vmem:[#allocation9 + $0xd0] sm:$0xf]
        %v3805 = vld [vmem:[#allocation9 + $0xd4] sm:$0xf]
        %v3806 = vld [vmem:[#allocation9 + $0xd8] sm:$0xf]
        %v3807 = vld [vmem:[#allocation9 + $0xdc] sm:$0xf]
        %v3808 = vld [vmem:[#allocation9 + $0xe0] sm:$0xf]
        %v3809 = vld [vmem:[#allocation9 + $0xe4] sm:$0xf]
        %v3810 = vld [vmem:[#allocation9 + $0xe8] sm:$0xf]
        %v3811 = vld [vmem:[#allocation9 + $0xec] sm:$0xf]
        %v3812 = vld [vmem:[#allocation9 + $0xf0] sm:$0xf]
        %v3813 = vld [vmem:[#allocation9 + $0xf4] sm:$0xf]
        %v3814 = vld [vmem:[#allocation9 + $0xf8] sm:$0xf]
        %v3815 = vld [vmem:[#allocation9 + $0xfc] sm:$0xf]
        %v3816 = vld [vmem:[#allocation9 + $0x100] sm:$0xf]
        %v3817 = vld [vmem:[#allocation9 + $0x104] sm:$0xf]
        %v3818 = vld [vmem:[#allocation9 + $0x108] sm:$0xf]
        %v3819 = vld [vmem:[#allocation9 + $0x10c] sm:$0xf]
        %v3820 = vld [vmem:[#allocation9 + $0x110] sm:$0xf]
        %v3821 = vld [vmem:[#allocation9 + $0x114] sm:$0xf]
        %v3822 = vld [vmem:[#allocation9 + $0x118] sm:$0xf]
        %v3823 = vld [vmem:[#allocation9 + $0x11c] sm:$0xf]
        %v3824 = vld [vmem:[#allocation9 + $0x120] sm:$0xf]
        %v3825 = vld [vmem:[#allocation9 + $0x124] sm:$0xf]
        %v3826 = vld [vmem:[#allocation9 + $0x128] sm:$0xf]
        %v3827 = vld [vmem:[#allocation9 + $0x12c] sm:$0xf]
        %v3828 = vld [vmem:[#allocation9 + $0x130] sm:$0xf]
        %v3829 = vld [vmem:[#allocation9 + $0x134] sm:$0xf]
        %v3830 = vld [vmem:[#allocation9 + $0x138] sm:$0xf]
        %v3831 = vld [vmem:[#allocation9 + $0x13c] sm:$0xf]
        %v3832 = vld [vmem:[#allocation9 + $0x140] sm:$0xf]
        %v3833 = vld [vmem:[#allocation9 + $0x144] sm:$0xf]
        %v3834 = vld [vmem:[#allocation9 + $0x148] sm:$0xf]
        %v3835 = vld [vmem:[#allocation9 + $0x14c] sm:$0xf]
        %v3836 = vld [vmem:[#allocation9 + $0x150] sm:$0xf]
        %v3837 = vld [vmem:[#allocation9 + $0x154] sm:$0xf]
        %v3838 = vld [vmem:[#allocation9 + $0x158] sm:$0xf]
        %v3839 = vld [vmem:[#allocation9 + $0x15c] sm:$0xf]
        %v3840 = vld [vmem:[#allocation9 + $0x160] sm:$0xf]
        %v3841 = vld [vmem:[#allocation9 + $0x164] sm:$0xf]
        %v3842 = vld [vmem:[#allocation9 + $0x168] sm:$0xf]
        %v3843 = vld [vmem:[#allocation9 + $0x16c] sm:$0xf]
        %v3844 = vld [vmem:[#allocation9 + $0x170] sm:$0xf]
        %v3845 = vld [vmem:[#allocation9 + $0x174] sm:$0xf]
        %v3846 = vld [vmem:[#allocation9 + $0x178] sm:$0xf]
        %v3847 = vld [vmem:[#allocation9 + $0x17c] sm:$0xf]
        %v3848 = vld [vmem:[#allocation9 + $0x180] sm:$0xf]
        %v3849 = vld [vmem:[#allocation9 + $0x184] sm:$0xf]
        %v3850 = vld [vmem:[#allocation9 + $0x188] sm:$0xf]
        %v3851 = vld [vmem:[#allocation9 + $0x18c] sm:$0xf]
        %v3852 = vld [vmem:[#allocation9 + $0x190] sm:$0xf]
        %v3853 = vld [vmem:[#allocation9 + $0x194] sm:$0xf]
        %v3854 = vld [vmem:[#allocation9 + $0x198] sm:$0xf]
        %v3855 = vld [vmem:[#allocation9 + $0x19c] sm:$0xf]
        %v3856 = vld [vmem:[#allocation9 + $0x1a0] sm:$0xf]
        %v3857 = vld [vmem:[#allocation9 + $0x1a4] sm:$0xf]
        %v3858 = vld [vmem:[#allocation9 + $0x1a8] sm:$0xf]
        %v3859 = vld [vmem:[#allocation9 + $0x1ac] sm:$0xf]
        %v3860 = vld [vmem:[#allocation9 + $0x1b0] sm:$0xf]
        %v3861 = vld [vmem:[#allocation9 + $0x1b4] sm:$0xf]
        %v3862 = vld [vmem:[#allocation9 + $0x1b8] sm:$0xf]
        %v3863 = vld [vmem:[#allocation9 + $0x1bc] sm:$0xf]
        %v3864 = vld [vmem:[#allocation9 + $0x1c0] sm:$0xf]
        %v3865 = vld [vmem:[#allocation9 + $0x1c4] sm:$0xf]
        %v3866 = vld [vmem:[#allocation9 + $0x1c8] sm:$0xf]
        %v3867 = vld [vmem:[#allocation9 + $0x1cc] sm:$0xf]
        %v3868 = vld [vmem:[#allocation9 + $0x1d0] sm:$0xf]
        %v3869 = vld [vmem:[#allocation9 + $0x1d4] sm:$0xf]
        %v3870 = vld [vmem:[#allocation9 + $0x1d8] sm:$0xf]
        %v3871 = vld [vmem:[#allocation9 + $0x1dc] sm:$0xf]
        %v3872 = vld [vmem:[#allocation9 + $0x1e0] sm:$0xf]
        %v3873 = vld [vmem:[#allocation9 + $0x1e4] sm:$0xf]
        %v3874 = vld [vmem:[#allocation9 + $0x1e8] sm:$0xf]
        %v3875 = vld [vmem:[#allocation9 + $0x1ec] sm:$0xf]
        %v3876 = vld [vmem:[#allocation9 + $0x1f0] sm:$0xf]
        %v3877 = vld [vmem:[#allocation9 + $0x1f4] sm:$0xf]
        %v3878 = vld [vmem:[#allocation9 + $0x1f8] sm:$0xf]
        %v3879 = vld [vmem:[#allocation9 + $0x1fc] sm:$0xf]
        %v3880 = vld [vmem:[#allocation9 + $0x200] sm:$0xf]
        %v3881 = vld [vmem:[#allocation9 + $0x204] sm:$0xf]
        %v3882 = vld [vmem:[#allocation9 + $0x208] sm:$0xf]
        %v3883 = vld [vmem:[#allocation9 + $0x20c] sm:$0xf]
        %v3884 = vld [vmem:[#allocation9 + $0x210] sm:$0xf]
        %v3885 = vld [vmem:[#allocation9 + $0x214] sm:$0xf]
        %v3886 = vld [vmem:[#allocation9 + $0x218] sm:$0xf]
        %v3887 = vld [vmem:[#allocation9 + $0x21c] sm:$0xf]
        %v3888 = vld [vmem:[#allocation9 + $0x220] sm:$0xf]
        %v3889 = vld [vmem:[#allocation9 + $0x224] sm:$0xf]
        %v3890 = vld [vmem:[#allocation9 + $0x228] sm:$0xf]
        %v3891 = vld [vmem:[#allocation9 + $0x22c] sm:$0xf]
        %v3892 = vld [vmem:[#allocation9 + $0x230] sm:$0xf]
        %v3893 = vld [vmem:[#allocation9 + $0x234] sm:$0xf]
        %v3894 = vld [vmem:[#allocation9 + $0x238] sm:$0xf]
        %v3895 = vld [vmem:[#allocation9 + $0x23c] sm:$0xf]
        %v3896 = vld [vmem:[#allocation3 + $0x10] sm:$0xf]
        %v3897 = vld [vmem:[#allocation3 + $0x34] sm:$0xf]
        %v3898 = vld [vmem:[#allocation3 + $0x58] sm:$0xf]
        %v3899 = vld [vmem:[#allocation3 + $0x7c] sm:$0xf]
        %v3900 = vld [vmem:[#allocation3 + $0xa0] sm:$0xf]
        %v3901 = vld [vmem:[#allocation3 + $0xc4] sm:$0xf]
        %v3902 = vld [vmem:[#allocation3 + $0xe8] sm:$0xf]
        %v3903 = vld [vmem:[#allocation3 + $0x10c] sm:$0xf]
        %v3904 = vld [vmem:[#allocation3 + $0x130] sm:$0xf]
        %v3905 = vld [vmem:[#allocation3 + $0x154] sm:$0xf]
        %v3906 = vld [vmem:[#allocation3 + $0x178] sm:$0xf]
        %v3907 = vld [vmem:[#allocation3 + $0x19c] sm:$0xf]
        %v3908 = vld [vmem:[#allocation3 + $0x1c0] sm:$0xf]
        %v3909 = vld [vmem:[#allocation3 + $0x1e4] sm:$0xf]
        %v3910 = vld [vmem:[#allocation3 + $0x208] sm:$0xf]
        %v3911 = vld [vmem:[#allocation3 + $0x22c] sm:$0xf]
        %v3912 = vld [vmem:[#allocation3 + $0x250] sm:$0xf]
        %v3913 = vld [vmem:[#allocation3 + $0x274] sm:$0xf]
        %v3914 = vld [vmem:[#allocation3 + $0x298] sm:$0xf]
        %v3915 = vld [vmem:[#allocation3 + $0x2bc] sm:$0xf]
        %v3916 = vld [vmem:[#allocation3 + $0x2e0] sm:$0xf]
        %v3917 = vld [vmem:[#allocation3 + $0x304] sm:$0xf]
        %v3918 = vld [vmem:[#allocation3 + $0x328] sm:$0xf]
        %v3919 = vld [vmem:[#allocation3 + $0x34c] sm:$0xf]
        %v3920 = vld [vmem:[#allocation3 + $0x370] sm:$0xf]
        %v3921 = vld [vmem:[#allocation3 + $0x394] sm:$0xf]
        %v3922 = vld [vmem:[#allocation3 + $0x3b8] sm:$0xf]
        %v3923 = vld [vmem:[#allocation3 + $0x3dc] sm:$0xf]
        %v3924 = vld [vmem:[#allocation3 + $0x400] sm:$0xf]
        %v3925 = vld [vmem:[#allocation3 + $0x424] sm:$0xf]
        %v3926 = vld [vmem:[#allocation3 + $0x448] sm:$0xf]
        %v3927 = vld [vmem:[#allocation3 + $0x46c] sm:$0xf]
        %v3928 = vld [vmem:[#allocation12] sm:$0xf]
        %v3929 = vld [vmem:[#allocation12 + $0x4] sm:$0xf]
        %v3930 = vld [vmem:[#allocation12 + $0x8] sm:$0xf]
        %v3931 = vld [vmem:[#allocation12 + $0xc] sm:$0xf]
        %v3932 = vld [vmem:[#allocation12 + $0x10] sm:$0xf]
        %v3933 = vld [vmem:[#allocation12 + $0x14] sm:$0xf]
        %v3934 = vld [vmem:[#allocation12 + $0x18] sm:$0xf]
        %v3935 = vld [vmem:[#allocation12 + $0x1c] sm:$0xf]
        %v3936 = vld [vmem:[#allocation12 + $0x20] sm:$0xf]
        %v3937 = vld [vmem:[#allocation12 + $0x24] sm:$0xf]
        %v3938 = vld [vmem:[#allocation12 + $0x28] sm:$0xf]
        %v3939 = vld [vmem:[#allocation12 + $0x2c] sm:$0xf]
        %v3940 = vld [vmem:[#allocation12 + $0x30] sm:$0xf]
        %v3941 = vld [vmem:[#allocation12 + $0x34] sm:$0xf]
        %v3942 = vld [vmem:[#allocation12 + $0x38] sm:$0xf]
        %v3943 = vld [vmem:[#allocation12 + $0x3c] sm:$0xf]
        %v3944 = vld [vmem:[%s4] sm:$0x1]
        %v3946 = vperm.slane %v3944, 0
        %v4108 = vunpack.c.l.b16 %v3592
        %v4109 = vunpack.c.h.b16 %v3592
        %v4110 = vunpack.c.l.b16 %v3593
        %v4111 = vunpack.c.h.b16 %v3593
        %v4112 = vunpack.c.l.b16 %v3594
        %v4113 = vunpack.c.h.b16 %v3594
        %v4114 = vunpack.c.l.b16 %v3595
        %v4115 = vunpack.c.h.b16 %v3595
        %v4116 = vunpack.c.l.b16 %v3596
        %v4117 = vunpack.c.l.b16 %v3597
        %v4118 = vunpack.c.h.b16 %v3597
        %v4119 = vunpack.c.l.b16 %v3598
        %v4120 = vunpack.c.h.b16 %v3598
        %v4121 = vunpack.c.l.b16 %v3599
        %v4122 = vunpack.c.h.b16 %v3599
        %v4123 = vunpack.c.l.b16 %v3600
        %v4124 = vunpack.c.h.b16 %v3600
        %v4125 = vunpack.c.l.b16 %v3601
        %v4126 = vunpack.c.l.b16 %v3602
        %v4127 = vunpack.c.h.b16 %v3602
        %v4128 = vunpack.c.l.b16 %v3603
        %v4129 = vunpack.c.h.b16 %v3603
        %v4130 = vunpack.c.l.b16 %v3604
        %v4131 = vunpack.c.h.b16 %v3604
        %v4132 = vunpack.c.l.b16 %v3605
        %v4133 = vunpack.c.h.b16 %v3605
        %v4134 = vunpack.c.l.b16 %v3606
        %v4135 = vunpack.c.l.b16 %v3607
        %v4136 = vunpack.c.h.b16 %v3607
        %v4137 = vunpack.c.l.b16 %v3608
        %v4138 = vunpack.c.h.b16 %v3608
        %v4139 = vunpack.c.l.b16 %v3609
        %v4140 = vunpack.c.h.b16 %v3609
        %v4141 = vunpack.c.l.b16 %v3610
        %v4142 = vunpack.c.h.b16 %v3610
        %v4143 = vunpack.c.l.b16 %v3611
        %v4144 = vunpack.c.l.b16 %v3612
        %v4145 = vunpack.c.h.b16 %v3612
        %v4146 = vunpack.c.l.b16 %v3613
        %v4147 = vunpack.c.h.b16 %v3613
        %v4148 = vunpack.c.l.b16 %v3614
        %v4149 = vunpack.c.h.b16 %v3614
        %v4150 = vunpack.c.l.b16 %v3615
        %v4151 = vunpack.c.h.b16 %v3615
        %v4152 = vunpack.c.l.b16 %v3616
        %v4153 = vunpack.c.l.b16 %v3617
        %v4154 = vunpack.c.h.b16 %v3617
        %v4155 = vunpack.c.l.b16 %v3618
        %v4156 = vunpack.c.h.b16 %v3618
        %v4157 = vunpack.c.l.b16 %v3619
        %v4158 = vunpack.c.h.b16 %v3619
        %v4159 = vunpack.c.l.b16 %v3620
        %v4160 = vunpack.c.h.b16 %v3620
        %v4161 = vunpack.c.l.b16 %v3621
        %v4162 = vunpack.c.l.b16 %v3622
        %v4163 = vunpack.c.h.b16 %v3622
        %v4164 = vunpack.c.l.b16 %v3623
        %v4165 = vunpack.c.h.b16 %v3623
        %v4166 = vunpack.c.l.b16 %v3624
        %v4167 = vunpack.c.h.b16 %v3624
        %v4168 = vunpack.c.l.b16 %v3625
        %v4169 = vunpack.c.h.b16 %v3625
        %v4170 = vunpack.c.l.b16 %v3626
        %v4171 = vunpack.c.l.b16 %v3627
        %v4172 = vunpack.c.h.b16 %v3627
        %v4173 = vunpack.c.l.b16 %v3628
        %v4174 = vunpack.c.h.b16 %v3628
        %v4175 = vunpack.c.l.b16 %v3629
        %v4176 = vunpack.c.h.b16 %v3629
        %v4177 = vunpack.c.l.b16 %v3630
        %v4178 = vunpack.c.h.b16 %v3630
        %v4179 = vunpack.c.l.b16 %v3631
        %v4180 = vunpack.c.l.b16 %v3632
        %v4181 = vunpack.c.h.b16 %v3632
        %v4182 = vunpack.c.l.b16 %v3633
        %v4183 = vunpack.c.h.b16 %v3633
        %v4184 = vunpack.c.l.b16 %v3634
        %v4185 = vunpack.c.h.b16 %v3634
        %v4186 = vunpack.c.l.b16 %v3635
        %v4187 = vunpack.c.h.b16 %v3635
        %v4188 = vunpack.c.l.b16 %v3636
        %v4189 = vunpack.c.l.b16 %v3637
        %v4190 = vunpack.c.h.b16 %v3637
        %v4191 = vunpack.c.l.b16 %v3638
        %v4192 = vunpack.c.h.b16 %v3638
        %v4193 = vunpack.c.l.b16 %v3639
        %v4194 = vunpack.c.h.b16 %v3639
        %v4195 = vunpack.c.l.b16 %v3640
        %v4196 = vunpack.c.h.b16 %v3640
        %v4197 = vunpack.c.l.b16 %v3641
        %v4198 = vunpack.c.l.b16 %v3642
        %v4199 = vunpack.c.h.b16 %v3642
        %v4200 = vunpack.c.l.b16 %v3643
        %v4201 = vunpack.c.h.b16 %v3643
        %v4202 = vunpack.c.l.b16 %v3644
        %v4203 = vunpack.c.h.b16 %v3644
        %v4204 = vunpack.c.l.b16 %v3645
        %v4205 = vunpack.c.h.b16 %v3645
        %v4206 = vunpack.c.l.b16 %v3646
        %v4207 = vunpack.c.l.b16 %v3647
        %v4208 = vunpack.c.h.b16 %v3647
        %v4209 = vunpack.c.l.b16 %v3648
        %v4210 = vunpack.c.h.b16 %v3648
        %v4211 = vunpack.c.l.b16 %v3649
        %v4212 = vunpack.c.h.b16 %v3649
        %v4213 = vunpack.c.l.b16 %v3650
        %v4214 = vunpack.c.h.b16 %v3650
        %v4215 = vunpack.c.l.b16 %v3651
        %v4216 = vunpack.c.l.b16 %v3652
        %v4217 = vunpack.c.h.b16 %v3652
        %v4218 = vunpack.c.l.b16 %v3653
        %v4219 = vunpack.c.h.b16 %v3653
        %v4220 = vunpack.c.l.b16 %v3654
        %v4221 = vunpack.c.h.b16 %v3654
        %v4222 = vunpack.c.l.b16 %v3655
        %v4223 = vunpack.c.h.b16 %v3655
        %v4224 = vunpack.c.l.b16 %v3656
        %v4225 = vunpack.c.l.b16 %v3657
        %v4226 = vunpack.c.h.b16 %v3657
        %v4227 = vunpack.c.l.b16 %v3658
        %v4228 = vunpack.c.h.b16 %v3658
        %v4229 = vunpack.c.l.b16 %v3659
        %v4230 = vunpack.c.h.b16 %v3659
        %v4231 = vunpack.c.l.b16 %v3660
        %v4232 = vunpack.c.h.b16 %v3660
        %v4233 = vunpack.c.l.b16 %v3661
        %v4234 = vunpack.c.l.b16 %v3662
        %v4235 = vunpack.c.h.b16 %v3662
        %v4236 = vunpack.c.l.b16 %v3663
        %v4237 = vunpack.c.h.b16 %v3663
        %v4238 = vunpack.c.l.b16 %v3664
        %v4239 = vunpack.c.h.b16 %v3664
        %v4240 = vunpack.c.l.b16 %v3665
        %v4241 = vunpack.c.h.b16 %v3665
        %v4242 = vunpack.c.l.b16 %v3666
        %v4243 = vunpack.c.l.b16 %v3667
        %v4244 = vunpack.c.h.b16 %v3667
        %v4245 = vunpack.c.l.b16 %v3668
        %v4246 = vunpack.c.h.b16 %v3668
        %v4247 = vunpack.c.l.b16 %v3669
        %v4248 = vunpack.c.h.b16 %v3669
        %v4249 = vunpack.c.l.b16 %v3670
        %v4250 = vunpack.c.h.b16 %v3670
        %v4251 = vunpack.c.l.b16 %v3671
        %v4252 = vunpack.c.l.b16 %v3672
        %v4253 = vunpack.c.h.b16 %v3672
        %v4254 = vunpack.c.l.b16 %v3673
        %v4255 = vunpack.c.h.b16 %v3673
        %v4256 = vunpack.c.l.b16 %v3674
        %v4257 = vunpack.c.h.b16 %v3674
        %v4258 = vunpack.c.l.b16 %v3675
        %v4259 = vunpack.c.h.b16 %v3675
        %v4260 = vunpack.c.l.b16 %v3676
        %v4261 = vunpack.c.l.b16 %v3677
        %v4262 = vunpack.c.h.b16 %v3677
        %v4263 = vunpack.c.l.b16 %v3678
        %v4264 = vunpack.c.h.b16 %v3678
        %v4265 = vunpack.c.l.b16 %v3679
        %v4266 = vunpack.c.h.b16 %v3679
        %v4267 = vunpack.c.l.b16 %v3680
        %v4268 = vunpack.c.h.b16 %v3680
        %v4269 = vunpack.c.l.b16 %v3681
        %v4270 = vunpack.c.l.b16 %v3682
        %v4271 = vunpack.c.h.b16 %v3682
        %v4272 = vunpack.c.l.b16 %v3683
        %v4273 = vunpack.c.h.b16 %v3683
        %v4274 = vunpack.c.l.b16 %v3684
        %v4275 = vunpack.c.h.b16 %v3684
        %v4276 = vunpack.c.l.b16 %v3685
        %v4277 = vunpack.c.h.b16 %v3685
        %v4278 = vunpack.c.l.b16 %v3686
        %v4279 = vunpack.c.l.b16 %v3687
        %v4280 = vunpack.c.h.b16 %v3687
        %v4281 = vunpack.c.l.b16 %v3688
        %v4282 = vunpack.c.h.b16 %v3688
        %v4283 = vunpack.c.l.b16 %v3689
        %v4284 = vunpack.c.h.b16 %v3689
        %v4285 = vunpack.c.l.b16 %v3690
        %v4286 = vunpack.c.h.b16 %v3690
        %v4287 = vunpack.c.l.b16 %v3691
        %v4288 = vunpack.c.l.b16 %v3692
        %v4289 = vunpack.c.h.b16 %v3692
        %v4290 = vunpack.c.l.b16 %v3693
        %v4291 = vunpack.c.h.b16 %v3693
        %v4292 = vunpack.c.l.b16 %v3694
        %v4293 = vunpack.c.h.b16 %v3694
        %v4294 = vunpack.c.l.b16 %v3695
        %v4295 = vunpack.c.h.b16 %v3695
        %v4296 = vunpack.c.l.b16 %v3696
        %v4297 = vunpack.c.l.b16 %v3697
        %v4298 = vunpack.c.h.b16 %v3697
        %v4299 = vunpack.c.l.b16 %v3698
        %v4300 = vunpack.c.h.b16 %v3698
        %v4301 = vunpack.c.l.b16 %v3699
        %v4302 = vunpack.c.h.b16 %v3699
        %v4303 = vunpack.c.l.b16 %v3700
        %v4304 = vunpack.c.h.b16 %v3700
        %v4305 = vunpack.c.l.b16 %v3701
        %v4306 = vunpack.c.l.b16 %v3702
        %v4307 = vunpack.c.h.b16 %v3702
        %v4308 = vunpack.c.l.b16 %v3703
        %v4309 = vunpack.c.h.b16 %v3703
        %v4310 = vunpack.c.l.b16 %v3704
        %v4311 = vunpack.c.h.b16 %v3704
        %v4312 = vunpack.c.l.b16 %v3705
        %v4313 = vunpack.c.h.b16 %v3705
        %v4314 = vunpack.c.l.b16 %v3706
        %v4315 = vunpack.c.l.b16 %v3707
        %v4316 = vunpack.c.h.b16 %v3707
        %v4317 = vunpack.c.l.b16 %v3708
        %v4318 = vunpack.c.h.b16 %v3708
        %v4319 = vunpack.c.l.b16 %v3709
        %v4320 = vunpack.c.h.b16 %v3709
        %v4321 = vunpack.c.l.b16 %v3710
        %v4322 = vunpack.c.h.b16 %v3710
        %v4323 = vunpack.c.l.b16 %v3711
        %v4324 = vunpack.c.l.b16 %v3712
        %v4325 = vunpack.c.h.b16 %v3712
        %v4326 = vunpack.c.l.b16 %v3713
        %v4327 = vunpack.c.h.b16 %v3713
        %v4328 = vunpack.c.l.b16 %v3714
        %v4329 = vunpack.c.h.b16 %v3714
        %v4330 = vunpack.c.l.b16 %v3715
        %v4331 = vunpack.c.h.b16 %v3715
        %v4332 = vunpack.c.l.b16 %v3716
        %v4333 = vunpack.c.l.b16 %v3717
        %v4334 = vunpack.c.h.b16 %v3717
        %v4335 = vunpack.c.l.b16 %v3718
        %v4336 = vunpack.c.h.b16 %v3718
        %v4337 = vunpack.c.l.b16 %v3719
        %v4338 = vunpack.c.h.b16 %v3719
        %v4339 = vunpack.c.l.b16 %v3720
        %v4340 = vunpack.c.h.b16 %v3720
        %v4341 = vunpack.c.l.b16 %v3721
        %v4342 = vunpack.c.l.b16 %v3722
        %v4343 = vunpack.c.h.b16 %v3722
        %v4344 = vunpack.c.l.b16 %v3723
        %v4345 = vunpack.c.h.b16 %v3723
        %v4346 = vunpack.c.l.b16 %v3724
        %v4347 = vunpack.c.h.b16 %v3724
        %v4348 = vunpack.c.l.b16 %v3725
        %v4349 = vunpack.c.h.b16 %v3725
        %v4350 = vunpack.c.l.b16 %v3726
        %v4351 = vunpack.c.l.b16 %v3727
        %v4352 = vunpack.c.h.b16 %v3727
        %v4353 = vunpack.c.l.b16 %v3728
        %v4354 = vunpack.c.h.b16 %v3728
        %v4355 = vunpack.c.l.b16 %v3729
        %v4356 = vunpack.c.h.b16 %v3729
        %v4357 = vunpack.c.l.b16 %v3730
        %v4358 = vunpack.c.h.b16 %v3730
        %v4359 = vunpack.c.l.b16 %v3731
        %v4360 = vunpack.c.l.b16 %v3732
        %v4361 = vunpack.c.h.b16 %v3732
        %v4362 = vunpack.c.l.b16 %v3733
        %v4363 = vunpack.c.h.b16 %v3733
        %v4364 = vunpack.c.l.b16 %v3734
        %v4365 = vunpack.c.h.b16 %v3734
        %v4366 = vunpack.c.l.b16 %v3735
        %v4367 = vunpack.c.h.b16 %v3735
        %v4368 = vunpack.c.l.b16 %v3736
        %v4369 = vunpack.c.l.b16 %v3737
        %v4370 = vunpack.c.h.b16 %v3737
        %v4371 = vunpack.c.l.b16 %v3738
        %v4372 = vunpack.c.h.b16 %v3738
        %v4373 = vunpack.c.l.b16 %v3739
        %v4374 = vunpack.c.h.b16 %v3739
        %v4375 = vunpack.c.l.b16 %v3740
        %v4376 = vunpack.c.h.b16 %v3740
        %v4377 = vunpack.c.l.b16 %v3741
        %v4378 = vunpack.c.l.b16 %v3742
        %v4379 = vunpack.c.h.b16 %v3742
        %v4380 = vunpack.c.l.b16 %v3743
        %v4381 = vunpack.c.h.b16 %v3743
        %v4382 = vunpack.c.l.b16 %v3744
        %v4383 = vunpack.c.h.b16 %v3744
        %v4384 = vunpack.c.l.b16 %v3745
        %v4385 = vunpack.c.h.b16 %v3745
        %v4386 = vunpack.c.l.b16 %v3746
        %v4387 = vunpack.c.l.b16 %v3747
        %v4388 = vunpack.c.h.b16 %v3747
        %v4389 = vunpack.c.l.b16 %v3748
        %v4390 = vunpack.c.h.b16 %v3748
        %v4391 = vunpack.c.l.b16 %v3749
        %v4392 = vunpack.c.h.b16 %v3749
        %v4393 = vunpack.c.l.b16 %v3750
        %v4394 = vunpack.c.h.b16 %v3750
        %v4395 = vunpack.c.l.b16 %v3751
        %v4396 = vpack.c.b16 %v4117, %v4108
        %v4397 = vpack.c.b16 %v4118, %v4109
        %v4398 = vpack.c.b16 %v4119, %v4110
        %v4399 = vpack.c.b16 %v4120, %v4111
        %v4400 = vpack.c.b16 %v4121, %v4112
        %v4401 = vpack.c.b16 %v4122, %v4113
        %v4402 = vpack.c.b16 %v4123, %v4114
        %v4403 = vpack.c.b16 %v4124, %v4115
        %v4404 = vpack.c.b16 %v4125, %v4116
        %v4405 = vpack.c.b16 %v4135, %v4126
        %v4406 = vpack.c.b16 %v4136, %v4127
        %v4407 = vpack.c.b16 %v4137, %v4128
        %v4408 = vpack.c.b16 %v4138, %v4129
        %v4409 = vpack.c.b16 %v4139, %v4130
        %v4410 = vpack.c.b16 %v4140, %v4131
        %v4411 = vpack.c.b16 %v4141, %v4132
        %v4412 = vpack.c.b16 %v4142, %v4133
        %v4413 = vpack.c.b16 %v4143, %v4134
        %v4414 = vpack.c.b16 %v4153, %v4144
        %v4415 = vpack.c.b16 %v4154, %v4145
        %v4416 = vpack.c.b16 %v4155, %v4146
        %v4417 = vpack.c.b16 %v4156, %v4147
        %v4418 = vpack.c.b16 %v4157, %v4148
        %v4419 = vpack.c.b16 %v4158, %v4149
        %v4420 = vpack.c.b16 %v4159, %v4150
        %v4421 = vpack.c.b16 %v4160, %v4151
        %v4422 = vpack.c.b16 %v4161, %v4152
        %v4423 = vpack.c.b16 %v4171, %v4162
        %v4424 = vpack.c.b16 %v4172, %v4163
        %v4425 = vpack.c.b16 %v4173, %v4164
        %v4426 = vpack.c.b16 %v4174, %v4165
        %v4427 = vpack.c.b16 %v4175, %v4166
        %v4428 = vpack.c.b16 %v4176, %v4167
        %v4429 = vpack.c.b16 %v4177, %v4168
        %v4430 = vpack.c.b16 %v4178, %v4169
        %v4431 = vpack.c.b16 %v4179, %v4170
        %v4432 = vpack.c.b16 %v4189, %v4180
        %v4433 = vpack.c.b16 %v4190, %v4181
        %v4434 = vpack.c.b16 %v4191, %v4182
        %v4435 = vpack.c.b16 %v4192, %v4183
        %v4436 = vpack.c.b16 %v4193, %v4184
        %v4437 = vpack.c.b16 %v4194, %v4185
        %v4438 = vpack.c.b16 %v4195, %v4186
        %v4439 = vpack.c.b16 %v4196, %v4187
        %v4440 = vpack.c.b16 %v4197, %v4188
        %v4441 = vpack.c.b16 %v4207, %v4198
        %v4442 = vpack.c.b16 %v4208, %v4199
        %v4443 = vpack.c.b16 %v4209, %v4200
        %v4444 = vpack.c.b16 %v4210, %v4201
        %v4445 = vpack.c.b16 %v4211, %v4202
        %v4446 = vpack.c.b16 %v4212, %v4203
        %v4447 = vpack.c.b16 %v4213, %v4204
        %v4448 = vpack.c.b16 %v4214, %v4205
        %v4449 = vpack.c.b16 %v4215, %v4206
        %v4450 = vpack.c.b16 %v4225, %v4216
        %v4451 = vpack.c.b16 %v4226, %v4217
        %v4452 = vpack.c.b16 %v4227, %v4218
        %v4453 = vpack.c.b16 %v4228, %v4219
        %v4454 = vpack.c.b16 %v4229, %v4220
        %v4455 = vpack.c.b16 %v4230, %v4221
        %v4456 = vpack.c.b16 %v4231, %v4222
        %v4457 = vpack.c.b16 %v4232, %v4223
        %v4458 = vpack.c.b16 %v4233, %v4224
        %v4459 = vpack.c.b16 %v4243, %v4234
        %v4460 = vpack.c.b16 %v4244, %v4235
        %v4461 = vpack.c.b16 %v4245, %v4236
        %v4462 = vpack.c.b16 %v4246, %v4237
        %v4463 = vpack.c.b16 %v4247, %v4238
        %v4464 = vpack.c.b16 %v4248, %v4239
        %v4465 = vpack.c.b16 %v4249, %v4240
        %v4466 = vpack.c.b16 %v4250, %v4241
        %v4467 = vpack.c.b16 %v4251, %v4242
        %v4468 = vpack.c.b16 %v4261, %v4252
        %v4469 = vpack.c.b16 %v4262, %v4253
        %v4470 = vpack.c.b16 %v4263, %v4254
        %v4471 = vpack.c.b16 %v4264, %v4255
        %v4472 = vpack.c.b16 %v4265, %v4256
        %v4473 = vpack.c.b16 %v4266, %v4257
        %v4474 = vpack.c.b16 %v4267, %v4258
        %v4475 = vpack.c.b16 %v4268, %v4259
        %v4476 = vpack.c.b16 %v4269, %v4260
        %v4477 = vpack.c.b16 %v4279, %v4270
        %v4478 = vpack.c.b16 %v4280, %v4271
        %v4479 = vpack.c.b16 %v4281, %v4272
        %v4480 = vpack.c.b16 %v4282, %v4273
        %v4481 = vpack.c.b16 %v4283, %v4274
        %v4482 = vpack.c.b16 %v4284, %v4275
        %v4483 = vpack.c.b16 %v4285, %v4276
        %v4484 = vpack.c.b16 %v4286, %v4277
        %v4485 = vpack.c.b16 %v4287, %v4278
        %v4486 = vpack.c.b16 %v4297, %v4288
        %v4487 = vpack.c.b16 %v4298, %v4289
        %v4488 = vpack.c.b16 %v4299, %v4290
        %v4489 = vpack.c.b16 %v4300, %v4291
        %v4490 = vpack.c.b16 %v4301, %v4292
        %v4491 = vpack.c.b16 %v4302, %v4293
        %v4492 = vpack.c.b16 %v4303, %v4294
        %v4493 = vpack.c.b16 %v4304, %v4295
        %v4494 = vpack.c.b16 %v4305, %v4296
        %v4495 = vpack.c.b16 %v4315, %v4306
        %v4496 = vpack.c.b16 %v4316, %v4307
        %v4497 = vpack.c.b16 %v4317, %v4308
        %v4498 = vpack.c.b16 %v4318, %v4309
        %v4499 = vpack.c.b16 %v4319, %v4310
        %v4500 = vpack.c.b16 %v4320, %v4311
        %v4501 = vpack.c.b16 %v4321, %v4312
        %v4502 = vpack.c.b16 %v4322, %v4313
        %v4503 = vpack.c.b16 %v4323, %v4314
        %v4504 = vpack.c.b16 %v4333, %v4324
        %v4505 = vpack.c.b16 %v4334, %v4325
        %v4506 = vpack.c.b16 %v4335, %v4326
        %v4507 = vpack.c.b16 %v4336, %v4327
        %v4508 = vpack.c.b16 %v4337, %v4328
        %v4509 = vpack.c.b16 %v4338, %v4329
        %v4510 = vpack.c.b16 %v4339, %v4330
        %v4511 = vpack.c.b16 %v4340, %v4331
        %v4512 = vpack.c.b16 %v4341, %v4332
        %v4513 = vpack.c.b16 %v4351, %v4342
        %v4514 = vpack.c.b16 %v4352, %v4343
        %v4515 = vpack.c.b16 %v4353, %v4344
        %v4516 = vpack.c.b16 %v4354, %v4345
        %v4517 = vpack.c.b16 %v4355, %v4346
        %v4518 = vpack.c.b16 %v4356, %v4347
        %v4519 = vpack.c.b16 %v4357, %v4348
        %v4520 = vpack.c.b16 %v4358, %v4349
        %v4521 = vpack.c.b16 %v4359, %v4350
        %v4522 = vpack.c.b16 %v4369, %v4360
        %v4523 = vpack.c.b16 %v4370, %v4361
        %v4524 = vpack.c.b16 %v4371, %v4362
        %v4525 = vpack.c.b16 %v4372, %v4363
        %v4526 = vpack.c.b16 %v4373, %v4364
        %v4527 = vpack.c.b16 %v4374, %v4365
        %v4528 = vpack.c.b16 %v4375, %v4366
        %v4529 = vpack.c.b16 %v4376, %v4367
        %v4530 = vpack.c.b16 %v4377, %v4368
        %v4531 = vpack.c.b16 %v4387, %v4378
        %v4532 = vpack.c.b16 %v4388, %v4379
        %v4533 = vpack.c.b16 %v4389, %v4380
        %v4534 = vpack.c.b16 %v4390, %v4381
        %v4535 = vpack.c.b16 %v4391, %v4382
        %v4536 = vpack.c.b16 %v4392, %v4383
        %v4537 = vpack.c.b16 %v4393, %v4384
        %v4538 = vpack.c.b16 %v4394, %v4385
        %v4539 = vpack.c.b16 %v4395, %v4386
        %v4828 = vunpack.c.l.b16 %v3752
        %v4829 = vunpack.c.l.b16 %v3753
        %v4830 = vunpack.c.l.b16 %v3754
        %v4831 = vunpack.c.l.b16 %v3755
        %v4832 = vunpack.c.l.b16 %v3756
        %v4833 = vunpack.c.l.b16 %v3757
        %v4834 = vunpack.c.l.b16 %v3758
        %v4835 = vunpack.c.l.b16 %v3759
        %v4836 = vunpack.c.l.b16 %v3760
        %v4837 = vunpack.c.l.b16 %v3761
        %v4838 = vunpack.c.l.b16 %v3762
        %v4839 = vunpack.c.l.b16 %v3763
        %v4840 = vunpack.c.l.b16 %v3764
        %v4841 = vunpack.c.l.b16 %v3765
        %v4842 = vunpack.c.l.b16 %v3766
        %v4843 = vunpack.c.l.b16 %v3767
        %v4844 = vunpack.c.l.b16 %v3768
        %v4845 = vunpack.c.l.b16 %v3769
        %v4846 = vunpack.c.l.b16 %v3770
        %v4847 = vunpack.c.l.b16 %v3771
        %v4848 = vunpack.c.l.b16 %v3772
        %v4849 = vunpack.c.l.b16 %v3773
        %v4850 = vunpack.c.l.b16 %v3774
        %v4851 = vunpack.c.l.b16 %v3775
        %v4852 = vunpack.c.l.b16 %v3776
        %v4853 = vunpack.c.l.b16 %v3777
        %v4854 = vunpack.c.l.b16 %v3778
        %v4855 = vunpack.c.l.b16 %v3779
        %v4856 = vunpack.c.l.b16 %v3780
        %v4857 = vunpack.c.l.b16 %v3781
        %v4858 = vunpack.c.l.b16 %v3782
        %v4859 = vunpack.c.l.b16 %v3783
        %v4860 = vunpack.c.l.b16 %v3784
        %v4861 = vunpack.c.l.b16 %v3785
        %v4862 = vunpack.c.l.b16 %v3786
        %v4863 = vunpack.c.l.b16 %v3787
        %v4864 = vunpack.c.l.b16 %v3788
        %v4865 = vunpack.c.l.b16 %v3789
        %v4866 = vunpack.c.l.b16 %v3790
        %v4867 = vunpack.c.l.b16 %v3791
        %v4868 = vunpack.c.l.b16 %v3792
        %v4869 = vunpack.c.l.b16 %v3793
        %v4870 = vunpack.c.l.b16 %v3794
        %v4871 = vunpack.c.l.b16 %v3795
        %v4872 = vunpack.c.l.b16 %v3796
        %v4873 = vunpack.c.l.b16 %v3797
        %v4874 = vunpack.c.l.b16 %v3798
        %v4875 = vunpack.c.l.b16 %v3799
        %v4876 = vunpack.c.l.b16 %v3800
        %v4877 = vunpack.c.l.b16 %v3801
        %v4878 = vunpack.c.l.b16 %v3802
        %v4879 = vunpack.c.l.b16 %v3803
        %v4880 = vunpack.c.l.b16 %v3804
        %v4881 = vunpack.c.l.b16 %v3805
        %v4882 = vunpack.c.l.b16 %v3806
        %v4883 = vunpack.c.l.b16 %v3807
        %v4884 = vunpack.c.l.b16 %v3808
        %v4885 = vunpack.c.l.b16 %v3809
        %v4886 = vunpack.c.l.b16 %v3810
        %v4887 = vunpack.c.l.b16 %v3811
        %v4888 = vunpack.c.l.b16 %v3812
        %v4889 = vunpack.c.l.b16 %v3813
        %v4890 = vunpack.c.l.b16 %v3814
        %v4891 = vunpack.c.l.b16 %v3815
        %v4892 = vunpack.c.l.b16 %v3816
        %v4893 = vunpack.c.l.b16 %v3817
        %v4894 = vunpack.c.l.b16 %v3818
        %v4895 = vunpack.c.l.b16 %v3819
        %v4896 = vunpack.c.l.b16 %v3820
        %v4897 = vunpack.c.l.b16 %v3821
        %v4898 = vunpack.c.l.b16 %v3822
        %v4899 = vunpack.c.l.b16 %v3823
        %v4900 = vunpack.c.l.b16 %v3824
        %v4901 = vunpack.c.l.b16 %v3825
        %v4902 = vunpack.c.l.b16 %v3826
        %v4903 = vunpack.c.l.b16 %v3827
        %v4904 = vunpack.c.l.b16 %v3828
        %v4905 = vunpack.c.l.b16 %v3829
        %v4906 = vunpack.c.l.b16 %v3830
        %v4907 = vunpack.c.l.b16 %v3831
        %v4908 = vunpack.c.l.b16 %v3832
        %v4909 = vunpack.c.l.b16 %v3833
        %v4910 = vunpack.c.l.b16 %v3834
        %v4911 = vunpack.c.l.b16 %v3835
        %v4912 = vunpack.c.l.b16 %v3836
        %v4913 = vunpack.c.l.b16 %v3837
        %v4914 = vunpack.c.l.b16 %v3838
        %v4915 = vunpack.c.l.b16 %v3839
        %v4916 = vunpack.c.l.b16 %v3840
        %v4917 = vunpack.c.l.b16 %v3841
        %v4918 = vunpack.c.l.b16 %v3842
        %v4919 = vunpack.c.l.b16 %v3843
        %v4920 = vunpack.c.l.b16 %v3844
        %v4921 = vunpack.c.l.b16 %v3845
        %v4922 = vunpack.c.l.b16 %v3846
        %v4923 = vunpack.c.l.b16 %v3847
        %v4924 = vunpack.c.l.b16 %v3848
        %v4925 = vunpack.c.l.b16 %v3849
        %v4926 = vunpack.c.l.b16 %v3850
        %v4927 = vunpack.c.l.b16 %v3851
        %v4928 = vunpack.c.l.b16 %v3852
        %v4929 = vunpack.c.l.b16 %v3853
        %v4930 = vunpack.c.l.b16 %v3854
        %v4931 = vunpack.c.l.b16 %v3855
        %v4932 = vunpack.c.l.b16 %v3856
        %v4933 = vunpack.c.l.b16 %v3857
        %v4934 = vunpack.c.l.b16 %v3858
        %v4935 = vunpack.c.l.b16 %v3859
        %v4936 = vunpack.c.l.b16 %v3860
        %v4937 = vunpack.c.l.b16 %v3861
        %v4938 = vunpack.c.l.b16 %v3862
        %v4939 = vunpack.c.l.b16 %v3863
        %v4940 = vunpack.c.l.b16 %v3864
        %v4941 = vunpack.c.l.b16 %v3865
        %v4942 = vunpack.c.l.b16 %v3866
        %v4943 = vunpack.c.l.b16 %v3867
        %v4944 = vunpack.c.l.b16 %v3868
        %v4945 = vunpack.c.l.b16 %v3869
        %v4946 = vunpack.c.l.b16 %v3870
        %v4947 = vunpack.c.l.b16 %v3871
        %v4948 = vunpack.c.l.b16 %v3872
        %v4949 = vunpack.c.l.b16 %v3873
        %v4950 = vunpack.c.l.b16 %v3874
        %v4951 = vunpack.c.l.b16 %v3875
        %v4952 = vunpack.c.l.b16 %v3876
        %v4953 = vunpack.c.l.b16 %v3877
        %v4954 = vunpack.c.l.b16 %v3878
        %v4955 = vunpack.c.l.b16 %v3879
        %v4956 = vunpack.c.l.b16 %v3880
        %v4957 = vunpack.c.l.b16 %v3881
        %v4958 = vunpack.c.l.b16 %v3882
        %v4959 = vunpack.c.l.b16 %v3883
        %v4960 = vunpack.c.l.b16 %v3884
        %v4961 = vunpack.c.l.b16 %v3885
        %v4962 = vunpack.c.l.b16 %v3886
        %v4963 = vunpack.c.l.b16 %v3887
        %v4964 = vunpack.c.l.b16 %v3888
        %v4965 = vunpack.c.l.b16 %v3889
        %v4966 = vunpack.c.l.b16 %v3890
        %v4967 = vunpack.c.l.b16 %v3891
        %v4968 = vunpack.c.l.b16 %v3892
        %v4969 = vunpack.c.l.b16 %v3893
        %v4970 = vunpack.c.l.b16 %v3894
        %v4971 = vunpack.c.l.b16 %v3895
        %v4972 = vpack.c.b16 %v4829, %v4828
        %v4973 = vpack.c.b16 %v4831, %v4830
        %v4974 = vpack.c.b16 %v4833, %v4832
        %v4975 = vpack.c.b16 %v4835, %v4834
        %v4976 = vpack.c.b16 %v4837, %v4836
        %v4977 = vpack.c.b16 %v4839, %v4838
        %v4978 = vpack.c.b16 %v4841, %v4840
        %v4979 = vpack.c.b16 %v4843, %v4842
        %v4980 = vpack.c.b16 %v4845, %v4844
        %v4981 = vpack.c.b16 %v4847, %v4846
        %v4982 = vpack.c.b16 %v4849, %v4848
        %v4983 = vpack.c.b16 %v4851, %v4850
        %v4984 = vpack.c.b16 %v4853, %v4852
        %v4985 = vpack.c.b16 %v4855, %v4854
        %v4986 = vpack.c.b16 %v4857, %v4856
        %v4987 = vpack.c.b16 %v4859, %v4858
        %v4988 = vpack.c.b16 %v4861, %v4860
        %v4989 = vpack.c.b16 %v4863, %v4862
        %v4990 = vpack.c.b16 %v4865, %v4864
        %v4991 = vpack.c.b16 %v4867, %v4866
        %v4992 = vpack.c.b16 %v4869, %v4868
        %v4993 = vpack.c.b16 %v4871, %v4870
        %v4994 = vpack.c.b16 %v4873, %v4872
        %v4995 = vpack.c.b16 %v4875, %v4874
        %v4996 = vpack.c.b16 %v4877, %v4876
        %v4997 = vpack.c.b16 %v4879, %v4878
        %v4998 = vpack.c.b16 %v4881, %v4880
        %v4999 = vpack.c.b16 %v4883, %v4882
        %v5000 = vpack.c.b16 %v4885, %v4884
        %v5001 = vpack.c.b16 %v4887, %v4886
        %v5002 = vpack.c.b16 %v4889, %v4888
        %v5003 = vpack.c.b16 %v4891, %v4890
        %v5004 = vpack.c.b16 %v4893, %v4892
        %v5005 = vpack.c.b16 %v4895, %v4894
        %v5006 = vpack.c.b16 %v4897, %v4896
        %v5007 = vpack.c.b16 %v4899, %v4898
        %v5008 = vpack.c.b16 %v4901, %v4900
        %v5009 = vpack.c.b16 %v4903, %v4902
        %v5010 = vpack.c.b16 %v4905, %v4904
        %v5011 = vpack.c.b16 %v4907, %v4906
        %v5012 = vpack.c.b16 %v4909, %v4908
        %v5013 = vpack.c.b16 %v4911, %v4910
        %v5014 = vpack.c.b16 %v4913, %v4912
        %v5015 = vpack.c.b16 %v4915, %v4914
        %v5016 = vpack.c.b16 %v4917, %v4916
        %v5017 = vpack.c.b16 %v4919, %v4918
        %v5018 = vpack.c.b16 %v4921, %v4920
        %v5019 = vpack.c.b16 %v4923, %v4922
        %v5020 = vpack.c.b16 %v4925, %v4924
        %v5021 = vpack.c.b16 %v4927, %v4926
        %v5022 = vpack.c.b16 %v4929, %v4928
        %v5023 = vpack.c.b16 %v4931, %v4930
        %v5024 = vpack.c.b16 %v4933, %v4932
        %v5025 = vpack.c.b16 %v4935, %v4934
        %v5026 = vpack.c.b16 %v4937, %v4936
        %v5027 = vpack.c.b16 %v4939, %v4938
        %v5028 = vpack.c.b16 %v4941, %v4940
        %v5029 = vpack.c.b16 %v4943, %v4942
        %v5030 = vpack.c.b16 %v4945, %v4944
        %v5031 = vpack.c.b16 %v4947, %v4946
        %v5032 = vpack.c.b16 %v4949, %v4948
        %v5033 = vpack.c.b16 %v4951, %v4950
        %v5034 = vpack.c.b16 %v4953, %v4952
        %v5035 = vpack.c.b16 %v4955, %v4954
        %v5036 = vpack.c.b16 %v4957, %v4956
        %v5037 = vpack.c.b16 %v4959, %v4958
        %v5038 = vpack.c.b16 %v4961, %v4960
        %v5039 = vpack.c.b16 %v4963, %v4962
        %v5040 = vpack.c.b16 %v4965, %v4964
        %v5041 = vpack.c.b16 %v4967, %v4966
        %v5042 = vpack.c.b16 %v4969, %v4968
        %v5043 = vpack.c.b16 %v4971, %v4970
        %5116 = vmatpush.bf16.msra.mxu0 %v4979
        %5117 = vmatpush.bf16.msra.mxu0 %v4978
        %5118 = vmatpush.bf16.msra.mxu0 %v4977
        %5119 = vmatpush.bf16.msra.mxu0 %v4976
        %5120 = vmatpush.bf16.msra.mxu0 %v4975
        %5121 = vmatpush.bf16.msra.mxu0 %v4974
        %5122 = vmatpush.bf16.msra.mxu0 %v4973
        %5123 = vmatpush.bf16.msra.mxu0 %v4972
        %5124 = vmatmul.bf16.gmra.mxu0 %v4396
        %v5125 = vpop.f32.mrf.mxu0
        %v5126 = vadd.f32 %v3946, %v5125
        %v5127 = vpop.f32.mrf.mxu0
        %v5128 = vadd.f32 %v3946, %v5127
        %5129 = vmatmul.bf16.gmra.mxu0 %v4405
        %v5130 = vpop.f32.mrf.mxu0
        %v5131 = vadd.f32 %v3946, %v5130
        %v5132 = vpop.f32.mrf.mxu0
        %v5133 = vadd.f32 %v3946, %v5132
        %5134 = vmatmul.bf16.gmra.mxu0 %v4414
        %v5135 = vpop.f32.mrf.mxu0
        %v5136 = vadd.f32 %v3946, %v5135
        %v5137 = vpop.f32.mrf.mxu0
        %v5138 = vadd.f32 %v3946, %v5137
        %5139 = vmatmul.bf16.gmra.mxu0 %v4423
        %v5140 = vpop.f32.mrf.mxu0
        %v5141 = vadd.f32 %v3946, %v5140
        %v5142 = vpop.f32.mrf.mxu0
        %v5143 = vadd.f32 %v3946, %v5142
        %5144 = vmatmul.bf16.gmra.mxu0 %v4432
        %v5145 = vpop.f32.mrf.mxu0
        %v5146 = vadd.f32 %v3946, %v5145
        %v5147 = vpop.f32.mrf.mxu0
        %v5148 = vadd.f32 %v3946, %v5147
        %5149 = vmatmul.bf16.gmra.mxu0 %v4441
        %v5150 = vpop.f32.mrf.mxu0
        %v5151 = vadd.f32 %v3946, %v5150
        %v5152 = vpop.f32.mrf.mxu0
        %v5153 = vadd.f32 %v3946, %v5152
        %5154 = vmatmul.bf16.gmra.mxu0 %v4450
        %v5155 = vpop.f32.mrf.mxu0
        %v5156 = vadd.f32 %v3946, %v5155
        %v5157 = vpop.f32.mrf.mxu0
        %v5158 = vadd.f32 %v3946, %v5157
        %5159 = vmatmul.bf16.gmra.mxu0 %v4459
        %v5160 = vpop.f32.mrf.mxu0
        %v5161 = vadd.f32 %v3946, %v5160
        %v5162 = vpop.f32.mrf.mxu0
        %v5163 = vadd.f32 %v3946, %v5162
        %5164 = vmatmul.bf16.gmra.mxu0 %v4468
        %v5165 = vpop.f32.mrf.mxu0
        %v5166 = vadd.f32 %v3946, %v5165
        %v5167 = vpop.f32.mrf.mxu0
        %v5168 = vadd.f32 %v3946, %v5167
        %5169 = vmatmul.bf16.gmra.mxu0 %v4477
        %v5170 = vpop.f32.mrf.mxu0
        %v5171 = vadd.f32 %v3946, %v5170
        %v5172 = vpop.f32.mrf.mxu0
        %v5173 = vadd.f32 %v3946, %v5172
        %5174 = vmatmul.bf16.gmra.mxu0 %v4486
        %v5175 = vpop.f32.mrf.mxu0
        %v5176 = vadd.f32 %v3946, %v5175
        %v5177 = vpop.f32.mrf.mxu0
        %v5178 = vadd.f32 %v3946, %v5177
        %5179 = vmatmul.bf16.gmra.mxu0 %v4495
        %v5180 = vpop.f32.mrf.mxu0
        %v5181 = vadd.f32 %v3946, %v5180
        %v5182 = vpop.f32.mrf.mxu0
        %v5183 = vadd.f32 %v3946, %v5182
        %5184 = vmatmul.bf16.gmra.mxu0 %v4504
        %v5185 = vpop.f32.mrf.mxu0
        %v5186 = vadd.f32 %v3946, %v5185
        %v5187 = vpop.f32.mrf.mxu0
        %v5188 = vadd.f32 %v3946, %v5187
        %5189 = vmatmul.bf16.gmra.mxu0 %v4513
        %v5190 = vpop.f32.mrf.mxu0
        %v5191 = vadd.f32 %v3946, %v5190
        %v5192 = vpop.f32.mrf.mxu0
        %v5193 = vadd.f32 %v3946, %v5192
        %5194 = vmatmul.bf16.gmra.mxu0 %v4522
        %v5195 = vpop.f32.mrf.mxu0
        %v5196 = vadd.f32 %v3946, %v5195
        %v5197 = vpop.f32.mrf.mxu0
        %v5198 = vadd.f32 %v3946, %v5197
        %5199 = vmatmul.bf16.gmra.mxu0 %v4531
        %v5200 = vpop.f32.mrf.mxu0
        %v5201 = vadd.f32 %v3946, %v5200
        %v5202 = vpop.f32.mrf.mxu0
        %v5203 = vadd.f32 %v3946, %v5202
        %5204 = vdwg.mxu0
        %5205 = vmatpush.bf16.msra.mxu0 %v4987
        %5206 = vmatpush.bf16.msra.mxu0 %v4986
        %5207 = vmatpush.bf16.msra.mxu0 %v4985
        %5208 = vmatpush.bf16.msra.mxu0 %v4984
        %5209 = vmatpush.bf16.msra.mxu0 %v4983
        %5210 = vmatpush.bf16.msra.mxu0 %v4982
        %5211 = vmatpush.bf16.msra.mxu0 %v4981
        %5212 = vmatpush.bf16.msra.mxu0 %v4980
        %5213 = vmatmul.bf16.gmra.mxu0 %v4397
        %v5214 = vpop.f32.mrf.mxu0
        %v5215 = vadd.f32 %v5126, %v5214
        %v5216 = vpop.f32.mrf.mxu0
        %v5217 = vadd.f32 %v5128, %v5216
        %5218 = vmatmul.bf16.gmra.mxu0 %v4406
        %v5219 = vpop.f32.mrf.mxu0
        %v5220 = vadd.f32 %v5131, %v5219
        %v5221 = vpop.f32.mrf.mxu0
        %v5222 = vadd.f32 %v5133, %v5221
        %5223 = vmatmul.bf16.gmra.mxu0 %v4415
        %v5224 = vpop.f32.mrf.mxu0
        %v5225 = vadd.f32 %v5136, %v5224
        %v5226 = vpop.f32.mrf.mxu0
        %v5227 = vadd.f32 %v5138, %v5226
        %5228 = vmatmul.bf16.gmra.mxu0 %v4424
        %v5229 = vpop.f32.mrf.mxu0
        %v5230 = vadd.f32 %v5141, %v5229
        %v5231 = vpop.f32.mrf.mxu0
        %v5232 = vadd.f32 %v5143, %v5231
        %5233 = vmatmul.bf16.gmra.mxu0 %v4433
        %v5234 = vpop.f32.mrf.mxu0
        %v5235 = vadd.f32 %v5146, %v5234
        %v5236 = vpop.f32.mrf.mxu0
        %v5237 = vadd.f32 %v5148, %v5236
        %5238 = vmatmul.bf16.gmra.mxu0 %v4442
        %v5239 = vpop.f32.mrf.mxu0
        %v5240 = vadd.f32 %v5151, %v5239
        %v5241 = vpop.f32.mrf.mxu0
        %v5242 = vadd.f32 %v5153, %v5241
        %5243 = vmatmul.bf16.gmra.mxu0 %v4451
        %v5244 = vpop.f32.mrf.mxu0
        %v5245 = vadd.f32 %v5156, %v5244
        %v5246 = vpop.f32.mrf.mxu0
        %v5247 = vadd.f32 %v5158, %v5246
        %5248 = vmatmul.bf16.gmra.mxu0 %v4460
        %v5249 = vpop.f32.mrf.mxu0
        %v5250 = vadd.f32 %v5161, %v5249
        %v5251 = vpop.f32.mrf.mxu0
        %v5252 = vadd.f32 %v5163, %v5251
        %5253 = vmatmul.bf16.gmra.mxu0 %v4469
        %v5254 = vpop.f32.mrf.mxu0
        %v5255 = vadd.f32 %v5166, %v5254
        %v5256 = vpop.f32.mrf.mxu0
        %v5257 = vadd.f32 %v5168, %v5256
        %5258 = vmatmul.bf16.gmra.mxu0 %v4478
        %v5259 = vpop.f32.mrf.mxu0
        %v5260 = vadd.f32 %v5171, %v5259
        %v5261 = vpop.f32.mrf.mxu0
        %v5262 = vadd.f32 %v5173, %v5261
        %5263 = vmatmul.bf16.gmra.mxu0 %v4487
        %v5264 = vpop.f32.mrf.mxu0
        %v5265 = vadd.f32 %v5176, %v5264
        %v5266 = vpop.f32.mrf.mxu0
        %v5267 = vadd.f32 %v5178, %v5266
        %5268 = vmatmul.bf16.gmra.mxu0 %v4496
        %v5269 = vpop.f32.mrf.mxu0
        %v5270 = vadd.f32 %v5181, %v5269
        %v5271 = vpop.f32.mrf.mxu0
        %v5272 = vadd.f32 %v5183, %v5271
        %5273 = vmatmul.bf16.gmra.mxu0 %v4505
        %v5274 = vpop.f32.mrf.mxu0
        %v5275 = vadd.f32 %v5186, %v5274
        %v5276 = vpop.f32.mrf.mxu0
        %v5277 = vadd.f32 %v5188, %v5276
        %5278 = vmatmul.bf16.gmra.mxu0 %v4514
        %v5279 = vpop.f32.mrf.mxu0
        %v5280 = vadd.f32 %v5191, %v5279
        %v5281 = vpop.f32.mrf.mxu0
        %v5282 = vadd.f32 %v5193, %v5281
        %5283 = vmatmul.bf16.gmra.mxu0 %v4523
        %v5284 = vpop.f32.mrf.mxu0
        %v5285 = vadd.f32 %v5196, %v5284
        %v5286 = vpop.f32.mrf.mxu0
        %v5287 = vadd.f32 %v5198, %v5286
        %5288 = vmatmul.bf16.gmra.mxu0 %v4532
        %v5289 = vpop.f32.mrf.mxu0
        %v5290 = vadd.f32 %v5201, %v5289
        %v5291 = vpop.f32.mrf.mxu0
        %v5292 = vadd.f32 %v5203, %v5291
        %5293 = vdwg.mxu0
        %5294 = vmatpush.bf16.msra.mxu0 %v4995
        %5295 = vmatpush.bf16.msra.mxu0 %v4994
        %5296 = vmatpush.bf16.msra.mxu0 %v4993
        %5297 = vmatpush.bf16.msra.mxu0 %v4992
        %5298 = vmatpush.bf16.msra.mxu0 %v4991
        %5299 = vmatpush.bf16.msra.mxu0 %v4990
        %5300 = vmatpush.bf16.msra.mxu0 %v4989
        %5301 = vmatpush.bf16.msra.mxu0 %v4988
        %5302 = vmatmul.bf16.gmra.mxu0 %v4398
        %v5303 = vpop.f32.mrf.mxu0
        %v5304 = vadd.f32 %v5215, %v5303
        %v5305 = vpop.f32.mrf.mxu0
        %v5306 = vadd.f32 %v5217, %v5305
        %5307 = vmatmul.bf16.gmra.mxu0 %v4407
        %v5308 = vpop.f32.mrf.mxu0
        %v5309 = vadd.f32 %v5220, %v5308
        %v5310 = vpop.f32.mrf.mxu0
        %v5311 = vadd.f32 %v5222, %v5310
        %5312 = vmatmul.bf16.gmra.mxu0 %v4416
        %v5313 = vpop.f32.mrf.mxu0
        %v5314 = vadd.f32 %v5225, %v5313
        %v5315 = vpop.f32.mrf.mxu0
        %v5316 = vadd.f32 %v5227, %v5315
        %5317 = vmatmul.bf16.gmra.mxu0 %v4425
        %v5318 = vpop.f32.mrf.mxu0
        %v5319 = vadd.f32 %v5230, %v5318
        %v5320 = vpop.f32.mrf.mxu0
        %v5321 = vadd.f32 %v5232, %v5320
        %5322 = vmatmul.bf16.gmra.mxu0 %v4434
        %v5323 = vpop.f32.mrf.mxu0
        %v5324 = vadd.f32 %v5235, %v5323
        %v5325 = vpop.f32.mrf.mxu0
        %v5326 = vadd.f32 %v5237, %v5325
        %5327 = vmatmul.bf16.gmra.mxu0 %v4443
        %v5328 = vpop.f32.mrf.mxu0
        %v5329 = vadd.f32 %v5240, %v5328
        %v5330 = vpop.f32.mrf.mxu0
        %v5331 = vadd.f32 %v5242, %v5330
        %5332 = vmatmul.bf16.gmra.mxu0 %v4452
        %v5333 = vpop.f32.mrf.mxu0
        %v5334 = vadd.f32 %v5245, %v5333
        %v5335 = vpop.f32.mrf.mxu0
        %v5336 = vadd.f32 %v5247, %v5335
        %5337 = vmatmul.bf16.gmra.mxu0 %v4461
        %v5338 = vpop.f32.mrf.mxu0
        %v5339 = vadd.f32 %v5250, %v5338
        %v5340 = vpop.f32.mrf.mxu0
        %v5341 = vadd.f32 %v5252, %v5340
        %5342 = vmatmul.bf16.gmra.mxu0 %v4470
        %v5343 = vpop.f32.mrf.mxu0
        %v5344 = vadd.f32 %v5255, %v5343
        %v5345 = vpop.f32.mrf.mxu0
        %v5346 = vadd.f32 %v5257, %v5345
        %5347 = vmatmul.bf16.gmra.mxu0 %v4479
        %v5348 = vpop.f32.mrf.mxu0
        %v5349 = vadd.f32 %v5260, %v5348
        %v5350 = vpop.f32.mrf.mxu0
        %v5351 = vadd.f32 %v5262, %v5350
        %5352 = vmatmul.bf16.gmra.mxu0 %v4488
        %v5353 = vpop.f32.mrf.mxu0
        %v5354 = vadd.f32 %v5265, %v5353
        %v5355 = vpop.f32.mrf.mxu0
        %v5356 = vadd.f32 %v5267, %v5355
        %5357 = vmatmul.bf16.gmra.mxu0 %v4497
        %v5358 = vpop.f32.mrf.mxu0
        %v5359 = vadd.f32 %v5270, %v5358
        %v5360 = vpop.f32.mrf.mxu0
        %v5361 = vadd.f32 %v5272, %v5360
        %5362 = vmatmul.bf16.gmra.mxu0 %v4506
        %v5363 = vpop.f32.mrf.mxu0
        %v5364 = vadd.f32 %v5275, %v5363
        %v5365 = vpop.f32.mrf.mxu0
        %v5366 = vadd.f32 %v5277, %v5365
        %5367 = vmatmul.bf16.gmra.mxu0 %v4515
        %v5368 = vpop.f32.mrf.mxu0
        %v5369 = vadd.f32 %v5280, %v5368
        %v5370 = vpop.f32.mrf.mxu0
        %v5371 = vadd.f32 %v5282, %v5370
        %5372 = vmatmul.bf16.gmra.mxu0 %v4524
        %v5373 = vpop.f32.mrf.mxu0
        %v5374 = vadd.f32 %v5285, %v5373
        %v5375 = vpop.f32.mrf.mxu0
        %v5376 = vadd.f32 %v5287, %v5375
        %5377 = vmatmul.bf16.gmra.mxu0 %v4533
        %v5378 = vpop.f32.mrf.mxu0
        %v5379 = vadd.f32 %v5290, %v5378
        %v5380 = vpop.f32.mrf.mxu0
        %v5381 = vadd.f32 %v5292, %v5380
        %5382 = vdwg.mxu0
        %5383 = vmatpush.bf16.msra.mxu0 %v5003
        %5384 = vmatpush.bf16.msra.mxu0 %v5002
        %5385 = vmatpush.bf16.msra.mxu0 %v5001
        %5386 = vmatpush.bf16.msra.mxu0 %v5000
        %5387 = vmatpush.bf16.msra.mxu0 %v4999
        %5388 = vmatpush.bf16.msra.mxu0 %v4998
        %5389 = vmatpush.bf16.msra.mxu0 %v4997
        %5390 = vmatpush.bf16.msra.mxu0 %v4996
        %5391 = vmatmul.bf16.gmra.mxu0 %v4399
        %v5392 = vpop.f32.mrf.mxu0
        %v5393 = vadd.f32 %v5304, %v5392
        %v5394 = vpop.f32.mrf.mxu0
        %v5395 = vadd.f32 %v5306, %v5394
        %5396 = vmatmul.bf16.gmra.mxu0 %v4408
        %v5397 = vpop.f32.mrf.mxu0
        %v5398 = vadd.f32 %v5309, %v5397
        %v5399 = vpop.f32.mrf.mxu0
        %v5400 = vadd.f32 %v5311, %v5399
        %5401 = vmatmul.bf16.gmra.mxu0 %v4417
        %v5402 = vpop.f32.mrf.mxu0
        %v5403 = vadd.f32 %v5314, %v5402
        %v5404 = vpop.f32.mrf.mxu0
        %v5405 = vadd.f32 %v5316, %v5404
        %5406 = vmatmul.bf16.gmra.mxu0 %v4426
        %v5407 = vpop.f32.mrf.mxu0
        %v5408 = vadd.f32 %v5319, %v5407
        %v5409 = vpop.f32.mrf.mxu0
        %v5410 = vadd.f32 %v5321, %v5409
        %5411 = vmatmul.bf16.gmra.mxu0 %v4435
        %v5412 = vpop.f32.mrf.mxu0
        %v5413 = vadd.f32 %v5324, %v5412
        %v5414 = vpop.f32.mrf.mxu0
        %v5415 = vadd.f32 %v5326, %v5414
        %5416 = vmatmul.bf16.gmra.mxu0 %v4444
        %v5417 = vpop.f32.mrf.mxu0
        %v5418 = vadd.f32 %v5329, %v5417
        %v5419 = vpop.f32.mrf.mxu0
        %v5420 = vadd.f32 %v5331, %v5419
        %5421 = vmatmul.bf16.gmra.mxu0 %v4453
        %v5422 = vpop.f32.mrf.mxu0
        %v5423 = vadd.f32 %v5334, %v5422
        %v5424 = vpop.f32.mrf.mxu0
        %v5425 = vadd.f32 %v5336, %v5424
        %5426 = vmatmul.bf16.gmra.mxu0 %v4462
        %v5427 = vpop.f32.mrf.mxu0
        %v5428 = vadd.f32 %v5339, %v5427
        %v5429 = vpop.f32.mrf.mxu0
        %v5430 = vadd.f32 %v5341, %v5429
        %5431 = vmatmul.bf16.gmra.mxu0 %v4471
        %v5432 = vpop.f32.mrf.mxu0
        %v5433 = vadd.f32 %v5344, %v5432
        %v5434 = vpop.f32.mrf.mxu0
        %v5435 = vadd.f32 %v5346, %v5434
        %5436 = vmatmul.bf16.gmra.mxu0 %v4480
        %v5437 = vpop.f32.mrf.mxu0
        %v5438 = vadd.f32 %v5349, %v5437
        %v5439 = vpop.f32.mrf.mxu0
        %v5440 = vadd.f32 %v5351, %v5439
        %5441 = vmatmul.bf16.gmra.mxu0 %v4489
        %v5442 = vpop.f32.mrf.mxu0
        %v5443 = vadd.f32 %v5354, %v5442
        %v5444 = vpop.f32.mrf.mxu0
        %v5445 = vadd.f32 %v5356, %v5444
        %5446 = vmatmul.bf16.gmra.mxu0 %v4498
        %v5447 = vpop.f32.mrf.mxu0
        %v5448 = vadd.f32 %v5359, %v5447
        %v5449 = vpop.f32.mrf.mxu0
        %v5450 = vadd.f32 %v5361, %v5449
        %5451 = vmatmul.bf16.gmra.mxu0 %v4507
        %v5452 = vpop.f32.mrf.mxu0
        %v5453 = vadd.f32 %v5364, %v5452
        %v5454 = vpop.f32.mrf.mxu0
        %v5455 = vadd.f32 %v5366, %v5454
        %5456 = vmatmul.bf16.gmra.mxu0 %v4516
        %v5457 = vpop.f32.mrf.mxu0
        %v5458 = vadd.f32 %v5369, %v5457
        %v5459 = vpop.f32.mrf.mxu0
        %v5460 = vadd.f32 %v5371, %v5459
        %5461 = vmatmul.bf16.gmra.mxu0 %v4525
        %v5462 = vpop.f32.mrf.mxu0
        %v5463 = vadd.f32 %v5374, %v5462
        %v5464 = vpop.f32.mrf.mxu0
        %v5465 = vadd.f32 %v5376, %v5464
        %5466 = vmatmul.bf16.gmra.mxu0 %v4534
        %v5467 = vpop.f32.mrf.mxu0
        %v5468 = vadd.f32 %v5379, %v5467
        %v5469 = vpop.f32.mrf.mxu0
        %v5470 = vadd.f32 %v5381, %v5469
        %5471 = vdwg.mxu0
        %5472 = vmatpush.bf16.msra.mxu0 %v5011
        %5473 = vmatpush.bf16.msra.mxu0 %v5010
        %5474 = vmatpush.bf16.msra.mxu0 %v5009
        %5475 = vmatpush.bf16.msra.mxu0 %v5008
        %5476 = vmatpush.bf16.msra.mxu0 %v5007
        %5477 = vmatpush.bf16.msra.mxu0 %v5006
        %5478 = vmatpush.bf16.msra.mxu0 %v5005
        %5479 = vmatpush.bf16.msra.mxu0 %v5004
        %5480 = vmatmul.bf16.gmra.mxu0 %v4400
        %v5481 = vpop.f32.mrf.mxu0
        %v5482 = vadd.f32 %v5393, %v5481
        %v5483 = vpop.f32.mrf.mxu0
        %v5484 = vadd.f32 %v5395, %v5483
        %5485 = vmatmul.bf16.gmra.mxu0 %v4409
        %v5486 = vpop.f32.mrf.mxu0
        %v5487 = vadd.f32 %v5398, %v5486
        %v5488 = vpop.f32.mrf.mxu0
        %v5489 = vadd.f32 %v5400, %v5488
        %5490 = vmatmul.bf16.gmra.mxu0 %v4418
        %v5491 = vpop.f32.mrf.mxu0
        %v5492 = vadd.f32 %v5403, %v5491
        %v5493 = vpop.f32.mrf.mxu0
        %v5494 = vadd.f32 %v5405, %v5493
        %5495 = vmatmul.bf16.gmra.mxu0 %v4427
        %v5496 = vpop.f32.mrf.mxu0
        %v5497 = vadd.f32 %v5408, %v5496
        %v5498 = vpop.f32.mrf.mxu0
        %v5499 = vadd.f32 %v5410, %v5498
        %5500 = vmatmul.bf16.gmra.mxu0 %v4436
        %v5501 = vpop.f32.mrf.mxu0
        %v5502 = vadd.f32 %v5413, %v5501
        %v5503 = vpop.f32.mrf.mxu0
        %v5504 = vadd.f32 %v5415, %v5503
        %5505 = vmatmul.bf16.gmra.mxu0 %v4445
        %v5506 = vpop.f32.mrf.mxu0
        %v5507 = vadd.f32 %v5418, %v5506
        %v5508 = vpop.f32.mrf.mxu0
        %v5509 = vadd.f32 %v5420, %v5508
        %5510 = vmatmul.bf16.gmra.mxu0 %v4454
        %v5511 = vpop.f32.mrf.mxu0
        %v5512 = vadd.f32 %v5423, %v5511
        %v5513 = vpop.f32.mrf.mxu0
        %v5514 = vadd.f32 %v5425, %v5513
        %5515 = vmatmul.bf16.gmra.mxu0 %v4463
        %v5516 = vpop.f32.mrf.mxu0
        %v5517 = vadd.f32 %v5428, %v5516
        %v5518 = vpop.f32.mrf.mxu0
        %v5519 = vadd.f32 %v5430, %v5518
        %5520 = vmatmul.bf16.gmra.mxu0 %v4472
        %v5521 = vpop.f32.mrf.mxu0
        %v5522 = vadd.f32 %v5433, %v5521
        %v5523 = vpop.f32.mrf.mxu0
        %v5524 = vadd.f32 %v5435, %v5523
        %5525 = vmatmul.bf16.gmra.mxu0 %v4481
        %v5526 = vpop.f32.mrf.mxu0
        %v5527 = vadd.f32 %v5438, %v5526
        %v5528 = vpop.f32.mrf.mxu0
        %v5529 = vadd.f32 %v5440, %v5528
        %5530 = vmatmul.bf16.gmra.mxu0 %v4490
        %v5531 = vpop.f32.mrf.mxu0
        %v5532 = vadd.f32 %v5443, %v5531
        %v5533 = vpop.f32.mrf.mxu0
        %v5534 = vadd.f32 %v5445, %v5533
        %5535 = vmatmul.bf16.gmra.mxu0 %v4499
        %v5536 = vpop.f32.mrf.mxu0
        %v5537 = vadd.f32 %v5448, %v5536
        %v5538 = vpop.f32.mrf.mxu0
        %v5539 = vadd.f32 %v5450, %v5538
        %5540 = vmatmul.bf16.gmra.mxu0 %v4508
        %v5541 = vpop.f32.mrf.mxu0
        %v5542 = vadd.f32 %v5453, %v5541
        %v5543 = vpop.f32.mrf.mxu0
        %v5544 = vadd.f32 %v5455, %v5543
        %5545 = vmatmul.bf16.gmra.mxu0 %v4517
        %v5546 = vpop.f32.mrf.mxu0
        %v5547 = vadd.f32 %v5458, %v5546
        %v5548 = vpop.f32.mrf.mxu0
        %v5549 = vadd.f32 %v5460, %v5548
        %5550 = vmatmul.bf16.gmra.mxu0 %v4526
        %v5551 = vpop.f32.mrf.mxu0
        %v5552 = vadd.f32 %v5463, %v5551
        %v5553 = vpop.f32.mrf.mxu0
        %v5554 = vadd.f32 %v5465, %v5553
        %5555 = vmatmul.bf16.gmra.mxu0 %v4535
        %v5556 = vpop.f32.mrf.mxu0
        %v5557 = vadd.f32 %v5468, %v5556
        %v5558 = vpop.f32.mrf.mxu0
        %v5559 = vadd.f32 %v5470, %v5558
        %5560 = vdwg.mxu0
        %5561 = vmatpush.bf16.msra.mxu0 %v5019
        %5562 = vmatpush.bf16.msra.mxu0 %v5018
        %5563 = vmatpush.bf16.msra.mxu0 %v5017
        %5564 = vmatpush.bf16.msra.mxu0 %v5016
        %5565 = vmatpush.bf16.msra.mxu0 %v5015
        %5566 = vmatpush.bf16.msra.mxu0 %v5014
        %5567 = vmatpush.bf16.msra.mxu0 %v5013
        %5568 = vmatpush.bf16.msra.mxu0 %v5012
        %5569 = vmatmul.bf16.gmra.mxu0 %v4401
        %v5570 = vpop.f32.mrf.mxu0
        %v5571 = vadd.f32 %v5482, %v5570
        %v5572 = vpop.f32.mrf.mxu0
        %v5573 = vadd.f32 %v5484, %v5572
        %5574 = vmatmul.bf16.gmra.mxu0 %v4410
        %v5575 = vpop.f32.mrf.mxu0
        %v5576 = vadd.f32 %v5487, %v5575
        %v5577 = vpop.f32.mrf.mxu0
        %v5578 = vadd.f32 %v5489, %v5577
        %5579 = vmatmul.bf16.gmra.mxu0 %v4419
        %v5580 = vpop.f32.mrf.mxu0
        %v5581 = vadd.f32 %v5492, %v5580
        %v5582 = vpop.f32.mrf.mxu0
        %v5583 = vadd.f32 %v5494, %v5582
        %5584 = vmatmul.bf16.gmra.mxu0 %v4428
        %v5585 = vpop.f32.mrf.mxu0
        %v5586 = vadd.f32 %v5497, %v5585
        %v5587 = vpop.f32.mrf.mxu0
        %v5588 = vadd.f32 %v5499, %v5587
        %5589 = vmatmul.bf16.gmra.mxu0 %v4437
        %v5590 = vpop.f32.mrf.mxu0
        %v5591 = vadd.f32 %v5502, %v5590
        %v5592 = vpop.f32.mrf.mxu0
        %v5593 = vadd.f32 %v5504, %v5592
        %5594 = vmatmul.bf16.gmra.mxu0 %v4446
        %v5595 = vpop.f32.mrf.mxu0
        %v5596 = vadd.f32 %v5507, %v5595
        %v5597 = vpop.f32.mrf.mxu0
        %v5598 = vadd.f32 %v5509, %v5597
        %5599 = vmatmul.bf16.gmra.mxu0 %v4455
        %v5600 = vpop.f32.mrf.mxu0
        %v5601 = vadd.f32 %v5512, %v5600
        %v5602 = vpop.f32.mrf.mxu0
        %v5603 = vadd.f32 %v5514, %v5602
        %5604 = vmatmul.bf16.gmra.mxu0 %v4464
        %v5605 = vpop.f32.mrf.mxu0
        %v5606 = vadd.f32 %v5517, %v5605
        %v5607 = vpop.f32.mrf.mxu0
        %v5608 = vadd.f32 %v5519, %v5607
        %5609 = vmatmul.bf16.gmra.mxu0 %v4473
        %v5610 = vpop.f32.mrf.mxu0
        %v5611 = vadd.f32 %v5522, %v5610
        %v5612 = vpop.f32.mrf.mxu0
        %v5613 = vadd.f32 %v5524, %v5612
        %5614 = vmatmul.bf16.gmra.mxu0 %v4482
        %v5615 = vpop.f32.mrf.mxu0
        %v5616 = vadd.f32 %v5527, %v5615
        %v5617 = vpop.f32.mrf.mxu0
        %v5618 = vadd.f32 %v5529, %v5617
        %5619 = vmatmul.bf16.gmra.mxu0 %v4491
        %v5620 = vpop.f32.mrf.mxu0
        %v5621 = vadd.f32 %v5532, %v5620
        %v5622 = vpop.f32.mrf.mxu0
        %v5623 = vadd.f32 %v5534, %v5622
        %5624 = vmatmul.bf16.gmra.mxu0 %v4500
        %v5625 = vpop.f32.mrf.mxu0
        %v5626 = vadd.f32 %v5537, %v5625
        %v5627 = vpop.f32.mrf.mxu0
        %v5628 = vadd.f32 %v5539, %v5627
        %5629 = vmatmul.bf16.gmra.mxu0 %v4509
        %v5630 = vpop.f32.mrf.mxu0
        %v5631 = vadd.f32 %v5542, %v5630
        %v5632 = vpop.f32.mrf.mxu0
        %v5633 = vadd.f32 %v5544, %v5632
        %5634 = vmatmul.bf16.gmra.mxu0 %v4518
        %v5635 = vpop.f32.mrf.mxu0
        %v5636 = vadd.f32 %v5547, %v5635
        %v5637 = vpop.f32.mrf.mxu0
        %v5638 = vadd.f32 %v5549, %v5637
        %5639 = vmatmul.bf16.gmra.mxu0 %v4527
        %v5640 = vpop.f32.mrf.mxu0
        %v5641 = vadd.f32 %v5552, %v5640
        %v5642 = vpop.f32.mrf.mxu0
        %v5643 = vadd.f32 %v5554, %v5642
        %5644 = vmatmul.bf16.gmra.mxu0 %v4536
        %v5645 = vpop.f32.mrf.mxu0
        %v5646 = vadd.f32 %v5557, %v5645
        %v5647 = vpop.f32.mrf.mxu0
        %v5648 = vadd.f32 %v5559, %v5647
        %5649 = vdwg.mxu0
        %5650 = vmatpush.bf16.msra.mxu0 %v5027
        %5651 = vmatpush.bf16.msra.mxu0 %v5026
        %5652 = vmatpush.bf16.msra.mxu0 %v5025
        %5653 = vmatpush.bf16.msra.mxu0 %v5024
        %5654 = vmatpush.bf16.msra.mxu0 %v5023
        %5655 = vmatpush.bf16.msra.mxu0 %v5022
        %5656 = vmatpush.bf16.msra.mxu0 %v5021
        %5657 = vmatpush.bf16.msra.mxu0 %v5020
        %5658 = vmatmul.bf16.gmra.mxu0 %v4402
        %v5659 = vpop.f32.mrf.mxu0
        %v5660 = vadd.f32 %v5571, %v5659
        %v5661 = vpop.f32.mrf.mxu0
        %v5662 = vadd.f32 %v5573, %v5661
        %5663 = vmatmul.bf16.gmra.mxu0 %v4411
        %v5664 = vpop.f32.mrf.mxu0
        %v5665 = vadd.f32 %v5576, %v5664
        %v5666 = vpop.f32.mrf.mxu0
        %v5667 = vadd.f32 %v5578, %v5666
        %5668 = vmatmul.bf16.gmra.mxu0 %v4420
        %v5669 = vpop.f32.mrf.mxu0
        %v5670 = vadd.f32 %v5581, %v5669
        %v5671 = vpop.f32.mrf.mxu0
        %v5672 = vadd.f32 %v5583, %v5671
        %5673 = vmatmul.bf16.gmra.mxu0 %v4429
        %v5674 = vpop.f32.mrf.mxu0
        %v5675 = vadd.f32 %v5586, %v5674
        %v5676 = vpop.f32.mrf.mxu0
        %v5677 = vadd.f32 %v5588, %v5676
        %5678 = vmatmul.bf16.gmra.mxu0 %v4438
        %v5679 = vpop.f32.mrf.mxu0
        %v5680 = vadd.f32 %v5591, %v5679
        %v5681 = vpop.f32.mrf.mxu0
        %v5682 = vadd.f32 %v5593, %v5681
        %5683 = vmatmul.bf16.gmra.mxu0 %v4447
        %v5684 = vpop.f32.mrf.mxu0
        %v5685 = vadd.f32 %v5596, %v5684
        %v5686 = vpop.f32.mrf.mxu0
        %v5687 = vadd.f32 %v5598, %v5686
        %5688 = vmatmul.bf16.gmra.mxu0 %v4456
        %v5689 = vpop.f32.mrf.mxu0
        %v5690 = vadd.f32 %v5601, %v5689
        %v5691 = vpop.f32.mrf.mxu0
        %v5692 = vadd.f32 %v5603, %v5691
        %5693 = vmatmul.bf16.gmra.mxu0 %v4465
        %v5694 = vpop.f32.mrf.mxu0
        %v5695 = vadd.f32 %v5606, %v5694
        %v5696 = vpop.f32.mrf.mxu0
        %v5697 = vadd.f32 %v5608, %v5696
        %5698 = vmatmul.bf16.gmra.mxu0 %v4474
        %v5699 = vpop.f32.mrf.mxu0
        %v5700 = vadd.f32 %v5611, %v5699
        %v5701 = vpop.f32.mrf.mxu0
        %v5702 = vadd.f32 %v5613, %v5701
        %5703 = vmatmul.bf16.gmra.mxu0 %v4483
        %v5704 = vpop.f32.mrf.mxu0
        %v5705 = vadd.f32 %v5616, %v5704
        %v5706 = vpop.f32.mrf.mxu0
        %v5707 = vadd.f32 %v5618, %v5706
        %5708 = vmatmul.bf16.gmra.mxu0 %v4492
        %v5709 = vpop.f32.mrf.mxu0
        %v5710 = vadd.f32 %v5621, %v5709
        %v5711 = vpop.f32.mrf.mxu0
        %v5712 = vadd.f32 %v5623, %v5711
        %5713 = vmatmul.bf16.gmra.mxu0 %v4501
        %v5714 = vpop.f32.mrf.mxu0
        %v5715 = vadd.f32 %v5626, %v5714
        %v5716 = vpop.f32.mrf.mxu0
        %v5717 = vadd.f32 %v5628, %v5716
        %5718 = vmatmul.bf16.gmra.mxu0 %v4510
        %v5719 = vpop.f32.mrf.mxu0
        %v5720 = vadd.f32 %v5631, %v5719
        %v5721 = vpop.f32.mrf.mxu0
        %v5722 = vadd.f32 %v5633, %v5721
        %5723 = vmatmul.bf16.gmra.mxu0 %v4519
        %v5724 = vpop.f32.mrf.mxu0
        %v5725 = vadd.f32 %v5636, %v5724
        %v5726 = vpop.f32.mrf.mxu0
        %v5727 = vadd.f32 %v5638, %v5726
        %5728 = vmatmul.bf16.gmra.mxu0 %v4528
        %v5729 = vpop.f32.mrf.mxu0
        %v5730 = vadd.f32 %v5641, %v5729
        %v5731 = vpop.f32.mrf.mxu0
        %v5732 = vadd.f32 %v5643, %v5731
        %5733 = vmatmul.bf16.gmra.mxu0 %v4537
        %v5734 = vpop.f32.mrf.mxu0
        %v5735 = vadd.f32 %v5646, %v5734
        %v5736 = vpop.f32.mrf.mxu0
        %v5737 = vadd.f32 %v5648, %v5736
        %5738 = vdwg.mxu0
        %5739 = vmatpush.bf16.msra.mxu0 %v5035
        %5740 = vmatpush.bf16.msra.mxu0 %v5034
        %5741 = vmatpush.bf16.msra.mxu0 %v5033
        %5742 = vmatpush.bf16.msra.mxu0 %v5032
        %5743 = vmatpush.bf16.msra.mxu0 %v5031
        %5744 = vmatpush.bf16.msra.mxu0 %v5030
        %5745 = vmatpush.bf16.msra.mxu0 %v5029
        %5746 = vmatpush.bf16.msra.mxu0 %v5028
        %5747 = vmatmul.bf16.gmra.mxu0 %v4403
        %v5748 = vpop.f32.mrf.mxu0
        %v5749 = vadd.f32 %v5660, %v5748
        %v5750 = vpop.f32.mrf.mxu0
        %v5751 = vadd.f32 %v5662, %v5750
        %5752 = vmatmul.bf16.gmra.mxu0 %v4412
        %v5753 = vpop.f32.mrf.mxu0
        %v5754 = vadd.f32 %v5665, %v5753
        %v5755 = vpop.f32.mrf.mxu0
        %v5756 = vadd.f32 %v5667, %v5755
        %5757 = vmatmul.bf16.gmra.mxu0 %v4421
        %v5758 = vpop.f32.mrf.mxu0
        %v5759 = vadd.f32 %v5670, %v5758
        %v5760 = vpop.f32.mrf.mxu0
        %v5761 = vadd.f32 %v5672, %v5760
        %5762 = vmatmul.bf16.gmra.mxu0 %v4430
        %v5763 = vpop.f32.mrf.mxu0
        %v5764 = vadd.f32 %v5675, %v5763
        %v5765 = vpop.f32.mrf.mxu0
        %v5766 = vadd.f32 %v5677, %v5765
        %5767 = vmatmul.bf16.gmra.mxu0 %v4439
        %v5768 = vpop.f32.mrf.mxu0
        %v5769 = vadd.f32 %v5680, %v5768
        %v5770 = vpop.f32.mrf.mxu0
        %v5771 = vadd.f32 %v5682, %v5770
        %5772 = vmatmul.bf16.gmra.mxu0 %v4448
        %v5773 = vpop.f32.mrf.mxu0
        %v5774 = vadd.f32 %v5685, %v5773
        %v5775 = vpop.f32.mrf.mxu0
        %v5776 = vadd.f32 %v5687, %v5775
        %5777 = vmatmul.bf16.gmra.mxu0 %v4457
        %v5778 = vpop.f32.mrf.mxu0
        %v5779 = vadd.f32 %v5690, %v5778
        %v5780 = vpop.f32.mrf.mxu0
        %v5781 = vadd.f32 %v5692, %v5780
        %5782 = vmatmul.bf16.gmra.mxu0 %v4466
        %v5783 = vpop.f32.mrf.mxu0
        %v5784 = vadd.f32 %v5695, %v5783
        %v5785 = vpop.f32.mrf.mxu0
        %v5786 = vadd.f32 %v5697, %v5785
        %5787 = vmatmul.bf16.gmra.mxu0 %v4475
        %v5788 = vpop.f32.mrf.mxu0
        %v5789 = vadd.f32 %v5700, %v5788
        %v5790 = vpop.f32.mrf.mxu0
        %v5791 = vadd.f32 %v5702, %v5790
        %5792 = vmatmul.bf16.gmra.mxu0 %v4484
        %v5793 = vpop.f32.mrf.mxu0
        %v5794 = vadd.f32 %v5705, %v5793
        %v5795 = vpop.f32.mrf.mxu0
        %v5796 = vadd.f32 %v5707, %v5795
        %5797 = vmatmul.bf16.gmra.mxu0 %v4493
        %v5798 = vpop.f32.mrf.mxu0
        %v5799 = vadd.f32 %v5710, %v5798
        %v5800 = vpop.f32.mrf.mxu0
        %v5801 = vadd.f32 %v5712, %v5800
        %5802 = vmatmul.bf16.gmra.mxu0 %v4502
        %v5803 = vpop.f32.mrf.mxu0
        %v5804 = vadd.f32 %v5715, %v5803
        %v5805 = vpop.f32.mrf.mxu0
        %v5806 = vadd.f32 %v5717, %v5805
        %5807 = vmatmul.bf16.gmra.mxu0 %v4511
        %v5808 = vpop.f32.mrf.mxu0
        %v5809 = vadd.f32 %v5720, %v5808
        %v5810 = vpop.f32.mrf.mxu0
        %v5811 = vadd.f32 %v5722, %v5810
        %5812 = vmatmul.bf16.gmra.mxu0 %v4520
        %v5813 = vpop.f32.mrf.mxu0
        %v5814 = vadd.f32 %v5725, %v5813
        %v5815 = vpop.f32.mrf.mxu0
        %v5816 = vadd.f32 %v5727, %v5815
        %5817 = vmatmul.bf16.gmra.mxu0 %v4529
        %v5818 = vpop.f32.mrf.mxu0
        %v5819 = vadd.f32 %v5730, %v5818
        %v5820 = vpop.f32.mrf.mxu0
        %v5821 = vadd.f32 %v5732, %v5820
        %5822 = vmatmul.bf16.gmra.mxu0 %v4538
        %v5823 = vpop.f32.mrf.mxu0
        %v5824 = vadd.f32 %v5735, %v5823
        %v5825 = vpop.f32.mrf.mxu0
        %v5826 = vadd.f32 %v5737, %v5825
        %5827 = vdwg.mxu0
        %5828 = vmatpush.bf16.msra.mxu0 %v5043
        %5829 = vmatpush.bf16.msra.mxu0 %v5042
        %5830 = vmatpush.bf16.msra.mxu0 %v5041
        %5831 = vmatpush.bf16.msra.mxu0 %v5040
        %5832 = vmatpush.bf16.msra.mxu0 %v5039
        %5833 = vmatpush.bf16.msra.mxu0 %v5038
        %5834 = vmatpush.bf16.msra.mxu0 %v5037
        %5835 = vmatpush.bf16.msra.mxu0 %v5036
        %5836 = vmatmul.bf16.gmra.mxu0 %v4404
        %v5837 = vpop.f32.mrf.mxu0
        %v5838 = vadd.f32 %v5749, %v5837
        %v5839 = vpop.f32.mrf.mxu0
        %v5840 = vadd.f32 %v5751, %v5839
        %5841 = vmatmul.bf16.gmra.mxu0 %v4413
        %v5842 = vpop.f32.mrf.mxu0
        %v5843 = vadd.f32 %v5754, %v5842
        %v5844 = vpop.f32.mrf.mxu0
        %v5845 = vadd.f32 %v5756, %v5844
        %5846 = vmatmul.bf16.gmra.mxu0 %v4422
        %v5847 = vpop.f32.mrf.mxu0
        %v5848 = vadd.f32 %v5759, %v5847
        %v5849 = vpop.f32.mrf.mxu0
        %v5850 = vadd.f32 %v5761, %v5849
        %5851 = vmatmul.bf16.gmra.mxu0 %v4431
        %v5852 = vpop.f32.mrf.mxu0
        %v5853 = vadd.f32 %v5764, %v5852
        %v5854 = vpop.f32.mrf.mxu0
        %v5855 = vadd.f32 %v5766, %v5854
        %5856 = vmatmul.bf16.gmra.mxu0 %v4440
        %v5857 = vpop.f32.mrf.mxu0
        %v5858 = vadd.f32 %v5769, %v5857
        %v5859 = vpop.f32.mrf.mxu0
        %v5860 = vadd.f32 %v5771, %v5859
        %5861 = vmatmul.bf16.gmra.mxu0 %v4449
        %v5862 = vpop.f32.mrf.mxu0
        %v5863 = vadd.f32 %v5774, %v5862
        %v5864 = vpop.f32.mrf.mxu0
        %v5865 = vadd.f32 %v5776, %v5864
        %5866 = vmatmul.bf16.gmra.mxu0 %v4458
        %v5867 = vpop.f32.mrf.mxu0
        %v5868 = vadd.f32 %v5779, %v5867
        %v5869 = vpop.f32.mrf.mxu0
        %v5870 = vadd.f32 %v5781, %v5869
        %5871 = vmatmul.bf16.gmra.mxu0 %v4467
        %v5872 = vpop.f32.mrf.mxu0
        %v5873 = vadd.f32 %v5784, %v5872
        %v5874 = vpop.f32.mrf.mxu0
        %v5875 = vadd.f32 %v5786, %v5874
        %5876 = vmatmul.bf16.gmra.mxu0 %v4476
        %v5877 = vpop.f32.mrf.mxu0
        %v5878 = vadd.f32 %v5789, %v5877
        %v5879 = vpop.f32.mrf.mxu0
        %v5880 = vadd.f32 %v5791, %v5879
        %5881 = vmatmul.bf16.gmra.mxu0 %v4485
        %v5882 = vpop.f32.mrf.mxu0
        %v5883 = vadd.f32 %v5794, %v5882
        %v5884 = vpop.f32.mrf.mxu0
        %v5885 = vadd.f32 %v5796, %v5884
        %5886 = vmatmul.bf16.gmra.mxu0 %v4494
        %v5887 = vpop.f32.mrf.mxu0
        %v5888 = vadd.f32 %v5799, %v5887
        %v5889 = vpop.f32.mrf.mxu0
        %v5890 = vadd.f32 %v5801, %v5889
        %5891 = vmatmul.bf16.gmra.mxu0 %v4503
        %v5892 = vpop.f32.mrf.mxu0
        %v5893 = vadd.f32 %v5804, %v5892
        %v5894 = vpop.f32.mrf.mxu0
        %v5895 = vadd.f32 %v5806, %v5894
        %5896 = vmatmul.bf16.gmra.mxu0 %v4512
        %v5897 = vpop.f32.mrf.mxu0
        %v5898 = vadd.f32 %v5809, %v5897
        %v5899 = vpop.f32.mrf.mxu0
        %v5900 = vadd.f32 %v5811, %v5899
        %5901 = vmatmul.bf16.gmra.mxu0 %v4521
        %v5902 = vpop.f32.mrf.mxu0
        %v5903 = vadd.f32 %v5814, %v5902
        %v5904 = vpop.f32.mrf.mxu0
        %v5905 = vadd.f32 %v5816, %v5904
        %5906 = vmatmul.bf16.gmra.mxu0 %v4530
        %v5907 = vpop.f32.mrf.mxu0
        %v5908 = vadd.f32 %v5819, %v5907
        %v5909 = vpop.f32.mrf.mxu0
        %v5910 = vadd.f32 %v5821, %v5909
        %5911 = vmatmul.bf16.gmra.mxu0 %v4539
        %v5912 = vpop.f32.mrf.mxu0
        %v5913 = vadd.f32 %v5824, %v5912
        %v5914 = vpop.f32.mrf.mxu0
        %v5915 = vadd.f32 %v5826, %v5914
        %5916 = vdwg.mxu0
        %v5917 = vmax.f32 %v5838, 0.0
        %v5918 = vmax.f32 %v5840, 0.0
        %v5919 = vmax.f32 %v5843, 0.0
        %v5920 = vmax.f32 %v5845, 0.0
        %v5921 = vmax.f32 %v5848, 0.0
        %v5922 = vmax.f32 %v5850, 0.0
        %v5923 = vmax.f32 %v5853, 0.0
        %v5924 = vmax.f32 %v5855, 0.0
        %v5925 = vmax.f32 %v5858, 0.0
        %v5926 = vmax.f32 %v5860, 0.0
        %v5927 = vmax.f32 %v5863, 0.0
        %v5928 = vmax.f32 %v5865, 0.0
        %v5929 = vmax.f32 %v5868, 0.0
        %v5930 = vmax.f32 %v5870, 0.0
        %v5931 = vmax.f32 %v5873, 0.0
        %v5932 = vmax.f32 %v5875, 0.0
        %v5933 = vmax.f32 %v5878, 0.0
        %v5934 = vmax.f32 %v5880, 0.0
        %v5935 = vmax.f32 %v5883, 0.0
        %v5936 = vmax.f32 %v5885, 0.0
        %v5937 = vmax.f32 %v5888, 0.0
        %v5938 = vmax.f32 %v5890, 0.0
        %v5939 = vmax.f32 %v5893, 0.0
        %v5940 = vmax.f32 %v5895, 0.0
        %v5941 = vmax.f32 %v5898, 0.0
        %v5942 = vmax.f32 %v5900, 0.0
        %v5943 = vmax.f32 %v5903, 0.0
        %v5944 = vmax.f32 %v5905, 0.0
        %v5945 = vmax.f32 %v5908, 0.0
        %v5946 = vmax.f32 %v5910, 0.0
        %v5947 = vmax.f32 %v5913, 0.0
        %v5948 = vmax.f32 %v5915, 0.0
        %v5949 = vpack.c.bf16 %v5917, %v5917
        %v5950 = vpack.c.bf16 %v5918, %v5918
        %v5951 = vpack.c.bf16 %v5919, %v5919
        %v5952 = vpack.c.bf16 %v5920, %v5920
        %v5953 = vpack.c.bf16 %v5921, %v5921
        %v5954 = vpack.c.bf16 %v5922, %v5922
        %v5955 = vpack.c.bf16 %v5923, %v5923
        %v5956 = vpack.c.bf16 %v5924, %v5924
        %v5957 = vpack.c.bf16 %v5925, %v5925
        %v5958 = vpack.c.bf16 %v5926, %v5926
        %v5959 = vpack.c.bf16 %v5927, %v5927
        %v5960 = vpack.c.bf16 %v5928, %v5928
        %v5961 = vpack.c.bf16 %v5929, %v5929
        %v5962 = vpack.c.bf16 %v5930, %v5930
        %v5963 = vpack.c.bf16 %v5931, %v5931
        %v5964 = vpack.c.bf16 %v5932, %v5932
        %v5965 = vpack.c.bf16 %v5933, %v5933
        %v5966 = vpack.c.bf16 %v5934, %v5934
        %v5967 = vpack.c.bf16 %v5935, %v5935
        %v5968 = vpack.c.bf16 %v5936, %v5936
        %v5969 = vpack.c.bf16 %v5937, %v5937
        %v5970 = vpack.c.bf16 %v5938, %v5938
        %v5971 = vpack.c.bf16 %v5939, %v5939
        %v5972 = vpack.c.bf16 %v5940, %v5940
        %v5973 = vpack.c.bf16 %v5941, %v5941
        %v5974 = vpack.c.bf16 %v5942, %v5942
        %v5975 = vpack.c.bf16 %v5943, %v5943
        %v5976 = vpack.c.bf16 %v5944, %v5944
        %v5977 = vpack.c.bf16 %v5945, %v5945
        %v5978 = vpack.c.bf16 %v5946, %v5946
        %v5979 = vpack.c.bf16 %v5947, %v5947
        %v5980 = vpack.c.bf16 %v5948, %v5948
        %v5982 = vshrl.u32 %v5949, 16
        %v5984 = vrot.slane %v5982, 7
        %v5985 = vshll.u32 %v5949, 16
        %v5987 = vor.u32 %v5984, %v5985
        %v5988 = vrot.slane %v5984, 4
        %v5990 = vshrl.u32 %v5950, 16
        %v5992 = vrot.slane %v5990, 7
        %v5993 = vshll.u32 %v5950, 16
        %v5995 = vor.u32 %v5992, %v5993
        %v5996 = vsel %vm653, %v5988, %v5995
        %v5997 = vrot.slane %v5992, 4
        %v5999 = vshrl.u32 %v5951, 16
        %v6001 = vrot.slane %v5999, 7
        %v6002 = vshll.u32 %v5951, 16
        %v6004 = vor.u32 %v6001, %v6002
        %v6005 = vrot.slane %v6001, 4
        %v6007 = vshrl.u32 %v5952, 16
        %v6009 = vrot.slane %v6007, 7
        %v6010 = vshll.u32 %v5952, 16
        %v6012 = vor.u32 %v6009, %v6010
        %v6013 = vsel %vm653, %v6005, %v6012
        %v6014 = vrot.slane %v6009, 4
        %v6016 = vshrl.u32 %v5953, 16
        %v6018 = vrot.slane %v6016, 7
        %v6019 = vshll.u32 %v5953, 16
        %v6021 = vor.u32 %v6018, %v6019
        %v6022 = vrot.slane %v6018, 4
        %v6024 = vshrl.u32 %v5954, 16
        %v6026 = vrot.slane %v6024, 7
        %v6027 = vshll.u32 %v5954, 16
        %v6029 = vor.u32 %v6026, %v6027
        %v6030 = vsel %vm653, %v6022, %v6029
        %v6031 = vrot.slane %v6026, 4
        %v6033 = vshrl.u32 %v5955, 16
        %v6035 = vrot.slane %v6033, 7
        %v6036 = vshll.u32 %v5955, 16
        %v6038 = vor.u32 %v6035, %v6036
        %v6039 = vrot.slane %v6035, 4
        %v6041 = vshrl.u32 %v5956, 16
        %v6043 = vrot.slane %v6041, 7
        %v6044 = vshll.u32 %v5956, 16
        %v6046 = vor.u32 %v6043, %v6044
        %v6047 = vsel %vm653, %v6039, %v6046
        %v6048 = vrot.slane %v6043, 4
        %v6050 = vshrl.u32 %v5957, 16
        %v6052 = vrot.slane %v6050, 7
        %v6053 = vshll.u32 %v5957, 16
        %v6055 = vor.u32 %v6052, %v6053
        %v6056 = vrot.slane %v6052, 4
        %v6058 = vshrl.u32 %v5958, 16
        %v6060 = vrot.slane %v6058, 7
        %v6061 = vshll.u32 %v5958, 16
        %v6063 = vor.u32 %v6060, %v6061
        %v6064 = vsel %vm653, %v6056, %v6063
        %v6065 = vrot.slane %v6060, 4
        %v6067 = vshrl.u32 %v5959, 16
        %v6069 = vrot.slane %v6067, 7
        %v6070 = vshll.u32 %v5959, 16
        %v6072 = vor.u32 %v6069, %v6070
        %v6073 = vrot.slane %v6069, 4
        %v6075 = vshrl.u32 %v5960, 16
        %v6077 = vrot.slane %v6075, 7
        %v6078 = vshll.u32 %v5960, 16
        %v6080 = vor.u32 %v6077, %v6078
        %v6081 = vsel %vm653, %v6073, %v6080
        %v6082 = vrot.slane %v6077, 4
        %v6084 = vshrl.u32 %v5961, 16
        %v6086 = vrot.slane %v6084, 7
        %v6087 = vshll.u32 %v5961, 16
        %v6089 = vor.u32 %v6086, %v6087
        %v6090 = vrot.slane %v6086, 4
        %v6092 = vshrl.u32 %v5962, 16
        %v6094 = vrot.slane %v6092, 7
        %v6095 = vshll.u32 %v5962, 16
        %v6097 = vor.u32 %v6094, %v6095
        %v6098 = vsel %vm653, %v6090, %v6097
        %v6099 = vrot.slane %v6094, 4
        %v6101 = vshrl.u32 %v5963, 16
        %v6103 = vrot.slane %v6101, 7
        %v6104 = vshll.u32 %v5963, 16
        %v6106 = vor.u32 %v6103, %v6104
        %v6107 = vrot.slane %v6103, 4
        %v6109 = vshrl.u32 %v5964, 16
        %v6111 = vrot.slane %v6109, 7
        %v6112 = vshll.u32 %v5964, 16
        %v6114 = vor.u32 %v6111, %v6112
        %v6115 = vsel %vm653, %v6107, %v6114
        %v6116 = vrot.slane %v6111, 4
        %v6118 = vshrl.u32 %v5965, 16
        %v6120 = vrot.slane %v6118, 7
        %v6121 = vshll.u32 %v5965, 16
        %v6123 = vor.u32 %v6120, %v6121
        %v6124 = vrot.slane %v6120, 4
        %v6126 = vshrl.u32 %v5966, 16
        %v6128 = vrot.slane %v6126, 7
        %v6129 = vshll.u32 %v5966, 16
        %v6131 = vor.u32 %v6128, %v6129
        %v6132 = vsel %vm653, %v6124, %v6131
        %v6133 = vrot.slane %v6128, 4
        %v6135 = vshrl.u32 %v5967, 16
        %v6137 = vrot.slane %v6135, 7
        %v6138 = vshll.u32 %v5967, 16
        %v6140 = vor.u32 %v6137, %v6138
        %v6141 = vrot.slane %v6137, 4
        %v6143 = vshrl.u32 %v5968, 16
        %v6145 = vrot.slane %v6143, 7
        %v6146 = vshll.u32 %v5968, 16
        %v6148 = vor.u32 %v6145, %v6146
        %v6149 = vsel %vm653, %v6141, %v6148
        %v6150 = vrot.slane %v6145, 4
        %v6152 = vshrl.u32 %v5969, 16
        %v6154 = vrot.slane %v6152, 7
        %v6155 = vshll.u32 %v5969, 16
        %v6157 = vor.u32 %v6154, %v6155
        %v6158 = vrot.slane %v6154, 4
        %v6160 = vshrl.u32 %v5970, 16
        %v6162 = vrot.slane %v6160, 7
        %v6163 = vshll.u32 %v5970, 16
        %v6165 = vor.u32 %v6162, %v6163
        %v6166 = vsel %vm653, %v6158, %v6165
        %v6167 = vrot.slane %v6162, 4
        %v6169 = vshrl.u32 %v5971, 16
        %v6171 = vrot.slane %v6169, 7
        %v6172 = vshll.u32 %v5971, 16
        %v6174 = vor.u32 %v6171, %v6172
        %v6175 = vrot.slane %v6171, 4
        %v6177 = vshrl.u32 %v5972, 16
        %v6179 = vrot.slane %v6177, 7
        %v6180 = vshll.u32 %v5972, 16
        %v6182 = vor.u32 %v6179, %v6180
        %v6183 = vsel %vm653, %v6175, %v6182
        %v6184 = vrot.slane %v6179, 4
        %v6186 = vshrl.u32 %v5973, 16
        %v6188 = vrot.slane %v6186, 7
        %v6189 = vshll.u32 %v5973, 16
        %v6191 = vor.u32 %v6188, %v6189
        %v6192 = vrot.slane %v6188, 4
        %v6194 = vshrl.u32 %v5974, 16
        %v6196 = vrot.slane %v6194, 7
        %v6197 = vshll.u32 %v5974, 16
        %v6199 = vor.u32 %v6196, %v6197
        %v6200 = vsel %vm653, %v6192, %v6199
        %v6201 = vrot.slane %v6196, 4
        %v6203 = vshrl.u32 %v5975, 16
        %v6205 = vrot.slane %v6203, 7
        %v6206 = vshll.u32 %v5975, 16
        %v6208 = vor.u32 %v6205, %v6206
        %v6209 = vrot.slane %v6205, 4
        %v6211 = vshrl.u32 %v5976, 16
        %v6213 = vrot.slane %v6211, 7
        %v6214 = vshll.u32 %v5976, 16
        %v6216 = vor.u32 %v6213, %v6214
        %v6217 = vsel %vm653, %v6209, %v6216
        %v6218 = vrot.slane %v6213, 4
        %v6220 = vshrl.u32 %v5977, 16
        %v6222 = vrot.slane %v6220, 7
        %v6223 = vshll.u32 %v5977, 16
        %v6225 = vor.u32 %v6222, %v6223
        %v6226 = vrot.slane %v6222, 4
        %v6228 = vshrl.u32 %v5978, 16
        %v6230 = vrot.slane %v6228, 7
        %v6231 = vshll.u32 %v5978, 16
        %v6233 = vor.u32 %v6230, %v6231
        %v6234 = vsel %vm653, %v6226, %v6233
        %v6235 = vrot.slane %v6230, 4
        %v6237 = vshrl.u32 %v5979, 16
        %v6239 = vrot.slane %v6237, 7
        %v6240 = vshll.u32 %v5979, 16
        %v6242 = vor.u32 %v6239, %v6240
        %v6243 = vrot.slane %v6239, 4
        %v6245 = vshrl.u32 %v5980, 16
        %v6247 = vrot.slane %v6245, 7
        %v6248 = vshll.u32 %v5980, 16
        %v6250 = vor.u32 %v6247, %v6248
        %v6251 = vsel %vm653, %v6243, %v6250
        %v6252 = vrot.slane %v6247, 4
        %v6301 = vld [vmem:[%s974] sm:$0xf]
        %v6302 = vsel %vm976, %v5987, %v6301
        %6303 = vst [vmem:[%s974] sm:$0xf] %v6302
        %6304 = vst [vmem:[%s974 + $0x4] sm:$0xf] %v5996
        %v6305 = vld [vmem:[%s974 + $0x8] sm:$0x1]
        %v6306 = vsel %vm541, %v5997, %v6305
        %6307 = vst [vmem:[%s974 + $0x8] sm:$0x1] %v6306
        %v6308 = vld [vmem:[%s974 + $0xc] sm:$0xf]
        %v6309 = vsel %vm976, %v6004, %v6308
        %6310 = vst [vmem:[%s974 + $0xc] sm:$0xf] %v6309
        %6311 = vst [vmem:[%s974 + $0x10] sm:$0xf] %v6013
        %v6312 = vld [vmem:[%s974 + $0x14] sm:$0x1]
        %v6313 = vsel %vm541, %v6014, %v6312
        %6314 = vst [vmem:[%s974 + $0x14] sm:$0x1] %v6313
        %v6315 = vld [vmem:[%s974 + $0x18] sm:$0xf]
        %v6316 = vsel %vm976, %v6021, %v6315
        %6317 = vst [vmem:[%s974 + $0x18] sm:$0xf] %v6316
        %6318 = vst [vmem:[%s974 + $0x1c] sm:$0xf] %v6030
        %v6319 = vld [vmem:[%s974 + $0x20] sm:$0x1]
        %v6320 = vsel %vm541, %v6031, %v6319
        %6321 = vst [vmem:[%s974 + $0x20] sm:$0x1] %v6320
        %v6322 = vld [vmem:[%s974 + $0x24] sm:$0xf]
        %v6323 = vsel %vm976, %v6038, %v6322
        %6324 = vst [vmem:[%s974 + $0x24] sm:$0xf] %v6323
        %6325 = vst [vmem:[%s974 + $0x28] sm:$0xf] %v6047
        %v6326 = vld [vmem:[%s974 + $0x2c] sm:$0x1]
        %v6327 = vsel %vm541, %v6048, %v6326
        %6328 = vst [vmem:[%s974 + $0x2c] sm:$0x1] %v6327
        %v6329 = vld [vmem:[%s974 + $0x30] sm:$0xf]
        %v6330 = vsel %vm976, %v6055, %v6329
        %6331 = vst [vmem:[%s974 + $0x30] sm:$0xf] %v6330
        %6332 = vst [vmem:[%s974 + $0x34] sm:$0xf] %v6064
        %v6333 = vld [vmem:[%s974 + $0x38] sm:$0x1]
        %v6334 = vsel %vm541, %v6065, %v6333
        %6335 = vst [vmem:[%s974 + $0x38] sm:$0x1] %v6334
        %v6336 = vld [vmem:[%s974 + $0x3c] sm:$0xf]
        %v6337 = vsel %vm976, %v6072, %v6336
        %6338 = vst [vmem:[%s974 + $0x3c] sm:$0xf] %v6337
        %6339 = vst [vmem:[%s974 + $0x40] sm:$0xf] %v6081
        %v6340 = vld [vmem:[%s974 + $0x44] sm:$0x1]
        %v6341 = vsel %vm541, %v6082, %v6340
        %6342 = vst [vmem:[%s974 + $0x44] sm:$0x1] %v6341
        %v6343 = vld [vmem:[%s974 + $0x48] sm:$0xf]
        %v6344 = vsel %vm976, %v6089, %v6343
        %6345 = vst [vmem:[%s974 + $0x48] sm:$0xf] %v6344
        %6346 = vst [vmem:[%s974 + $0x4c] sm:$0xf] %v6098
        %v6347 = vld [vmem:[%s974 + $0x50] sm:$0x1]
        %v6348 = vsel %vm541, %v6099, %v6347
        %6349 = vst [vmem:[%s974 + $0x50] sm:$0x1] %v6348
        %v6350 = vld [vmem:[%s974 + $0x54] sm:$0xf]
        %v6351 = vsel %vm976, %v6106, %v6350
        %6352 = vst [vmem:[%s974 + $0x54] sm:$0xf] %v6351
        %6353 = vst [vmem:[%s974 + $0x58] sm:$0xf] %v6115
        %v6354 = vld [vmem:[%s974 + $0x5c] sm:$0x1]
        %v6355 = vsel %vm541, %v6116, %v6354
        %6356 = vst [vmem:[%s974 + $0x5c] sm:$0x1] %v6355
        %v6357 = vld [vmem:[%s974 + $0x60] sm:$0xf]
        %v6358 = vsel %vm976, %v6123, %v6357
        %6359 = vst [vmem:[%s974 + $0x60] sm:$0xf] %v6358
        %6360 = vst [vmem:[%s974 + $0x64] sm:$0xf] %v6132
        %v6361 = vld [vmem:[%s974 + $0x68] sm:$0x1]
        %v6362 = vsel %vm541, %v6133, %v6361
        %6363 = vst [vmem:[%s974 + $0x68] sm:$0x1] %v6362
        %v6364 = vld [vmem:[%s974 + $0x6c] sm:$0xf]
        %v6365 = vsel %vm976, %v6140, %v6364
        %6366 = vst [vmem:[%s974 + $0x6c] sm:$0xf] %v6365
        %6367 = vst [vmem:[%s974 + $0x70] sm:$0xf] %v6149
        %v6368 = vld [vmem:[%s974 + $0x74] sm:$0x1]
        %v6369 = vsel %vm541, %v6150, %v6368
        %6370 = vst [vmem:[%s974 + $0x74] sm:$0x1] %v6369
        %v6371 = vld [vmem:[%s974 + $0x78] sm:$0xf]
        %v6372 = vsel %vm976, %v6157, %v6371
        %6373 = vst [vmem:[%s974 + $0x78] sm:$0xf] %v6372
        %6374 = vst [vmem:[%s974 + $0x7c] sm:$0xf] %v6166
        %v6375 = vld [vmem:[%s974 + $0x80] sm:$0x1]
        %v6376 = vsel %vm541, %v6167, %v6375
        %6377 = vst [vmem:[%s974 + $0x80] sm:$0x1] %v6376
        %v6378 = vld [vmem:[%s974 + $0x84] sm:$0xf]
        %v6379 = vsel %vm976, %v6174, %v6378
        %6380 = vst [vmem:[%s974 + $0x84] sm:$0xf] %v6379
        %6381 = vst [vmem:[%s974 + $0x88] sm:$0xf] %v6183
        %v6382 = vld [vmem:[%s974 + $0x8c] sm:$0x1]
        %v6383 = vsel %vm541, %v6184, %v6382
        %6384 = vst [vmem:[%s974 + $0x8c] sm:$0x1] %v6383
        %v6385 = vld [vmem:[%s974 + $0x90] sm:$0xf]
        %v6386 = vsel %vm976, %v6191, %v6385
        %6387 = vst [vmem:[%s974 + $0x90] sm:$0xf] %v6386
        %6388 = vst [vmem:[%s974 + $0x94] sm:$0xf] %v6200
        %v6389 = vld [vmem:[%s974 + $0x98] sm:$0x1]
        %v6390 = vsel %vm541, %v6201, %v6389
        %6391 = vst [vmem:[%s974 + $0x98] sm:$0x1] %v6390
        %v6392 = vld [vmem:[%s974 + $0x9c] sm:$0xf]
        %v6393 = vsel %vm976, %v6208, %v6392
        %6394 = vst [vmem:[%s974 + $0x9c] sm:$0xf] %v6393
        %6395 = vst [vmem:[%s974 + $0xa0] sm:$0xf] %v6217
        %v6396 = vld [vmem:[%s974 + $0xa4] sm:$0x1]
        %v6397 = vsel %vm541, %v6218, %v6396
        %6398 = vst [vmem:[%s974 + $0xa4] sm:$0x1] %v6397
        %v6399 = vld [vmem:[%s974 + $0xa8] sm:$0xf]
        %v6400 = vsel %vm976, %v6225, %v6399
        %6401 = vst [vmem:[%s974 + $0xa8] sm:$0xf] %v6400
        %6402 = vst [vmem:[%s974 + $0xac] sm:$0xf] %v6234
        %v6403 = vld [vmem:[%s974 + $0xb0] sm:$0x1]
        %v6404 = vsel %vm541, %v6235, %v6403
        %6405 = vst [vmem:[%s974 + $0xb0] sm:$0x1] %v6404
        %v6406 = vld [vmem:[%s974 + $0xb4] sm:$0xf]
        %v6407 = vsel %vm976, %v6242, %v6406
        %6408 = vst [vmem:[%s974 + $0xb4] sm:$0xf] %v6407
        %6409 = vst [vmem:[%s974 + $0xb8] sm:$0xf] %v6251
        %v6410 = vld [vmem:[%s974 + $0xbc] sm:$0x1]
        %v6411 = vsel %vm541, %v6252, %v6410
        %6412 = vst [vmem:[%s974 + $0xbc] sm:$0x1] %v6411
        %v6413 = vld [vmem:[#allocation2] sm:$0xf]
        %v6414 = vld [vmem:[#allocation2 + $0x4] sm:$0xf]
        %v6415 = vld [vmem:[#allocation2 + $0xc] sm:$0xf]
        %v6416 = vld [vmem:[#allocation2 + $0x10] sm:$0xf]
        %v6417 = vld [vmem:[#allocation2 + $0x18] sm:$0xf]
        %v6418 = vld [vmem:[#allocation2 + $0x1c] sm:$0xf]
        %v6419 = vld [vmem:[#allocation2 + $0x24] sm:$0xf]
        %v6420 = vld [vmem:[#allocation2 + $0x28] sm:$0xf]
        %v6421 = vld [vmem:[#allocation2 + $0x30] sm:$0xf]
        %v6422 = vld [vmem:[#allocation2 + $0x34] sm:$0xf]
        %v6423 = vld [vmem:[#allocation2 + $0x3c] sm:$0xf]
        %v6424 = vld [vmem:[#allocation2 + $0x40] sm:$0xf]
        %v6425 = vld [vmem:[#allocation2 + $0x48] sm:$0xf]
        %v6426 = vld [vmem:[#allocation2 + $0x4c] sm:$0xf]
        %v6427 = vld [vmem:[#allocation2 + $0x54] sm:$0xf]
        %v6428 = vld [vmem:[#allocation2 + $0x58] sm:$0xf]
        %v6429 = vld [vmem:[#allocation2 + $0x60] sm:$0xf]
        %v6430 = vld [vmem:[#allocation2 + $0x64] sm:$0xf]
        %v6431 = vld [vmem:[#allocation2 + $0x6c] sm:$0xf]
        %v6432 = vld [vmem:[#allocation2 + $0x70] sm:$0xf]
        %v6433 = vld [vmem:[#allocation2 + $0x78] sm:$0xf]
        %v6434 = vld [vmem:[#allocation2 + $0x7c] sm:$0xf]
        %v6435 = vld [vmem:[#allocation2 + $0x84] sm:$0xf]
        %v6436 = vld [vmem:[#allocation2 + $0x88] sm:$0xf]
        %v6437 = vld [vmem:[#allocation2 + $0x90] sm:$0xf]
        %v6438 = vld [vmem:[#allocation2 + $0x94] sm:$0xf]
        %v6439 = vld [vmem:[#allocation2 + $0x9c] sm:$0xf]
        %v6440 = vld [vmem:[#allocation2 + $0xa0] sm:$0xf]
        %v6441 = vld [vmem:[#allocation2 + $0xa8] sm:$0xf]
        %v6442 = vld [vmem:[#allocation2 + $0xac] sm:$0xf]
        %v6443 = vld [vmem:[#allocation2 + $0xb4] sm:$0xf]
        %v6444 = vld [vmem:[#allocation2 + $0xb8] sm:$0xf]
        %6445 = vst [vmem:[#allocation3] sm:$0xf] %v6413
        %6446 = vst [vmem:[#allocation3 + $0x24] sm:$0xf] %v6414
        %6447 = vst [vmem:[#allocation3 + $0x48] sm:$0xf] %v6415
        %6448 = vst [vmem:[#allocation3 + $0x6c] sm:$0xf] %v6416
        %6449 = vst [vmem:[#allocation3 + $0x90] sm:$0xf] %v6417
        %6450 = vst [vmem:[#allocation3 + $0xb4] sm:$0xf] %v6418
        %6451 = vst [vmem:[#allocation3 + $0xd8] sm:$0xf] %v6419
        %6452 = vst [vmem:[#allocation3 + $0xfc] sm:$0xf] %v6420
        %6453 = vst [vmem:[#allocation3 + $0x120] sm:$0xf] %v6421
        %6454 = vst [vmem:[#allocation3 + $0x144] sm:$0xf] %v6422
        %6455 = vst [vmem:[#allocation3 + $0x168] sm:$0xf] %v6423
        %6456 = vst [vmem:[#allocation3 + $0x18c] sm:$0xf] %v6424
        %6457 = vst [vmem:[#allocation3 + $0x1b0] sm:$0xf] %v6425
        %6458 = vst [vmem:[#allocation3 + $0x1d4] sm:$0xf] %v6426
        %6459 = vst [vmem:[#allocation3 + $0x1f8] sm:$0xf] %v6427
        %6460 = vst [vmem:[#allocation3 + $0x21c] sm:$0xf] %v6428
        %6461 = vst [vmem:[#allocation3 + $0x240] sm:$0xf] %v6429
        %6462 = vst [vmem:[#allocation3 + $0x264] sm:$0xf] %v6430
        %6463 = vst [vmem:[#allocation3 + $0x288] sm:$0xf] %v6431
        %6464 = vst [vmem:[#allocation3 + $0x2ac] sm:$0xf] %v6432
        %6465 = vst [vmem:[#allocation3 + $0x2d0] sm:$0xf] %v6433
        %6466 = vst [vmem:[#allocation3 + $0x2f4] sm:$0xf] %v6434
        %6467 = vst [vmem:[#allocation3 + $0x318] sm:$0xf] %v6435
        %6468 = vst [vmem:[#allocation3 + $0x33c] sm:$0xf] %v6436
        %6469 = vst [vmem:[#allocation3 + $0x360] sm:$0xf] %v6437
        %6470 = vst [vmem:[#allocation3 + $0x384] sm:$0xf] %v6438
        %6471 = vst [vmem:[#allocation3 + $0x3a8] sm:$0xf] %v6439
        %6472 = vst [vmem:[#allocation3 + $0x3cc] sm:$0xf] %v6440
        %6473 = vst [vmem:[#allocation3 + $0x3f0] sm:$0xf] %v6441
        %6474 = vst [vmem:[#allocation3 + $0x414] sm:$0xf] %v6442
        %6475 = vst [vmem:[#allocation3 + $0x438] sm:$0xf] %v6443
        %6476 = vst [vmem:[#allocation3 + $0x45c] sm:$0xf] %v6444
        %v6477 = vld [vmem:[#allocation2] sm:$0xf]
        %v6478 = vld [vmem:[#allocation2 + $0x4] sm:$0xf]
        %v6479 = vld [vmem:[#allocation2 + $0x8] sm:$0x1]
        %v6480 = vld [vmem:[#allocation2 + $0xc] sm:$0xf]
        %v6481 = vld [vmem:[#allocation2 + $0x10] sm:$0xf]
        %v6482 = vld [vmem:[#allocation2 + $0x14] sm:$0x1]
        %v6483 = vld [vmem:[#allocation2 + $0x18] sm:$0xf]
        %v6484 = vld [vmem:[#allocation2 + $0x1c] sm:$0xf]
        %v6485 = vld [vmem:[#allocation2 + $0x20] sm:$0x1]
        %v6486 = vld [vmem:[#allocation2 + $0x24] sm:$0xf]
        %v6487 = vld [vmem:[#allocation2 + $0x28] sm:$0xf]
        %v6488 = vld [vmem:[#allocation2 + $0x2c] sm:$0x1]
        %v6489 = vld [vmem:[#allocation2 + $0x30] sm:$0xf]
        %v6490 = vld [vmem:[#allocation2 + $0x34] sm:$0xf]
        %v6491 = vld [vmem:[#allocation2 + $0x38] sm:$0x1]
        %v6492 = vld [vmem:[#allocation2 + $0x3c] sm:$0xf]
        %v6493 = vld [vmem:[#allocation2 + $0x40] sm:$0xf]
        %v6494 = vld [vmem:[#allocation2 + $0x44] sm:$0x1]
        %v6495 = vld [vmem:[#allocation2 + $0x48] sm:$0xf]
        %v6496 = vld [vmem:[#allocation2 + $0x4c] sm:$0xf]
        %v6497 = vld [vmem:[#allocation2 + $0x50] sm:$0x1]
        %v6498 = vld [vmem:[#allocation2 + $0x54] sm:$0xf]
        %v6499 = vld [vmem:[#allocation2 + $0x58] sm:$0xf]
        %v6500 = vld [vmem:[#allocation2 + $0x5c] sm:$0x1]
        %v6501 = vld [vmem:[#allocation2 + $0x60] sm:$0xf]
        %v6502 = vld [vmem:[#allocation2 + $0x64] sm:$0xf]
        %v6503 = vld [vmem:[#allocation2 + $0x68] sm:$0x1]
        %v6504 = vld [vmem:[#allocation2 + $0x6c] sm:$0xf]
        %v6505 = vld [vmem:[#allocation2 + $0x70] sm:$0xf]
        %v6506 = vld [vmem:[#allocation2 + $0x74] sm:$0x1]
        %v6507 = vld [vmem:[#allocation2 + $0x78] sm:$0xf]
        %v6508 = vld [vmem:[#allocation2 + $0x7c] sm:$0xf]
        %v6509 = vld [vmem:[#allocation2 + $0x80] sm:$0x1]
        %v6510 = vld [vmem:[#allocation2 + $0x84] sm:$0xf]
        %v6511 = vld [vmem:[#allocation2 + $0x88] sm:$0xf]
        %v6512 = vld [vmem:[#allocation2 + $0x8c] sm:$0x1]
        %v6513 = vld [vmem:[#allocation2 + $0x90] sm:$0xf]
        %v6514 = vld [vmem:[#allocation2 + $0x94] sm:$0xf]
        %v6515 = vld [vmem:[#allocation2 + $0x98] sm:$0x1]
        %v6516 = vld [vmem:[#allocation2 + $0x9c] sm:$0xf]
        %v6517 = vld [vmem:[#allocation2 + $0xa0] sm:$0xf]
        %v6518 = vld [vmem:[#allocation2 + $0xa4] sm:$0x1]
        %v6519 = vld [vmem:[#allocation2 + $0xa8] sm:$0xf]
        %v6520 = vld [vmem:[#allocation2 + $0xac] sm:$0xf]
        %v6521 = vld [vmem:[#allocation2 + $0xb0] sm:$0x1]
        %v6522 = vld [vmem:[#allocation2 + $0xb4] sm:$0xf]
        %v6523 = vld [vmem:[#allocation2 + $0xb8] sm:$0xf]
        %v6524 = vld [vmem:[#allocation2 + $0xbc] sm:$0x1]
        %v6526 = vshrl.u32 %v6477, 16
        %v6528 = vrot.slane %v6526, 4
        %v6529 = vshll.u32 %v6477, 16
        %v6531 = vrot.slane %v6529, 5
        %v6532 = vor.u32 %v6528, %v6531
        %v6533 = vrot.slane %v6532, 4
        %v6535 = vshll.u32 %v6478, 16
        %v6537 = vrot.slane %v6535, 5
        %v6538 = vsel %vm1203, %v6533, %v6537
        %v6539 = vshrl.u32 %v6478, 16
        %v6541 = vrot.slane %v6539, 4
        %v6542 = vor.u32 %v6541, %v6537
        %v6543 = vrot.slane %v6542, 4
        %v6545 = vshll.u32 %v6479, 16
        %v6547 = vrot.slane %v6545, 5
        %v6548 = vsel %vm1203, %v6543, %v6547
        %v6550 = vshrl.u32 %v6480, 16
        %v6552 = vrot.slane %v6550, 4
        %v6553 = vshll.u32 %v6480, 16
        %v6555 = vrot.slane %v6553, 5
        %v6556 = vor.u32 %v6552, %v6555
        %v6557 = vrot.slane %v6556, 4
        %v6559 = vshll.u32 %v6481, 16
        %v6561 = vrot.slane %v6559, 5
        %v6562 = vsel %vm1203, %v6557, %v6561
        %v6563 = vshrl.u32 %v6481, 16
        %v6565 = vrot.slane %v6563, 4
        %v6566 = vor.u32 %v6565, %v6561
        %v6567 = vrot.slane %v6566, 4
        %v6569 = vshll.u32 %v6482, 16
        %v6571 = vrot.slane %v6569, 5
        %v6572 = vsel %vm1203, %v6567, %v6571
        %v6574 = vshrl.u32 %v6483, 16
        %v6576 = vrot.slane %v6574, 4
        %v6577 = vshll.u32 %v6483, 16
        %v6579 = vrot.slane %v6577, 5
        %v6580 = vor.u32 %v6576, %v6579
        %v6581 = vrot.slane %v6580, 4
        %v6583 = vshll.u32 %v6484, 16
        %v6585 = vrot.slane %v6583, 5
        %v6586 = vsel %vm1203, %v6581, %v6585
        %v6587 = vshrl.u32 %v6484, 16
        %v6589 = vrot.slane %v6587, 4
        %v6590 = vor.u32 %v6589, %v6585
        %v6591 = vrot.slane %v6590, 4
        %v6593 = vshll.u32 %v6485, 16
        %v6595 = vrot.slane %v6593, 5
        %v6596 = vsel %vm1203, %v6591, %v6595
        %v6598 = vshrl.u32 %v6486, 16
        %v6600 = vrot.slane %v6598, 4
        %v6601 = vshll.u32 %v6486, 16
        %v6603 = vrot.slane %v6601, 5
        %v6604 = vor.u32 %v6600, %v6603
        %v6605 = vrot.slane %v6604, 4
        %v6607 = vshll.u32 %v6487, 16
        %v6609 = vrot.slane %v6607, 5
        %v6610 = vsel %vm1203, %v6605, %v6609
        %v6611 = vshrl.u32 %v6487, 16
        %v6613 = vrot.slane %v6611, 4
        %v6614 = vor.u32 %v6613, %v6609
        %v6615 = vrot.slane %v6614, 4
        %v6617 = vshll.u32 %v6488, 16
        %v6619 = vrot.slane %v6617, 5
        %v6620 = vsel %vm1203, %v6615, %v6619
        %v6622 = vshrl.u32 %v6489, 16
        %v6624 = vrot.slane %v6622, 4
        %v6625 = vshll.u32 %v6489, 16
        %v6627 = vrot.slane %v6625, 5
        %v6628 = vor.u32 %v6624, %v6627
        %v6629 = vrot.slane %v6628, 4
        %v6631 = vshll.u32 %v6490, 16
        %v6633 = vrot.slane %v6631, 5
        %v6634 = vsel %vm1203, %v6629, %v6633
        %v6635 = vshrl.u32 %v6490, 16
        %v6637 = vrot.slane %v6635, 4
        %v6638 = vor.u32 %v6637, %v6633
        %v6639 = vrot.slane %v6638, 4
        %v6641 = vshll.u32 %v6491, 16
        %v6643 = vrot.slane %v6641, 5
        %v6644 = vsel %vm1203, %v6639, %v6643
        %v6646 = vshrl.u32 %v6492, 16
        %v6648 = vrot.slane %v6646, 4
        %v6649 = vshll.u32 %v6492, 16
        %v6651 = vrot.slane %v6649, 5
        %v6652 = vor.u32 %v6648, %v6651
        %v6653 = vrot.slane %v6652, 4
        %v6655 = vshll.u32 %v6493, 16
        %v6657 = vrot.slane %v6655, 5
        %v6658 = vsel %vm1203, %v6653, %v6657
        %v6659 = vshrl.u32 %v6493, 16
        %v6661 = vrot.slane %v6659, 4
        %v6662 = vor.u32 %v6661, %v6657
        %v6663 = vrot.slane %v6662, 4
        %v6665 = vshll.u32 %v6494, 16
        %v6667 = vrot.slane %v6665, 5
        %v6668 = vsel %vm1203, %v6663, %v6667
        %v6670 = vshrl.u32 %v6495, 16
        %v6672 = vrot.slane %v6670, 4
        %v6673 = vshll.u32 %v6495, 16
        %v6675 = vrot.slane %v6673, 5
        %v6676 = vor.u32 %v6672, %v6675
        %v6677 = vrot.slane %v6676, 4
        %v6679 = vshll.u32 %v6496, 16
        %v6681 = vrot.slane %v6679, 5
        %v6682 = vsel %vm1203, %v6677, %v6681
        %v6683 = vshrl.u32 %v6496, 16
        %v6685 = vrot.slane %v6683, 4
        %v6686 = vor.u32 %v6685, %v6681
        %v6687 = vrot.slane %v6686, 4
        %v6689 = vshll.u32 %v6497, 16
        %v6691 = vrot.slane %v6689, 5
        %v6692 = vsel %vm1203, %v6687, %v6691
        %v6694 = vshrl.u32 %v6498, 16
        %v6696 = vrot.slane %v6694, 4
        %v6697 = vshll.u32 %v6498, 16
        %v6699 = vrot.slane %v6697, 5
        %v6700 = vor.u32 %v6696, %v6699
        %v6701 = vrot.slane %v6700, 4
        %v6703 = vshll.u32 %v6499, 16
        %v6705 = vrot.slane %v6703, 5
        %v6706 = vsel %vm1203, %v6701, %v6705
        %v6707 = vshrl.u32 %v6499, 16
        %v6709 = vrot.slane %v6707, 4
        %v6710 = vor.u32 %v6709, %v6705
        %v6711 = vrot.slane %v6710, 4
        %v6713 = vshll.u32 %v6500, 16
        %v6715 = vrot.slane %v6713, 5
        %v6716 = vsel %vm1203, %v6711, %v6715
        %v6718 = vshrl.u32 %v6501, 16
        %v6720 = vrot.slane %v6718, 4
        %v6721 = vshll.u32 %v6501, 16
        %v6723 = vrot.slane %v6721, 5
        %v6724 = vor.u32 %v6720, %v6723
        %v6725 = vrot.slane %v6724, 4
        %v6727 = vshll.u32 %v6502, 16
        %v6729 = vrot.slane %v6727, 5
        %v6730 = vsel %vm1203, %v6725, %v6729
        %v6731 = vshrl.u32 %v6502, 16
        %v6733 = vrot.slane %v6731, 4
        %v6734 = vor.u32 %v6733, %v6729
        %v6735 = vrot.slane %v6734, 4
        %v6737 = vshll.u32 %v6503, 16
        %v6739 = vrot.slane %v6737, 5
        %v6740 = vsel %vm1203, %v6735, %v6739
        %v6742 = vshrl.u32 %v6504, 16
        %v6744 = vrot.slane %v6742, 4
        %v6745 = vshll.u32 %v6504, 16
        %v6747 = vrot.slane %v6745, 5
        %v6748 = vor.u32 %v6744, %v6747
        %v6749 = vrot.slane %v6748, 4
        %v6751 = vshll.u32 %v6505, 16
        %v6753 = vrot.slane %v6751, 5
        %v6754 = vsel %vm1203, %v6749, %v6753
        %v6755 = vshrl.u32 %v6505, 16
        %v6757 = vrot.slane %v6755, 4
        %v6758 = vor.u32 %v6757, %v6753
        %v6759 = vrot.slane %v6758, 4
        %v6761 = vshll.u32 %v6506, 16
        %v6763 = vrot.slane %v6761, 5
        %v6764 = vsel %vm1203, %v6759, %v6763
        %v6766 = vshrl.u32 %v6507, 16
        %v6768 = vrot.slane %v6766, 4
        %v6769 = vshll.u32 %v6507, 16
        %v6771 = vrot.slane %v6769, 5
        %v6772 = vor.u32 %v6768, %v6771
        %v6773 = vrot.slane %v6772, 4
        %v6775 = vshll.u32 %v6508, 16
        %v6777 = vrot.slane %v6775, 5
        %v6778 = vsel %vm1203, %v6773, %v6777
        %v6779 = vshrl.u32 %v6508, 16
        %v6781 = vrot.slane %v6779, 4
        %v6782 = vor.u32 %v6781, %v6777
        %v6783 = vrot.slane %v6782, 4
        %v6785 = vshll.u32 %v6509, 16
        %v6787 = vrot.slane %v6785, 5
        %v6788 = vsel %vm1203, %v6783, %v6787
        %v6790 = vshrl.u32 %v6510, 16
        %v6792 = vrot.slane %v6790, 4
        %v6793 = vshll.u32 %v6510, 16
        %v6795 = vrot.slane %v6793, 5
        %v6796 = vor.u32 %v6792, %v6795
        %v6797 = vrot.slane %v6796, 4
        %v6799 = vshll.u32 %v6511, 16
        %v6801 = vrot.slane %v6799, 5
        %v6802 = vsel %vm1203, %v6797, %v6801
        %v6803 = vshrl.u32 %v6511, 16
        %v6805 = vrot.slane %v6803, 4
        %v6806 = vor.u32 %v6805, %v6801
        %v6807 = vrot.slane %v6806, 4
        %v6809 = vshll.u32 %v6512, 16
        %v6811 = vrot.slane %v6809, 5
        %v6812 = vsel %vm1203, %v6807, %v6811
        %v6814 = vshrl.u32 %v6513, 16
        %v6816 = vrot.slane %v6814, 4
        %v6817 = vshll.u32 %v6513, 16
        %v6819 = vrot.slane %v6817, 5
        %v6820 = vor.u32 %v6816, %v6819
        %v6821 = vrot.slane %v6820, 4
        %v6823 = vshll.u32 %v6514, 16
        %v6825 = vrot.slane %v6823, 5
        %v6826 = vsel %vm1203, %v6821, %v6825
        %v6827 = vshrl.u32 %v6514, 16
        %v6829 = vrot.slane %v6827, 4
        %v6830 = vor.u32 %v6829, %v6825
        %v6831 = vrot.slane %v6830, 4
        %v6833 = vshll.u32 %v6515, 16
        %v6835 = vrot.slane %v6833, 5
        %v6836 = vsel %vm1203, %v6831, %v6835
        %v6838 = vshrl.u32 %v6516, 16
        %v6840 = vrot.slane %v6838, 4
        %v6841 = vshll.u32 %v6516, 16
        %v6843 = vrot.slane %v6841, 5
        %v6844 = vor.u32 %v6840, %v6843
        %v6845 = vrot.slane %v6844, 4
        %v6847 = vshll.u32 %v6517, 16
        %v6849 = vrot.slane %v6847, 5
        %v6850 = vsel %vm1203, %v6845, %v6849
        %v6851 = vshrl.u32 %v6517, 16
        %v6853 = vrot.slane %v6851, 4
        %v6854 = vor.u32 %v6853, %v6849
        %v6855 = vrot.slane %v6854, 4
        %v6857 = vshll.u32 %v6518, 16
        %v6859 = vrot.slane %v6857, 5
        %v6860 = vsel %vm1203, %v6855, %v6859
        %v6862 = vshrl.u32 %v6519, 16
        %v6864 = vrot.slane %v6862, 4
        %v6865 = vshll.u32 %v6519, 16
        %v6867 = vrot.slane %v6865, 5
        %v6868 = vor.u32 %v6864, %v6867
        %v6869 = vrot.slane %v6868, 4
        %v6871 = vshll.u32 %v6520, 16
        %v6873 = vrot.slane %v6871, 5
        %v6874 = vsel %vm1203, %v6869, %v6873
        %v6875 = vshrl.u32 %v6520, 16
        %v6877 = vrot.slane %v6875, 4
        %v6878 = vor.u32 %v6877, %v6873
        %v6879 = vrot.slane %v6878, 4
        %v6881 = vshll.u32 %v6521, 16
        %v6883 = vrot.slane %v6881, 5
        %v6884 = vsel %vm1203, %v6879, %v6883
        %v6886 = vshrl.u32 %v6522, 16
        %v6888 = vrot.slane %v6886, 4
        %v6889 = vshll.u32 %v6522, 16
        %v6891 = vrot.slane %v6889, 5
        %v6892 = vor.u32 %v6888, %v6891
        %v6893 = vrot.slane %v6892, 4
        %v6895 = vshll.u32 %v6523, 16
        %v6897 = vrot.slane %v6895, 5
        %v6898 = vsel %vm1203, %v6893, %v6897
        %v6899 = vshrl.u32 %v6523, 16
        %v6901 = vrot.slane %v6899, 4
        %v6902 = vor.u32 %v6901, %v6897
        %v6903 = vrot.slane %v6902, 4
        %v6905 = vshll.u32 %v6524, 16
        %v6907 = vrot.slane %v6905, 5
        %v6908 = vsel %vm1203, %v6903, %v6907
        %6941 = vst [vmem:[#allocation3 + $0x4] sm:$0xf] %v6538
        %6942 = vst [vmem:[#allocation3 + $0x28] sm:$0xf] %v6548
        %6943 = vst [vmem:[#allocation3 + $0x4c] sm:$0xf] %v6562
        %6944 = vst [vmem:[#allocation3 + $0x70] sm:$0xf] %v6572
        %6945 = vst [vmem:[#allocation3 + $0x94] sm:$0xf] %v6586
        %6946 = vst [vmem:[#allocation3 + $0xb8] sm:$0xf] %v6596
        %6947 = vst [vmem:[#allocation3 + $0xdc] sm:$0xf] %v6610
        %6948 = vst [vmem:[#allocation3 + $0x100] sm:$0xf] %v6620
        %6949 = vst [vmem:[#allocation3 + $0x124] sm:$0xf] %v6634
        %6950 = vst [vmem:[#allocation3 + $0x148] sm:$0xf] %v6644
        %6951 = vst [vmem:[#allocation3 + $0x16c] sm:$0xf] %v6658
        %6952 = vst [vmem:[#allocation3 + $0x190] sm:$0xf] %v6668
        %6953 = vst [vmem:[#allocation3 + $0x1b4] sm:$0xf] %v6682
        %6954 = vst [vmem:[#allocation3 + $0x1d8] sm:$0xf] %v6692
        %6955 = vst [vmem:[#allocation3 + $0x1fc] sm:$0xf] %v6706
        %6956 = vst [vmem:[#allocation3 + $0x220] sm:$0xf] %v6716
        %6957 = vst [vmem:[#allocation3 + $0x244] sm:$0xf] %v6730
        %6958 = vst [vmem:[#allocation3 + $0x268] sm:$0xf] %v6740
        %6959 = vst [vmem:[#allocation3 + $0x28c] sm:$0xf] %v6754
        %6960 = vst [vmem:[#allocation3 + $0x2b0] sm:$0xf] %v6764
        %6961 = vst [vmem:[#allocation3 + $0x2d4] sm:$0xf] %v6778
        %6962 = vst [vmem:[#allocation3 + $0x2f8] sm:$0xf] %v6788
        %6963 = vst [vmem:[#allocation3 + $0x31c] sm:$0xf] %v6802
        %6964 = vst [vmem:[#allocation3 + $0x340] sm:$0xf] %v6812
        %6965 = vst [vmem:[#allocation3 + $0x364] sm:$0xf] %v6826
        %6966 = vst [vmem:[#allocation3 + $0x388] sm:$0xf] %v6836
        %6967 = vst [vmem:[#allocation3 + $0x3ac] sm:$0xf] %v6850
        %6968 = vst [vmem:[#allocation3 + $0x3d0] sm:$0xf] %v6860
        %6969 = vst [vmem:[#allocation3 + $0x3f4] sm:$0xf] %v6874
        %6970 = vst [vmem:[#allocation3 + $0x418] sm:$0xf] %v6884
        %6971 = vst [vmem:[#allocation3 + $0x43c] sm:$0xf] %v6898
        %6972 = vst [vmem:[#allocation3 + $0x460] sm:$0xf] %v6908
        %v6973 = vld [vmem:[#allocation2] sm:$0xe]
        %v6974 = vld [vmem:[#allocation2 + $0x4] sm:$0xf]
        %v6975 = vld [vmem:[#allocation2 + $0x8] sm:$0x1]
        %v6976 = vld [vmem:[#allocation2 + $0xc] sm:$0xe]
        %v6977 = vld [vmem:[#allocation2 + $0x10] sm:$0xf]
        %v6978 = vld [vmem:[#allocation2 + $0x14] sm:$0x1]
        %v6979 = vld [vmem:[#allocation2 + $0x18] sm:$0xe]
        %v6980 = vld [vmem:[#allocation2 + $0x1c] sm:$0xf]
        %v6981 = vld [vmem:[#allocation2 + $0x20] sm:$0x1]
        %v6982 = vld [vmem:[#allocation2 + $0x24] sm:$0xe]
        %v6983 = vld [vmem:[#allocation2 + $0x28] sm:$0xf]
        %v6984 = vld [vmem:[#allocation2 + $0x2c] sm:$0x1]
        %v6985 = vld [vmem:[#allocation2 + $0x30] sm:$0xe]
        %v6986 = vld [vmem:[#allocation2 + $0x34] sm:$0xf]
        %v6987 = vld [vmem:[#allocation2 + $0x38] sm:$0x1]
        %v6988 = vld [vmem:[#allocation2 + $0x3c] sm:$0xe]
        %v6989 = vld [vmem:[#allocation2 + $0x40] sm:$0xf]
        %v6990 = vld [vmem:[#allocation2 + $0x44] sm:$0x1]
        %v6991 = vld [vmem:[#allocation2 + $0x48] sm:$0xe]
        %v6992 = vld [vmem:[#allocation2 + $0x4c] sm:$0xf]
        %v6993 = vld [vmem:[#allocation2 + $0x50] sm:$0x1]
        %v6994 = vld [vmem:[#allocation2 + $0x54] sm:$0xe]
        %v6995 = vld [vmem:[#allocation2 + $0x58] sm:$0xf]
        %v6996 = vld [vmem:[#allocation2 + $0x5c] sm:$0x1]
        %v6997 = vld [vmem:[#allocation2 + $0x60] sm:$0xe]
        %v6998 = vld [vmem:[#allocation2 + $0x64] sm:$0xf]
        %v6999 = vld [vmem:[#allocation2 + $0x68] sm:$0x1]
        %v7000 = vld [vmem:[#allocation2 + $0x6c] sm:$0xe]
        %v7001 = vld [vmem:[#allocation2 + $0x70] sm:$0xf]
        %v7002 = vld [vmem:[#allocation2 + $0x74] sm:$0x1]
        %v7003 = vld [vmem:[#allocation2 + $0x78] sm:$0xe]
        %v7004 = vld [vmem:[#allocation2 + $0x7c] sm:$0xf]
        %v7005 = vld [vmem:[#allocation2 + $0x80] sm:$0x1]
        %v7006 = vld [vmem:[#allocation2 + $0x84] sm:$0xe]
        %v7007 = vld [vmem:[#allocation2 + $0x88] sm:$0xf]
        %v7008 = vld [vmem:[#allocation2 + $0x8c] sm:$0x1]
        %v7009 = vld [vmem:[#allocation2 + $0x90] sm:$0xe]
        %v7010 = vld [vmem:[#allocation2 + $0x94] sm:$0xf]
        %v7011 = vld [vmem:[#allocation2 + $0x98] sm:$0x1]
        %v7012 = vld [vmem:[#allocation2 + $0x9c] sm:$0xe]
        %v7013 = vld [vmem:[#allocation2 + $0xa0] sm:$0xf]
        %v7014 = vld [vmem:[#allocation2 + $0xa4] sm:$0x1]
        %v7015 = vld [vmem:[#allocation2 + $0xa8] sm:$0xe]
        %v7016 = vld [vmem:[#allocation2 + $0xac] sm:$0xf]
        %v7017 = vld [vmem:[#allocation2 + $0xb0] sm:$0x1]
        %v7018 = vld [vmem:[#allocation2 + $0xb4] sm:$0xe]
        %v7019 = vld [vmem:[#allocation2 + $0xb8] sm:$0xf]
        %v7020 = vld [vmem:[#allocation2 + $0xbc] sm:$0x1]
        %v7069 = vrot.slane %v6973, 5
        %v7070 = vrot.slane %v7069, 4
        %v7071 = vrot.slane %v6974, 5
        %v7072 = vsel %vm1750, %v7070, %v7071
        %v7073 = vrot.slane %v7071, 4
        %v7074 = vrot.slane %v6975, 5
        %v7075 = vsel %vm1750, %v7073, %v7074
        %v7076 = vrot.slane %v6976, 5
        %v7077 = vrot.slane %v7076, 4
        %v7078 = vrot.slane %v6977, 5
        %v7079 = vsel %vm1750, %v7077, %v7078
        %v7080 = vrot.slane %v7078, 4
        %v7081 = vrot.slane %v6978, 5
        %v7082 = vsel %vm1750, %v7080, %v7081
        %v7083 = vrot.slane %v6979, 5
        %v7084 = vrot.slane %v7083, 4
        %v7085 = vrot.slane %v6980, 5
        %v7086 = vsel %vm1750, %v7084, %v7085
        %v7087 = vrot.slane %v7085, 4
        %v7088 = vrot.slane %v6981, 5
        %v7089 = vsel %vm1750, %v7087, %v7088
        %v7090 = vrot.slane %v6982, 5
        %v7091 = vrot.slane %v7090, 4
        %v7092 = vrot.slane %v6983, 5
        %v7093 = vsel %vm1750, %v7091, %v7092
        %v7094 = vrot.slane %v7092, 4
        %v7095 = vrot.slane %v6984, 5
        %v7096 = vsel %vm1750, %v7094, %v7095
        %v7097 = vrot.slane %v6985, 5
        %v7098 = vrot.slane %v7097, 4
        %v7099 = vrot.slane %v6986, 5
        %v7100 = vsel %vm1750, %v7098, %v7099
        %v7101 = vrot.slane %v7099, 4
        %v7102 = vrot.slane %v6987, 5
        %v7103 = vsel %vm1750, %v7101, %v7102
        %v7104 = vrot.slane %v6988, 5
        %v7105 = vrot.slane %v7104, 4
        %v7106 = vrot.slane %v6989, 5
        %v7107 = vsel %vm1750, %v7105, %v7106
        %v7108 = vrot.slane %v7106, 4
        %v7109 = vrot.slane %v6990, 5
        %v7110 = vsel %vm1750, %v7108, %v7109
        %v7111 = vrot.slane %v6991, 5
        %v7112 = vrot.slane %v7111, 4
        %v7113 = vrot.slane %v6992, 5
        %v7114 = vsel %vm1750, %v7112, %v7113
        %v7115 = vrot.slane %v7113, 4
        %v7116 = vrot.slane %v6993, 5
        %v7117 = vsel %vm1750, %v7115, %v7116
        %v7118 = vrot.slane %v6994, 5
        %v7119 = vrot.slane %v7118, 4
        %v7120 = vrot.slane %v6995, 5
        %v7121 = vsel %vm1750, %v7119, %v7120
        %v7122 = vrot.slane %v7120, 4
        %v7123 = vrot.slane %v6996, 5
        %v7124 = vsel %vm1750, %v7122, %v7123
        %v7125 = vrot.slane %v6997, 5
        %v7126 = vrot.slane %v7125, 4
        %v7127 = vrot.slane %v6998, 5
        %v7128 = vsel %vm1750, %v7126, %v7127
        %v7129 = vrot.slane %v7127, 4
        %v7130 = vrot.slane %v6999, 5
        %v7131 = vsel %vm1750, %v7129, %v7130
        %v7132 = vrot.slane %v7000, 5
        %v7133 = vrot.slane %v7132, 4
        %v7134 = vrot.slane %v7001, 5
        %v7135 = vsel %vm1750, %v7133, %v7134
        %v7136 = vrot.slane %v7134, 4
        %v7137 = vrot.slane %v7002, 5
        %v7138 = vsel %vm1750, %v7136, %v7137
        %v7139 = vrot.slane %v7003, 5
        %v7140 = vrot.slane %v7139, 4
        %v7141 = vrot.slane %v7004, 5
        %v7142 = vsel %vm1750, %v7140, %v7141
        %v7143 = vrot.slane %v7141, 4
        %v7144 = vrot.slane %v7005, 5
        %v7145 = vsel %vm1750, %v7143, %v7144
        %v7146 = vrot.slane %v7006, 5
        %v7147 = vrot.slane %v7146, 4
        %v7148 = vrot.slane %v7007, 5
        %v7149 = vsel %vm1750, %v7147, %v7148
        %v7150 = vrot.slane %v7148, 4
        %v7151 = vrot.slane %v7008, 5
        %v7152 = vsel %vm1750, %v7150, %v7151
        %v7153 = vrot.slane %v7009, 5
        %v7154 = vrot.slane %v7153, 4
        %v7155 = vrot.slane %v7010, 5
        %v7156 = vsel %vm1750, %v7154, %v7155
        %v7157 = vrot.slane %v7155, 4
        %v7158 = vrot.slane %v7011, 5
        %v7159 = vsel %vm1750, %v7157, %v7158
        %v7160 = vrot.slane %v7012, 5
        %v7161 = vrot.slane %v7160, 4
        %v7162 = vrot.slane %v7013, 5
        %v7163 = vsel %vm1750, %v7161, %v7162
        %v7164 = vrot.slane %v7162, 4
        %v7165 = vrot.slane %v7014, 5
        %v7166 = vsel %vm1750, %v7164, %v7165
        %v7167 = vrot.slane %v7015, 5
        %v7168 = vrot.slane %v7167, 4
        %v7169 = vrot.slane %v7016, 5
        %v7170 = vsel %vm1750, %v7168, %v7169
        %v7171 = vrot.slane %v7169, 4
        %v7172 = vrot.slane %v7017, 5
        %v7173 = vsel %vm1750, %v7171, %v7172
        %v7174 = vrot.slane %v7018, 5
        %v7175 = vrot.slane %v7174, 4
        %v7176 = vrot.slane %v7019, 5
        %v7177 = vsel %vm1750, %v7175, %v7176
        %v7178 = vrot.slane %v7176, 4
        %v7179 = vrot.slane %v7020, 5
        %v7180 = vsel %vm1750, %v7178, %v7179
        %7213 = vst [vmem:[#allocation3 + $0x8] sm:$0xf] %v7072
        %7214 = vst [vmem:[#allocation3 + $0x2c] sm:$0xf] %v7075
        %7215 = vst [vmem:[#allocation3 + $0x50] sm:$0xf] %v7079
        %7216 = vst [vmem:[#allocation3 + $0x74] sm:$0xf] %v7082
        %7217 = vst [vmem:[#allocation3 + $0x98] sm:$0xf] %v7086
        %7218 = vst [vmem:[#allocation3 + $0xbc] sm:$0xf] %v7089
        %7219 = vst [vmem:[#allocation3 + $0xe0] sm:$0xf] %v7093
        %7220 = vst [vmem:[#allocation3 + $0x104] sm:$0xf] %v7096
        %7221 = vst [vmem:[#allocation3 + $0x128] sm:$0xf] %v7100
        %7222 = vst [vmem:[#allocation3 + $0x14c] sm:$0xf] %v7103
        %7223 = vst [vmem:[#allocation3 + $0x170] sm:$0xf] %v7107
        %7224 = vst [vmem:[#allocation3 + $0x194] sm:$0xf] %v7110
        %7225 = vst [vmem:[#allocation3 + $0x1b8] sm:$0xf] %v7114
        %7226 = vst [vmem:[#allocation3 + $0x1dc] sm:$0xf] %v7117
        %7227 = vst [vmem:[#allocation3 + $0x200] sm:$0xf] %v7121
        %7228 = vst [vmem:[#allocation3 + $0x224] sm:$0xf] %v7124
        %7229 = vst [vmem:[#allocation3 + $0x248] sm:$0xf] %v7128
        %7230 = vst [vmem:[#allocation3 + $0x26c] sm:$0xf] %v7131
        %7231 = vst [vmem:[#allocation3 + $0x290] sm:$0xf] %v7135
        %7232 = vst [vmem:[#allocation3 + $0x2b4] sm:$0xf] %v7138
        %7233 = vst [vmem:[#allocation3 + $0x2d8] sm:$0xf] %v7142
        %7234 = vst [vmem:[#allocation3 + $0x2fc] sm:$0xf] %v7145
        %7235 = vst [vmem:[#allocation3 + $0x320] sm:$0xf] %v7149
        %7236 = vst [vmem:[#allocation3 + $0x344] sm:$0xf] %v7152
        %7237 = vst [vmem:[#allocation3 + $0x368] sm:$0xf] %v7156
        %7238 = vst [vmem:[#allocation3 + $0x38c] sm:$0xf] %v7159
        %7239 = vst [vmem:[#allocation3 + $0x3b0] sm:$0xf] %v7163
        %7240 = vst [vmem:[#allocation3 + $0x3d4] sm:$0xf] %v7166
        %7241 = vst [vmem:[#allocation3 + $0x3f8] sm:$0xf] %v7170
        %7242 = vst [vmem:[#allocation3 + $0x41c] sm:$0xf] %v7173
        %7243 = vst [vmem:[#allocation3 + $0x440] sm:$0xf] %v7177
        %7244 = vst [vmem:[#allocation3 + $0x464] sm:$0xf] %v7180
        %v7245 = vld [vmem:[%s974] sm:$0xf]
        %v7246 = vld [vmem:[%s974 + $0x4] sm:$0xf]
        %v7247 = vld [vmem:[%s974 + $0xc] sm:$0xf]
        %v7248 = vld [vmem:[%s974 + $0x10] sm:$0xf]
        %v7249 = vld [vmem:[%s974 + $0x18] sm:$0xf]
        %v7250 = vld [vmem:[%s974 + $0x1c] sm:$0xf]
        %v7251 = vld [vmem:[%s974 + $0x24] sm:$0xf]
        %v7252 = vld [vmem:[%s974 + $0x28] sm:$0xf]
        %v7253 = vld [vmem:[%s974 + $0x30] sm:$0xf]
        %v7254 = vld [vmem:[%s974 + $0x34] sm:$0xf]
        %v7255 = vld [vmem:[%s974 + $0x3c] sm:$0xf]
        %v7256 = vld [vmem:[%s974 + $0x40] sm:$0xf]
        %v7257 = vld [vmem:[%s974 + $0x48] sm:$0xf]
        %v7258 = vld [vmem:[%s974 + $0x4c] sm:$0xf]
        %v7259 = vld [vmem:[%s974 + $0x54] sm:$0xf]
        %v7260 = vld [vmem:[%s974 + $0x58] sm:$0xf]
        %v7261 = vld [vmem:[%s974 + $0x60] sm:$0xf]
        %v7262 = vld [vmem:[%s974 + $0x64] sm:$0xf]
        %v7263 = vld [vmem:[%s974 + $0x6c] sm:$0xf]
        %v7264 = vld [vmem:[%s974 + $0x70] sm:$0xf]
        %v7265 = vld [vmem:[%s974 + $0x78] sm:$0xf]
        %v7266 = vld [vmem:[%s974 + $0x7c] sm:$0xf]
        %v7267 = vld [vmem:[%s974 + $0x84] sm:$0xf]
        %v7268 = vld [vmem:[%s974 + $0x88] sm:$0xf]
        %v7269 = vld [vmem:[%s974 + $0x90] sm:$0xf]
        %v7270 = vld [vmem:[%s974 + $0x94] sm:$0xf]
        %v7271 = vld [vmem:[%s974 + $0x9c] sm:$0xf]
        %v7272 = vld [vmem:[%s974 + $0xa0] sm:$0xf]
        %v7273 = vld [vmem:[%s974 + $0xa8] sm:$0xf]
        %v7274 = vld [vmem:[%s974 + $0xac] sm:$0xf]
        %v7275 = vld [vmem:[%s974 + $0xb4] sm:$0xf]
        %v7276 = vld [vmem:[%s974 + $0xb8] sm:$0xf]
        %7277 = vst [vmem:[#allocation3 + $0xc] sm:$0xf] %v7245
        %7278 = vst [vmem:[#allocation3 + $0x30] sm:$0xf] %v7246
        %7279 = vst [vmem:[#allocation3 + $0x54] sm:$0xf] %v7247
        %7280 = vst [vmem:[#allocation3 + $0x78] sm:$0xf] %v7248
        %7281 = vst [vmem:[#allocation3 + $0x9c] sm:$0xf] %v7249
        %7282 = vst [vmem:[#allocation3 + $0xc0] sm:$0xf] %v7250
        %7283 = vst [vmem:[#allocation3 + $0xe4] sm:$0xf] %v7251
        %7284 = vst [vmem:[#allocation3 + $0x108] sm:$0xf] %v7252
        %7285 = vst [vmem:[#allocation3 + $0x12c] sm:$0xf] %v7253
        %7286 = vst [vmem:[#allocation3 + $0x150] sm:$0xf] %v7254
        %7287 = vst [vmem:[#allocation3 + $0x174] sm:$0xf] %v7255
        %7288 = vst [vmem:[#allocation3 + $0x198] sm:$0xf] %v7256
        %7289 = vst [vmem:[#allocation3 + $0x1bc] sm:$0xf] %v7257
        %7290 = vst [vmem:[#allocation3 + $0x1e0] sm:$0xf] %v7258
        %7291 = vst [vmem:[#allocation3 + $0x204] sm:$0xf] %v7259
        %7292 = vst [vmem:[#allocation3 + $0x228] sm:$0xf] %v7260
        %7293 = vst [vmem:[#allocation3 + $0x24c] sm:$0xf] %v7261
        %7294 = vst [vmem:[#allocation3 + $0x270] sm:$0xf] %v7262
        %7295 = vst [vmem:[#allocation3 + $0x294] sm:$0xf] %v7263
        %7296 = vst [vmem:[#allocation3 + $0x2b8] sm:$0xf] %v7264
        %7297 = vst [vmem:[#allocation3 + $0x2dc] sm:$0xf] %v7265
        %7298 = vst [vmem:[#allocation3 + $0x300] sm:$0xf] %v7266
        %7299 = vst [vmem:[#allocation3 + $0x324] sm:$0xf] %v7267
        %7300 = vst [vmem:[#allocation3 + $0x348] sm:$0xf] %v7268
        %7301 = vst [vmem:[#allocation3 + $0x36c] sm:$0xf] %v7269
        %7302 = vst [vmem:[#allocation3 + $0x390] sm:$0xf] %v7270
        %7303 = vst [vmem:[#allocation3 + $0x3b4] sm:$0xf] %v7271
        %7304 = vst [vmem:[#allocation3 + $0x3d8] sm:$0xf] %v7272
        %7305 = vst [vmem:[#allocation3 + $0x3fc] sm:$0xf] %v7273
        %7306 = vst [vmem:[#allocation3 + $0x420] sm:$0xf] %v7274
        %7307 = vst [vmem:[#allocation3 + $0x444] sm:$0xf] %v7275
        %7308 = vst [vmem:[#allocation3 + $0x468] sm:$0xf] %v7276
        %v7309 = vld [vmem:[%s974] sm:$0xf]
        %v7310 = vld [vmem:[%s974 + $0x4] sm:$0xf]
        %v7311 = vld [vmem:[%s974 + $0x8] sm:$0x1]
        %v7312 = vld [vmem:[%s974 + $0xc] sm:$0xf]
        %v7313 = vld [vmem:[%s974 + $0x10] sm:$0xf]
        %v7314 = vld [vmem:[%s974 + $0x14] sm:$0x1]
        %v7315 = vld [vmem:[%s974 + $0x18] sm:$0xf]
        %v7316 = vld [vmem:[%s974 + $0x1c] sm:$0xf]
        %v7317 = vld [vmem:[%s974 + $0x20] sm:$0x1]
        %v7318 = vld [vmem:[%s974 + $0x24] sm:$0xf]
        %v7319 = vld [vmem:[%s974 + $0x28] sm:$0xf]
        %v7320 = vld [vmem:[%s974 + $0x2c] sm:$0x1]
        %v7321 = vld [vmem:[%s974 + $0x30] sm:$0xf]
        %v7322 = vld [vmem:[%s974 + $0x34] sm:$0xf]
        %v7323 = vld [vmem:[%s974 + $0x38] sm:$0x1]
        %v7324 = vld [vmem:[%s974 + $0x3c] sm:$0xf]
        %v7325 = vld [vmem:[%s974 + $0x40] sm:$0xf]
        %v7326 = vld [vmem:[%s974 + $0x44] sm:$0x1]
        %v7327 = vld [vmem:[%s974 + $0x48] sm:$0xf]
        %v7328 = vld [vmem:[%s974 + $0x4c] sm:$0xf]
        %v7329 = vld [vmem:[%s974 + $0x50] sm:$0x1]
        %v7330 = vld [vmem:[%s974 + $0x54] sm:$0xf]
        %v7331 = vld [vmem:[%s974 + $0x58] sm:$0xf]
        %v7332 = vld [vmem:[%s974 + $0x5c] sm:$0x1]
        %v7333 = vld [vmem:[%s974 + $0x60] sm:$0xf]
        %v7334 = vld [vmem:[%s974 + $0x64] sm:$0xf]
        %v7335 = vld [vmem:[%s974 + $0x68] sm:$0x1]
        %v7336 = vld [vmem:[%s974 + $0x6c] sm:$0xf]
        %v7337 = vld [vmem:[%s974 + $0x70] sm:$0xf]
        %v7338 = vld [vmem:[%s974 + $0x74] sm:$0x1]
        %v7339 = vld [vmem:[%s974 + $0x78] sm:$0xf]
        %v7340 = vld [vmem:[%s974 + $0x7c] sm:$0xf]
        %v7341 = vld [vmem:[%s974 + $0x80] sm:$0x1]
        %v7342 = vld [vmem:[%s974 + $0x84] sm:$0xf]
        %v7343 = vld [vmem:[%s974 + $0x88] sm:$0xf]
        %v7344 = vld [vmem:[%s974 + $0x8c] sm:$0x1]
        %v7345 = vld [vmem:[%s974 + $0x90] sm:$0xf]
        %v7346 = vld [vmem:[%s974 + $0x94] sm:$0xf]
        %v7347 = vld [vmem:[%s974 + $0x98] sm:$0x1]
        %v7348 = vld [vmem:[%s974 + $0x9c] sm:$0xf]
        %v7349 = vld [vmem:[%s974 + $0xa0] sm:$0xf]
        %v7350 = vld [vmem:[%s974 + $0xa4] sm:$0x1]
        %v7351 = vld [vmem:[%s974 + $0xa8] sm:$0xf]
        %v7352 = vld [vmem:[%s974 + $0xac] sm:$0xf]
        %v7353 = vld [vmem:[%s974 + $0xb0] sm:$0x1]
        %v7354 = vld [vmem:[%s974 + $0xb4] sm:$0xf]
        %v7355 = vld [vmem:[%s974 + $0xb8] sm:$0xf]
        %v7356 = vld [vmem:[%s974 + $0xbc] sm:$0x1]
        %v7358 = vshrl.u32 %v7309, 16
        %v7360 = vrot.slane %v7358, 4
        %v7361 = vshll.u32 %v7309, 16
        %v7363 = vrot.slane %v7361, 5
        %v7364 = vor.u32 %v7360, %v7363
        %v7365 = vrot.slane %v7364, 4
        %v7367 = vshll.u32 %v7310, 16
        %v7369 = vrot.slane %v7367, 5
        %v7370 = vsel %vm1203, %v7365, %v7369
        %v7371 = vshrl.u32 %v7310, 16
        %v7373 = vrot.slane %v7371, 4
        %v7374 = vor.u32 %v7373, %v7369
        %v7375 = vrot.slane %v7374, 4
        %v7377 = vshll.u32 %v7311, 16
        %v7379 = vrot.slane %v7377, 5
        %v7380 = vsel %vm1203, %v7375, %v7379
        %v7382 = vshrl.u32 %v7312, 16
        %v7384 = vrot.slane %v7382, 4
        %v7385 = vshll.u32 %v7312, 16
        %v7387 = vrot.slane %v7385, 5
        %v7388 = vor.u32 %v7384, %v7387
        %v7389 = vrot.slane %v7388, 4
        %v7391 = vshll.u32 %v7313, 16
        %v7393 = vrot.slane %v7391, 5
        %v7394 = vsel %vm1203, %v7389, %v7393
        %v7395 = vshrl.u32 %v7313, 16
        %v7397 = vrot.slane %v7395, 4
        %v7398 = vor.u32 %v7397, %v7393
        %v7399 = vrot.slane %v7398, 4
        %v7401 = vshll.u32 %v7314, 16
        %v7403 = vrot.slane %v7401, 5
        %v7404 = vsel %vm1203, %v7399, %v7403
        %v7406 = vshrl.u32 %v7315, 16
        %v7408 = vrot.slane %v7406, 4
        %v7409 = vshll.u32 %v7315, 16
        %v7411 = vrot.slane %v7409, 5
        %v7412 = vor.u32 %v7408, %v7411
        %v7413 = vrot.slane %v7412, 4
        %v7415 = vshll.u32 %v7316, 16
        %v7417 = vrot.slane %v7415, 5
        %v7418 = vsel %vm1203, %v7413, %v7417
        %v7419 = vshrl.u32 %v7316, 16
        %v7421 = vrot.slane %v7419, 4
        %v7422 = vor.u32 %v7421, %v7417
        %v7423 = vrot.slane %v7422, 4
        %v7425 = vshll.u32 %v7317, 16
        %v7427 = vrot.slane %v7425, 5
        %v7428 = vsel %vm1203, %v7423, %v7427
        %v7430 = vshrl.u32 %v7318, 16
        %v7432 = vrot.slane %v7430, 4
        %v7433 = vshll.u32 %v7318, 16
        %v7435 = vrot.slane %v7433, 5
        %v7436 = vor.u32 %v7432, %v7435
        %v7437 = vrot.slane %v7436, 4
        %v7439 = vshll.u32 %v7319, 16
        %v7441 = vrot.slane %v7439, 5
        %v7442 = vsel %vm1203, %v7437, %v7441
        %v7443 = vshrl.u32 %v7319, 16
        %v7445 = vrot.slane %v7443, 4
        %v7446 = vor.u32 %v7445, %v7441
        %v7447 = vrot.slane %v7446, 4
        %v7449 = vshll.u32 %v7320, 16
        %v7451 = vrot.slane %v7449, 5
        %v7452 = vsel %vm1203, %v7447, %v7451
        %v7454 = vshrl.u32 %v7321, 16
        %v7456 = vrot.slane %v7454, 4
        %v7457 = vshll.u32 %v7321, 16
        %v7459 = vrot.slane %v7457, 5
        %v7460 = vor.u32 %v7456, %v7459
        %v7461 = vrot.slane %v7460, 4
        %v7463 = vshll.u32 %v7322, 16
        %v7465 = vrot.slane %v7463, 5
        %v7466 = vsel %vm1203, %v7461, %v7465
        %v7467 = vshrl.u32 %v7322, 16
        %v7469 = vrot.slane %v7467, 4
        %v7470 = vor.u32 %v7469, %v7465
        %v7471 = vrot.slane %v7470, 4
        %v7473 = vshll.u32 %v7323, 16
        %v7475 = vrot.slane %v7473, 5
        %v7476 = vsel %vm1203, %v7471, %v7475
        %v7478 = vshrl.u32 %v7324, 16
        %v7480 = vrot.slane %v7478, 4
        %v7481 = vshll.u32 %v7324, 16
        %v7483 = vrot.slane %v7481, 5
        %v7484 = vor.u32 %v7480, %v7483
        %v7485 = vrot.slane %v7484, 4
        %v7487 = vshll.u32 %v7325, 16
        %v7489 = vrot.slane %v7487, 5
        %v7490 = vsel %vm1203, %v7485, %v7489
        %v7491 = vshrl.u32 %v7325, 16
        %v7493 = vrot.slane %v7491, 4
        %v7494 = vor.u32 %v7493, %v7489
        %v7495 = vrot.slane %v7494, 4
        %v7497 = vshll.u32 %v7326, 16
        %v7499 = vrot.slane %v7497, 5
        %v7500 = vsel %vm1203, %v7495, %v7499
        %v7502 = vshrl.u32 %v7327, 16
        %v7504 = vrot.slane %v7502, 4
        %v7505 = vshll.u32 %v7327, 16
        %v7507 = vrot.slane %v7505, 5
        %v7508 = vor.u32 %v7504, %v7507
        %v7509 = vrot.slane %v7508, 4
        %v7511 = vshll.u32 %v7328, 16
        %v7513 = vrot.slane %v7511, 5
        %v7514 = vsel %vm1203, %v7509, %v7513
        %v7515 = vshrl.u32 %v7328, 16
        %v7517 = vrot.slane %v7515, 4
        %v7518 = vor.u32 %v7517, %v7513
        %v7519 = vrot.slane %v7518, 4
        %v7521 = vshll.u32 %v7329, 16
        %v7523 = vrot.slane %v7521, 5
        %v7524 = vsel %vm1203, %v7519, %v7523
        %v7526 = vshrl.u32 %v7330, 16
        %v7528 = vrot.slane %v7526, 4
        %v7529 = vshll.u32 %v7330, 16
        %v7531 = vrot.slane %v7529, 5
        %v7532 = vor.u32 %v7528, %v7531
        %v7533 = vrot.slane %v7532, 4
        %v7535 = vshll.u32 %v7331, 16
        %v7537 = vrot.slane %v7535, 5
        %v7538 = vsel %vm1203, %v7533, %v7537
        %v7539 = vshrl.u32 %v7331, 16
        %v7541 = vrot.slane %v7539, 4
        %v7542 = vor.u32 %v7541, %v7537
        %v7543 = vrot.slane %v7542, 4
        %v7545 = vshll.u32 %v7332, 16
        %v7547 = vrot.slane %v7545, 5
        %v7548 = vsel %vm1203, %v7543, %v7547
        %v7550 = vshrl.u32 %v7333, 16
        %v7552 = vrot.slane %v7550, 4
        %v7553 = vshll.u32 %v7333, 16
        %v7555 = vrot.slane %v7553, 5
        %v7556 = vor.u32 %v7552, %v7555
        %v7557 = vrot.slane %v7556, 4
        %v7559 = vshll.u32 %v7334, 16
        %v7561 = vrot.slane %v7559, 5
        %v7562 = vsel %vm1203, %v7557, %v7561
        %v7563 = vshrl.u32 %v7334, 16
        %v7565 = vrot.slane %v7563, 4
        %v7566 = vor.u32 %v7565, %v7561
        %v7567 = vrot.slane %v7566, 4
        %v7569 = vshll.u32 %v7335, 16
        %v7571 = vrot.slane %v7569, 5
        %v7572 = vsel %vm1203, %v7567, %v7571
        %v7574 = vshrl.u32 %v7336, 16
        %v7576 = vrot.slane %v7574, 4
        %v7577 = vshll.u32 %v7336, 16
        %v7579 = vrot.slane %v7577, 5
        %v7580 = vor.u32 %v7576, %v7579
        %v7581 = vrot.slane %v7580, 4
        %v7583 = vshll.u32 %v7337, 16
        %v7585 = vrot.slane %v7583, 5
        %v7586 = vsel %vm1203, %v7581, %v7585
        %v7587 = vshrl.u32 %v7337, 16
        %v7589 = vrot.slane %v7587, 4
        %v7590 = vor.u32 %v7589, %v7585
        %v7591 = vrot.slane %v7590, 4
        %v7593 = vshll.u32 %v7338, 16
        %v7595 = vrot.slane %v7593, 5
        %v7596 = vsel %vm1203, %v7591, %v7595
        %v7598 = vshrl.u32 %v7339, 16
        %v7600 = vrot.slane %v7598, 4
        %v7601 = vshll.u32 %v7339, 16
        %v7603 = vrot.slane %v7601, 5
        %v7604 = vor.u32 %v7600, %v7603
        %v7605 = vrot.slane %v7604, 4
        %v7607 = vshll.u32 %v7340, 16
        %v7609 = vrot.slane %v7607, 5
        %v7610 = vsel %vm1203, %v7605, %v7609
        %v7611 = vshrl.u32 %v7340, 16
        %v7613 = vrot.slane %v7611, 4
        %v7614 = vor.u32 %v7613, %v7609
        %v7615 = vrot.slane %v7614, 4
        %v7617 = vshll.u32 %v7341, 16
        %v7619 = vrot.slane %v7617, 5
        %v7620 = vsel %vm1203, %v7615, %v7619
        %v7622 = vshrl.u32 %v7342, 16
        %v7624 = vrot.slane %v7622, 4
        %v7625 = vshll.u32 %v7342, 16
        %v7627 = vrot.slane %v7625, 5
        %v7628 = vor.u32 %v7624, %v7627
        %v7629 = vrot.slane %v7628, 4
        %v7631 = vshll.u32 %v7343, 16
        %v7633 = vrot.slane %v7631, 5
        %v7634 = vsel %vm1203, %v7629, %v7633
        %v7635 = vshrl.u32 %v7343, 16
        %v7637 = vrot.slane %v7635, 4
        %v7638 = vor.u32 %v7637, %v7633
        %v7639 = vrot.slane %v7638, 4
        %v7641 = vshll.u32 %v7344, 16
        %v7643 = vrot.slane %v7641, 5
        %v7644 = vsel %vm1203, %v7639, %v7643
        %v7646 = vshrl.u32 %v7345, 16
        %v7648 = vrot.slane %v7646, 4
        %v7649 = vshll.u32 %v7345, 16
        %v7651 = vrot.slane %v7649, 5
        %v7652 = vor.u32 %v7648, %v7651
        %v7653 = vrot.slane %v7652, 4
        %v7655 = vshll.u32 %v7346, 16
        %v7657 = vrot.slane %v7655, 5
        %v7658 = vsel %vm1203, %v7653, %v7657
        %v7659 = vshrl.u32 %v7346, 16
        %v7661 = vrot.slane %v7659, 4
        %v7662 = vor.u32 %v7661, %v7657
        %v7663 = vrot.slane %v7662, 4
        %v7665 = vshll.u32 %v7347, 16
        %v7667 = vrot.slane %v7665, 5
        %v7668 = vsel %vm1203, %v7663, %v7667
        %v7670 = vshrl.u32 %v7348, 16
        %v7672 = vrot.slane %v7670, 4
        %v7673 = vshll.u32 %v7348, 16
        %v7675 = vrot.slane %v7673, 5
        %v7676 = vor.u32 %v7672, %v7675
        %v7677 = vrot.slane %v7676, 4
        %v7679 = vshll.u32 %v7349, 16
        %v7681 = vrot.slane %v7679, 5
        %v7682 = vsel %vm1203, %v7677, %v7681
        %v7683 = vshrl.u32 %v7349, 16
        %v7685 = vrot.slane %v7683, 4
        %v7686 = vor.u32 %v7685, %v7681
        %v7687 = vrot.slane %v7686, 4
        %v7689 = vshll.u32 %v7350, 16
        %v7691 = vrot.slane %v7689, 5
        %v7692 = vsel %vm1203, %v7687, %v7691
        %v7694 = vshrl.u32 %v7351, 16
        %v7696 = vrot.slane %v7694, 4
        %v7697 = vshll.u32 %v7351, 16
        %v7699 = vrot.slane %v7697, 5
        %v7700 = vor.u32 %v7696, %v7699
        %v7701 = vrot.slane %v7700, 4
        %v7703 = vshll.u32 %v7352, 16
        %v7705 = vrot.slane %v7703, 5
        %v7706 = vsel %vm1203, %v7701, %v7705
        %v7707 = vshrl.u32 %v7352, 16
        %v7709 = vrot.slane %v7707, 4
        %v7710 = vor.u32 %v7709, %v7705
        %v7711 = vrot.slane %v7710, 4
        %v7713 = vshll.u32 %v7353, 16
        %v7715 = vrot.slane %v7713, 5
        %v7716 = vsel %vm1203, %v7711, %v7715
        %v7718 = vshrl.u32 %v7354, 16
        %v7720 = vrot.slane %v7718, 4
        %v7721 = vshll.u32 %v7354, 16
        %v7723 = vrot.slane %v7721, 5
        %v7724 = vor.u32 %v7720, %v7723
        %v7725 = vrot.slane %v7724, 4
        %v7727 = vshll.u32 %v7355, 16
        %v7729 = vrot.slane %v7727, 5
        %v7730 = vsel %vm1203, %v7725, %v7729
        %v7731 = vshrl.u32 %v7355, 16
        %v7733 = vrot.slane %v7731, 4
        %v7734 = vor.u32 %v7733, %v7729
        %v7735 = vrot.slane %v7734, 4
        %v7737 = vshll.u32 %v7356, 16
        %v7739 = vrot.slane %v7737, 5
        %v7740 = vsel %vm1203, %v7735, %v7739
        %7773 = vst [vmem:[#allocation3 + $0x10] sm:$0xf] %v7370
        %7774 = vst [vmem:[#allocation3 + $0x34] sm:$0xf] %v7380
        %7775 = vst [vmem:[#allocation3 + $0x58] sm:$0xf] %v7394
        %7776 = vst [vmem:[#allocation3 + $0x7c] sm:$0xf] %v7404
        %7777 = vst [vmem:[#allocation3 + $0xa0] sm:$0xf] %v7418
        %7778 = vst [vmem:[#allocation3 + $0xc4] sm:$0xf] %v7428
        %7779 = vst [vmem:[#allocation3 + $0xe8] sm:$0xf] %v7442
        %7780 = vst [vmem:[#allocation3 + $0x10c] sm:$0xf] %v7452
        %7781 = vst [vmem:[#allocation3 + $0x130] sm:$0xf] %v7466
        %7782 = vst [vmem:[#allocation3 + $0x154] sm:$0xf] %v7476
        %7783 = vst [vmem:[#allocation3 + $0x178] sm:$0xf] %v7490
        %7784 = vst [vmem:[#allocation3 + $0x19c] sm:$0xf] %v7500
        %7785 = vst [vmem:[#allocation3 + $0x1c0] sm:$0xf] %v7514
        %7786 = vst [vmem:[#allocation3 + $0x1e4] sm:$0xf] %v7524
        %7787 = vst [vmem:[#allocation3 + $0x208] sm:$0xf] %v7538
        %7788 = vst [vmem:[#allocation3 + $0x22c] sm:$0xf] %v7548
        %7789 = vst [vmem:[#allocation3 + $0x250] sm:$0xf] %v7562
        %7790 = vst [vmem:[#allocation3 + $0x274] sm:$0xf] %v7572
        %7791 = vst [vmem:[#allocation3 + $0x298] sm:$0xf] %v7586
        %7792 = vst [vmem:[#allocation3 + $0x2bc] sm:$0xf] %v7596
        %7793 = vst [vmem:[#allocation3 + $0x2e0] sm:$0xf] %v7610
        %7794 = vst [vmem:[#allocation3 + $0x304] sm:$0xf] %v7620
        %7795 = vst [vmem:[#allocation3 + $0x328] sm:$0xf] %v7634
        %7796 = vst [vmem:[#allocation3 + $0x34c] sm:$0xf] %v7644
        %7797 = vst [vmem:[#allocation3 + $0x370] sm:$0xf] %v7658
        %7798 = vst [vmem:[#allocation3 + $0x394] sm:$0xf] %v7668
        %7799 = vst [vmem:[#allocation3 + $0x3b8] sm:$0xf] %v7682
        %7800 = vst [vmem:[#allocation3 + $0x3dc] sm:$0xf] %v7692
        %7801 = vst [vmem:[#allocation3 + $0x400] sm:$0xf] %v7706
        %7802 = vst [vmem:[#allocation3 + $0x424] sm:$0xf] %v7716
        %7803 = vst [vmem:[#allocation3 + $0x448] sm:$0xf] %v7730
        %7804 = vst [vmem:[#allocation3 + $0x46c] sm:$0xf] %v7740
        %v7805 = vld [vmem:[%s974] sm:$0xe]
        %v7806 = vld [vmem:[%s974 + $0x4] sm:$0xf]
        %v7807 = vld [vmem:[%s974 + $0x8] sm:$0x1]
        %v7808 = vld [vmem:[%s974 + $0xc] sm:$0xe]
        %v7809 = vld [vmem:[%s974 + $0x10] sm:$0xf]
        %v7810 = vld [vmem:[%s974 + $0x14] sm:$0x1]
        %v7811 = vld [vmem:[%s974 + $0x18] sm:$0xe]
        %v7812 = vld [vmem:[%s974 + $0x1c] sm:$0xf]
        %v7813 = vld [vmem:[%s974 + $0x20] sm:$0x1]
        %v7814 = vld [vmem:[%s974 + $0x24] sm:$0xe]
        %v7815 = vld [vmem:[%s974 + $0x28] sm:$0xf]
        %v7816 = vld [vmem:[%s974 + $0x2c] sm:$0x1]
        %v7817 = vld [vmem:[%s974 + $0x30] sm:$0xe]
        %v7818 = vld [vmem:[%s974 + $0x34] sm:$0xf]
        %v7819 = vld [vmem:[%s974 + $0x38] sm:$0x1]
        %v7820 = vld [vmem:[%s974 + $0x3c] sm:$0xe]
        %v7821 = vld [vmem:[%s974 + $0x40] sm:$0xf]
        %v7822 = vld [vmem:[%s974 + $0x44] sm:$0x1]
        %v7823 = vld [vmem:[%s974 + $0x48] sm:$0xe]
        %v7824 = vld [vmem:[%s974 + $0x4c] sm:$0xf]
        %v7825 = vld [vmem:[%s974 + $0x50] sm:$0x1]
        %v7826 = vld [vmem:[%s974 + $0x54] sm:$0xe]
        %v7827 = vld [vmem:[%s974 + $0x58] sm:$0xf]
        %v7828 = vld [vmem:[%s974 + $0x5c] sm:$0x1]
        %v7829 = vld [vmem:[%s974 + $0x60] sm:$0xe]
        %v7830 = vld [vmem:[%s974 + $0x64] sm:$0xf]
        %v7831 = vld [vmem:[%s974 + $0x68] sm:$0x1]
        %v7832 = vld [vmem:[%s974 + $0x6c] sm:$0xe]
        %v7833 = vld [vmem:[%s974 + $0x70] sm:$0xf]
        %v7834 = vld [vmem:[%s974 + $0x74] sm:$0x1]
        %v7835 = vld [vmem:[%s974 + $0x78] sm:$0xe]
        %v7836 = vld [vmem:[%s974 + $0x7c] sm:$0xf]
        %v7837 = vld [vmem:[%s974 + $0x80] sm:$0x1]
        %v7838 = vld [vmem:[%s974 + $0x84] sm:$0xe]
        %v7839 = vld [vmem:[%s974 + $0x88] sm:$0xf]
        %v7840 = vld [vmem:[%s974 + $0x8c] sm:$0x1]
        %v7841 = vld [vmem:[%s974 + $0x90] sm:$0xe]
        %v7842 = vld [vmem:[%s974 + $0x94] sm:$0xf]
        %v7843 = vld [vmem:[%s974 + $0x98] sm:$0x1]
        %v7844 = vld [vmem:[%s974 + $0x9c] sm:$0xe]
        %v7845 = vld [vmem:[%s974 + $0xa0] sm:$0xf]
        %v7846 = vld [vmem:[%s974 + $0xa4] sm:$0x1]
        %v7847 = vld [vmem:[%s974 + $0xa8] sm:$0xe]
        %v7848 = vld [vmem:[%s974 + $0xac] sm:$0xf]
        %v7849 = vld [vmem:[%s974 + $0xb0] sm:$0x1]
        %v7850 = vld [vmem:[%s974 + $0xb4] sm:$0xe]
        %v7851 = vld [vmem:[%s974 + $0xb8] sm:$0xf]
        %v7852 = vld [vmem:[%s974 + $0xbc] sm:$0x1]
        %v7901 = vrot.slane %v7805, 5
        %v7902 = vrot.slane %v7901, 4
        %v7903 = vrot.slane %v7806, 5
        %v7904 = vsel %vm1750, %v7902, %v7903
        %v7905 = vrot.slane %v7903, 4
        %v7906 = vrot.slane %v7807, 5
        %v7907 = vsel %vm1750, %v7905, %v7906
        %v7908 = vrot.slane %v7808, 5
        %v7909 = vrot.slane %v7908, 4
        %v7910 = vrot.slane %v7809, 5
        %v7911 = vsel %vm1750, %v7909, %v7910
        %v7912 = vrot.slane %v7910, 4
        %v7913 = vrot.slane %v7810, 5
        %v7914 = vsel %vm1750, %v7912, %v7913
        %v7915 = vrot.slane %v7811, 5
        %v7916 = vrot.slane %v7915, 4
        %v7917 = vrot.slane %v7812, 5
        %v7918 = vsel %vm1750, %v7916, %v7917
        %v7919 = vrot.slane %v7917, 4
        %v7920 = vrot.slane %v7813, 5
        %v7921 = vsel %vm1750, %v7919, %v7920
        %v7922 = vrot.slane %v7814, 5
        %v7923 = vrot.slane %v7922, 4
        %v7924 = vrot.slane %v7815, 5
        %v7925 = vsel %vm1750, %v7923, %v7924
        %v7926 = vrot.slane %v7924, 4
        %v7927 = vrot.slane %v7816, 5
        %v7928 = vsel %vm1750, %v7926, %v7927
        %v7929 = vrot.slane %v7817, 5
        %v7930 = vrot.slane %v7929, 4
        %v7931 = vrot.slane %v7818, 5
        %v7932 = vsel %vm1750, %v7930, %v7931
        %v7933 = vrot.slane %v7931, 4
        %v7934 = vrot.slane %v7819, 5
        %v7935 = vsel %vm1750, %v7933, %v7934
        %v7936 = vrot.slane %v7820, 5
        %v7937 = vrot.slane %v7936, 4
        %v7938 = vrot.slane %v7821, 5
        %v7939 = vsel %vm1750, %v7937, %v7938
        %v7940 = vrot.slane %v7938, 4
        %v7941 = vrot.slane %v7822, 5
        %v7942 = vsel %vm1750, %v7940, %v7941
        %v7943 = vrot.slane %v7823, 5
        %v7944 = vrot.slane %v7943, 4
        %v7945 = vrot.slane %v7824, 5
        %v7946 = vsel %vm1750, %v7944, %v7945
        %v7947 = vrot.slane %v7945, 4
        %v7948 = vrot.slane %v7825, 5
        %v7949 = vsel %vm1750, %v7947, %v7948
        %v7950 = vrot.slane %v7826, 5
        %v7951 = vrot.slane %v7950, 4
        %v7952 = vrot.slane %v7827, 5
        %v7953 = vsel %vm1750, %v7951, %v7952
        %v7954 = vrot.slane %v7952, 4
        %v7955 = vrot.slane %v7828, 5
        %v7956 = vsel %vm1750, %v7954, %v7955
        %v7957 = vrot.slane %v7829, 5
        %v7958 = vrot.slane %v7957, 4
        %v7959 = vrot.slane %v7830, 5
        %v7960 = vsel %vm1750, %v7958, %v7959
        %v7961 = vrot.slane %v7959, 4
        %v7962 = vrot.slane %v7831, 5
        %v7963 = vsel %vm1750, %v7961, %v7962
        %v7964 = vrot.slane %v7832, 5
        %v7965 = vrot.slane %v7964, 4
        %v7966 = vrot.slane %v7833, 5
        %v7967 = vsel %vm1750, %v7965, %v7966
        %v7968 = vrot.slane %v7966, 4
        %v7969 = vrot.slane %v7834, 5
        %v7970 = vsel %vm1750, %v7968, %v7969
        %v7971 = vrot.slane %v7835, 5
        %v7972 = vrot.slane %v7971, 4
        %v7973 = vrot.slane %v7836, 5
        %v7974 = vsel %vm1750, %v7972, %v7973
        %v7975 = vrot.slane %v7973, 4
        %v7976 = vrot.slane %v7837, 5
        %v7977 = vsel %vm1750, %v7975, %v7976
        %v7978 = vrot.slane %v7838, 5
        %v7979 = vrot.slane %v7978, 4
        %v7980 = vrot.slane %v7839, 5
        %v7981 = vsel %vm1750, %v7979, %v7980
        %v7982 = vrot.slane %v7980, 4
        %v7983 = vrot.slane %v7840, 5
        %v7984 = vsel %vm1750, %v7982, %v7983
        %v7985 = vrot.slane %v7841, 5
        %v7986 = vrot.slane %v7985, 4
        %v7987 = vrot.slane %v7842, 5
        %v7988 = vsel %vm1750, %v7986, %v7987
        %v7989 = vrot.slane %v7987, 4
        %v7990 = vrot.slane %v7843, 5
        %v7991 = vsel %vm1750, %v7989, %v7990
        %v7992 = vrot.slane %v7844, 5
        %v7993 = vrot.slane %v7992, 4
        %v7994 = vrot.slane %v7845, 5
        %v7995 = vsel %vm1750, %v7993, %v7994
        %v7996 = vrot.slane %v7994, 4
        %v7997 = vrot.slane %v7846, 5
        %v7998 = vsel %vm1750, %v7996, %v7997
        %v7999 = vrot.slane %v7847, 5
        %v8000 = vrot.slane %v7999, 4
        %v8001 = vrot.slane %v7848, 5
        %v8002 = vsel %vm1750, %v8000, %v8001
        %v8003 = vrot.slane %v8001, 4
        %v8004 = vrot.slane %v7849, 5
        %v8005 = vsel %vm1750, %v8003, %v8004
        %v8006 = vrot.slane %v7850, 5
        %v8007 = vrot.slane %v8006, 4
        %v8008 = vrot.slane %v7851, 5
        %v8009 = vsel %vm1750, %v8007, %v8008
        %v8010 = vrot.slane %v8008, 4
        %v8011 = vrot.slane %v7852, 5
        %v8012 = vsel %vm1750, %v8010, %v8011
        %8045 = vst [vmem:[#allocation3 + $0x14] sm:$0xf] %v7904
        %8046 = vst [vmem:[#allocation3 + $0x38] sm:$0xf] %v7907
        %8047 = vst [vmem:[#allocation3 + $0x5c] sm:$0xf] %v7911
        %8048 = vst [vmem:[#allocation3 + $0x80] sm:$0xf] %v7914
        %8049 = vst [vmem:[#allocation3 + $0xa4] sm:$0xf] %v7918
        %8050 = vst [vmem:[#allocation3 + $0xc8] sm:$0xf] %v7921
        %8051 = vst [vmem:[#allocation3 + $0xec] sm:$0xf] %v7925
        %8052 = vst [vmem:[#allocation3 + $0x110] sm:$0xf] %v7928
        %8053 = vst [vmem:[#allocation3 + $0x134] sm:$0xf] %v7932
        %8054 = vst [vmem:[#allocation3 + $0x158] sm:$0xf] %v7935
        %8055 = vst [vmem:[#allocation3 + $0x17c] sm:$0xf] %v7939
        %8056 = vst [vmem:[#allocation3 + $0x1a0] sm:$0xf] %v7942
        %8057 = vst [vmem:[#allocation3 + $0x1c4] sm:$0xf] %v7946
        %8058 = vst [vmem:[#allocation3 + $0x1e8] sm:$0xf] %v7949
        %8059 = vst [vmem:[#allocation3 + $0x20c] sm:$0xf] %v7953
        %8060 = vst [vmem:[#allocation3 + $0x230] sm:$0xf] %v7956
        %8061 = vst [vmem:[#allocation3 + $0x254] sm:$0xf] %v7960
        %8062 = vst [vmem:[#allocation3 + $0x278] sm:$0xf] %v7963
        %8063 = vst [vmem:[#allocation3 + $0x29c] sm:$0xf] %v7967
        %8064 = vst [vmem:[#allocation3 + $0x2c0] sm:$0xf] %v7970
        %8065 = vst [vmem:[#allocation3 + $0x2e4] sm:$0xf] %v7974
        %8066 = vst [vmem:[#allocation3 + $0x308] sm:$0xf] %v7977
        %8067 = vst [vmem:[#allocation3 + $0x32c] sm:$0xf] %v7981
        %8068 = vst [vmem:[#allocation3 + $0x350] sm:$0xf] %v7984
        %8069 = vst [vmem:[#allocation3 + $0x374] sm:$0xf] %v7988
        %8070 = vst [vmem:[#allocation3 + $0x398] sm:$0xf] %v7991
        %8071 = vst [vmem:[#allocation3 + $0x3bc] sm:$0xf] %v7995
        %8072 = vst [vmem:[#allocation3 + $0x3e0] sm:$0xf] %v7998
        %8073 = vst [vmem:[#allocation3 + $0x404] sm:$0xf] %v8002
        %8074 = vst [vmem:[#allocation3 + $0x428] sm:$0xf] %v8005
        %8075 = vst [vmem:[#allocation3 + $0x44c] sm:$0xf] %v8009
        %8076 = vst [vmem:[#allocation3 + $0x470] sm:$0xf] %v8012
        %v8077 = vld [vmem:[%s2759] sm:$0xf]
        %v8078 = vld [vmem:[%s2759 + $0x4] sm:$0xf]
        %v8079 = vld [vmem:[%s2759 + $0xc] sm:$0xf]
        %v8080 = vld [vmem:[%s2759 + $0x10] sm:$0xf]
        %v8081 = vld [vmem:[%s2759 + $0x18] sm:$0xf]
        %v8082 = vld [vmem:[%s2759 + $0x1c] sm:$0xf]
        %v8083 = vld [vmem:[%s2759 + $0x24] sm:$0xf]
        %v8084 = vld [vmem:[%s2759 + $0x28] sm:$0xf]
        %v8085 = vld [vmem:[%s2759 + $0x30] sm:$0xf]
        %v8086 = vld [vmem:[%s2759 + $0x34] sm:$0xf]
        %v8087 = vld [vmem:[%s2759 + $0x3c] sm:$0xf]
        %v8088 = vld [vmem:[%s2759 + $0x40] sm:$0xf]
        %v8089 = vld [vmem:[%s2759 + $0x48] sm:$0xf]
        %v8090 = vld [vmem:[%s2759 + $0x4c] sm:$0xf]
        %v8091 = vld [vmem:[%s2759 + $0x54] sm:$0xf]
        %v8092 = vld [vmem:[%s2759 + $0x58] sm:$0xf]
        %v8093 = vld [vmem:[%s2759 + $0x60] sm:$0xf]
        %v8094 = vld [vmem:[%s2759 + $0x64] sm:$0xf]
        %v8095 = vld [vmem:[%s2759 + $0x6c] sm:$0xf]
        %v8096 = vld [vmem:[%s2759 + $0x70] sm:$0xf]
        %v8097 = vld [vmem:[%s2759 + $0x78] sm:$0xf]
        %v8098 = vld [vmem:[%s2759 + $0x7c] sm:$0xf]
        %v8099 = vld [vmem:[%s2759 + $0x84] sm:$0xf]
        %v8100 = vld [vmem:[%s2759 + $0x88] sm:$0xf]
        %v8101 = vld [vmem:[%s2759 + $0x90] sm:$0xf]
        %v8102 = vld [vmem:[%s2759 + $0x94] sm:$0xf]
        %v8103 = vld [vmem:[%s2759 + $0x9c] sm:$0xf]
        %v8104 = vld [vmem:[%s2759 + $0xa0] sm:$0xf]
        %v8105 = vld [vmem:[%s2759 + $0xa8] sm:$0xf]
        %v8106 = vld [vmem:[%s2759 + $0xac] sm:$0xf]
        %v8107 = vld [vmem:[%s2759 + $0xb4] sm:$0xf]
        %v8108 = vld [vmem:[%s2759 + $0xb8] sm:$0xf]
        %8109 = vst [vmem:[#allocation3 + $0x18] sm:$0xf] %v8077
        %8110 = vst [vmem:[#allocation3 + $0x3c] sm:$0xf] %v8078
        %8111 = vst [vmem:[#allocation3 + $0x60] sm:$0xf] %v8079
        %8112 = vst [vmem:[#allocation3 + $0x84] sm:$0xf] %v8080
        %8113 = vst [vmem:[#allocation3 + $0xa8] sm:$0xf] %v8081
        %8114 = vst [vmem:[#allocation3 + $0xcc] sm:$0xf] %v8082
        %8115 = vst [vmem:[#allocation3 + $0xf0] sm:$0xf] %v8083
        %8116 = vst [vmem:[#allocation3 + $0x114] sm:$0xf] %v8084
        %8117 = vst [vmem:[#allocation3 + $0x138] sm:$0xf] %v8085
        %8118 = vst [vmem:[#allocation3 + $0x15c] sm:$0xf] %v8086
        %8119 = vst [vmem:[#allocation3 + $0x180] sm:$0xf] %v8087
        %8120 = vst [vmem:[#allocation3 + $0x1a4] sm:$0xf] %v8088
        %8121 = vst [vmem:[#allocation3 + $0x1c8] sm:$0xf] %v8089
        %8122 = vst [vmem:[#allocation3 + $0x1ec] sm:$0xf] %v8090
        %8123 = vst [vmem:[#allocation3 + $0x210] sm:$0xf] %v8091
        %8124 = vst [vmem:[#allocation3 + $0x234] sm:$0xf] %v8092
        %8125 = vst [vmem:[#allocation3 + $0x258] sm:$0xf] %v8093
        %8126 = vst [vmem:[#allocation3 + $0x27c] sm:$0xf] %v8094
        %8127 = vst [vmem:[#allocation3 + $0x2a0] sm:$0xf] %v8095
        %8128 = vst [vmem:[#allocation3 + $0x2c4] sm:$0xf] %v8096
        %8129 = vst [vmem:[#allocation3 + $0x2e8] sm:$0xf] %v8097
        %8130 = vst [vmem:[#allocation3 + $0x30c] sm:$0xf] %v8098
        %8131 = vst [vmem:[#allocation3 + $0x330] sm:$0xf] %v8099
        %8132 = vst [vmem:[#allocation3 + $0x354] sm:$0xf] %v8100
        %8133 = vst [vmem:[#allocation3 + $0x378] sm:$0xf] %v8101
        %8134 = vst [vmem:[#allocation3 + $0x39c] sm:$0xf] %v8102
        %8135 = vst [vmem:[#allocation3 + $0x3c0] sm:$0xf] %v8103
        %8136 = vst [vmem:[#allocation3 + $0x3e4] sm:$0xf] %v8104
        %8137 = vst [vmem:[#allocation3 + $0x408] sm:$0xf] %v8105
        %8138 = vst [vmem:[#allocation3 + $0x42c] sm:$0xf] %v8106
        %8139 = vst [vmem:[#allocation3 + $0x450] sm:$0xf] %v8107
        %8140 = vst [vmem:[#allocation3 + $0x474] sm:$0xf] %v8108
        %v8141 = vld [vmem:[%s2759] sm:$0xf]
        %v8142 = vld [vmem:[%s2759 + $0x4] sm:$0xf]
        %v8143 = vld [vmem:[%s2759 + $0x8] sm:$0x1]
        %v8144 = vld [vmem:[%s2759 + $0xc] sm:$0xf]
        %v8145 = vld [vmem:[%s2759 + $0x10] sm:$0xf]
        %v8146 = vld [vmem:[%s2759 + $0x14] sm:$0x1]
        %v8147 = vld [vmem:[%s2759 + $0x18] sm:$0xf]
        %v8148 = vld [vmem:[%s2759 + $0x1c] sm:$0xf]
        %v8149 = vld [vmem:[%s2759 + $0x20] sm:$0x1]
        %v8150 = vld [vmem:[%s2759 + $0x24] sm:$0xf]
        %v8151 = vld [vmem:[%s2759 + $0x28] sm:$0xf]
        %v8152 = vld [vmem:[%s2759 + $0x2c] sm:$0x1]
        %v8153 = vld [vmem:[%s2759 + $0x30] sm:$0xf]
        %v8154 = vld [vmem:[%s2759 + $0x34] sm:$0xf]
        %v8155 = vld [vmem:[%s2759 + $0x38] sm:$0x1]
        %v8156 = vld [vmem:[%s2759 + $0x3c] sm:$0xf]
        %v8157 = vld [vmem:[%s2759 + $0x40] sm:$0xf]
        %v8158 = vld [vmem:[%s2759 + $0x44] sm:$0x1]
        %v8159 = vld [vmem:[%s2759 + $0x48] sm:$0xf]
        %v8160 = vld [vmem:[%s2759 + $0x4c] sm:$0xf]
        %v8161 = vld [vmem:[%s2759 + $0x50] sm:$0x1]
        %v8162 = vld [vmem:[%s2759 + $0x54] sm:$0xf]
        %v8163 = vld [vmem:[%s2759 + $0x58] sm:$0xf]
        %v8164 = vld [vmem:[%s2759 + $0x5c] sm:$0x1]
        %v8165 = vld [vmem:[%s2759 + $0x60] sm:$0xf]
        %v8166 = vld [vmem:[%s2759 + $0x64] sm:$0xf]
        %v8167 = vld [vmem:[%s2759 + $0x68] sm:$0x1]
        %v8168 = vld [vmem:[%s2759 + $0x6c] sm:$0xf]
        %v8169 = vld [vmem:[%s2759 + $0x70] sm:$0xf]
        %v8170 = vld [vmem:[%s2759 + $0x74] sm:$0x1]
        %v8171 = vld [vmem:[%s2759 + $0x78] sm:$0xf]
        %v8172 = vld [vmem:[%s2759 + $0x7c] sm:$0xf]
        %v8173 = vld [vmem:[%s2759 + $0x80] sm:$0x1]
        %v8174 = vld [vmem:[%s2759 + $0x84] sm:$0xf]
        %v8175 = vld [vmem:[%s2759 + $0x88] sm:$0xf]
        %v8176 = vld [vmem:[%s2759 + $0x8c] sm:$0x1]
        %v8177 = vld [vmem:[%s2759 + $0x90] sm:$0xf]
        %v8178 = vld [vmem:[%s2759 + $0x94] sm:$0xf]
        %v8179 = vld [vmem:[%s2759 + $0x98] sm:$0x1]
        %v8180 = vld [vmem:[%s2759 + $0x9c] sm:$0xf]
        %v8181 = vld [vmem:[%s2759 + $0xa0] sm:$0xf]
        %v8182 = vld [vmem:[%s2759 + $0xa4] sm:$0x1]
        %v8183 = vld [vmem:[%s2759 + $0xa8] sm:$0xf]
        %v8184 = vld [vmem:[%s2759 + $0xac] sm:$0xf]
        %v8185 = vld [vmem:[%s2759 + $0xb0] sm:$0x1]
        %v8186 = vld [vmem:[%s2759 + $0xb4] sm:$0xf]
        %v8187 = vld [vmem:[%s2759 + $0xb8] sm:$0xf]
        %v8188 = vld [vmem:[%s2759 + $0xbc] sm:$0x1]
        %v8190 = vshrl.u32 %v8141, 16
        %v8192 = vrot.slane %v8190, 4
        %v8193 = vshll.u32 %v8141, 16
        %v8195 = vrot.slane %v8193, 5
        %v8196 = vor.u32 %v8192, %v8195
        %v8197 = vrot.slane %v8196, 4
        %v8199 = vshll.u32 %v8142, 16
        %v8201 = vrot.slane %v8199, 5
        %v8202 = vsel %vm1203, %v8197, %v8201
        %v8203 = vshrl.u32 %v8142, 16
        %v8205 = vrot.slane %v8203, 4
        %v8206 = vor.u32 %v8205, %v8201
        %v8207 = vrot.slane %v8206, 4
        %v8209 = vshll.u32 %v8143, 16
        %v8211 = vrot.slane %v8209, 5
        %v8212 = vsel %vm1203, %v8207, %v8211
        %v8214 = vshrl.u32 %v8144, 16
        %v8216 = vrot.slane %v8214, 4
        %v8217 = vshll.u32 %v8144, 16
        %v8219 = vrot.slane %v8217, 5
        %v8220 = vor.u32 %v8216, %v8219
        %v8221 = vrot.slane %v8220, 4
        %v8223 = vshll.u32 %v8145, 16
        %v8225 = vrot.slane %v8223, 5
        %v8226 = vsel %vm1203, %v8221, %v8225
        %v8227 = vshrl.u32 %v8145, 16
        %v8229 = vrot.slane %v8227, 4
        %v8230 = vor.u32 %v8229, %v8225
        %v8231 = vrot.slane %v8230, 4
        %v8233 = vshll.u32 %v8146, 16
        %v8235 = vrot.slane %v8233, 5
        %v8236 = vsel %vm1203, %v8231, %v8235
        %v8238 = vshrl.u32 %v8147, 16
        %v8240 = vrot.slane %v8238, 4
        %v8241 = vshll.u32 %v8147, 16
        %v8243 = vrot.slane %v8241, 5
        %v8244 = vor.u32 %v8240, %v8243
        %v8245 = vrot.slane %v8244, 4
        %v8247 = vshll.u32 %v8148, 16
        %v8249 = vrot.slane %v8247, 5
        %v8250 = vsel %vm1203, %v8245, %v8249
        %v8251 = vshrl.u32 %v8148, 16
        %v8253 = vrot.slane %v8251, 4
        %v8254 = vor.u32 %v8253, %v8249
        %v8255 = vrot.slane %v8254, 4
        %v8257 = vshll.u32 %v8149, 16
        %v8259 = vrot.slane %v8257, 5
        %v8260 = vsel %vm1203, %v8255, %v8259
        %v8262 = vshrl.u32 %v8150, 16
        %v8264 = vrot.slane %v8262, 4
        %v8265 = vshll.u32 %v8150, 16
        %v8267 = vrot.slane %v8265, 5
        %v8268 = vor.u32 %v8264, %v8267
        %v8269 = vrot.slane %v8268, 4
        %v8271 = vshll.u32 %v8151, 16
        %v8273 = vrot.slane %v8271, 5
        %v8274 = vsel %vm1203, %v8269, %v8273
        %v8275 = vshrl.u32 %v8151, 16
        %v8277 = vrot.slane %v8275, 4
        %v8278 = vor.u32 %v8277, %v8273
        %v8279 = vrot.slane %v8278, 4
        %v8281 = vshll.u32 %v8152, 16
        %v8283 = vrot.slane %v8281, 5
        %v8284 = vsel %vm1203, %v8279, %v8283
        %v8286 = vshrl.u32 %v8153, 16
        %v8288 = vrot.slane %v8286, 4
        %v8289 = vshll.u32 %v8153, 16
        %v8291 = vrot.slane %v8289, 5
        %v8292 = vor.u32 %v8288, %v8291
        %v8293 = vrot.slane %v8292, 4
        %v8295 = vshll.u32 %v8154, 16
        %v8297 = vrot.slane %v8295, 5
        %v8298 = vsel %vm1203, %v8293, %v8297
        %v8299 = vshrl.u32 %v8154, 16
        %v8301 = vrot.slane %v8299, 4
        %v8302 = vor.u32 %v8301, %v8297
        %v8303 = vrot.slane %v8302, 4
        %v8305 = vshll.u32 %v8155, 16
        %v8307 = vrot.slane %v8305, 5
        %v8308 = vsel %vm1203, %v8303, %v8307
        %v8310 = vshrl.u32 %v8156, 16
        %v8312 = vrot.slane %v8310, 4
        %v8313 = vshll.u32 %v8156, 16
        %v8315 = vrot.slane %v8313, 5
        %v8316 = vor.u32 %v8312, %v8315
        %v8317 = vrot.slane %v8316, 4
        %v8319 = vshll.u32 %v8157, 16
        %v8321 = vrot.slane %v8319, 5
        %v8322 = vsel %vm1203, %v8317, %v8321
        %v8323 = vshrl.u32 %v8157, 16
        %v8325 = vrot.slane %v8323, 4
        %v8326 = vor.u32 %v8325, %v8321
        %v8327 = vrot.slane %v8326, 4
        %v8329 = vshll.u32 %v8158, 16
        %v8331 = vrot.slane %v8329, 5
        %v8332 = vsel %vm1203, %v8327, %v8331
        %v8334 = vshrl.u32 %v8159, 16
        %v8336 = vrot.slane %v8334, 4
        %v8337 = vshll.u32 %v8159, 16
        %v8339 = vrot.slane %v8337, 5
        %v8340 = vor.u32 %v8336, %v8339
        %v8341 = vrot.slane %v8340, 4
        %v8343 = vshll.u32 %v8160, 16
        %v8345 = vrot.slane %v8343, 5
        %v8346 = vsel %vm1203, %v8341, %v8345
        %v8347 = vshrl.u32 %v8160, 16
        %v8349 = vrot.slane %v8347, 4
        %v8350 = vor.u32 %v8349, %v8345
        %v8351 = vrot.slane %v8350, 4
        %v8353 = vshll.u32 %v8161, 16
        %v8355 = vrot.slane %v8353, 5
        %v8356 = vsel %vm1203, %v8351, %v8355
        %v8358 = vshrl.u32 %v8162, 16
        %v8360 = vrot.slane %v8358, 4
        %v8361 = vshll.u32 %v8162, 16
        %v8363 = vrot.slane %v8361, 5
        %v8364 = vor.u32 %v8360, %v8363
        %v8365 = vrot.slane %v8364, 4
        %v8367 = vshll.u32 %v8163, 16
        %v8369 = vrot.slane %v8367, 5
        %v8370 = vsel %vm1203, %v8365, %v8369
        %v8371 = vshrl.u32 %v8163, 16
        %v8373 = vrot.slane %v8371, 4
        %v8374 = vor.u32 %v8373, %v8369
        %v8375 = vrot.slane %v8374, 4
        %v8377 = vshll.u32 %v8164, 16
        %v8379 = vrot.slane %v8377, 5
        %v8380 = vsel %vm1203, %v8375, %v8379
        %v8382 = vshrl.u32 %v8165, 16
        %v8384 = vrot.slane %v8382, 4
        %v8385 = vshll.u32 %v8165, 16
        %v8387 = vrot.slane %v8385, 5
        %v8388 = vor.u32 %v8384, %v8387
        %v8389 = vrot.slane %v8388, 4
        %v8391 = vshll.u32 %v8166, 16
        %v8393 = vrot.slane %v8391, 5
        %v8394 = vsel %vm1203, %v8389, %v8393
        %v8395 = vshrl.u32 %v8166, 16
        %v8397 = vrot.slane %v8395, 4
        %v8398 = vor.u32 %v8397, %v8393
        %v8399 = vrot.slane %v8398, 4
        %v8401 = vshll.u32 %v8167, 16
        %v8403 = vrot.slane %v8401, 5
        %v8404 = vsel %vm1203, %v8399, %v8403
        %v8406 = vshrl.u32 %v8168, 16
        %v8408 = vrot.slane %v8406, 4
        %v8409 = vshll.u32 %v8168, 16
        %v8411 = vrot.slane %v8409, 5
        %v8412 = vor.u32 %v8408, %v8411
        %v8413 = vrot.slane %v8412, 4
        %v8415 = vshll.u32 %v8169, 16
        %v8417 = vrot.slane %v8415, 5
        %v8418 = vsel %vm1203, %v8413, %v8417
        %v8419 = vshrl.u32 %v8169, 16
        %v8421 = vrot.slane %v8419, 4
        %v8422 = vor.u32 %v8421, %v8417
        %v8423 = vrot.slane %v8422, 4
        %v8425 = vshll.u32 %v8170, 16
        %v8427 = vrot.slane %v8425, 5
        %v8428 = vsel %vm1203, %v8423, %v8427
        %v8430 = vshrl.u32 %v8171, 16
        %v8432 = vrot.slane %v8430, 4
        %v8433 = vshll.u32 %v8171, 16
        %v8435 = vrot.slane %v8433, 5
        %v8436 = vor.u32 %v8432, %v8435
        %v8437 = vrot.slane %v8436, 4
        %v8439 = vshll.u32 %v8172, 16
        %v8441 = vrot.slane %v8439, 5
        %v8442 = vsel %vm1203, %v8437, %v8441
        %v8443 = vshrl.u32 %v8172, 16
        %v8445 = vrot.slane %v8443, 4
        %v8446 = vor.u32 %v8445, %v8441
        %v8447 = vrot.slane %v8446, 4
        %v8449 = vshll.u32 %v8173, 16
        %v8451 = vrot.slane %v8449, 5
        %v8452 = vsel %vm1203, %v8447, %v8451
        %v8454 = vshrl.u32 %v8174, 16
        %v8456 = vrot.slane %v8454, 4
        %v8457 = vshll.u32 %v8174, 16
        %v8459 = vrot.slane %v8457, 5
        %v8460 = vor.u32 %v8456, %v8459
        %v8461 = vrot.slane %v8460, 4
        %v8463 = vshll.u32 %v8175, 16
        %v8465 = vrot.slane %v8463, 5
        %v8466 = vsel %vm1203, %v8461, %v8465
        %v8467 = vshrl.u32 %v8175, 16
        %v8469 = vrot.slane %v8467, 4
        %v8470 = vor.u32 %v8469, %v8465
        %v8471 = vrot.slane %v8470, 4
        %v8473 = vshll.u32 %v8176, 16
        %v8475 = vrot.slane %v8473, 5
        %v8476 = vsel %vm1203, %v8471, %v8475
        %v8478 = vshrl.u32 %v8177, 16
        %v8480 = vrot.slane %v8478, 4
        %v8481 = vshll.u32 %v8177, 16
        %v8483 = vrot.slane %v8481, 5
        %v8484 = vor.u32 %v8480, %v8483
        %v8485 = vrot.slane %v8484, 4
        %v8487 = vshll.u32 %v8178, 16
        %v8489 = vrot.slane %v8487, 5
        %v8490 = vsel %vm1203, %v8485, %v8489
        %v8491 = vshrl.u32 %v8178, 16
        %v8493 = vrot.slane %v8491, 4
        %v8494 = vor.u32 %v8493, %v8489
        %v8495 = vrot.slane %v8494, 4
        %v8497 = vshll.u32 %v8179, 16
        %v8499 = vrot.slane %v8497, 5
        %v8500 = vsel %vm1203, %v8495, %v8499
        %v8502 = vshrl.u32 %v8180, 16
        %v8504 = vrot.slane %v8502, 4
        %v8505 = vshll.u32 %v8180, 16
        %v8507 = vrot.slane %v8505, 5
        %v8508 = vor.u32 %v8504, %v8507
        %v8509 = vrot.slane %v8508, 4
        %v8511 = vshll.u32 %v8181, 16
        %v8513 = vrot.slane %v8511, 5
        %v8514 = vsel %vm1203, %v8509, %v8513
        %v8515 = vshrl.u32 %v8181, 16
        %v8517 = vrot.slane %v8515, 4
        %v8518 = vor.u32 %v8517, %v8513
        %v8519 = vrot.slane %v8518, 4
        %v8521 = vshll.u32 %v8182, 16
        %v8523 = vrot.slane %v8521, 5
        %v8524 = vsel %vm1203, %v8519, %v8523
        %v8526 = vshrl.u32 %v8183, 16
        %v8528 = vrot.slane %v8526, 4
        %v8529 = vshll.u32 %v8183, 16
        %v8531 = vrot.slane %v8529, 5
        %v8532 = vor.u32 %v8528, %v8531
        %v8533 = vrot.slane %v8532, 4
        %v8535 = vshll.u32 %v8184, 16
        %v8537 = vrot.slane %v8535, 5
        %v8538 = vsel %vm1203, %v8533, %v8537
        %v8539 = vshrl.u32 %v8184, 16
        %v8541 = vrot.slane %v8539, 4
        %v8542 = vor.u32 %v8541, %v8537
        %v8543 = vrot.slane %v8542, 4
        %v8545 = vshll.u32 %v8185, 16
        %v8547 = vrot.slane %v8545, 5
        %v8548 = vsel %vm1203, %v8543, %v8547
        %v8550 = vshrl.u32 %v8186, 16
        %v8552 = vrot.slane %v8550, 4
        %v8553 = vshll.u32 %v8186, 16
        %v8555 = vrot.slane %v8553, 5
        %v8556 = vor.u32 %v8552, %v8555
        %v8557 = vrot.slane %v8556, 4
        %v8559 = vshll.u32 %v8187, 16
        %v8561 = vrot.slane %v8559, 5
        %v8562 = vsel %vm1203, %v8557, %v8561
        %v8563 = vshrl.u32 %v8187, 16
        %v8565 = vrot.slane %v8563, 4
        %v8566 = vor.u32 %v8565, %v8561
        %v8567 = vrot.slane %v8566, 4
        %v8569 = vshll.u32 %v8188, 16
        %v8571 = vrot.slane %v8569, 5
        %v8572 = vsel %vm1203, %v8567, %v8571
        %8605 = vst [vmem:[#allocation3 + $0x1c] sm:$0xf] %v8202
        %8606 = vst [vmem:[#allocation3 + $0x40] sm:$0xf] %v8212
        %8607 = vst [vmem:[#allocation3 + $0x64] sm:$0xf] %v8226
        %8608 = vst [vmem:[#allocation3 + $0x88] sm:$0xf] %v8236
        %8609 = vst [vmem:[#allocation3 + $0xac] sm:$0xf] %v8250
        %8610 = vst [vmem:[#allocation3 + $0xd0] sm:$0xf] %v8260
        %8611 = vst [vmem:[#allocation3 + $0xf4] sm:$0xf] %v8274
        %8612 = vst [vmem:[#allocation3 + $0x118] sm:$0xf] %v8284
        %8613 = vst [vmem:[#allocation3 + $0x13c] sm:$0xf] %v8298
        %8614 = vst [vmem:[#allocation3 + $0x160] sm:$0xf] %v8308
        %8615 = vst [vmem:[#allocation3 + $0x184] sm:$0xf] %v8322
        %8616 = vst [vmem:[#allocation3 + $0x1a8] sm:$0xf] %v8332
        %8617 = vst [vmem:[#allocation3 + $0x1cc] sm:$0xf] %v8346
        %8618 = vst [vmem:[#allocation3 + $0x1f0] sm:$0xf] %v8356
        %8619 = vst [vmem:[#allocation3 + $0x214] sm:$0xf] %v8370
        %8620 = vst [vmem:[#allocation3 + $0x238] sm:$0xf] %v8380
        %8621 = vst [vmem:[#allocation3 + $0x25c] sm:$0xf] %v8394
        %8622 = vst [vmem:[#allocation3 + $0x280] sm:$0xf] %v8404
        %8623 = vst [vmem:[#allocation3 + $0x2a4] sm:$0xf] %v8418
        %8624 = vst [vmem:[#allocation3 + $0x2c8] sm:$0xf] %v8428
        %8625 = vst [vmem:[#allocation3 + $0x2ec] sm:$0xf] %v8442
        %8626 = vst [vmem:[#allocation3 + $0x310] sm:$0xf] %v8452
        %8627 = vst [vmem:[#allocation3 + $0x334] sm:$0xf] %v8466
        %8628 = vst [vmem:[#allocation3 + $0x358] sm:$0xf] %v8476
        %8629 = vst [vmem:[#allocation3 + $0x37c] sm:$0xf] %v8490
        %8630 = vst [vmem:[#allocation3 + $0x3a0] sm:$0xf] %v8500
        %8631 = vst [vmem:[#allocation3 + $0x3c4] sm:$0xf] %v8514
        %8632 = vst [vmem:[#allocation3 + $0x3e8] sm:$0xf] %v8524
        %8633 = vst [vmem:[#allocation3 + $0x40c] sm:$0xf] %v8538
        %8634 = vst [vmem:[#allocation3 + $0x430] sm:$0xf] %v8548
        %8635 = vst [vmem:[#allocation3 + $0x454] sm:$0xf] %v8562
        %8636 = vst [vmem:[#allocation3 + $0x478] sm:$0xf] %v8572
        %v8637 = vld [vmem:[%s2759] sm:$0xe]
        %v8638 = vld [vmem:[%s2759 + $0x4] sm:$0xf]
        %v8639 = vld [vmem:[%s2759 + $0x8] sm:$0x1]
        %v8640 = vld [vmem:[%s2759 + $0xc] sm:$0xe]
        %v8641 = vld [vmem:[%s2759 + $0x10] sm:$0xf]
        %v8642 = vld [vmem:[%s2759 + $0x14] sm:$0x1]
        %v8643 = vld [vmem:[%s2759 + $0x18] sm:$0xe]
        %v8644 = vld [vmem:[%s2759 + $0x1c] sm:$0xf]
        %v8645 = vld [vmem:[%s2759 + $0x20] sm:$0x1]
        %v8646 = vld [vmem:[%s2759 + $0x24] sm:$0xe]
        %v8647 = vld [vmem:[%s2759 + $0x28] sm:$0xf]
        %v8648 = vld [vmem:[%s2759 + $0x2c] sm:$0x1]
        %v8649 = vld [vmem:[%s2759 + $0x30] sm:$0xe]
        %v8650 = vld [vmem:[%s2759 + $0x34] sm:$0xf]
        %v8651 = vld [vmem:[%s2759 + $0x38] sm:$0x1]
        %v8652 = vld [vmem:[%s2759 + $0x3c] sm:$0xe]
        %v8653 = vld [vmem:[%s2759 + $0x40] sm:$0xf]
        %v8654 = vld [vmem:[%s2759 + $0x44] sm:$0x1]
        %v8655 = vld [vmem:[%s2759 + $0x48] sm:$0xe]
        %v8656 = vld [vmem:[%s2759 + $0x4c] sm:$0xf]
        %v8657 = vld [vmem:[%s2759 + $0x50] sm:$0x1]
        %v8658 = vld [vmem:[%s2759 + $0x54] sm:$0xe]
        %v8659 = vld [vmem:[%s2759 + $0x58] sm:$0xf]
        %v8660 = vld [vmem:[%s2759 + $0x5c] sm:$0x1]
        %v8661 = vld [vmem:[%s2759 + $0x60] sm:$0xe]
        %v8662 = vld [vmem:[%s2759 + $0x64] sm:$0xf]
        %v8663 = vld [vmem:[%s2759 + $0x68] sm:$0x1]
        %v8664 = vld [vmem:[%s2759 + $0x6c] sm:$0xe]
        %v8665 = vld [vmem:[%s2759 + $0x70] sm:$0xf]
        %v8666 = vld [vmem:[%s2759 + $0x74] sm:$0x1]
        %v8667 = vld [vmem:[%s2759 + $0x78] sm:$0xe]
        %v8668 = vld [vmem:[%s2759 + $0x7c] sm:$0xf]
        %v8669 = vld [vmem:[%s2759 + $0x80] sm:$0x1]
        %v8670 = vld [vmem:[%s2759 + $0x84] sm:$0xe]
        %v8671 = vld [vmem:[%s2759 + $0x88] sm:$0xf]
        %v8672 = vld [vmem:[%s2759 + $0x8c] sm:$0x1]
        %v8673 = vld [vmem:[%s2759 + $0x90] sm:$0xe]
        %v8674 = vld [vmem:[%s2759 + $0x94] sm:$0xf]
        %v8675 = vld [vmem:[%s2759 + $0x98] sm:$0x1]
        %v8676 = vld [vmem:[%s2759 + $0x9c] sm:$0xe]
        %v8677 = vld [vmem:[%s2759 + $0xa0] sm:$0xf]
        %v8678 = vld [vmem:[%s2759 + $0xa4] sm:$0x1]
        %v8679 = vld [vmem:[%s2759 + $0xa8] sm:$0xe]
        %v8680 = vld [vmem:[%s2759 + $0xac] sm:$0xf]
        %v8681 = vld [vmem:[%s2759 + $0xb0] sm:$0x1]
        %v8682 = vld [vmem:[%s2759 + $0xb4] sm:$0xe]
        %v8683 = vld [vmem:[%s2759 + $0xb8] sm:$0xf]
        %v8684 = vld [vmem:[%s2759 + $0xbc] sm:$0x1]
        %v8733 = vrot.slane %v8637, 5
        %v8734 = vrot.slane %v8733, 4
        %v8735 = vrot.slane %v8638, 5
        %v8736 = vsel %vm1750, %v8734, %v8735
        %v8737 = vrot.slane %v8735, 4
        %v8738 = vrot.slane %v8639, 5
        %v8739 = vsel %vm1750, %v8737, %v8738
        %v8740 = vrot.slane %v8640, 5
        %v8741 = vrot.slane %v8740, 4
        %v8742 = vrot.slane %v8641, 5
        %v8743 = vsel %vm1750, %v8741, %v8742
        %v8744 = vrot.slane %v8742, 4
        %v8745 = vrot.slane %v8642, 5
        %v8746 = vsel %vm1750, %v8744, %v8745
        %v8747 = vrot.slane %v8643, 5
        %v8748 = vrot.slane %v8747, 4
        %v8749 = vrot.slane %v8644, 5
        %v8750 = vsel %vm1750, %v8748, %v8749
        %v8751 = vrot.slane %v8749, 4
        %v8752 = vrot.slane %v8645, 5
        %v8753 = vsel %vm1750, %v8751, %v8752
        %v8754 = vrot.slane %v8646, 5
        %v8755 = vrot.slane %v8754, 4
        %v8756 = vrot.slane %v8647, 5
        %v8757 = vsel %vm1750, %v8755, %v8756
        %v8758 = vrot.slane %v8756, 4
        %v8759 = vrot.slane %v8648, 5
        %v8760 = vsel %vm1750, %v8758, %v8759
        %v8761 = vrot.slane %v8649, 5
        %v8762 = vrot.slane %v8761, 4
        %v8763 = vrot.slane %v8650, 5
        %v8764 = vsel %vm1750, %v8762, %v8763
        %v8765 = vrot.slane %v8763, 4
        %v8766 = vrot.slane %v8651, 5
        %v8767 = vsel %vm1750, %v8765, %v8766
        %v8768 = vrot.slane %v8652, 5
        %v8769 = vrot.slane %v8768, 4
        %v8770 = vrot.slane %v8653, 5
        %v8771 = vsel %vm1750, %v8769, %v8770
        %v8772 = vrot.slane %v8770, 4
        %v8773 = vrot.slane %v8654, 5
        %v8774 = vsel %vm1750, %v8772, %v8773
        %v8775 = vrot.slane %v8655, 5
        %v8776 = vrot.slane %v8775, 4
        %v8777 = vrot.slane %v8656, 5
        %v8778 = vsel %vm1750, %v8776, %v8777
        %v8779 = vrot.slane %v8777, 4
        %v8780 = vrot.slane %v8657, 5
        %v8781 = vsel %vm1750, %v8779, %v8780
        %v8782 = vrot.slane %v8658, 5
        %v8783 = vrot.slane %v8782, 4
        %v8784 = vrot.slane %v8659, 5
        %v8785 = vsel %vm1750, %v8783, %v8784
        %v8786 = vrot.slane %v8784, 4
        %v8787 = vrot.slane %v8660, 5
        %v8788 = vsel %vm1750, %v8786, %v8787
        %v8789 = vrot.slane %v8661, 5
        %v8790 = vrot.slane %v8789, 4
        %v8791 = vrot.slane %v8662, 5
        %v8792 = vsel %vm1750, %v8790, %v8791
        %v8793 = vrot.slane %v8791, 4
        %v8794 = vrot.slane %v8663, 5
        %v8795 = vsel %vm1750, %v8793, %v8794
        %v8796 = vrot.slane %v8664, 5
        %v8797 = vrot.slane %v8796, 4
        %v8798 = vrot.slane %v8665, 5
        %v8799 = vsel %vm1750, %v8797, %v8798
        %v8800 = vrot.slane %v8798, 4
        %v8801 = vrot.slane %v8666, 5
        %v8802 = vsel %vm1750, %v8800, %v8801
        %v8803 = vrot.slane %v8667, 5
        %v8804 = vrot.slane %v8803, 4
        %v8805 = vrot.slane %v8668, 5
        %v8806 = vsel %vm1750, %v8804, %v8805
        %v8807 = vrot.slane %v8805, 4
        %v8808 = vrot.slane %v8669, 5
        %v8809 = vsel %vm1750, %v8807, %v8808
        %v8810 = vrot.slane %v8670, 5
        %v8811 = vrot.slane %v8810, 4
        %v8812 = vrot.slane %v8671, 5
        %v8813 = vsel %vm1750, %v8811, %v8812
        %v8814 = vrot.slane %v8812, 4
        %v8815 = vrot.slane %v8672, 5
        %v8816 = vsel %vm1750, %v8814, %v8815
        %v8817 = vrot.slane %v8673, 5
        %v8818 = vrot.slane %v8817, 4
        %v8819 = vrot.slane %v8674, 5
        %v8820 = vsel %vm1750, %v8818, %v8819
        %v8821 = vrot.slane %v8819, 4
        %v8822 = vrot.slane %v8675, 5
        %v8823 = vsel %vm1750, %v8821, %v8822
        %v8824 = vrot.slane %v8676, 5
        %v8825 = vrot.slane %v8824, 4
        %v8826 = vrot.slane %v8677, 5
        %v8827 = vsel %vm1750, %v8825, %v8826
        %v8828 = vrot.slane %v8826, 4
        %v8829 = vrot.slane %v8678, 5
        %v8830 = vsel %vm1750, %v8828, %v8829
        %v8831 = vrot.slane %v8679, 5
        %v8832 = vrot.slane %v8831, 4
        %v8833 = vrot.slane %v8680, 5
        %v8834 = vsel %vm1750, %v8832, %v8833
        %v8835 = vrot.slane %v8833, 4
        %v8836 = vrot.slane %v8681, 5
        %v8837 = vsel %vm1750, %v8835, %v8836
        %v8838 = vrot.slane %v8682, 5
        %v8839 = vrot.slane %v8838, 4
        %v8840 = vrot.slane %v8683, 5
        %v8841 = vsel %vm1750, %v8839, %v8840
        %v8842 = vrot.slane %v8840, 4
        %v8843 = vrot.slane %v8684, 5
        %v8844 = vsel %vm1750, %v8842, %v8843
        %8877 = vst [vmem:[#allocation3 + $0x20] sm:$0xf] %v8736
        %8878 = vst [vmem:[#allocation3 + $0x44] sm:$0xf] %v8739
        %8879 = vst [vmem:[#allocation3 + $0x68] sm:$0xf] %v8743
        %8880 = vst [vmem:[#allocation3 + $0x8c] sm:$0xf] %v8746
        %8881 = vst [vmem:[#allocation3 + $0xb0] sm:$0xf] %v8750
        %8882 = vst [vmem:[#allocation3 + $0xd4] sm:$0xf] %v8753
        %8883 = vst [vmem:[#allocation3 + $0xf8] sm:$0xf] %v8757
        %8884 = vst [vmem:[#allocation3 + $0x11c] sm:$0xf] %v8760
        %8885 = vst [vmem:[#allocation3 + $0x140] sm:$0xf] %v8764
        %8886 = vst [vmem:[#allocation3 + $0x164] sm:$0xf] %v8767
        %8887 = vst [vmem:[#allocation3 + $0x188] sm:$0xf] %v8771
        %8888 = vst [vmem:[#allocation3 + $0x1ac] sm:$0xf] %v8774
        %8889 = vst [vmem:[#allocation3 + $0x1d0] sm:$0xf] %v8778
        %8890 = vst [vmem:[#allocation3 + $0x1f4] sm:$0xf] %v8781
        %8891 = vst [vmem:[#allocation3 + $0x218] sm:$0xf] %v8785
        %8892 = vst [vmem:[#allocation3 + $0x23c] sm:$0xf] %v8788
        %8893 = vst [vmem:[#allocation3 + $0x260] sm:$0xf] %v8792
        %8894 = vst [vmem:[#allocation3 + $0x284] sm:$0xf] %v8795
        %8895 = vst [vmem:[#allocation3 + $0x2a8] sm:$0xf] %v8799
        %8896 = vst [vmem:[#allocation3 + $0x2cc] sm:$0xf] %v8802
        %8897 = vst [vmem:[#allocation3 + $0x2f0] sm:$0xf] %v8806
        %8898 = vst [vmem:[#allocation3 + $0x314] sm:$0xf] %v8809
        %8899 = vst [vmem:[#allocation3 + $0x338] sm:$0xf] %v8813
        %8900 = vst [vmem:[#allocation3 + $0x35c] sm:$0xf] %v8816
        %8901 = vst [vmem:[#allocation3 + $0x380] sm:$0xf] %v8820
        %8902 = vst [vmem:[#allocation3 + $0x3a4] sm:$0xf] %v8823
        %8903 = vst [vmem:[#allocation3 + $0x3c8] sm:$0xf] %v8827
        %8904 = vst [vmem:[#allocation3 + $0x3ec] sm:$0xf] %v8830
        %8905 = vst [vmem:[#allocation3 + $0x410] sm:$0xf] %v8834
        %8906 = vst [vmem:[#allocation3 + $0x434] sm:$0xf] %v8837
        %8907 = vst [vmem:[#allocation3 + $0x458] sm:$0xf] %v8841
        %8908 = vst [vmem:[#allocation3 + $0x47c] sm:$0xf] %v8844
        %v8909 = vld [vmem:[#allocation3] sm:$0xff]
        %v8910 = vld [vmem:[#allocation3 + $0x8] sm:$0xff]
        %v8911 = vld [vmem:[#allocation3 + $0x10] sm:$0xff]
        %v8912 = vld [vmem:[#allocation3 + $0x18] sm:$0xff]
        %v8913 = vld [vmem:[#allocation3 + $0x20] sm:$0xf]
        %v8914 = vld [vmem:[#allocation3 + $0x24] sm:$0xff]
        %v8915 = vld [vmem:[#allocation3 + $0x2c] sm:$0xff]
        %v8916 = vld [vmem:[#allocation3 + $0x34] sm:$0xff]
        %v8917 = vld [vmem:[#allocation3 + $0x3c] sm:$0xff]
        %v8918 = vld [vmem:[#allocation3 + $0x44] sm:$0xf]
        %v8919 = vld [vmem:[#allocation3 + $0x48] sm:$0xff]
        %v8920 = vld [vmem:[#allocation3 + $0x50] sm:$0xff]
        %v8921 = vld [vmem:[#allocation3 + $0x58] sm:$0xff]
        %v8922 = vld [vmem:[#allocation3 + $0x60] sm:$0xff]
        %v8923 = vld [vmem:[#allocation3 + $0x68] sm:$0xf]
        %v8924 = vld [vmem:[#allocation3 + $0x6c] sm:$0xff]
        %v8925 = vld [vmem:[#allocation3 + $0x74] sm:$0xff]
        %v8926 = vld [vmem:[#allocation3 + $0x7c] sm:$0xff]
        %v8927 = vld [vmem:[#allocation3 + $0x84] sm:$0xff]
        %v8928 = vld [vmem:[#allocation3 + $0x8c] sm:$0xf]
        %v8929 = vld [vmem:[#allocation3 + $0x90] sm:$0xff]
        %v8930 = vld [vmem:[#allocation3 + $0x98] sm:$0xff]
        %v8931 = vld [vmem:[#allocation3 + $0xa0] sm:$0xff]
        %v8932 = vld [vmem:[#allocation3 + $0xa8] sm:$0xff]
        %v8933 = vld [vmem:[#allocation3 + $0xb0] sm:$0xf]
        %v8934 = vld [vmem:[#allocation3 + $0xb4] sm:$0xff]
        %v8935 = vld [vmem:[#allocation3 + $0xbc] sm:$0xff]
        %v8936 = vld [vmem:[#allocation3 + $0xc4] sm:$0xff]
        %v8937 = vld [vmem:[#allocation3 + $0xcc] sm:$0xff]
        %v8938 = vld [vmem:[#allocation3 + $0xd4] sm:$0xf]
        %v8939 = vld [vmem:[#allocation3 + $0xd8] sm:$0xff]
        %v8940 = vld [vmem:[#allocation3 + $0xe0] sm:$0xff]
        %v8941 = vld [vmem:[#allocation3 + $0xe8] sm:$0xff]
        %v8942 = vld [vmem:[#allocation3 + $0xf0] sm:$0xff]
        %v8943 = vld [vmem:[#allocation3 + $0xf8] sm:$0xf]
        %v8944 = vld [vmem:[#allocation3 + $0xfc] sm:$0xff]
        %v8945 = vld [vmem:[#allocation3 + $0x104] sm:$0xff]
        %v8946 = vld [vmem:[#allocation3 + $0x10c] sm:$0xff]
        %v8947 = vld [vmem:[#allocation3 + $0x114] sm:$0xff]
        %v8948 = vld [vmem:[#allocation3 + $0x11c] sm:$0xf]
        %v8949 = vld [vmem:[#allocation3 + $0x120] sm:$0xff]
        %v8950 = vld [vmem:[#allocation3 + $0x128] sm:$0xff]
        %v8951 = vld [vmem:[#allocation3 + $0x130] sm:$0xff]
        %v8952 = vld [vmem:[#allocation3 + $0x138] sm:$0xff]
        %v8953 = vld [vmem:[#allocation3 + $0x140] sm:$0xf]
        %v8954 = vld [vmem:[#allocation3 + $0x144] sm:$0xff]
        %v8955 = vld [vmem:[#allocation3 + $0x14c] sm:$0xff]
        %v8956 = vld [vmem:[#allocation3 + $0x154] sm:$0xff]
        %v8957 = vld [vmem:[#allocation3 + $0x15c] sm:$0xff]
        %v8958 = vld [vmem:[#allocation3 + $0x164] sm:$0xf]
        %v8959 = vld [vmem:[#allocation3 + $0x168] sm:$0xff]
        %v8960 = vld [vmem:[#allocation3 + $0x170] sm:$0xff]
        %v8961 = vld [vmem:[#allocation3 + $0x178] sm:$0xff]
        %v8962 = vld [vmem:[#allocation3 + $0x180] sm:$0xff]
        %v8963 = vld [vmem:[#allocation3 + $0x188] sm:$0xf]
        %v8964 = vld [vmem:[#allocation3 + $0x18c] sm:$0xff]
        %v8965 = vld [vmem:[#allocation3 + $0x194] sm:$0xff]
        %v8966 = vld [vmem:[#allocation3 + $0x19c] sm:$0xff]
        %v8967 = vld [vmem:[#allocation3 + $0x1a4] sm:$0xff]
        %v8968 = vld [vmem:[#allocation3 + $0x1ac] sm:$0xf]
        %v8969 = vld [vmem:[#allocation3 + $0x1b0] sm:$0xff]
        %v8970 = vld [vmem:[#allocation3 + $0x1b8] sm:$0xff]
        %v8971 = vld [vmem:[#allocation3 + $0x1c0] sm:$0xff]
        %v8972 = vld [vmem:[#allocation3 + $0x1c8] sm:$0xff]
        %v8973 = vld [vmem:[#allocation3 + $0x1d0] sm:$0xf]
        %v8974 = vld [vmem:[#allocation3 + $0x1d4] sm:$0xff]
        %v8975 = vld [vmem:[#allocation3 + $0x1dc] sm:$0xff]
        %v8976 = vld [vmem:[#allocation3 + $0x1e4] sm:$0xff]
        %v8977 = vld [vmem:[#allocation3 + $0x1ec] sm:$0xff]
        %v8978 = vld [vmem:[#allocation3 + $0x1f4] sm:$0xf]
        %v8979 = vld [vmem:[#allocation3 + $0x1f8] sm:$0xff]
        %v8980 = vld [vmem:[#allocation3 + $0x200] sm:$0xff]
        %v8981 = vld [vmem:[#allocation3 + $0x208] sm:$0xff]
        %v8982 = vld [vmem:[#allocation3 + $0x210] sm:$0xff]
        %v8983 = vld [vmem:[#allocation3 + $0x218] sm:$0xf]
        %v8984 = vld [vmem:[#allocation3 + $0x21c] sm:$0xff]
        %v8985 = vld [vmem:[#allocation3 + $0x224] sm:$0xff]
        %v8986 = vld [vmem:[#allocation3 + $0x22c] sm:$0xff]
        %v8987 = vld [vmem:[#allocation3 + $0x234] sm:$0xff]
        %v8988 = vld [vmem:[#allocation3 + $0x23c] sm:$0xf]
        %v8989 = vld [vmem:[#allocation3 + $0x240] sm:$0xff]
        %v8990 = vld [vmem:[#allocation3 + $0x248] sm:$0xff]
        %v8991 = vld [vmem:[#allocation3 + $0x250] sm:$0xff]
        %v8992 = vld [vmem:[#allocation3 + $0x258] sm:$0xff]
        %v8993 = vld [vmem:[#allocation3 + $0x260] sm:$0xf]
        %v8994 = vld [vmem:[#allocation3 + $0x264] sm:$0xff]
        %v8995 = vld [vmem:[#allocation3 + $0x26c] sm:$0xff]
        %v8996 = vld [vmem:[#allocation3 + $0x274] sm:$0xff]
        %v8997 = vld [vmem:[#allocation3 + $0x27c] sm:$0xff]
        %v8998 = vld [vmem:[#allocation3 + $0x284] sm:$0xf]
        %v8999 = vld [vmem:[#allocation3 + $0x288] sm:$0xff]
        %v9000 = vld [vmem:[#allocation3 + $0x290] sm:$0xff]
        %v9001 = vld [vmem:[#allocation3 + $0x298] sm:$0xff]
        %v9002 = vld [vmem:[#allocation3 + $0x2a0] sm:$0xff]
        %v9003 = vld [vmem:[#allocation3 + $0x2a8] sm:$0xf]
        %v9004 = vld [vmem:[#allocation3 + $0x2ac] sm:$0xff]
        %v9005 = vld [vmem:[#allocation3 + $0x2b4] sm:$0xff]
        %v9006 = vld [vmem:[#allocation3 + $0x2bc] sm:$0xff]
        %v9007 = vld [vmem:[#allocation3 + $0x2c4] sm:$0xff]
        %v9008 = vld [vmem:[#allocation3 + $0x2cc] sm:$0xf]
        %v9009 = vld [vmem:[#allocation3 + $0x2d0] sm:$0xff]
        %v9010 = vld [vmem:[#allocation3 + $0x2d8] sm:$0xff]
        %v9011 = vld [vmem:[#allocation3 + $0x2e0] sm:$0xff]
        %v9012 = vld [vmem:[#allocation3 + $0x2e8] sm:$0xff]
        %v9013 = vld [vmem:[#allocation3 + $0x2f0] sm:$0xf]
        %v9014 = vld [vmem:[#allocation3 + $0x2f4] sm:$0xff]
        %v9015 = vld [vmem:[#allocation3 + $0x2fc] sm:$0xff]
        %v9016 = vld [vmem:[#allocation3 + $0x304] sm:$0xff]
        %v9017 = vld [vmem:[#allocation3 + $0x30c] sm:$0xff]
        %v9018 = vld [vmem:[#allocation3 + $0x314] sm:$0xf]
        %v9019 = vld [vmem:[#allocation3 + $0x318] sm:$0xff]
        %v9020 = vld [vmem:[#allocation3 + $0x320] sm:$0xff]
        %v9021 = vld [vmem:[#allocation3 + $0x328] sm:$0xff]
        %v9022 = vld [vmem:[#allocation3 + $0x330] sm:$0xff]
        %v9023 = vld [vmem:[#allocation3 + $0x338] sm:$0xf]
        %v9024 = vld [vmem:[#allocation3 + $0x33c] sm:$0xff]
        %v9025 = vld [vmem:[#allocation3 + $0x344] sm:$0xff]
        %v9026 = vld [vmem:[#allocation3 + $0x34c] sm:$0xff]
        %v9027 = vld [vmem:[#allocation3 + $0x354] sm:$0xff]
        %v9028 = vld [vmem:[#allocation3 + $0x35c] sm:$0xf]
        %v9029 = vld [vmem:[#allocation3 + $0x360] sm:$0xff]
        %v9030 = vld [vmem:[#allocation3 + $0x368] sm:$0xff]
        %v9031 = vld [vmem:[#allocation3 + $0x370] sm:$0xff]
        %v9032 = vld [vmem:[#allocation3 + $0x378] sm:$0xff]
        %v9033 = vld [vmem:[#allocation3 + $0x380] sm:$0xf]
        %v9034 = vld [vmem:[#allocation3 + $0x384] sm:$0xff]
        %v9035 = vld [vmem:[#allocation3 + $0x38c] sm:$0xff]
        %v9036 = vld [vmem:[#allocation3 + $0x394] sm:$0xff]
        %v9037 = vld [vmem:[#allocation3 + $0x39c] sm:$0xff]
        %v9038 = vld [vmem:[#allocation3 + $0x3a4] sm:$0xf]
        %v9039 = vld [vmem:[#allocation3 + $0x3a8] sm:$0xff]
        %v9040 = vld [vmem:[#allocation3 + $0x3b0] sm:$0xff]
        %v9041 = vld [vmem:[#allocation3 + $0x3b8] sm:$0xff]
        %v9042 = vld [vmem:[#allocation3 + $0x3c0] sm:$0xff]
        %v9043 = vld [vmem:[#allocation3 + $0x3c8] sm:$0xf]
        %v9044 = vld [vmem:[#allocation3 + $0x3cc] sm:$0xff]
        %v9045 = vld [vmem:[#allocation3 + $0x3d4] sm:$0xff]
        %v9046 = vld [vmem:[#allocation3 + $0x3dc] sm:$0xff]
        %v9047 = vld [vmem:[#allocation3 + $0x3e4] sm:$0xff]
        %v9048 = vld [vmem:[#allocation3 + $0x3ec] sm:$0xf]
        %v9049 = vld [vmem:[#allocation3 + $0x3f0] sm:$0xff]
        %v9050 = vld [vmem:[#allocation3 + $0x3f8] sm:$0xff]
        %v9051 = vld [vmem:[#allocation3 + $0x400] sm:$0xff]
        %v9052 = vld [vmem:[#allocation3 + $0x408] sm:$0xff]
        %v9053 = vld [vmem:[#allocation3 + $0x410] sm:$0xf]
        %v9054 = vld [vmem:[#allocation3 + $0x414] sm:$0xff]
        %v9055 = vld [vmem:[#allocation3 + $0x41c] sm:$0xff]
        %v9056 = vld [vmem:[#allocation3 + $0x424] sm:$0xff]
        %v9057 = vld [vmem:[#allocation3 + $0x42c] sm:$0xff]
        %v9058 = vld [vmem:[#allocation3 + $0x434] sm:$0xf]
        %v9059 = vld [vmem:[#allocation3 + $0x438] sm:$0xff]
        %v9060 = vld [vmem:[#allocation3 + $0x440] sm:$0xff]
        %v9061 = vld [vmem:[#allocation3 + $0x448] sm:$0xff]
        %v9062 = vld [vmem:[#allocation3 + $0x450] sm:$0xff]
        %v9063 = vld [vmem:[#allocation3 + $0x458] sm:$0xf]
        %v9064 = vld [vmem:[#allocation3 + $0x45c] sm:$0xff]
        %v9065 = vld [vmem:[#allocation3 + $0x464] sm:$0xff]
        %v9066 = vld [vmem:[#allocation3 + $0x46c] sm:$0xff]
        %v9067 = vld [vmem:[#allocation3 + $0x474] sm:$0xff]
        %v9068 = vld [vmem:[#allocation3 + $0x47c] sm:$0xf]
        %v9069 = vld [vmem:[#allocation10] sm:$0xf]
        %v9070 = vld [vmem:[#allocation10 + $0x4] sm:$0xf]
        %v9071 = vld [vmem:[#allocation10 + $0x8] sm:$0xf]
        %v9072 = vld [vmem:[#allocation10 + $0xc] sm:$0xf]
        %v9073 = vld [vmem:[#allocation10 + $0x10] sm:$0xf]
        %v9074 = vld [vmem:[#allocation10 + $0x14] sm:$0xf]
        %v9075 = vld [vmem:[#allocation10 + $0x18] sm:$0xf]
        %v9076 = vld [vmem:[#allocation10 + $0x1c] sm:$0xf]
        %v9077 = vld [vmem:[#allocation10 + $0x20] sm:$0xf]
        %v9078 = vld [vmem:[#allocation10 + $0x24] sm:$0xf]
        %v9079 = vld [vmem:[#allocation10 + $0x28] sm:$0xf]
        %v9080 = vld [vmem:[#allocation10 + $0x2c] sm:$0xf]
        %v9081 = vld [vmem:[#allocation10 + $0x30] sm:$0xf]
        %v9082 = vld [vmem:[#allocation10 + $0x34] sm:$0xf]
        %v9083 = vld [vmem:[#allocation10 + $0x38] sm:$0xf]
        %v9084 = vld [vmem:[#allocation10 + $0x3c] sm:$0xf]
        %v9085 = vld [vmem:[#allocation10 + $0x40] sm:$0xf]
        %v9086 = vld [vmem:[#allocation10 + $0x44] sm:$0xf]
        %v9087 = vld [vmem:[#allocation10 + $0x48] sm:$0xf]
        %v9088 = vld [vmem:[#allocation10 + $0x4c] sm:$0xf]
        %v9089 = vld [vmem:[#allocation10 + $0x50] sm:$0xf]
        %v9090 = vld [vmem:[#allocation10 + $0x54] sm:$0xf]
        %v9091 = vld [vmem:[#allocation10 + $0x58] sm:$0xf]
        %v9092 = vld [vmem:[#allocation10 + $0x5c] sm:$0xf]
        %v9093 = vld [vmem:[#allocation10 + $0x60] sm:$0xf]
        %v9094 = vld [vmem:[#allocation10 + $0x64] sm:$0xf]
        %v9095 = vld [vmem:[#allocation10 + $0x68] sm:$0xf]
        %v9096 = vld [vmem:[#allocation10 + $0x6c] sm:$0xf]
        %v9097 = vld [vmem:[#allocation10 + $0x70] sm:$0xf]
        %v9098 = vld [vmem:[#allocation10 + $0x74] sm:$0xf]
        %v9099 = vld [vmem:[#allocation10 + $0x78] sm:$0xf]
        %v9100 = vld [vmem:[#allocation10 + $0x7c] sm:$0xf]
        %v9101 = vld [vmem:[#allocation10 + $0x80] sm:$0xf]
        %v9102 = vld [vmem:[#allocation10 + $0x84] sm:$0xf]
        %v9103 = vld [vmem:[#allocation10 + $0x88] sm:$0xf]
        %v9104 = vld [vmem:[#allocation10 + $0x8c] sm:$0xf]
        %v9105 = vld [vmem:[#allocation10 + $0x90] sm:$0xf]
        %v9106 = vld [vmem:[#allocation10 + $0x94] sm:$0xf]
        %v9107 = vld [vmem:[#allocation10 + $0x98] sm:$0xf]
        %v9108 = vld [vmem:[#allocation10 + $0x9c] sm:$0xf]
        %v9109 = vld [vmem:[#allocation10 + $0xa0] sm:$0xf]
        %v9110 = vld [vmem:[#allocation10 + $0xa4] sm:$0xf]
        %v9111 = vld [vmem:[#allocation10 + $0xa8] sm:$0xf]
        %v9112 = vld [vmem:[#allocation10 + $0xac] sm:$0xf]
        %v9113 = vld [vmem:[#allocation10 + $0xb0] sm:$0xf]
        %v9114 = vld [vmem:[#allocation10 + $0xb4] sm:$0xf]
        %v9115 = vld [vmem:[#allocation10 + $0xb8] sm:$0xf]
        %v9116 = vld [vmem:[#allocation10 + $0xbc] sm:$0xf]
        %v9117 = vld [vmem:[#allocation10 + $0xc0] sm:$0xf]
        %v9118 = vld [vmem:[#allocation10 + $0xc4] sm:$0xf]
        %v9119 = vld [vmem:[#allocation10 + $0xc8] sm:$0xf]
        %v9120 = vld [vmem:[#allocation10 + $0xcc] sm:$0xf]
        %v9121 = vld [vmem:[#allocation10 + $0xd0] sm:$0xf]
        %v9122 = vld [vmem:[#allocation10 + $0xd4] sm:$0xf]
        %v9123 = vld [vmem:[#allocation10 + $0xd8] sm:$0xf]
        %v9124 = vld [vmem:[#allocation10 + $0xdc] sm:$0xf]
        %v9125 = vld [vmem:[#allocation10 + $0xe0] sm:$0xf]
        %v9126 = vld [vmem:[#allocation10 + $0xe4] sm:$0xf]
        %v9127 = vld [vmem:[#allocation10 + $0xe8] sm:$0xf]
        %v9128 = vld [vmem:[#allocation10 + $0xec] sm:$0xf]
        %v9129 = vld [vmem:[#allocation10 + $0xf0] sm:$0xf]
        %v9130 = vld [vmem:[#allocation10 + $0xf4] sm:$0xf]
        %v9131 = vld [vmem:[#allocation10 + $0xf8] sm:$0xf]
        %v9132 = vld [vmem:[#allocation10 + $0xfc] sm:$0xf]
        %v9133 = vld [vmem:[#allocation10 + $0x100] sm:$0xf]
        %v9134 = vld [vmem:[#allocation10 + $0x104] sm:$0xf]
        %v9135 = vld [vmem:[#allocation10 + $0x108] sm:$0xf]
        %v9136 = vld [vmem:[#allocation10 + $0x10c] sm:$0xf]
        %v9137 = vld [vmem:[#allocation10 + $0x110] sm:$0xf]
        %v9138 = vld [vmem:[#allocation10 + $0x114] sm:$0xf]
        %v9139 = vld [vmem:[#allocation10 + $0x118] sm:$0xf]
        %v9140 = vld [vmem:[#allocation10 + $0x11c] sm:$0xf]
        %v9141 = vld [vmem:[#allocation10 + $0x120] sm:$0xf]
        %v9142 = vld [vmem:[#allocation10 + $0x124] sm:$0xf]
        %v9143 = vld [vmem:[#allocation10 + $0x128] sm:$0xf]
        %v9144 = vld [vmem:[#allocation10 + $0x12c] sm:$0xf]
        %v9145 = vld [vmem:[#allocation10 + $0x130] sm:$0xf]
        %v9146 = vld [vmem:[#allocation10 + $0x134] sm:$0xf]
        %v9147 = vld [vmem:[#allocation10 + $0x138] sm:$0xf]
        %v9148 = vld [vmem:[#allocation10 + $0x13c] sm:$0xf]
        %v9149 = vld [vmem:[#allocation10 + $0x140] sm:$0xf]
        %v9150 = vld [vmem:[#allocation10 + $0x144] sm:$0xf]
        %v9151 = vld [vmem:[#allocation10 + $0x148] sm:$0xf]
        %v9152 = vld [vmem:[#allocation10 + $0x14c] sm:$0xf]
        %v9153 = vld [vmem:[#allocation10 + $0x150] sm:$0xf]
        %v9154 = vld [vmem:[#allocation10 + $0x154] sm:$0xf]
        %v9155 = vld [vmem:[#allocation10 + $0x158] sm:$0xf]
        %v9156 = vld [vmem:[#allocation10 + $0x15c] sm:$0xf]
        %v9157 = vld [vmem:[#allocation10 + $0x160] sm:$0xf]
        %v9158 = vld [vmem:[#allocation10 + $0x164] sm:$0xf]
        %v9159 = vld [vmem:[#allocation10 + $0x168] sm:$0xf]
        %v9160 = vld [vmem:[#allocation10 + $0x16c] sm:$0xf]
        %v9161 = vld [vmem:[#allocation10 + $0x170] sm:$0xf]
        %v9162 = vld [vmem:[#allocation10 + $0x174] sm:$0xf]
        %v9163 = vld [vmem:[#allocation10 + $0x178] sm:$0xf]
        %v9164 = vld [vmem:[#allocation10 + $0x17c] sm:$0xf]
        %v9165 = vld [vmem:[#allocation10 + $0x180] sm:$0xf]
        %v9166 = vld [vmem:[#allocation10 + $0x184] sm:$0xf]
        %v9167 = vld [vmem:[#allocation10 + $0x188] sm:$0xf]
        %v9168 = vld [vmem:[#allocation10 + $0x18c] sm:$0xf]
        %v9169 = vld [vmem:[#allocation10 + $0x190] sm:$0xf]
        %v9170 = vld [vmem:[#allocation10 + $0x194] sm:$0xf]
        %v9171 = vld [vmem:[#allocation10 + $0x198] sm:$0xf]
        %v9172 = vld [vmem:[#allocation10 + $0x19c] sm:$0xf]
        %v9173 = vld [vmem:[#allocation10 + $0x1a0] sm:$0xf]
        %v9174 = vld [vmem:[#allocation10 + $0x1a4] sm:$0xf]
        %v9175 = vld [vmem:[#allocation10 + $0x1a8] sm:$0xf]
        %v9176 = vld [vmem:[#allocation10 + $0x1ac] sm:$0xf]
        %v9177 = vld [vmem:[#allocation10 + $0x1b0] sm:$0xf]
        %v9178 = vld [vmem:[#allocation10 + $0x1b4] sm:$0xf]
        %v9179 = vld [vmem:[#allocation10 + $0x1b8] sm:$0xf]
        %v9180 = vld [vmem:[#allocation10 + $0x1bc] sm:$0xf]
        %v9181 = vld [vmem:[#allocation10 + $0x1c0] sm:$0xf]
        %v9182 = vld [vmem:[#allocation10 + $0x1c4] sm:$0xf]
        %v9183 = vld [vmem:[#allocation10 + $0x1c8] sm:$0xf]
        %v9184 = vld [vmem:[#allocation10 + $0x1cc] sm:$0xf]
        %v9185 = vld [vmem:[#allocation10 + $0x1d0] sm:$0xf]
        %v9186 = vld [vmem:[#allocation10 + $0x1d4] sm:$0xf]
        %v9187 = vld [vmem:[#allocation10 + $0x1d8] sm:$0xf]
        %v9188 = vld [vmem:[#allocation10 + $0x1dc] sm:$0xf]
        %v9189 = vld [vmem:[#allocation10 + $0x1e0] sm:$0xf]
        %v9190 = vld [vmem:[#allocation10 + $0x1e4] sm:$0xf]
        %v9191 = vld [vmem:[#allocation10 + $0x1e8] sm:$0xf]
        %v9192 = vld [vmem:[#allocation10 + $0x1ec] sm:$0xf]
        %v9193 = vld [vmem:[#allocation10 + $0x1f0] sm:$0xf]
        %v9194 = vld [vmem:[#allocation10 + $0x1f4] sm:$0xf]
        %v9195 = vld [vmem:[#allocation10 + $0x1f8] sm:$0xf]
        %v9196 = vld [vmem:[#allocation10 + $0x1fc] sm:$0xf]
        %v9197 = vld [vmem:[#allocation10 + $0x200] sm:$0xf]
        %v9198 = vld [vmem:[#allocation10 + $0x204] sm:$0xf]
        %v9199 = vld [vmem:[#allocation10 + $0x208] sm:$0xf]
        %v9200 = vld [vmem:[#allocation10 + $0x20c] sm:$0xf]
        %v9201 = vld [vmem:[#allocation10 + $0x210] sm:$0xf]
        %v9202 = vld [vmem:[#allocation10 + $0x214] sm:$0xf]
        %v9203 = vld [vmem:[#allocation10 + $0x218] sm:$0xf]
        %v9204 = vld [vmem:[#allocation10 + $0x21c] sm:$0xf]
        %v9205 = vld [vmem:[#allocation10 + $0x220] sm:$0xf]
        %v9206 = vld [vmem:[#allocation10 + $0x224] sm:$0xf]
        %v9207 = vld [vmem:[#allocation10 + $0x228] sm:$0xf]
        %v9208 = vld [vmem:[#allocation10 + $0x22c] sm:$0xf]
        %v9209 = vld [vmem:[#allocation10 + $0x230] sm:$0xf]
        %v9210 = vld [vmem:[#allocation10 + $0x234] sm:$0xf]
        %v9211 = vld [vmem:[#allocation10 + $0x238] sm:$0xf]
        %v9212 = vld [vmem:[#allocation10 + $0x23c] sm:$0xf]
        %v9373 = vunpack.c.l.b16 %v8909
        %v9374 = vunpack.c.h.b16 %v8909
        %v9375 = vunpack.c.l.b16 %v8910
        %v9376 = vunpack.c.h.b16 %v8910
        %v9377 = vunpack.c.l.b16 %v8911
        %v9378 = vunpack.c.h.b16 %v8911
        %v9379 = vunpack.c.l.b16 %v8912
        %v9380 = vunpack.c.h.b16 %v8912
        %v9381 = vunpack.c.l.b16 %v8913
        %v9382 = vunpack.c.l.b16 %v8914
        %v9383 = vunpack.c.h.b16 %v8914
        %v9384 = vunpack.c.l.b16 %v8915
        %v9385 = vunpack.c.h.b16 %v8915
        %v9386 = vunpack.c.l.b16 %v8916
        %v9387 = vunpack.c.h.b16 %v8916
        %v9388 = vunpack.c.l.b16 %v8917
        %v9389 = vunpack.c.h.b16 %v8917
        %v9390 = vunpack.c.l.b16 %v8918
        %v9391 = vunpack.c.l.b16 %v8919
        %v9392 = vunpack.c.h.b16 %v8919
        %v9393 = vunpack.c.l.b16 %v8920
        %v9394 = vunpack.c.h.b16 %v8920
        %v9395 = vunpack.c.l.b16 %v8921
        %v9396 = vunpack.c.h.b16 %v8921
        %v9397 = vunpack.c.l.b16 %v8922
        %v9398 = vunpack.c.h.b16 %v8922
        %v9399 = vunpack.c.l.b16 %v8923
        %v9400 = vunpack.c.l.b16 %v8924
        %v9401 = vunpack.c.h.b16 %v8924
        %v9402 = vunpack.c.l.b16 %v8925
        %v9403 = vunpack.c.h.b16 %v8925
        %v9404 = vunpack.c.l.b16 %v8926
        %v9405 = vunpack.c.h.b16 %v8926
        %v9406 = vunpack.c.l.b16 %v8927
        %v9407 = vunpack.c.h.b16 %v8927
        %v9408 = vunpack.c.l.b16 %v8928
        %v9409 = vunpack.c.l.b16 %v8929
        %v9410 = vunpack.c.h.b16 %v8929
        %v9411 = vunpack.c.l.b16 %v8930
        %v9412 = vunpack.c.h.b16 %v8930
        %v9413 = vunpack.c.l.b16 %v8931
        %v9414 = vunpack.c.h.b16 %v8931
        %v9415 = vunpack.c.l.b16 %v8932
        %v9416 = vunpack.c.h.b16 %v8932
        %v9417 = vunpack.c.l.b16 %v8933
        %v9418 = vunpack.c.l.b16 %v8934
        %v9419 = vunpack.c.h.b16 %v8934
        %v9420 = vunpack.c.l.b16 %v8935
        %v9421 = vunpack.c.h.b16 %v8935
        %v9422 = vunpack.c.l.b16 %v8936
        %v9423 = vunpack.c.h.b16 %v8936
        %v9424 = vunpack.c.l.b16 %v8937
        %v9425 = vunpack.c.h.b16 %v8937
        %v9426 = vunpack.c.l.b16 %v8938
        %v9427 = vunpack.c.l.b16 %v8939
        %v9428 = vunpack.c.h.b16 %v8939
        %v9429 = vunpack.c.l.b16 %v8940
        %v9430 = vunpack.c.h.b16 %v8940
        %v9431 = vunpack.c.l.b16 %v8941
        %v9432 = vunpack.c.h.b16 %v8941
        %v9433 = vunpack.c.l.b16 %v8942
        %v9434 = vunpack.c.h.b16 %v8942
        %v9435 = vunpack.c.l.b16 %v8943
        %v9436 = vunpack.c.l.b16 %v8944
        %v9437 = vunpack.c.h.b16 %v8944
        %v9438 = vunpack.c.l.b16 %v8945
        %v9439 = vunpack.c.h.b16 %v8945
        %v9440 = vunpack.c.l.b16 %v8946
        %v9441 = vunpack.c.h.b16 %v8946
        %v9442 = vunpack.c.l.b16 %v8947
        %v9443 = vunpack.c.h.b16 %v8947
        %v9444 = vunpack.c.l.b16 %v8948
        %v9445 = vunpack.c.l.b16 %v8949
        %v9446 = vunpack.c.h.b16 %v8949
        %v9447 = vunpack.c.l.b16 %v8950
        %v9448 = vunpack.c.h.b16 %v8950
        %v9449 = vunpack.c.l.b16 %v8951
        %v9450 = vunpack.c.h.b16 %v8951
        %v9451 = vunpack.c.l.b16 %v8952
        %v9452 = vunpack.c.h.b16 %v8952
        %v9453 = vunpack.c.l.b16 %v8953
        %v9454 = vunpack.c.l.b16 %v8954
        %v9455 = vunpack.c.h.b16 %v8954
        %v9456 = vunpack.c.l.b16 %v8955
        %v9457 = vunpack.c.h.b16 %v8955
        %v9458 = vunpack.c.l.b16 %v8956
        %v9459 = vunpack.c.h.b16 %v8956
        %v9460 = vunpack.c.l.b16 %v8957
        %v9461 = vunpack.c.h.b16 %v8957
        %v9462 = vunpack.c.l.b16 %v8958
        %v9463 = vunpack.c.l.b16 %v8959
        %v9464 = vunpack.c.h.b16 %v8959
        %v9465 = vunpack.c.l.b16 %v8960
        %v9466 = vunpack.c.h.b16 %v8960
        %v9467 = vunpack.c.l.b16 %v8961
        %v9468 = vunpack.c.h.b16 %v8961
        %v9469 = vunpack.c.l.b16 %v8962
        %v9470 = vunpack.c.h.b16 %v8962
        %v9471 = vunpack.c.l.b16 %v8963
        %v9472 = vunpack.c.l.b16 %v8964
        %v9473 = vunpack.c.h.b16 %v8964
        %v9474 = vunpack.c.l.b16 %v8965
        %v9475 = vunpack.c.h.b16 %v8965
        %v9476 = vunpack.c.l.b16 %v8966
        %v9477 = vunpack.c.h.b16 %v8966
        %v9478 = vunpack.c.l.b16 %v8967
        %v9479 = vunpack.c.h.b16 %v8967
        %v9480 = vunpack.c.l.b16 %v8968
        %v9481 = vunpack.c.l.b16 %v8969
        %v9482 = vunpack.c.h.b16 %v8969
        %v9483 = vunpack.c.l.b16 %v8970
        %v9484 = vunpack.c.h.b16 %v8970
        %v9485 = vunpack.c.l.b16 %v8971
        %v9486 = vunpack.c.h.b16 %v8971
        %v9487 = vunpack.c.l.b16 %v8972
        %v9488 = vunpack.c.h.b16 %v8972
        %v9489 = vunpack.c.l.b16 %v8973
        %v9490 = vunpack.c.l.b16 %v8974
        %v9491 = vunpack.c.h.b16 %v8974
        %v9492 = vunpack.c.l.b16 %v8975
        %v9493 = vunpack.c.h.b16 %v8975
        %v9494 = vunpack.c.l.b16 %v8976
        %v9495 = vunpack.c.h.b16 %v8976
        %v9496 = vunpack.c.l.b16 %v8977
        %v9497 = vunpack.c.h.b16 %v8977
        %v9498 = vunpack.c.l.b16 %v8978
        %v9499 = vunpack.c.l.b16 %v8979
        %v9500 = vunpack.c.h.b16 %v8979
        %v9501 = vunpack.c.l.b16 %v8980
        %v9502 = vunpack.c.h.b16 %v8980
        %v9503 = vunpack.c.l.b16 %v8981
        %v9504 = vunpack.c.h.b16 %v8981
        %v9505 = vunpack.c.l.b16 %v8982
        %v9506 = vunpack.c.h.b16 %v8982
        %v9507 = vunpack.c.l.b16 %v8983
        %v9508 = vunpack.c.l.b16 %v8984
        %v9509 = vunpack.c.h.b16 %v8984
        %v9510 = vunpack.c.l.b16 %v8985
        %v9511 = vunpack.c.h.b16 %v8985
        %v9512 = vunpack.c.l.b16 %v8986
        %v9513 = vunpack.c.h.b16 %v8986
        %v9514 = vunpack.c.l.b16 %v8987
        %v9515 = vunpack.c.h.b16 %v8987
        %v9516 = vunpack.c.l.b16 %v8988
        %v9517 = vunpack.c.l.b16 %v8989
        %v9518 = vunpack.c.h.b16 %v8989
        %v9519 = vunpack.c.l.b16 %v8990
        %v9520 = vunpack.c.h.b16 %v8990
        %v9521 = vunpack.c.l.b16 %v8991
        %v9522 = vunpack.c.h.b16 %v8991
        %v9523 = vunpack.c.l.b16 %v8992
        %v9524 = vunpack.c.h.b16 %v8992
        %v9525 = vunpack.c.l.b16 %v8993
        %v9526 = vunpack.c.l.b16 %v8994
        %v9527 = vunpack.c.h.b16 %v8994
        %v9528 = vunpack.c.l.b16 %v8995
        %v9529 = vunpack.c.h.b16 %v8995
        %v9530 = vunpack.c.l.b16 %v8996
        %v9531 = vunpack.c.h.b16 %v8996
        %v9532 = vunpack.c.l.b16 %v8997
        %v9533 = vunpack.c.h.b16 %v8997
        %v9534 = vunpack.c.l.b16 %v8998
        %v9535 = vunpack.c.l.b16 %v8999
        %v9536 = vunpack.c.h.b16 %v8999
        %v9537 = vunpack.c.l.b16 %v9000
        %v9538 = vunpack.c.h.b16 %v9000
        %v9539 = vunpack.c.l.b16 %v9001
        %v9540 = vunpack.c.h.b16 %v9001
        %v9541 = vunpack.c.l.b16 %v9002
        %v9542 = vunpack.c.h.b16 %v9002
        %v9543 = vunpack.c.l.b16 %v9003
        %v9544 = vunpack.c.l.b16 %v9004
        %v9545 = vunpack.c.h.b16 %v9004
        %v9546 = vunpack.c.l.b16 %v9005
        %v9547 = vunpack.c.h.b16 %v9005
        %v9548 = vunpack.c.l.b16 %v9006
        %v9549 = vunpack.c.h.b16 %v9006
        %v9550 = vunpack.c.l.b16 %v9007
        %v9551 = vunpack.c.h.b16 %v9007
        %v9552 = vunpack.c.l.b16 %v9008
        %v9553 = vunpack.c.l.b16 %v9009
        %v9554 = vunpack.c.h.b16 %v9009
        %v9555 = vunpack.c.l.b16 %v9010
        %v9556 = vunpack.c.h.b16 %v9010
        %v9557 = vunpack.c.l.b16 %v9011
        %v9558 = vunpack.c.h.b16 %v9011
        %v9559 = vunpack.c.l.b16 %v9012
        %v9560 = vunpack.c.h.b16 %v9012
        %v9561 = vunpack.c.l.b16 %v9013
        %v9562 = vunpack.c.l.b16 %v9014
        %v9563 = vunpack.c.h.b16 %v9014
        %v9564 = vunpack.c.l.b16 %v9015
        %v9565 = vunpack.c.h.b16 %v9015
        %v9566 = vunpack.c.l.b16 %v9016
        %v9567 = vunpack.c.h.b16 %v9016
        %v9568 = vunpack.c.l.b16 %v9017
        %v9569 = vunpack.c.h.b16 %v9017
        %v9570 = vunpack.c.l.b16 %v9018
        %v9571 = vunpack.c.l.b16 %v9019
        %v9572 = vunpack.c.h.b16 %v9019
        %v9573 = vunpack.c.l.b16 %v9020
        %v9574 = vunpack.c.h.b16 %v9020
        %v9575 = vunpack.c.l.b16 %v9021
        %v9576 = vunpack.c.h.b16 %v9021
        %v9577 = vunpack.c.l.b16 %v9022
        %v9578 = vunpack.c.h.b16 %v9022
        %v9579 = vunpack.c.l.b16 %v9023
        %v9580 = vunpack.c.l.b16 %v9024
        %v9581 = vunpack.c.h.b16 %v9024
        %v9582 = vunpack.c.l.b16 %v9025
        %v9583 = vunpack.c.h.b16 %v9025
        %v9584 = vunpack.c.l.b16 %v9026
        %v9585 = vunpack.c.h.b16 %v9026
        %v9586 = vunpack.c.l.b16 %v9027
        %v9587 = vunpack.c.h.b16 %v9027
        %v9588 = vunpack.c.l.b16 %v9028
        %v9589 = vunpack.c.l.b16 %v9029
        %v9590 = vunpack.c.h.b16 %v9029
        %v9591 = vunpack.c.l.b16 %v9030
        %v9592 = vunpack.c.h.b16 %v9030
        %v9593 = vunpack.c.l.b16 %v9031
        %v9594 = vunpack.c.h.b16 %v9031
        %v9595 = vunpack.c.l.b16 %v9032
        %v9596 = vunpack.c.h.b16 %v9032
        %v9597 = vunpack.c.l.b16 %v9033
        %v9598 = vunpack.c.l.b16 %v9034
        %v9599 = vunpack.c.h.b16 %v9034
        %v9600 = vunpack.c.l.b16 %v9035
        %v9601 = vunpack.c.h.b16 %v9035
        %v9602 = vunpack.c.l.b16 %v9036
        %v9603 = vunpack.c.h.b16 %v9036
        %v9604 = vunpack.c.l.b16 %v9037
        %v9605 = vunpack.c.h.b16 %v9037
        %v9606 = vunpack.c.l.b16 %v9038
        %v9607 = vunpack.c.l.b16 %v9039
        %v9608 = vunpack.c.h.b16 %v9039
        %v9609 = vunpack.c.l.b16 %v9040
        %v9610 = vunpack.c.h.b16 %v9040
        %v9611 = vunpack.c.l.b16 %v9041
        %v9612 = vunpack.c.h.b16 %v9041
        %v9613 = vunpack.c.l.b16 %v9042
        %v9614 = vunpack.c.h.b16 %v9042
        %v9615 = vunpack.c.l.b16 %v9043
        %v9616 = vunpack.c.l.b16 %v9044
        %v9617 = vunpack.c.h.b16 %v9044
        %v9618 = vunpack.c.l.b16 %v9045
        %v9619 = vunpack.c.h.b16 %v9045
        %v9620 = vunpack.c.l.b16 %v9046
        %v9621 = vunpack.c.h.b16 %v9046
        %v9622 = vunpack.c.l.b16 %v9047
        %v9623 = vunpack.c.h.b16 %v9047
        %v9624 = vunpack.c.l.b16 %v9048
        %v9625 = vunpack.c.l.b16 %v9049
        %v9626 = vunpack.c.h.b16 %v9049
        %v9627 = vunpack.c.l.b16 %v9050
        %v9628 = vunpack.c.h.b16 %v9050
        %v9629 = vunpack.c.l.b16 %v9051
        %v9630 = vunpack.c.h.b16 %v9051
        %v9631 = vunpack.c.l.b16 %v9052
        %v9632 = vunpack.c.h.b16 %v9052
        %v9633 = vunpack.c.l.b16 %v9053
        %v9634 = vunpack.c.l.b16 %v9054
        %v9635 = vunpack.c.h.b16 %v9054
        %v9636 = vunpack.c.l.b16 %v9055
        %v9637 = vunpack.c.h.b16 %v9055
        %v9638 = vunpack.c.l.b16 %v9056
        %v9639 = vunpack.c.h.b16 %v9056
        %v9640 = vunpack.c.l.b16 %v9057
        %v9641 = vunpack.c.h.b16 %v9057
        %v9642 = vunpack.c.l.b16 %v9058
        %v9643 = vunpack.c.l.b16 %v9059
        %v9644 = vunpack.c.h.b16 %v9059
        %v9645 = vunpack.c.l.b16 %v9060
        %v9646 = vunpack.c.h.b16 %v9060
        %v9647 = vunpack.c.l.b16 %v9061
        %v9648 = vunpack.c.h.b16 %v9061
        %v9649 = vunpack.c.l.b16 %v9062
        %v9650 = vunpack.c.h.b16 %v9062
        %v9651 = vunpack.c.l.b16 %v9063
        %v9652 = vunpack.c.l.b16 %v9064
        %v9653 = vunpack.c.h.b16 %v9064
        %v9654 = vunpack.c.l.b16 %v9065
        %v9655 = vunpack.c.h.b16 %v9065
        %v9656 = vunpack.c.l.b16 %v9066
        %v9657 = vunpack.c.h.b16 %v9066
        %v9658 = vunpack.c.l.b16 %v9067
        %v9659 = vunpack.c.h.b16 %v9067
        %v9660 = vunpack.c.l.b16 %v9068
        %v9661 = vpack.c.b16 %v9382, %v9373
        %v9662 = vpack.c.b16 %v9383, %v9374
        %v9663 = vpack.c.b16 %v9384, %v9375
        %v9664 = vpack.c.b16 %v9385, %v9376
        %v9665 = vpack.c.b16 %v9386, %v9377
        %v9666 = vpack.c.b16 %v9387, %v9378
        %v9667 = vpack.c.b16 %v9388, %v9379
        %v9668 = vpack.c.b16 %v9389, %v9380
        %v9669 = vpack.c.b16 %v9390, %v9381
        %v9670 = vpack.c.b16 %v9400, %v9391
        %v9671 = vpack.c.b16 %v9401, %v9392
        %v9672 = vpack.c.b16 %v9402, %v9393
        %v9673 = vpack.c.b16 %v9403, %v9394
        %v9674 = vpack.c.b16 %v9404, %v9395
        %v9675 = vpack.c.b16 %v9405, %v9396
        %v9676 = vpack.c.b16 %v9406, %v9397
        %v9677 = vpack.c.b16 %v9407, %v9398
        %v9678 = vpack.c.b16 %v9408, %v9399
        %v9679 = vpack.c.b16 %v9418, %v9409
        %v9680 = vpack.c.b16 %v9419, %v9410
        %v9681 = vpack.c.b16 %v9420, %v9411
        %v9682 = vpack.c.b16 %v9421, %v9412
        %v9683 = vpack.c.b16 %v9422, %v9413
        %v9684 = vpack.c.b16 %v9423, %v9414
        %v9685 = vpack.c.b16 %v9424, %v9415
        %v9686 = vpack.c.b16 %v9425, %v9416
        %v9687 = vpack.c.b16 %v9426, %v9417
        %v9688 = vpack.c.b16 %v9436, %v9427
        %v9689 = vpack.c.b16 %v9437, %v9428
        %v9690 = vpack.c.b16 %v9438, %v9429
        %v9691 = vpack.c.b16 %v9439, %v9430
        %v9692 = vpack.c.b16 %v9440, %v9431
        %v9693 = vpack.c.b16 %v9441, %v9432
        %v9694 = vpack.c.b16 %v9442, %v9433
        %v9695 = vpack.c.b16 %v9443, %v9434
        %v9696 = vpack.c.b16 %v9444, %v9435
        %v9697 = vpack.c.b16 %v9454, %v9445
        %v9698 = vpack.c.b16 %v9455, %v9446
        %v9699 = vpack.c.b16 %v9456, %v9447
        %v9700 = vpack.c.b16 %v9457, %v9448
        %v9701 = vpack.c.b16 %v9458, %v9449
        %v9702 = vpack.c.b16 %v9459, %v9450
        %v9703 = vpack.c.b16 %v9460, %v9451
        %v9704 = vpack.c.b16 %v9461, %v9452
        %v9705 = vpack.c.b16 %v9462, %v9453
        %v9706 = vpack.c.b16 %v9472, %v9463
        %v9707 = vpack.c.b16 %v9473, %v9464
        %v9708 = vpack.c.b16 %v9474, %v9465
        %v9709 = vpack.c.b16 %v9475, %v9466
        %v9710 = vpack.c.b16 %v9476, %v9467
        %v9711 = vpack.c.b16 %v9477, %v9468
        %v9712 = vpack.c.b16 %v9478, %v9469
        %v9713 = vpack.c.b16 %v9479, %v9470
        %v9714 = vpack.c.b16 %v9480, %v9471
        %v9715 = vpack.c.b16 %v9490, %v9481
        %v9716 = vpack.c.b16 %v9491, %v9482
        %v9717 = vpack.c.b16 %v9492, %v9483
        %v9718 = vpack.c.b16 %v9493, %v9484
        %v9719 = vpack.c.b16 %v9494, %v9485
        %v9720 = vpack.c.b16 %v9495, %v9486
        %v9721 = vpack.c.b16 %v9496, %v9487
        %v9722 = vpack.c.b16 %v9497, %v9488
        %v9723 = vpack.c.b16 %v9498, %v9489
        %v9724 = vpack.c.b16 %v9508, %v9499
        %v9725 = vpack.c.b16 %v9509, %v9500
        %v9726 = vpack.c.b16 %v9510, %v9501
        %v9727 = vpack.c.b16 %v9511, %v9502
        %v9728 = vpack.c.b16 %v9512, %v9503
        %v9729 = vpack.c.b16 %v9513, %v9504
        %v9730 = vpack.c.b16 %v9514, %v9505
        %v9731 = vpack.c.b16 %v9515, %v9506
        %v9732 = vpack.c.b16 %v9516, %v9507
        %v9733 = vpack.c.b16 %v9526, %v9517
        %v9734 = vpack.c.b16 %v9527, %v9518
        %v9735 = vpack.c.b16 %v9528, %v9519
        %v9736 = vpack.c.b16 %v9529, %v9520
        %v9737 = vpack.c.b16 %v9530, %v9521
        %v9738 = vpack.c.b16 %v9531, %v9522
        %v9739 = vpack.c.b16 %v9532, %v9523
        %v9740 = vpack.c.b16 %v9533, %v9524
        %v9741 = vpack.c.b16 %v9534, %v9525
        %v9742 = vpack.c.b16 %v9544, %v9535
        %v9743 = vpack.c.b16 %v9545, %v9536
        %v9744 = vpack.c.b16 %v9546, %v9537
        %v9745 = vpack.c.b16 %v9547, %v9538
        %v9746 = vpack.c.b16 %v9548, %v9539
        %v9747 = vpack.c.b16 %v9549, %v9540
        %v9748 = vpack.c.b16 %v9550, %v9541
        %v9749 = vpack.c.b16 %v9551, %v9542
        %v9750 = vpack.c.b16 %v9552, %v9543
        %v9751 = vpack.c.b16 %v9562, %v9553
        %v9752 = vpack.c.b16 %v9563, %v9554
        %v9753 = vpack.c.b16 %v9564, %v9555
        %v9754 = vpack.c.b16 %v9565, %v9556
        %v9755 = vpack.c.b16 %v9566, %v9557
        %v9756 = vpack.c.b16 %v9567, %v9558
        %v9757 = vpack.c.b16 %v9568, %v9559
        %v9758 = vpack.c.b16 %v9569, %v9560
        %v9759 = vpack.c.b16 %v9570, %v9561
        %v9760 = vpack.c.b16 %v9580, %v9571
        %v9761 = vpack.c.b16 %v9581, %v9572
        %v9762 = vpack.c.b16 %v9582, %v9573
        %v9763 = vpack.c.b16 %v9583, %v9574
        %v9764 = vpack.c.b16 %v9584, %v9575
        %v9765 = vpack.c.b16 %v9585, %v9576
        %v9766 = vpack.c.b16 %v9586, %v9577
        %v9767 = vpack.c.b16 %v9587, %v9578
        %v9768 = vpack.c.b16 %v9588, %v9579
        %v9769 = vpack.c.b16 %v9598, %v9589
        %v9770 = vpack.c.b16 %v9599, %v9590
        %v9771 = vpack.c.b16 %v9600, %v9591
        %v9772 = vpack.c.b16 %v9601, %v9592
        %v9773 = vpack.c.b16 %v9602, %v9593
        %v9774 = vpack.c.b16 %v9603, %v9594
        %v9775 = vpack.c.b16 %v9604, %v9595
        %v9776 = vpack.c.b16 %v9605, %v9596
        %v9777 = vpack.c.b16 %v9606, %v9597
        %v9778 = vpack.c.b16 %v9616, %v9607
        %v9779 = vpack.c.b16 %v9617, %v9608
        %v9780 = vpack.c.b16 %v9618, %v9609
        %v9781 = vpack.c.b16 %v9619, %v9610
        %v9782 = vpack.c.b16 %v9620, %v9611
        %v9783 = vpack.c.b16 %v9621, %v9612
        %v9784 = vpack.c.b16 %v9622, %v9613
        %v9785 = vpack.c.b16 %v9623, %v9614
        %v9786 = vpack.c.b16 %v9624, %v9615
        %v9787 = vpack.c.b16 %v9634, %v9625
        %v9788 = vpack.c.b16 %v9635, %v9626
        %v9789 = vpack.c.b16 %v9636, %v9627
        %v9790 = vpack.c.b16 %v9637, %v9628
        %v9791 = vpack.c.b16 %v9638, %v9629
        %v9792 = vpack.c.b16 %v9639, %v9630
        %v9793 = vpack.c.b16 %v9640, %v9631
        %v9794 = vpack.c.b16 %v9641, %v9632
        %v9795 = vpack.c.b16 %v9642, %v9633
        %v9796 = vpack.c.b16 %v9652, %v9643
        %v9797 = vpack.c.b16 %v9653, %v9644
        %v9798 = vpack.c.b16 %v9654, %v9645
        %v9799 = vpack.c.b16 %v9655, %v9646
        %v9800 = vpack.c.b16 %v9656, %v9647
        %v9801 = vpack.c.b16 %v9657, %v9648
        %v9802 = vpack.c.b16 %v9658, %v9649
        %v9803 = vpack.c.b16 %v9659, %v9650
        %v9804 = vpack.c.b16 %v9660, %v9651
        %v10093 = vunpack.c.l.b16 %v9069
        %v10094 = vunpack.c.l.b16 %v9070
        %v10095 = vunpack.c.l.b16 %v9071
        %v10096 = vunpack.c.l.b16 %v9072
        %v10097 = vunpack.c.l.b16 %v9073
        %v10098 = vunpack.c.l.b16 %v9074
        %v10099 = vunpack.c.l.b16 %v9075
        %v10100 = vunpack.c.l.b16 %v9076
        %v10101 = vunpack.c.l.b16 %v9077
        %v10102 = vunpack.c.l.b16 %v9078
        %v10103 = vunpack.c.l.b16 %v9079
        %v10104 = vunpack.c.l.b16 %v9080
        %v10105 = vunpack.c.l.b16 %v9081
        %v10106 = vunpack.c.l.b16 %v9082
        %v10107 = vunpack.c.l.b16 %v9083
        %v10108 = vunpack.c.l.b16 %v9084
        %v10109 = vunpack.c.l.b16 %v9085
        %v10110 = vunpack.c.l.b16 %v9086
        %v10111 = vunpack.c.l.b16 %v9087
        %v10112 = vunpack.c.l.b16 %v9088
        %v10113 = vunpack.c.l.b16 %v9089
        %v10114 = vunpack.c.l.b16 %v9090
        %v10115 = vunpack.c.l.b16 %v9091
        %v10116 = vunpack.c.l.b16 %v9092
        %v10117 = vunpack.c.l.b16 %v9093
        %v10118 = vunpack.c.l.b16 %v9094
        %v10119 = vunpack.c.l.b16 %v9095
        %v10120 = vunpack.c.l.b16 %v9096
        %v10121 = vunpack.c.l.b16 %v9097
        %v10122 = vunpack.c.l.b16 %v9098
        %v10123 = vunpack.c.l.b16 %v9099
        %v10124 = vunpack.c.l.b16 %v9100
        %v10125 = vunpack.c.l.b16 %v9101
        %v10126 = vunpack.c.l.b16 %v9102
        %v10127 = vunpack.c.l.b16 %v9103
        %v10128 = vunpack.c.l.b16 %v9104
        %v10129 = vunpack.c.l.b16 %v9105
        %v10130 = vunpack.c.l.b16 %v9106
        %v10131 = vunpack.c.l.b16 %v9107
        %v10132 = vunpack.c.l.b16 %v9108
        %v10133 = vunpack.c.l.b16 %v9109
        %v10134 = vunpack.c.l.b16 %v9110
        %v10135 = vunpack.c.l.b16 %v9111
        %v10136 = vunpack.c.l.b16 %v9112
        %v10137 = vunpack.c.l.b16 %v9113
        %v10138 = vunpack.c.l.b16 %v9114
        %v10139 = vunpack.c.l.b16 %v9115
        %v10140 = vunpack.c.l.b16 %v9116
        %v10141 = vunpack.c.l.b16 %v9117
        %v10142 = vunpack.c.l.b16 %v9118
        %v10143 = vunpack.c.l.b16 %v9119
        %v10144 = vunpack.c.l.b16 %v9120
        %v10145 = vunpack.c.l.b16 %v9121
        %v10146 = vunpack.c.l.b16 %v9122
        %v10147 = vunpack.c.l.b16 %v9123
        %v10148 = vunpack.c.l.b16 %v9124
        %v10149 = vunpack.c.l.b16 %v9125
        %v10150 = vunpack.c.l.b16 %v9126
        %v10151 = vunpack.c.l.b16 %v9127
        %v10152 = vunpack.c.l.b16 %v9128
        %v10153 = vunpack.c.l.b16 %v9129
        %v10154 = vunpack.c.l.b16 %v9130
        %v10155 = vunpack.c.l.b16 %v9131
        %v10156 = vunpack.c.l.b16 %v9132
        %v10157 = vunpack.c.l.b16 %v9133
        %v10158 = vunpack.c.l.b16 %v9134
        %v10159 = vunpack.c.l.b16 %v9135
        %v10160 = vunpack.c.l.b16 %v9136
        %v10161 = vunpack.c.l.b16 %v9137
        %v10162 = vunpack.c.l.b16 %v9138
        %v10163 = vunpack.c.l.b16 %v9139
        %v10164 = vunpack.c.l.b16 %v9140
        %v10165 = vunpack.c.l.b16 %v9141
        %v10166 = vunpack.c.l.b16 %v9142
        %v10167 = vunpack.c.l.b16 %v9143
        %v10168 = vunpack.c.l.b16 %v9144
        %v10169 = vunpack.c.l.b16 %v9145
        %v10170 = vunpack.c.l.b16 %v9146
        %v10171 = vunpack.c.l.b16 %v9147
        %v10172 = vunpack.c.l.b16 %v9148
        %v10173 = vunpack.c.l.b16 %v9149
        %v10174 = vunpack.c.l.b16 %v9150
        %v10175 = vunpack.c.l.b16 %v9151
        %v10176 = vunpack.c.l.b16 %v9152
        %v10177 = vunpack.c.l.b16 %v9153
        %v10178 = vunpack.c.l.b16 %v9154
        %v10179 = vunpack.c.l.b16 %v9155
        %v10180 = vunpack.c.l.b16 %v9156
        %v10181 = vunpack.c.l.b16 %v9157
        %v10182 = vunpack.c.l.b16 %v9158
        %v10183 = vunpack.c.l.b16 %v9159
        %v10184 = vunpack.c.l.b16 %v9160
        %v10185 = vunpack.c.l.b16 %v9161
        %v10186 = vunpack.c.l.b16 %v9162
        %v10187 = vunpack.c.l.b16 %v9163
        %v10188 = vunpack.c.l.b16 %v9164
        %v10189 = vunpack.c.l.b16 %v9165
        %v10190 = vunpack.c.l.b16 %v9166
        %v10191 = vunpack.c.l.b16 %v9167
        %v10192 = vunpack.c.l.b16 %v9168
        %v10193 = vunpack.c.l.b16 %v9169
        %v10194 = vunpack.c.l.b16 %v9170
        %v10195 = vunpack.c.l.b16 %v9171
        %v10196 = vunpack.c.l.b16 %v9172
        %v10197 = vunpack.c.l.b16 %v9173
        %v10198 = vunpack.c.l.b16 %v9174
        %v10199 = vunpack.c.l.b16 %v9175
        %v10200 = vunpack.c.l.b16 %v9176
        %v10201 = vunpack.c.l.b16 %v9177
        %v10202 = vunpack.c.l.b16 %v9178
        %v10203 = vunpack.c.l.b16 %v9179
        %v10204 = vunpack.c.l.b16 %v9180
        %v10205 = vunpack.c.l.b16 %v9181
        %v10206 = vunpack.c.l.b16 %v9182
        %v10207 = vunpack.c.l.b16 %v9183
        %v10208 = vunpack.c.l.b16 %v9184
        %v10209 = vunpack.c.l.b16 %v9185
        %v10210 = vunpack.c.l.b16 %v9186
        %v10211 = vunpack.c.l.b16 %v9187
        %v10212 = vunpack.c.l.b16 %v9188
        %v10213 = vunpack.c.l.b16 %v9189
        %v10214 = vunpack.c.l.b16 %v9190
        %v10215 = vunpack.c.l.b16 %v9191
        %v10216 = vunpack.c.l.b16 %v9192
        %v10217 = vunpack.c.l.b16 %v9193
        %v10218 = vunpack.c.l.b16 %v9194
        %v10219 = vunpack.c.l.b16 %v9195
        %v10220 = vunpack.c.l.b16 %v9196
        %v10221 = vunpack.c.l.b16 %v9197
        %v10222 = vunpack.c.l.b16 %v9198
        %v10223 = vunpack.c.l.b16 %v9199
        %v10224 = vunpack.c.l.b16 %v9200
        %v10225 = vunpack.c.l.b16 %v9201
        %v10226 = vunpack.c.l.b16 %v9202
        %v10227 = vunpack.c.l.b16 %v9203
        %v10228 = vunpack.c.l.b16 %v9204
        %v10229 = vunpack.c.l.b16 %v9205
        %v10230 = vunpack.c.l.b16 %v9206
        %v10231 = vunpack.c.l.b16 %v9207
        %v10232 = vunpack.c.l.b16 %v9208
        %v10233 = vunpack.c.l.b16 %v9209
        %v10234 = vunpack.c.l.b16 %v9210
        %v10235 = vunpack.c.l.b16 %v9211
        %v10236 = vunpack.c.l.b16 %v9212
        %v10237 = vpack.c.b16 %v10094, %v10093
        %v10238 = vpack.c.b16 %v10096, %v10095
        %v10239 = vpack.c.b16 %v10098, %v10097
        %v10240 = vpack.c.b16 %v10100, %v10099
        %v10241 = vpack.c.b16 %v10102, %v10101
        %v10242 = vpack.c.b16 %v10104, %v10103
        %v10243 = vpack.c.b16 %v10106, %v10105
        %v10244 = vpack.c.b16 %v10108, %v10107
        %v10245 = vpack.c.b16 %v10110, %v10109
        %v10246 = vpack.c.b16 %v10112, %v10111
        %v10247 = vpack.c.b16 %v10114, %v10113
        %v10248 = vpack.c.b16 %v10116, %v10115
        %v10249 = vpack.c.b16 %v10118, %v10117
        %v10250 = vpack.c.b16 %v10120, %v10119
        %v10251 = vpack.c.b16 %v10122, %v10121
        %v10252 = vpack.c.b16 %v10124, %v10123
        %v10253 = vpack.c.b16 %v10126, %v10125
        %v10254 = vpack.c.b16 %v10128, %v10127
        %v10255 = vpack.c.b16 %v10130, %v10129
        %v10256 = vpack.c.b16 %v10132, %v10131
        %v10257 = vpack.c.b16 %v10134, %v10133
        %v10258 = vpack.c.b16 %v10136, %v10135
        %v10259 = vpack.c.b16 %v10138, %v10137
        %v10260 = vpack.c.b16 %v10140, %v10139
        %v10261 = vpack.c.b16 %v10142, %v10141
        %v10262 = vpack.c.b16 %v10144, %v10143
        %v10263 = vpack.c.b16 %v10146, %v10145
        %v10264 = vpack.c.b16 %v10148, %v10147
        %v10265 = vpack.c.b16 %v10150, %v10149
        %v10266 = vpack.c.b16 %v10152, %v10151
        %v10267 = vpack.c.b16 %v10154, %v10153
        %v10268 = vpack.c.b16 %v10156, %v10155
        %v10269 = vpack.c.b16 %v10158, %v10157
        %v10270 = vpack.c.b16 %v10160, %v10159
        %v10271 = vpack.c.b16 %v10162, %v10161
        %v10272 = vpack.c.b16 %v10164, %v10163
        %v10273 = vpack.c.b16 %v10166, %v10165
        %v10274 = vpack.c.b16 %v10168, %v10167
        %v10275 = vpack.c.b16 %v10170, %v10169
        %v10276 = vpack.c.b16 %v10172, %v10171
        %v10277 = vpack.c.b16 %v10174, %v10173
        %v10278 = vpack.c.b16 %v10176, %v10175
        %v10279 = vpack.c.b16 %v10178, %v10177
        %v10280 = vpack.c.b16 %v10180, %v10179
        %v10281 = vpack.c.b16 %v10182, %v10181
        %v10282 = vpack.c.b16 %v10184, %v10183
        %v10283 = vpack.c.b16 %v10186, %v10185
        %v10284 = vpack.c.b16 %v10188, %v10187
        %v10285 = vpack.c.b16 %v10190, %v10189
        %v10286 = vpack.c.b16 %v10192, %v10191
        %v10287 = vpack.c.b16 %v10194, %v10193
        %v10288 = vpack.c.b16 %v10196, %v10195
        %v10289 = vpack.c.b16 %v10198, %v10197
        %v10290 = vpack.c.b16 %v10200, %v10199
        %v10291 = vpack.c.b16 %v10202, %v10201
        %v10292 = vpack.c.b16 %v10204, %v10203
        %v10293 = vpack.c.b16 %v10206, %v10205
        %v10294 = vpack.c.b16 %v10208, %v10207
        %v10295 = vpack.c.b16 %v10210, %v10209
        %v10296 = vpack.c.b16 %v10212, %v10211
        %v10297 = vpack.c.b16 %v10214, %v10213
        %v10298 = vpack.c.b16 %v10216, %v10215
        %v10299 = vpack.c.b16 %v10218, %v10217
        %v10300 = vpack.c.b16 %v10220, %v10219
        %v10301 = vpack.c.b16 %v10222, %v10221
        %v10302 = vpack.c.b16 %v10224, %v10223
        %v10303 = vpack.c.b16 %v10226, %v10225
        %v10304 = vpack.c.b16 %v10228, %v10227
        %v10305 = vpack.c.b16 %v10230, %v10229
        %v10306 = vpack.c.b16 %v10232, %v10231
        %v10307 = vpack.c.b16 %v10234, %v10233
        %v10308 = vpack.c.b16 %v10236, %v10235
        %10381 = vmatpush.bf16.msra.mxu0 %v10244
        %10382 = vmatpush.bf16.msra.mxu0 %v10243
        %10383 = vmatpush.bf16.msra.mxu0 %v10242
        %10384 = vmatpush.bf16.msra.mxu0 %v10241
        %10385 = vmatpush.bf16.msra.mxu0 %v10240
        %10386 = vmatpush.bf16.msra.mxu0 %v10239
        %10387 = vmatpush.bf16.msra.mxu0 %v10238
        %10388 = vmatpush.bf16.msra.mxu0 %v10237
        %10389 = vmatmul.bf16.gmra.mxu0 %v9661
        %v10390 = vpop.f32.mrf.mxu0
        %v10391 = vadd.f32 0.0, %v10390
        %v10392 = vpop.f32.mrf.mxu0
        %v10393 = vadd.f32 0.0, %v10392
        %10394 = vmatmul.bf16.gmra.mxu0 %v9670
        %v10395 = vpop.f32.mrf.mxu0
        %v10396 = vadd.f32 0.0, %v10395
        %v10397 = vpop.f32.mrf.mxu0
        %v10398 = vadd.f32 0.0, %v10397
        %10399 = vmatmul.bf16.gmra.mxu0 %v9679
        %v10400 = vpop.f32.mrf.mxu0
        %v10401 = vadd.f32 0.0, %v10400
        %v10402 = vpop.f32.mrf.mxu0
        %v10403 = vadd.f32 0.0, %v10402
        %10404 = vmatmul.bf16.gmra.mxu0 %v9688
        %v10405 = vpop.f32.mrf.mxu0
        %v10406 = vadd.f32 0.0, %v10405
        %v10407 = vpop.f32.mrf.mxu0
        %v10408 = vadd.f32 0.0, %v10407
        %10409 = vmatmul.bf16.gmra.mxu0 %v9697
        %v10410 = vpop.f32.mrf.mxu0
        %v10411 = vadd.f32 0.0, %v10410
        %v10412 = vpop.f32.mrf.mxu0
        %v10413 = vadd.f32 0.0, %v10412
        %10414 = vmatmul.bf16.gmra.mxu0 %v9706
        %v10415 = vpop.f32.mrf.mxu0
        %v10416 = vadd.f32 0.0, %v10415
        %v10417 = vpop.f32.mrf.mxu0
        %v10418 = vadd.f32 0.0, %v10417
        %10419 = vmatmul.bf16.gmra.mxu0 %v9715
        %v10420 = vpop.f32.mrf.mxu0
        %v10421 = vadd.f32 0.0, %v10420
        %v10422 = vpop.f32.mrf.mxu0
        %v10423 = vadd.f32 0.0, %v10422
        %10424 = vmatmul.bf16.gmra.mxu0 %v9724
        %v10425 = vpop.f32.mrf.mxu0
        %v10426 = vadd.f32 0.0, %v10425
        %v10427 = vpop.f32.mrf.mxu0
        %v10428 = vadd.f32 0.0, %v10427
        %10429 = vmatmul.bf16.gmra.mxu0 %v9733
        %v10430 = vpop.f32.mrf.mxu0
        %v10431 = vadd.f32 0.0, %v10430
        %v10432 = vpop.f32.mrf.mxu0
        %v10433 = vadd.f32 0.0, %v10432
        %10434 = vmatmul.bf16.gmra.mxu0 %v9742
        %v10435 = vpop.f32.mrf.mxu0
        %v10436 = vadd.f32 0.0, %v10435
        %v10437 = vpop.f32.mrf.mxu0
        %v10438 = vadd.f32 0.0, %v10437
        %10439 = vmatmul.bf16.gmra.mxu0 %v9751
        %v10440 = vpop.f32.mrf.mxu0
        %v10441 = vadd.f32 0.0, %v10440
        %v10442 = vpop.f32.mrf.mxu0
        %v10443 = vadd.f32 0.0, %v10442
        %10444 = vmatmul.bf16.gmra.mxu0 %v9760
        %v10445 = vpop.f32.mrf.mxu0
        %v10446 = vadd.f32 0.0, %v10445
        %v10447 = vpop.f32.mrf.mxu0
        %v10448 = vadd.f32 0.0, %v10447
        %10449 = vmatmul.bf16.gmra.mxu0 %v9769
        %v10450 = vpop.f32.mrf.mxu0
        %v10451 = vadd.f32 0.0, %v10450
        %v10452 = vpop.f32.mrf.mxu0
        %v10453 = vadd.f32 0.0, %v10452
        %10454 = vmatmul.bf16.gmra.mxu0 %v9778
        %v10455 = vpop.f32.mrf.mxu0
        %v10456 = vadd.f32 0.0, %v10455
        %v10457 = vpop.f32.mrf.mxu0
        %v10458 = vadd.f32 0.0, %v10457
        %10459 = vmatmul.bf16.gmra.mxu0 %v9787
        %v10460 = vpop.f32.mrf.mxu0
        %v10461 = vadd.f32 0.0, %v10460
        %v10462 = vpop.f32.mrf.mxu0
        %v10463 = vadd.f32 0.0, %v10462
        %10464 = vmatmul.bf16.gmra.mxu0 %v9796
        %v10465 = vpop.f32.mrf.mxu0
        %v10466 = vadd.f32 0.0, %v10465
        %v10467 = vpop.f32.mrf.mxu0
        %v10468 = vadd.f32 0.0, %v10467
        %10469 = vdwg.mxu0
        %10470 = vmatpush.bf16.msra.mxu0 %v10252
        %10471 = vmatpush.bf16.msra.mxu0 %v10251
        %10472 = vmatpush.bf16.msra.mxu0 %v10250
        %10473 = vmatpush.bf16.msra.mxu0 %v10249
        %10474 = vmatpush.bf16.msra.mxu0 %v10248
        %10475 = vmatpush.bf16.msra.mxu0 %v10247
        %10476 = vmatpush.bf16.msra.mxu0 %v10246
        %10477 = vmatpush.bf16.msra.mxu0 %v10245
        %10478 = vmatmul.bf16.gmra.mxu0 %v9662
        %v10479 = vpop.f32.mrf.mxu0
        %v10480 = vadd.f32 %v10391, %v10479
        %v10481 = vpop.f32.mrf.mxu0
        %v10482 = vadd.f32 %v10393, %v10481
        %10483 = vmatmul.bf16.gmra.mxu0 %v9671
        %v10484 = vpop.f32.mrf.mxu0
        %v10485 = vadd.f32 %v10396, %v10484
        %v10486 = vpop.f32.mrf.mxu0
        %v10487 = vadd.f32 %v10398, %v10486
        %10488 = vmatmul.bf16.gmra.mxu0 %v9680
        %v10489 = vpop.f32.mrf.mxu0
        %v10490 = vadd.f32 %v10401, %v10489
        %v10491 = vpop.f32.mrf.mxu0
        %v10492 = vadd.f32 %v10403, %v10491
        %10493 = vmatmul.bf16.gmra.mxu0 %v9689
        %v10494 = vpop.f32.mrf.mxu0
        %v10495 = vadd.f32 %v10406, %v10494
        %v10496 = vpop.f32.mrf.mxu0
        %v10497 = vadd.f32 %v10408, %v10496
        %10498 = vmatmul.bf16.gmra.mxu0 %v9698
        %v10499 = vpop.f32.mrf.mxu0
        %v10500 = vadd.f32 %v10411, %v10499
        %v10501 = vpop.f32.mrf.mxu0
        %v10502 = vadd.f32 %v10413, %v10501
        %10503 = vmatmul.bf16.gmra.mxu0 %v9707
        %v10504 = vpop.f32.mrf.mxu0
        %v10505 = vadd.f32 %v10416, %v10504
        %v10506 = vpop.f32.mrf.mxu0
        %v10507 = vadd.f32 %v10418, %v10506
        %10508 = vmatmul.bf16.gmra.mxu0 %v9716
        %v10509 = vpop.f32.mrf.mxu0
        %v10510 = vadd.f32 %v10421, %v10509
        %v10511 = vpop.f32.mrf.mxu0
        %v10512 = vadd.f32 %v10423, %v10511
        %10513 = vmatmul.bf16.gmra.mxu0 %v9725
        %v10514 = vpop.f32.mrf.mxu0
        %v10515 = vadd.f32 %v10426, %v10514
        %v10516 = vpop.f32.mrf.mxu0
        %v10517 = vadd.f32 %v10428, %v10516
        %10518 = vmatmul.bf16.gmra.mxu0 %v9734
        %v10519 = vpop.f32.mrf.mxu0
        %v10520 = vadd.f32 %v10431, %v10519
        %v10521 = vpop.f32.mrf.mxu0
        %v10522 = vadd.f32 %v10433, %v10521
        %10523 = vmatmul.bf16.gmra.mxu0 %v9743
        %v10524 = vpop.f32.mrf.mxu0
        %v10525 = vadd.f32 %v10436, %v10524
        %v10526 = vpop.f32.mrf.mxu0
        %v10527 = vadd.f32 %v10438, %v10526
        %10528 = vmatmul.bf16.gmra.mxu0 %v9752
        %v10529 = vpop.f32.mrf.mxu0
        %v10530 = vadd.f32 %v10441, %v10529
        %v10531 = vpop.f32.mrf.mxu0
        %v10532 = vadd.f32 %v10443, %v10531
        %10533 = vmatmul.bf16.gmra.mxu0 %v9761
        %v10534 = vpop.f32.mrf.mxu0
        %v10535 = vadd.f32 %v10446, %v10534
        %v10536 = vpop.f32.mrf.mxu0
        %v10537 = vadd.f32 %v10448, %v10536
        %10538 = vmatmul.bf16.gmra.mxu0 %v9770
        %v10539 = vpop.f32.mrf.mxu0
        %v10540 = vadd.f32 %v10451, %v10539
        %v10541 = vpop.f32.mrf.mxu0
        %v10542 = vadd.f32 %v10453, %v10541
        %10543 = vmatmul.bf16.gmra.mxu0 %v9779
        %v10544 = vpop.f32.mrf.mxu0
        %v10545 = vadd.f32 %v10456, %v10544
        %v10546 = vpop.f32.mrf.mxu0
        %v10547 = vadd.f32 %v10458, %v10546
        %10548 = vmatmul.bf16.gmra.mxu0 %v9788
        %v10549 = vpop.f32.mrf.mxu0
        %v10550 = vadd.f32 %v10461, %v10549
        %v10551 = vpop.f32.mrf.mxu0
        %v10552 = vadd.f32 %v10463, %v10551
        %10553 = vmatmul.bf16.gmra.mxu0 %v9797
        %v10554 = vpop.f32.mrf.mxu0
        %v10555 = vadd.f32 %v10466, %v10554
        %v10556 = vpop.f32.mrf.mxu0
        %v10557 = vadd.f32 %v10468, %v10556
        %10558 = vdwg.mxu0
        %10559 = vmatpush.bf16.msra.mxu0 %v10260
        %10560 = vmatpush.bf16.msra.mxu0 %v10259
        %10561 = vmatpush.bf16.msra.mxu0 %v10258
        %10562 = vmatpush.bf16.msra.mxu0 %v10257
        %10563 = vmatpush.bf16.msra.mxu0 %v10256
        %10564 = vmatpush.bf16.msra.mxu0 %v10255
        %10565 = vmatpush.bf16.msra.mxu0 %v10254
        %10566 = vmatpush.bf16.msra.mxu0 %v10253
        %10567 = vmatmul.bf16.gmra.mxu0 %v9663
        %v10568 = vpop.f32.mrf.mxu0
        %v10569 = vadd.f32 %v10480, %v10568
        %v10570 = vpop.f32.mrf.mxu0
        %v10571 = vadd.f32 %v10482, %v10570
        %10572 = vmatmul.bf16.gmra.mxu0 %v9672
        %v10573 = vpop.f32.mrf.mxu0
        %v10574 = vadd.f32 %v10485, %v10573
        %v10575 = vpop.f32.mrf.mxu0
        %v10576 = vadd.f32 %v10487, %v10575
        %10577 = vmatmul.bf16.gmra.mxu0 %v9681
        %v10578 = vpop.f32.mrf.mxu0
        %v10579 = vadd.f32 %v10490, %v10578
        %v10580 = vpop.f32.mrf.mxu0
        %v10581 = vadd.f32 %v10492, %v10580
        %10582 = vmatmul.bf16.gmra.mxu0 %v9690
        %v10583 = vpop.f32.mrf.mxu0
        %v10584 = vadd.f32 %v10495, %v10583
        %v10585 = vpop.f32.mrf.mxu0
        %v10586 = vadd.f32 %v10497, %v10585
        %10587 = vmatmul.bf16.gmra.mxu0 %v9699
        %v10588 = vpop.f32.mrf.mxu0
        %v10589 = vadd.f32 %v10500, %v10588
        %v10590 = vpop.f32.mrf.mxu0
        %v10591 = vadd.f32 %v10502, %v10590
        %10592 = vmatmul.bf16.gmra.mxu0 %v9708
        %v10593 = vpop.f32.mrf.mxu0
        %v10594 = vadd.f32 %v10505, %v10593
        %v10595 = vpop.f32.mrf.mxu0
        %v10596 = vadd.f32 %v10507, %v10595
        %10597 = vmatmul.bf16.gmra.mxu0 %v9717
        %v10598 = vpop.f32.mrf.mxu0
        %v10599 = vadd.f32 %v10510, %v10598
        %v10600 = vpop.f32.mrf.mxu0
        %v10601 = vadd.f32 %v10512, %v10600
        %10602 = vmatmul.bf16.gmra.mxu0 %v9726
        %v10603 = vpop.f32.mrf.mxu0
        %v10604 = vadd.f32 %v10515, %v10603
        %v10605 = vpop.f32.mrf.mxu0
        %v10606 = vadd.f32 %v10517, %v10605
        %10607 = vmatmul.bf16.gmra.mxu0 %v9735
        %v10608 = vpop.f32.mrf.mxu0
        %v10609 = vadd.f32 %v10520, %v10608
        %v10610 = vpop.f32.mrf.mxu0
        %v10611 = vadd.f32 %v10522, %v10610
        %10612 = vmatmul.bf16.gmra.mxu0 %v9744
        %v10613 = vpop.f32.mrf.mxu0
        %v10614 = vadd.f32 %v10525, %v10613
        %v10615 = vpop.f32.mrf.mxu0
        %v10616 = vadd.f32 %v10527, %v10615
        %10617 = vmatmul.bf16.gmra.mxu0 %v9753
        %v10618 = vpop.f32.mrf.mxu0
        %v10619 = vadd.f32 %v10530, %v10618
        %v10620 = vpop.f32.mrf.mxu0
        %v10621 = vadd.f32 %v10532, %v10620
        %10622 = vmatmul.bf16.gmra.mxu0 %v9762
        %v10623 = vpop.f32.mrf.mxu0
        %v10624 = vadd.f32 %v10535, %v10623
        %v10625 = vpop.f32.mrf.mxu0
        %v10626 = vadd.f32 %v10537, %v10625
        %10627 = vmatmul.bf16.gmra.mxu0 %v9771
        %v10628 = vpop.f32.mrf.mxu0
        %v10629 = vadd.f32 %v10540, %v10628
        %v10630 = vpop.f32.mrf.mxu0
        %v10631 = vadd.f32 %v10542, %v10630
        %10632 = vmatmul.bf16.gmra.mxu0 %v9780
        %v10633 = vpop.f32.mrf.mxu0
        %v10634 = vadd.f32 %v10545, %v10633
        %v10635 = vpop.f32.mrf.mxu0
        %v10636 = vadd.f32 %v10547, %v10635
        %10637 = vmatmul.bf16.gmra.mxu0 %v9789
        %v10638 = vpop.f32.mrf.mxu0
        %v10639 = vadd.f32 %v10550, %v10638
        %v10640 = vpop.f32.mrf.mxu0
        %v10641 = vadd.f32 %v10552, %v10640
        %10642 = vmatmul.bf16.gmra.mxu0 %v9798
        %v10643 = vpop.f32.mrf.mxu0
        %v10644 = vadd.f32 %v10555, %v10643
        %v10645 = vpop.f32.mrf.mxu0
        %v10646 = vadd.f32 %v10557, %v10645
        %10647 = vdwg.mxu0
        %10648 = vmatpush.bf16.msra.mxu0 %v10268
        %10649 = vmatpush.bf16.msra.mxu0 %v10267
        %10650 = vmatpush.bf16.msra.mxu0 %v10266
        %10651 = vmatpush.bf16.msra.mxu0 %v10265
        %10652 = vmatpush.bf16.msra.mxu0 %v10264
        %10653 = vmatpush.bf16.msra.mxu0 %v10263
        %10654 = vmatpush.bf16.msra.mxu0 %v10262
        %10655 = vmatpush.bf16.msra.mxu0 %v10261
        %10656 = vmatmul.bf16.gmra.mxu0 %v9664
        %v10657 = vpop.f32.mrf.mxu0
        %v10658 = vadd.f32 %v10569, %v10657
        %v10659 = vpop.f32.mrf.mxu0
        %v10660 = vadd.f32 %v10571, %v10659
        %10661 = vmatmul.bf16.gmra.mxu0 %v9673
        %v10662 = vpop.f32.mrf.mxu0
        %v10663 = vadd.f32 %v10574, %v10662
        %v10664 = vpop.f32.mrf.mxu0
        %v10665 = vadd.f32 %v10576, %v10664
        %10666 = vmatmul.bf16.gmra.mxu0 %v9682
        %v10667 = vpop.f32.mrf.mxu0
        %v10668 = vadd.f32 %v10579, %v10667
        %v10669 = vpop.f32.mrf.mxu0
        %v10670 = vadd.f32 %v10581, %v10669
        %10671 = vmatmul.bf16.gmra.mxu0 %v9691
        %v10672 = vpop.f32.mrf.mxu0
        %v10673 = vadd.f32 %v10584, %v10672
        %v10674 = vpop.f32.mrf.mxu0
        %v10675 = vadd.f32 %v10586, %v10674
        %10676 = vmatmul.bf16.gmra.mxu0 %v9700
        %v10677 = vpop.f32.mrf.mxu0
        %v10678 = vadd.f32 %v10589, %v10677
        %v10679 = vpop.f32.mrf.mxu0
        %v10680 = vadd.f32 %v10591, %v10679
        %10681 = vmatmul.bf16.gmra.mxu0 %v9709
        %v10682 = vpop.f32.mrf.mxu0
        %v10683 = vadd.f32 %v10594, %v10682
        %v10684 = vpop.f32.mrf.mxu0
        %v10685 = vadd.f32 %v10596, %v10684
        %10686 = vmatmul.bf16.gmra.mxu0 %v9718
        %v10687 = vpop.f32.mrf.mxu0
        %v10688 = vadd.f32 %v10599, %v10687
        %v10689 = vpop.f32.mrf.mxu0
        %v10690 = vadd.f32 %v10601, %v10689
        %10691 = vmatmul.bf16.gmra.mxu0 %v9727
        %v10692 = vpop.f32.mrf.mxu0
        %v10693 = vadd.f32 %v10604, %v10692
        %v10694 = vpop.f32.mrf.mxu0
        %v10695 = vadd.f32 %v10606, %v10694
        %10696 = vmatmul.bf16.gmra.mxu0 %v9736
        %v10697 = vpop.f32.mrf.mxu0
        %v10698 = vadd.f32 %v10609, %v10697
        %v10699 = vpop.f32.mrf.mxu0
        %v10700 = vadd.f32 %v10611, %v10699
        %10701 = vmatmul.bf16.gmra.mxu0 %v9745
        %v10702 = vpop.f32.mrf.mxu0
        %v10703 = vadd.f32 %v10614, %v10702
        %v10704 = vpop.f32.mrf.mxu0
        %v10705 = vadd.f32 %v10616, %v10704
        %10706 = vmatmul.bf16.gmra.mxu0 %v9754
        %v10707 = vpop.f32.mrf.mxu0
        %v10708 = vadd.f32 %v10619, %v10707
        %v10709 = vpop.f32.mrf.mxu0
        %v10710 = vadd.f32 %v10621, %v10709
        %10711 = vmatmul.bf16.gmra.mxu0 %v9763
        %v10712 = vpop.f32.mrf.mxu0
        %v10713 = vadd.f32 %v10624, %v10712
        %v10714 = vpop.f32.mrf.mxu0
        %v10715 = vadd.f32 %v10626, %v10714
        %10716 = vmatmul.bf16.gmra.mxu0 %v9772
        %v10717 = vpop.f32.mrf.mxu0
        %v10718 = vadd.f32 %v10629, %v10717
        %v10719 = vpop.f32.mrf.mxu0
        %v10720 = vadd.f32 %v10631, %v10719
        %10721 = vmatmul.bf16.gmra.mxu0 %v9781
        %v10722 = vpop.f32.mrf.mxu0
        %v10723 = vadd.f32 %v10634, %v10722
        %v10724 = vpop.f32.mrf.mxu0
        %v10725 = vadd.f32 %v10636, %v10724
        %10726 = vmatmul.bf16.gmra.mxu0 %v9790
        %v10727 = vpop.f32.mrf.mxu0
        %v10728 = vadd.f32 %v10639, %v10727
        %v10729 = vpop.f32.mrf.mxu0
        %v10730 = vadd.f32 %v10641, %v10729
        %10731 = vmatmul.bf16.gmra.mxu0 %v9799
        %v10732 = vpop.f32.mrf.mxu0
        %v10733 = vadd.f32 %v10644, %v10732
        %v10734 = vpop.f32.mrf.mxu0
        %v10735 = vadd.f32 %v10646, %v10734
        %10736 = vdwg.mxu0
        %10737 = vmatpush.bf16.msra.mxu0 %v10276
        %10738 = vmatpush.bf16.msra.mxu0 %v10275
        %10739 = vmatpush.bf16.msra.mxu0 %v10274
        %10740 = vmatpush.bf16.msra.mxu0 %v10273
        %10741 = vmatpush.bf16.msra.mxu0 %v10272
        %10742 = vmatpush.bf16.msra.mxu0 %v10271
        %10743 = vmatpush.bf16.msra.mxu0 %v10270
        %10744 = vmatpush.bf16.msra.mxu0 %v10269
        %10745 = vmatmul.bf16.gmra.mxu0 %v9665
        %v10746 = vpop.f32.mrf.mxu0
        %v10747 = vadd.f32 %v10658, %v10746
        %v10748 = vpop.f32.mrf.mxu0
        %v10749 = vadd.f32 %v10660, %v10748
        %10750 = vmatmul.bf16.gmra.mxu0 %v9674
        %v10751 = vpop.f32.mrf.mxu0
        %v10752 = vadd.f32 %v10663, %v10751
        %v10753 = vpop.f32.mrf.mxu0
        %v10754 = vadd.f32 %v10665, %v10753
        %10755 = vmatmul.bf16.gmra.mxu0 %v9683
        %v10756 = vpop.f32.mrf.mxu0
        %v10757 = vadd.f32 %v10668, %v10756
        %v10758 = vpop.f32.mrf.mxu0
        %v10759 = vadd.f32 %v10670, %v10758
        %10760 = vmatmul.bf16.gmra.mxu0 %v9692
        %v10761 = vpop.f32.mrf.mxu0
        %v10762 = vadd.f32 %v10673, %v10761
        %v10763 = vpop.f32.mrf.mxu0
        %v10764 = vadd.f32 %v10675, %v10763
        %10765 = vmatmul.bf16.gmra.mxu0 %v9701
        %v10766 = vpop.f32.mrf.mxu0
        %v10767 = vadd.f32 %v10678, %v10766
        %v10768 = vpop.f32.mrf.mxu0
        %v10769 = vadd.f32 %v10680, %v10768
        %10770 = vmatmul.bf16.gmra.mxu0 %v9710
        %v10771 = vpop.f32.mrf.mxu0
        %v10772 = vadd.f32 %v10683, %v10771
        %v10773 = vpop.f32.mrf.mxu0
        %v10774 = vadd.f32 %v10685, %v10773
        %10775 = vmatmul.bf16.gmra.mxu0 %v9719
        %v10776 = vpop.f32.mrf.mxu0
        %v10777 = vadd.f32 %v10688, %v10776
        %v10778 = vpop.f32.mrf.mxu0
        %v10779 = vadd.f32 %v10690, %v10778
        %10780 = vmatmul.bf16.gmra.mxu0 %v9728
        %v10781 = vpop.f32.mrf.mxu0
        %v10782 = vadd.f32 %v10693, %v10781
        %v10783 = vpop.f32.mrf.mxu0
        %v10784 = vadd.f32 %v10695, %v10783
        %10785 = vmatmul.bf16.gmra.mxu0 %v9737
        %v10786 = vpop.f32.mrf.mxu0
        %v10787 = vadd.f32 %v10698, %v10786
        %v10788 = vpop.f32.mrf.mxu0
        %v10789 = vadd.f32 %v10700, %v10788
        %10790 = vmatmul.bf16.gmra.mxu0 %v9746
        %v10791 = vpop.f32.mrf.mxu0
        %v10792 = vadd.f32 %v10703, %v10791
        %v10793 = vpop.f32.mrf.mxu0
        %v10794 = vadd.f32 %v10705, %v10793
        %10795 = vmatmul.bf16.gmra.mxu0 %v9755
        %v10796 = vpop.f32.mrf.mxu0
        %v10797 = vadd.f32 %v10708, %v10796
        %v10798 = vpop.f32.mrf.mxu0
        %v10799 = vadd.f32 %v10710, %v10798
        %10800 = vmatmul.bf16.gmra.mxu0 %v9764
        %v10801 = vpop.f32.mrf.mxu0
        %v10802 = vadd.f32 %v10713, %v10801
        %v10803 = vpop.f32.mrf.mxu0
        %v10804 = vadd.f32 %v10715, %v10803
        %10805 = vmatmul.bf16.gmra.mxu0 %v9773
        %v10806 = vpop.f32.mrf.mxu0
        %v10807 = vadd.f32 %v10718, %v10806
        %v10808 = vpop.f32.mrf.mxu0
        %v10809 = vadd.f32 %v10720, %v10808
        %10810 = vmatmul.bf16.gmra.mxu0 %v9782
        %v10811 = vpop.f32.mrf.mxu0
        %v10812 = vadd.f32 %v10723, %v10811
        %v10813 = vpop.f32.mrf.mxu0
        %v10814 = vadd.f32 %v10725, %v10813
        %10815 = vmatmul.bf16.gmra.mxu0 %v9791
        %v10816 = vpop.f32.mrf.mxu0
        %v10817 = vadd.f32 %v10728, %v10816
        %v10818 = vpop.f32.mrf.mxu0
        %v10819 = vadd.f32 %v10730, %v10818
        %10820 = vmatmul.bf16.gmra.mxu0 %v9800
        %v10821 = vpop.f32.mrf.mxu0
        %v10822 = vadd.f32 %v10733, %v10821
        %v10823 = vpop.f32.mrf.mxu0
        %v10824 = vadd.f32 %v10735, %v10823
        %10825 = vdwg.mxu0
        %10826 = vmatpush.bf16.msra.mxu0 %v10284
        %10827 = vmatpush.bf16.msra.mxu0 %v10283
        %10828 = vmatpush.bf16.msra.mxu0 %v10282
        %10829 = vmatpush.bf16.msra.mxu0 %v10281
        %10830 = vmatpush.bf16.msra.mxu0 %v10280
        %10831 = vmatpush.bf16.msra.mxu0 %v10279
        %10832 = vmatpush.bf16.msra.mxu0 %v10278
        %10833 = vmatpush.bf16.msra.mxu0 %v10277
        %10834 = vmatmul.bf16.gmra.mxu0 %v9666
        %v10835 = vpop.f32.mrf.mxu0
        %v10836 = vadd.f32 %v10747, %v10835
        %v10837 = vpop.f32.mrf.mxu0
        %v10838 = vadd.f32 %v10749, %v10837
        %10839 = vmatmul.bf16.gmra.mxu0 %v9675
        %v10840 = vpop.f32.mrf.mxu0
        %v10841 = vadd.f32 %v10752, %v10840
        %v10842 = vpop.f32.mrf.mxu0
        %v10843 = vadd.f32 %v10754, %v10842
        %10844 = vmatmul.bf16.gmra.mxu0 %v9684
        %v10845 = vpop.f32.mrf.mxu0
        %v10846 = vadd.f32 %v10757, %v10845
        %v10847 = vpop.f32.mrf.mxu0
        %v10848 = vadd.f32 %v10759, %v10847
        %10849 = vmatmul.bf16.gmra.mxu0 %v9693
        %v10850 = vpop.f32.mrf.mxu0
        %v10851 = vadd.f32 %v10762, %v10850
        %v10852 = vpop.f32.mrf.mxu0
        %v10853 = vadd.f32 %v10764, %v10852
        %10854 = vmatmul.bf16.gmra.mxu0 %v9702
        %v10855 = vpop.f32.mrf.mxu0
        %v10856 = vadd.f32 %v10767, %v10855
        %v10857 = vpop.f32.mrf.mxu0
        %v10858 = vadd.f32 %v10769, %v10857
        %10859 = vmatmul.bf16.gmra.mxu0 %v9711
        %v10860 = vpop.f32.mrf.mxu0
        %v10861 = vadd.f32 %v10772, %v10860
        %v10862 = vpop.f32.mrf.mxu0
        %v10863 = vadd.f32 %v10774, %v10862
        %10864 = vmatmul.bf16.gmra.mxu0 %v9720
        %v10865 = vpop.f32.mrf.mxu0
        %v10866 = vadd.f32 %v10777, %v10865
        %v10867 = vpop.f32.mrf.mxu0
        %v10868 = vadd.f32 %v10779, %v10867
        %10869 = vmatmul.bf16.gmra.mxu0 %v9729
        %v10870 = vpop.f32.mrf.mxu0
        %v10871 = vadd.f32 %v10782, %v10870
        %v10872 = vpop.f32.mrf.mxu0
        %v10873 = vadd.f32 %v10784, %v10872
        %10874 = vmatmul.bf16.gmra.mxu0 %v9738
        %v10875 = vpop.f32.mrf.mxu0
        %v10876 = vadd.f32 %v10787, %v10875
        %v10877 = vpop.f32.mrf.mxu0
        %v10878 = vadd.f32 %v10789, %v10877
        %10879 = vmatmul.bf16.gmra.mxu0 %v9747
        %v10880 = vpop.f32.mrf.mxu0
        %v10881 = vadd.f32 %v10792, %v10880
        %v10882 = vpop.f32.mrf.mxu0
        %v10883 = vadd.f32 %v10794, %v10882
        %10884 = vmatmul.bf16.gmra.mxu0 %v9756
        %v10885 = vpop.f32.mrf.mxu0
        %v10886 = vadd.f32 %v10797, %v10885
        %v10887 = vpop.f32.mrf.mxu0
        %v10888 = vadd.f32 %v10799, %v10887
        %10889 = vmatmul.bf16.gmra.mxu0 %v9765
        %v10890 = vpop.f32.mrf.mxu0
        %v10891 = vadd.f32 %v10802, %v10890
        %v10892 = vpop.f32.mrf.mxu0
        %v10893 = vadd.f32 %v10804, %v10892
        %10894 = vmatmul.bf16.gmra.mxu0 %v9774
        %v10895 = vpop.f32.mrf.mxu0
        %v10896 = vadd.f32 %v10807, %v10895
        %v10897 = vpop.f32.mrf.mxu0
        %v10898 = vadd.f32 %v10809, %v10897
        %10899 = vmatmul.bf16.gmra.mxu0 %v9783
        %v10900 = vpop.f32.mrf.mxu0
        %v10901 = vadd.f32 %v10812, %v10900
        %v10902 = vpop.f32.mrf.mxu0
        %v10903 = vadd.f32 %v10814, %v10902
        %10904 = vmatmul.bf16.gmra.mxu0 %v9792
        %v10905 = vpop.f32.mrf.mxu0
        %v10906 = vadd.f32 %v10817, %v10905
        %v10907 = vpop.f32.mrf.mxu0
        %v10908 = vadd.f32 %v10819, %v10907
        %10909 = vmatmul.bf16.gmra.mxu0 %v9801
        %v10910 = vpop.f32.mrf.mxu0
        %v10911 = vadd.f32 %v10822, %v10910
        %v10912 = vpop.f32.mrf.mxu0
        %v10913 = vadd.f32 %v10824, %v10912
        %10914 = vdwg.mxu0
        %10915 = vmatpush.bf16.msra.mxu0 %v10292
        %10916 = vmatpush.bf16.msra.mxu0 %v10291
        %10917 = vmatpush.bf16.msra.mxu0 %v10290
        %10918 = vmatpush.bf16.msra.mxu0 %v10289
        %10919 = vmatpush.bf16.msra.mxu0 %v10288
        %10920 = vmatpush.bf16.msra.mxu0 %v10287
        %10921 = vmatpush.bf16.msra.mxu0 %v10286
        %10922 = vmatpush.bf16.msra.mxu0 %v10285
        %10923 = vmatmul.bf16.gmra.mxu0 %v9667
        %v10924 = vpop.f32.mrf.mxu0
        %v10925 = vadd.f32 %v10836, %v10924
        %v10926 = vpop.f32.mrf.mxu0
        %v10927 = vadd.f32 %v10838, %v10926
        %10928 = vmatmul.bf16.gmra.mxu0 %v9676
        %v10929 = vpop.f32.mrf.mxu0
        %v10930 = vadd.f32 %v10841, %v10929
        %v10931 = vpop.f32.mrf.mxu0
        %v10932 = vadd.f32 %v10843, %v10931
        %10933 = vmatmul.bf16.gmra.mxu0 %v9685
        %v10934 = vpop.f32.mrf.mxu0
        %v10935 = vadd.f32 %v10846, %v10934
        %v10936 = vpop.f32.mrf.mxu0
        %v10937 = vadd.f32 %v10848, %v10936
        %10938 = vmatmul.bf16.gmra.mxu0 %v9694
        %v10939 = vpop.f32.mrf.mxu0
        %v10940 = vadd.f32 %v10851, %v10939
        %v10941 = vpop.f32.mrf.mxu0
        %v10942 = vadd.f32 %v10853, %v10941
        %10943 = vmatmul.bf16.gmra.mxu0 %v9703
        %v10944 = vpop.f32.mrf.mxu0
        %v10945 = vadd.f32 %v10856, %v10944
        %v10946 = vpop.f32.mrf.mxu0
        %v10947 = vadd.f32 %v10858, %v10946
        %10948 = vmatmul.bf16.gmra.mxu0 %v9712
        %v10949 = vpop.f32.mrf.mxu0
        %v10950 = vadd.f32 %v10861, %v10949
        %v10951 = vpop.f32.mrf.mxu0
        %v10952 = vadd.f32 %v10863, %v10951
        %10953 = vmatmul.bf16.gmra.mxu0 %v9721
        %v10954 = vpop.f32.mrf.mxu0
        %v10955 = vadd.f32 %v10866, %v10954
        %v10956 = vpop.f32.mrf.mxu0
        %v10957 = vadd.f32 %v10868, %v10956
        %10958 = vmatmul.bf16.gmra.mxu0 %v9730
        %v10959 = vpop.f32.mrf.mxu0
        %v10960 = vadd.f32 %v10871, %v10959
        %v10961 = vpop.f32.mrf.mxu0
        %v10962 = vadd.f32 %v10873, %v10961
        %10963 = vmatmul.bf16.gmra.mxu0 %v9739
        %v10964 = vpop.f32.mrf.mxu0
        %v10965 = vadd.f32 %v10876, %v10964
        %v10966 = vpop.f32.mrf.mxu0
        %v10967 = vadd.f32 %v10878, %v10966
        %10968 = vmatmul.bf16.gmra.mxu0 %v9748
        %v10969 = vpop.f32.mrf.mxu0
        %v10970 = vadd.f32 %v10881, %v10969
        %v10971 = vpop.f32.mrf.mxu0
        %v10972 = vadd.f32 %v10883, %v10971
        %10973 = vmatmul.bf16.gmra.mxu0 %v9757
        %v10974 = vpop.f32.mrf.mxu0
        %v10975 = vadd.f32 %v10886, %v10974
        %v10976 = vpop.f32.mrf.mxu0
        %v10977 = vadd.f32 %v10888, %v10976
        %10978 = vmatmul.bf16.gmra.mxu0 %v9766
        %v10979 = vpop.f32.mrf.mxu0
        %v10980 = vadd.f32 %v10891, %v10979
        %v10981 = vpop.f32.mrf.mxu0
        %v10982 = vadd.f32 %v10893, %v10981
        %10983 = vmatmul.bf16.gmra.mxu0 %v9775
        %v10984 = vpop.f32.mrf.mxu0
        %v10985 = vadd.f32 %v10896, %v10984
        %v10986 = vpop.f32.mrf.mxu0
        %v10987 = vadd.f32 %v10898, %v10986
        %10988 = vmatmul.bf16.gmra.mxu0 %v9784
        %v10989 = vpop.f32.mrf.mxu0
        %v10990 = vadd.f32 %v10901, %v10989
        %v10991 = vpop.f32.mrf.mxu0
        %v10992 = vadd.f32 %v10903, %v10991
        %10993 = vmatmul.bf16.gmra.mxu0 %v9793
        %v10994 = vpop.f32.mrf.mxu0
        %v10995 = vadd.f32 %v10906, %v10994
        %v10996 = vpop.f32.mrf.mxu0
        %v10997 = vadd.f32 %v10908, %v10996
        %10998 = vmatmul.bf16.gmra.mxu0 %v9802
        %v10999 = vpop.f32.mrf.mxu0
        %v11000 = vadd.f32 %v10911, %v10999
        %v11001 = vpop.f32.mrf.mxu0
        %v11002 = vadd.f32 %v10913, %v11001
        %11003 = vdwg.mxu0
        %11004 = vmatpush.bf16.msra.mxu0 %v10300
        %11005 = vmatpush.bf16.msra.mxu0 %v10299
        %11006 = vmatpush.bf16.msra.mxu0 %v10298
        %11007 = vmatpush.bf16.msra.mxu0 %v10297
        %11008 = vmatpush.bf16.msra.mxu0 %v10296
        %11009 = vmatpush.bf16.msra.mxu0 %v10295
        %11010 = vmatpush.bf16.msra.mxu0 %v10294
        %11011 = vmatpush.bf16.msra.mxu0 %v10293
        %11012 = vmatmul.bf16.gmra.mxu0 %v9668
        %v11013 = vpop.f32.mrf.mxu0
        %v11014 = vadd.f32 %v10925, %v11013
        %v11015 = vpop.f32.mrf.mxu0
        %v11016 = vadd.f32 %v10927, %v11015
        %11017 = vmatmul.bf16.gmra.mxu0 %v9677
        %v11018 = vpop.f32.mrf.mxu0
        %v11019 = vadd.f32 %v10930, %v11018
        %v11020 = vpop.f32.mrf.mxu0
        %v11021 = vadd.f32 %v10932, %v11020
        %11022 = vmatmul.bf16.gmra.mxu0 %v9686
        %v11023 = vpop.f32.mrf.mxu0
        %v11024 = vadd.f32 %v10935, %v11023
        %v11025 = vpop.f32.mrf.mxu0
        %v11026 = vadd.f32 %v10937, %v11025
        %11027 = vmatmul.bf16.gmra.mxu0 %v9695
        %v11028 = vpop.f32.mrf.mxu0
        %v11029 = vadd.f32 %v10940, %v11028
        %v11030 = vpop.f32.mrf.mxu0
        %v11031 = vadd.f32 %v10942, %v11030
        %11032 = vmatmul.bf16.gmra.mxu0 %v9704
        %v11033 = vpop.f32.mrf.mxu0
        %v11034 = vadd.f32 %v10945, %v11033
        %v11035 = vpop.f32.mrf.mxu0
        %v11036 = vadd.f32 %v10947, %v11035
        %11037 = vmatmul.bf16.gmra.mxu0 %v9713
        %v11038 = vpop.f32.mrf.mxu0
        %v11039 = vadd.f32 %v10950, %v11038
        %v11040 = vpop.f32.mrf.mxu0
        %v11041 = vadd.f32 %v10952, %v11040
        %11042 = vmatmul.bf16.gmra.mxu0 %v9722
        %v11043 = vpop.f32.mrf.mxu0
        %v11044 = vadd.f32 %v10955, %v11043
        %v11045 = vpop.f32.mrf.mxu0
        %v11046 = vadd.f32 %v10957, %v11045
        %11047 = vmatmul.bf16.gmra.mxu0 %v9731
        %v11048 = vpop.f32.mrf.mxu0
        %v11049 = vadd.f32 %v10960, %v11048
        %v11050 = vpop.f32.mrf.mxu0
        %v11051 = vadd.f32 %v10962, %v11050
        %11052 = vmatmul.bf16.gmra.mxu0 %v9740
        %v11053 = vpop.f32.mrf.mxu0
        %v11054 = vadd.f32 %v10965, %v11053
        %v11055 = vpop.f32.mrf.mxu0
        %v11056 = vadd.f32 %v10967, %v11055
        %11057 = vmatmul.bf16.gmra.mxu0 %v9749
        %v11058 = vpop.f32.mrf.mxu0
        %v11059 = vadd.f32 %v10970, %v11058
        %v11060 = vpop.f32.mrf.mxu0
        %v11061 = vadd.f32 %v10972, %v11060
        %11062 = vmatmul.bf16.gmra.mxu0 %v9758
        %v11063 = vpop.f32.mrf.mxu0
        %v11064 = vadd.f32 %v10975, %v11063
        %v11065 = vpop.f32.mrf.mxu0
        %v11066 = vadd.f32 %v10977, %v11065
        %11067 = vmatmul.bf16.gmra.mxu0 %v9767
        %v11068 = vpop.f32.mrf.mxu0
        %v11069 = vadd.f32 %v10980, %v11068
        %v11070 = vpop.f32.mrf.mxu0
        %v11071 = vadd.f32 %v10982, %v11070
        %11072 = vmatmul.bf16.gmra.mxu0 %v9776
        %v11073 = vpop.f32.mrf.mxu0
        %v11074 = vadd.f32 %v10985, %v11073
        %v11075 = vpop.f32.mrf.mxu0
        %v11076 = vadd.f32 %v10987, %v11075
        %11077 = vmatmul.bf16.gmra.mxu0 %v9785
        %v11078 = vpop.f32.mrf.mxu0
        %v11079 = vadd.f32 %v10990, %v11078
        %v11080 = vpop.f32.mrf.mxu0
        %v11081 = vadd.f32 %v10992, %v11080
        %11082 = vmatmul.bf16.gmra.mxu0 %v9794
        %v11083 = vpop.f32.mrf.mxu0
        %v11084 = vadd.f32 %v10995, %v11083
        %v11085 = vpop.f32.mrf.mxu0
        %v11086 = vadd.f32 %v10997, %v11085
        %11087 = vmatmul.bf16.gmra.mxu0 %v9803
        %v11088 = vpop.f32.mrf.mxu0
        %v11089 = vadd.f32 %v11000, %v11088
        %v11090 = vpop.f32.mrf.mxu0
        %v11091 = vadd.f32 %v11002, %v11090
        %11092 = vdwg.mxu0
        %11093 = vmatpush.bf16.msra.mxu0 %v10308
        %11094 = vmatpush.bf16.msra.mxu0 %v10307
        %11095 = vmatpush.bf16.msra.mxu0 %v10306
        %11096 = vmatpush.bf16.msra.mxu0 %v10305
        %11097 = vmatpush.bf16.msra.mxu0 %v10304
        %11098 = vmatpush.bf16.msra.mxu0 %v10303
        %11099 = vmatpush.bf16.msra.mxu0 %v10302
        %11100 = vmatpush.bf16.msra.mxu0 %v10301
        %11101 = vmatmul.bf16.gmra.mxu0 %v9669
        %v11102 = vpop.f32.mrf.mxu0
        %v11103 = vadd.f32 %v11014, %v11102
        %v11104 = vpop.f32.mrf.mxu0
        %v11105 = vadd.f32 %v11016, %v11104
        %11106 = vmatmul.bf16.gmra.mxu0 %v9678
        %v11107 = vpop.f32.mrf.mxu0
        %v11108 = vadd.f32 %v11019, %v11107
        %v11109 = vpop.f32.mrf.mxu0
        %v11110 = vadd.f32 %v11021, %v11109
        %11111 = vmatmul.bf16.gmra.mxu0 %v9687
        %v11112 = vpop.f32.mrf.mxu0
        %v11113 = vadd.f32 %v11024, %v11112
        %v11114 = vpop.f32.mrf.mxu0
        %v11115 = vadd.f32 %v11026, %v11114
        %11116 = vmatmul.bf16.gmra.mxu0 %v9696
        %v11117 = vpop.f32.mrf.mxu0
        %v11118 = vadd.f32 %v11029, %v11117
        %v11119 = vpop.f32.mrf.mxu0
        %v11120 = vadd.f32 %v11031, %v11119
        %11121 = vmatmul.bf16.gmra.mxu0 %v9705
        %v11122 = vpop.f32.mrf.mxu0
        %v11123 = vadd.f32 %v11034, %v11122
        %v11124 = vpop.f32.mrf.mxu0
        %v11125 = vadd.f32 %v11036, %v11124
        %11126 = vmatmul.bf16.gmra.mxu0 %v9714
        %v11127 = vpop.f32.mrf.mxu0
        %v11128 = vadd.f32 %v11039, %v11127
        %v11129 = vpop.f32.mrf.mxu0
        %v11130 = vadd.f32 %v11041, %v11129
        %11131 = vmatmul.bf16.gmra.mxu0 %v9723
        %v11132 = vpop.f32.mrf.mxu0
        %v11133 = vadd.f32 %v11044, %v11132
        %v11134 = vpop.f32.mrf.mxu0
        %v11135 = vadd.f32 %v11046, %v11134
        %11136 = vmatmul.bf16.gmra.mxu0 %v9732
        %v11137 = vpop.f32.mrf.mxu0
        %v11138 = vadd.f32 %v11049, %v11137
        %v11139 = vpop.f32.mrf.mxu0
        %v11140 = vadd.f32 %v11051, %v11139
        %11141 = vmatmul.bf16.gmra.mxu0 %v9741
        %v11142 = vpop.f32.mrf.mxu0
        %v11143 = vadd.f32 %v11054, %v11142
        %v11144 = vpop.f32.mrf.mxu0
        %v11145 = vadd.f32 %v11056, %v11144
        %11146 = vmatmul.bf16.gmra.mxu0 %v9750
        %v11147 = vpop.f32.mrf.mxu0
        %v11148 = vadd.f32 %v11059, %v11147
        %v11149 = vpop.f32.mrf.mxu0
        %v11150 = vadd.f32 %v11061, %v11149
        %11151 = vmatmul.bf16.gmra.mxu0 %v9759
        %v11152 = vpop.f32.mrf.mxu0
        %v11153 = vadd.f32 %v11064, %v11152
        %v11154 = vpop.f32.mrf.mxu0
        %v11155 = vadd.f32 %v11066, %v11154
        %11156 = vmatmul.bf16.gmra.mxu0 %v9768
        %v11157 = vpop.f32.mrf.mxu0
        %v11158 = vadd.f32 %v11069, %v11157
        %v11159 = vpop.f32.mrf.mxu0
        %v11160 = vadd.f32 %v11071, %v11159
        %11161 = vmatmul.bf16.gmra.mxu0 %v9777
        %v11162 = vpop.f32.mrf.mxu0
        %v11163 = vadd.f32 %v11074, %v11162
        %v11164 = vpop.f32.mrf.mxu0
        %v11165 = vadd.f32 %v11076, %v11164
        %11166 = vmatmul.bf16.gmra.mxu0 %v9786
        %v11167 = vpop.f32.mrf.mxu0
        %v11168 = vadd.f32 %v11079, %v11167
        %v11169 = vpop.f32.mrf.mxu0
        %v11170 = vadd.f32 %v11081, %v11169
        %11171 = vmatmul.bf16.gmra.mxu0 %v9795
        %v11172 = vpop.f32.mrf.mxu0
        %v11173 = vadd.f32 %v11084, %v11172
        %v11174 = vpop.f32.mrf.mxu0
        %v11175 = vadd.f32 %v11086, %v11174
        %11176 = vmatmul.bf16.gmra.mxu0 %v9804
        %v11177 = vpop.f32.mrf.mxu0
        %v11178 = vadd.f32 %v11089, %v11177
        %v11179 = vpop.f32.mrf.mxu0
        %v11180 = vadd.f32 %v11091, %v11179
        %11181 = vdwg.mxu0
        %v11214 = vunpack.c.l.b16 %v3896
        %v11215 = vunpack.c.l.b16 %v3897
        %v11216 = vunpack.c.l.b16 %v3898
        %v11217 = vunpack.c.l.b16 %v3899
        %v11218 = vunpack.c.l.b16 %v3900
        %v11219 = vunpack.c.l.b16 %v3901
        %v11220 = vunpack.c.l.b16 %v3902
        %v11221 = vunpack.c.l.b16 %v3903
        %v11222 = vunpack.c.l.b16 %v3904
        %v11223 = vunpack.c.l.b16 %v3905
        %v11224 = vunpack.c.l.b16 %v3906
        %v11225 = vunpack.c.l.b16 %v3907
        %v11226 = vunpack.c.l.b16 %v3908
        %v11227 = vunpack.c.l.b16 %v3909
        %v11228 = vunpack.c.l.b16 %v3910
        %v11229 = vunpack.c.l.b16 %v3911
        %v11230 = vunpack.c.l.b16 %v3912
        %v11231 = vunpack.c.l.b16 %v3913
        %v11232 = vunpack.c.l.b16 %v3914
        %v11233 = vunpack.c.l.b16 %v3915
        %v11234 = vunpack.c.l.b16 %v3916
        %v11235 = vunpack.c.l.b16 %v3917
        %v11236 = vunpack.c.l.b16 %v3918
        %v11237 = vunpack.c.l.b16 %v3919
        %v11238 = vunpack.c.l.b16 %v3920
        %v11239 = vunpack.c.l.b16 %v3921
        %v11240 = vunpack.c.l.b16 %v3922
        %v11241 = vunpack.c.l.b16 %v3923
        %v11242 = vunpack.c.l.b16 %v3924
        %v11243 = vunpack.c.l.b16 %v3925
        %v11244 = vunpack.c.l.b16 %v3926
        %v11245 = vunpack.c.l.b16 %v3927
        %v11246 = vpack.c.b16 %v11215, %v11214
        %v11247 = vpack.c.b16 %v11217, %v11216
        %v11248 = vpack.c.b16 %v11219, %v11218
        %v11249 = vpack.c.b16 %v11221, %v11220
        %v11250 = vpack.c.b16 %v11223, %v11222
        %v11251 = vpack.c.b16 %v11225, %v11224
        %v11252 = vpack.c.b16 %v11227, %v11226
        %v11253 = vpack.c.b16 %v11229, %v11228
        %v11254 = vpack.c.b16 %v11231, %v11230
        %v11255 = vpack.c.b16 %v11233, %v11232
        %v11256 = vpack.c.b16 %v11235, %v11234
        %v11257 = vpack.c.b16 %v11237, %v11236
        %v11258 = vpack.c.b16 %v11239, %v11238
        %v11259 = vpack.c.b16 %v11241, %v11240
        %v11260 = vpack.c.b16 %v11243, %v11242
        %v11261 = vpack.c.b16 %v11245, %v11244
        %v11294 = vunpack.c.l.b16 %v3928
        %v11295 = vunpack.c.l.b16 %v3929
        %v11296 = vunpack.c.l.b16 %v3930
        %v11297 = vunpack.c.l.b16 %v3931
        %v11298 = vunpack.c.l.b16 %v3932
        %v11299 = vunpack.c.l.b16 %v3933
        %v11300 = vunpack.c.l.b16 %v3934
        %v11301 = vunpack.c.l.b16 %v3935
        %v11302 = vunpack.c.l.b16 %v3936
        %v11303 = vunpack.c.l.b16 %v3937
        %v11304 = vunpack.c.l.b16 %v3938
        %v11305 = vunpack.c.l.b16 %v3939
        %v11306 = vunpack.c.l.b16 %v3940
        %v11307 = vunpack.c.l.b16 %v3941
        %v11308 = vunpack.c.l.b16 %v3942
        %v11309 = vunpack.c.l.b16 %v3943
        %v11310 = vpack.c.b16 %v11295, %v11294
        %v11311 = vpack.c.b16 %v11297, %v11296
        %v11312 = vpack.c.b16 %v11299, %v11298
        %v11313 = vpack.c.b16 %v11301, %v11300
        %v11314 = vpack.c.b16 %v11303, %v11302
        %v11315 = vpack.c.b16 %v11305, %v11304
        %v11316 = vpack.c.b16 %v11307, %v11306
        %v11317 = vpack.c.b16 %v11309, %v11308
        %11326 = vmatpush.bf16.msra.mxu0 %v11317
        %11327 = vmatpush.bf16.msra.mxu0 %v11316
        %11328 = vmatpush.bf16.msra.mxu0 %v11315
        %11329 = vmatpush.bf16.msra.mxu0 %v11314
        %11330 = vmatpush.bf16.msra.mxu0 %v11313
        %11331 = vmatpush.bf16.msra.mxu0 %v11312
        %11332 = vmatpush.bf16.msra.mxu0 %v11311
        %11333 = vmatpush.bf16.msra.mxu0 %v11310
        %11334 = vmatmul.bf16.gmra.mxu0 %v11246
        %v11335 = vpop.f32.mrf.mxu0
        %v11336 = vadd.f32 %v11103, %v11335
        %v11337 = vpop.f32.mrf.mxu0
        %v11338 = vadd.f32 %v11105, %v11337
        %11339 = vmatmul.bf16.gmra.mxu0 %v11247
        %v11340 = vpop.f32.mrf.mxu0
        %v11341 = vadd.f32 %v11108, %v11340
        %v11342 = vpop.f32.mrf.mxu0
        %v11343 = vadd.f32 %v11110, %v11342
        %11344 = vmatmul.bf16.gmra.mxu0 %v11248
        %v11345 = vpop.f32.mrf.mxu0
        %v11346 = vadd.f32 %v11113, %v11345
        %v11347 = vpop.f32.mrf.mxu0
        %v11348 = vadd.f32 %v11115, %v11347
        %11349 = vmatmul.bf16.gmra.mxu0 %v11249
        %v11350 = vpop.f32.mrf.mxu0
        %v11351 = vadd.f32 %v11118, %v11350
        %v11352 = vpop.f32.mrf.mxu0
        %v11353 = vadd.f32 %v11120, %v11352
        %11354 = vmatmul.bf16.gmra.mxu0 %v11250
        %v11355 = vpop.f32.mrf.mxu0
        %v11356 = vadd.f32 %v11123, %v11355
        %v11357 = vpop.f32.mrf.mxu0
        %v11358 = vadd.f32 %v11125, %v11357
        %11359 = vmatmul.bf16.gmra.mxu0 %v11251
        %v11360 = vpop.f32.mrf.mxu0
        %v11361 = vadd.f32 %v11128, %v11360
        %v11362 = vpop.f32.mrf.mxu0
        %v11363 = vadd.f32 %v11130, %v11362
        %11364 = vmatmul.bf16.gmra.mxu0 %v11252
        %v11365 = vpop.f32.mrf.mxu0
        %v11366 = vadd.f32 %v11133, %v11365
        %v11367 = vpop.f32.mrf.mxu0
        %v11368 = vadd.f32 %v11135, %v11367
        %11369 = vmatmul.bf16.gmra.mxu0 %v11253
        %v11370 = vpop.f32.mrf.mxu0
        %v11371 = vadd.f32 %v11138, %v11370
        %v11372 = vpop.f32.mrf.mxu0
        %v11373 = vadd.f32 %v11140, %v11372
        %11374 = vmatmul.bf16.gmra.mxu0 %v11254
        %v11375 = vpop.f32.mrf.mxu0
        %v11376 = vadd.f32 %v11143, %v11375
        %v11377 = vpop.f32.mrf.mxu0
        %v11378 = vadd.f32 %v11145, %v11377
        %11379 = vmatmul.bf16.gmra.mxu0 %v11255
        %v11380 = vpop.f32.mrf.mxu0
        %v11381 = vadd.f32 %v11148, %v11380
        %v11382 = vpop.f32.mrf.mxu0
        %v11383 = vadd.f32 %v11150, %v11382
        %11384 = vmatmul.bf16.gmra.mxu0 %v11256
        %v11385 = vpop.f32.mrf.mxu0
        %v11386 = vadd.f32 %v11153, %v11385
        %v11387 = vpop.f32.mrf.mxu0
        %v11388 = vadd.f32 %v11155, %v11387
        %11389 = vmatmul.bf16.gmra.mxu0 %v11257
        %v11390 = vpop.f32.mrf.mxu0
        %v11391 = vadd.f32 %v11158, %v11390
        %v11392 = vpop.f32.mrf.mxu0
        %v11393 = vadd.f32 %v11160, %v11392
        %11394 = vmatmul.bf16.gmra.mxu0 %v11258
        %v11395 = vpop.f32.mrf.mxu0
        %v11396 = vadd.f32 %v11163, %v11395
        %v11397 = vpop.f32.mrf.mxu0
        %v11398 = vadd.f32 %v11165, %v11397
        %11399 = vmatmul.bf16.gmra.mxu0 %v11259
        %v11400 = vpop.f32.mrf.mxu0
        %v11401 = vadd.f32 %v11168, %v11400
        %v11402 = vpop.f32.mrf.mxu0
        %v11403 = vadd.f32 %v11170, %v11402
        %11404 = vmatmul.bf16.gmra.mxu0 %v11260
        %v11405 = vpop.f32.mrf.mxu0
        %v11406 = vadd.f32 %v11173, %v11405
        %v11407 = vpop.f32.mrf.mxu0
        %v11408 = vadd.f32 %v11175, %v11407
        %11409 = vmatmul.bf16.gmra.mxu0 %v11261
        %v11410 = vpop.f32.mrf.mxu0
        %v11411 = vadd.f32 %v11178, %v11410
        %v11412 = vpop.f32.mrf.mxu0
        %v11413 = vadd.f32 %v11180, %v11412
        %11414 = vdwg.mxu0
        %11415 = vst [vmem:[%s362] sm:$0xff] %v11336
        %11416 = vst [vmem:[%s362 + $0x8] sm:$0xff] %v11338
        %11417 = vst [vmem:[%s362 + $0x10] sm:$0xff] %v11341
        %11418 = vst [vmem:[%s362 + $0x18] sm:$0xff] %v11343
        %11419 = vst [vmem:[%s362 + $0x20] sm:$0xff] %v11346
        %11420 = vst [vmem:[%s362 + $0x28] sm:$0xff] %v11348
        %11421 = vst [vmem:[%s362 + $0x30] sm:$0xff] %v11351
        %11422 = vst [vmem:[%s362 + $0x38] sm:$0xff] %v11353
        %11423 = vst [vmem:[%s362 + $0x40] sm:$0xff] %v11356
        %11424 = vst [vmem:[%s362 + $0x48] sm:$0xff] %v11358
        %11425 = vst [vmem:[%s362 + $0x50] sm:$0xff] %v11361
        %11426 = vst [vmem:[%s362 + $0x58] sm:$0xff] %v11363
        %11427 = vst [vmem:[%s362 + $0x60] sm:$0xff] %v11366
        %11428 = vst [vmem:[%s362 + $0x68] sm:$0xff] %v11368
        %11429 = vst [vmem:[%s362 + $0x70] sm:$0xff] %v11371
        %11430 = vst [vmem:[%s362 + $0x78] sm:$0xff] %v11373
        %11431 = vst [vmem:[%s362 + $0x80] sm:$0xff] %v11376
        %11432 = vst [vmem:[%s362 + $0x88] sm:$0xff] %v11378
        %11433 = vst [vmem:[%s362 + $0x90] sm:$0xff] %v11381
        %11434 = vst [vmem:[%s362 + $0x98] sm:$0xff] %v11383
        %11435 = vst [vmem:[%s362 + $0xa0] sm:$0xff] %v11386
        %11436 = vst [vmem:[%s362 + $0xa8] sm:$0xff] %v11388
        %11437 = vst [vmem:[%s362 + $0xb0] sm:$0xff] %v11391
        %11438 = vst [vmem:[%s362 + $0xb8] sm:$0xff] %v11393
        %11439 = vst [vmem:[%s362 + $0xc0] sm:$0xff] %v11396
        %11440 = vst [vmem:[%s362 + $0xc8] sm:$0xff] %v11398
        %11441 = vst [vmem:[%s362 + $0xd0] sm:$0xff] %v11401
        %11442 = vst [vmem:[%s362 + $0xd8] sm:$0xff] %v11403
        %11443 = vst [vmem:[%s362 + $0xe0] sm:$0xff] %v11406
        %11444 = vst [vmem:[%s362 + $0xe8] sm:$0xff] %v11408
        %11445 = vst [vmem:[%s362 + $0xf0] sm:$0xff] %v11411
        %11446 = vst [vmem:[%s362 + $0xf8] sm:$0xff] %v11413
        %s11447 = sand.u32 %s186, 1
        %s11448 = scalar_lea.sflag [#allocation6], %s11447
        %s11449 = sand.u32 %s186, 1
        %s11450 = smul.addr %s11449, 256
        %s11451 = scalar_lea.vmem [#allocation13], %s11450
        // Predicated region
        $region69: #{tpu_custom_call.1} parent=47 // pred_check
          %p11452 = pneg %p196
        $region70: #{tpu_custom_call.1} parent=47 // pred_check_branch
          %11454 = sbr.rel (%p11452) target = $region72
        $region71: #{tpu_custom_call.1} parent=47 // pred_region
          %11456 = vsyncadd %s11448, 0
          %s11457 = smul.addr %s26, 32
          %s11458 = smul.addr %s11457, 8
          %s11459 = scalar_lea.hbm %s7, %s11458
          %s11460 = sshll.u32 %s11451, 4
          %s11461 = int_to_ptr.vmem [resolvable:$true] %s11460
          %s11462 = sshll.u32 %s11459, 4
          %s11463 = int_to_ptr.hbm [resolvable:$true] %s11462
          %11468 = dma.vmem_to_hbm [thread:$0]  %s11461, 4096, %s11463, %s11448, 128, 128, 8
        $region72: #{tpu_custom_call.1} parent=47 // pred_fallthru
          _
      $region48: #{tpu_custom_call.1} parent=5 // pred_fallthru
        _
      %p11469 = scmp.le.s32.totalorder 2, %s21
      // Predicated region
      $region73: #{tpu_custom_call.1} parent=5 // pred_check
        %p11470 = pneg %p11469
      $region74: #{tpu_custom_call.1} parent=5 // pred_check_branch
        %11472 = sbr.rel (%p11470) target = $region76
      $region75: #{tpu_custom_call.1} parent=5 // pred_region
        %s11473 = ssub.s32 %s21, 2
        // Predicated region
        $region77: #{tpu_custom_call.1} parent=75 // pred_check
          %p11474 = pneg %p202
        $region78: #{tpu_custom_call.1} parent=75 // pred_check_branch
          %11476 = sbr.rel (%p11474) target = $region80
        $region79: #{tpu_custom_call.1} parent=75 // pred_region
          %s11477 = sand.u32 %s187, 1
          %s11478 = scalar_lea.sflag [#allocation6], %s11477
          %s11479 = sand.u32 %s187, 1
          %s11480 = smul.addr %s11479, 256
          %s11481 = scalar_lea.vmem [#allocation13], %s11480
          %11483 = dma.done %s11478, 4096
        $region80: #{tpu_custom_call.1} parent=75 // pred_fallthru
          _
      $region76: #{tpu_custom_call.1} parent=5 // pred_fallthru
        _
    $region6: #{tpu_custom_call.1} parent=1 // loop_footer
      %s25 = sadd.s32 1, %s21
    $region7: #{tpu_custom_call.1} parent=1 // loop_footer_branch
      %20 = sbr.rel target = $region3
    $region8: #{tpu_custom_call.1} parent=1 // loop_exit
      _
    %11484 = vsyncpa [#allocation5], 1
    %s11485 = scalar_lea.sflag [#allocation5], 1
    %11486 = vsyncpa %s11485, 1
    %11487 = vsyncpa [#allocation8], 1
    %11488 = vsyncpa [#allocation11], 1
    %11489 = vsyncpa [#allocation6], 1
    %s11490 = scalar_lea.sflag [#allocation6], 1
    %11491 = vsyncpa %s11490, 1

</llo_original>
